<compile_context>
chip_gen: v5e
topology: v5e:2x2
jax: 0.10.0
libtpu: 0.0.40
codegen_flags: <defaults>
</compile_context>

<pallas_src>
import jax
import jax.numpy as jnp
from jax import lax
from jax.experimental import pallas as pl
from jax.experimental.pallas import tpu as pltpu

# ----------------------------- config ---------------------------------------
VOCAB = 50
EMB_H = 32          # embedding dim H
WINDOW = 4          # config['windowsize']  -> W*H = 128 (lane aligned)
NFILTER = 8         # config['nfilter']
NKERNEL = 3         # config['nkernel']
NHIDDENS = 16       # config['nhiddens']  (self.ffw is unused in forward)
DROPOUT = 0.1       # TODO(synk): Dropout implemented as eval-mode identity.

WH = WINDOW * EMB_H
L_OUT = WH - NKERNEL + 1


# ----------------------------- Pallas wrapper + kernel -----------------------
def cdssm_pallas(q_windows, s_windows, conv_w, conv_b, *, tb=256):
    """q_windows: (B, NQ, WH), s_windows: (B, NS, WH) -> (B, 1) scores."""
    B, nq, wh = q_windows.shape
    _, ns, _ = s_windows.shape
    nw = nq + ns
    F, K = conv_w.shape
    l_out = wh - K + 1

    num_tiles = pl.cdiv(B, tb)
    b_pad = num_tiles * tb

    # ---- wrapper-side layout plumbing (plain XLA, cheap) ----
    # Stack query+sentence windows, quantize to bf16, pad batch to a multiple
    # of tb, and lay out each tile window-major: rows [w*tb:(w+1)*tb] = window w.
    x = jnp.concatenate([q_windows, s_windows], axis=1).astype(jnp.bfloat16)
    x = jnp.pad(x, ((0, b_pad - B), (0, 0), (0, 0)))              # (b_pad, nw, wh)
    x = x.transpose(1, 0, 2)                                      # (nw, b_pad, wh)
    x = x.reshape(nw, num_tiles, tb, wh).transpose(1, 0, 2, 3)    # (tiles, nw, tb, wh)
    x = x.reshape(num_tiles, nw * tb, wh)                         # (tiles, nw*tb, wh)

    w_flat = conv_w.reshape(-1).astype(jnp.float32)               # (F*K,)  -> SMEM
    b_vec = conv_b.reshape(-1).astype(jnp.float32)                # (F,)    -> SMEM

    def kernel(x_ref, w_ref, b_ref, out_ref):
        # x_ref: (1, nw*tb, wh) bf16 VMEM;  w_ref: (F*K,) f32 SMEM;
        # b_ref: (F,) f32 SMEM;             out_ref: (1, tb) f32 (lane-dense).
        xx = x_ref[0].astype(jnp.float32)                         # (nw*tb, wh)

        # Shifted copies shared by every filter and both branches.
        # pltpu.roll follows np.roll: shift = wh-k puts x[:, j+k] into lane j.
        shifted = [xx] + [pltpu.roll(xx, wh - k, 1) for k in range(1, K)]

        # ReLU outputs are >= 0, so 0-init is a correct identity for the max.
        qmax = jnp.zeros((tb, wh), jnp.float32)
        smax = jnp.zeros((tb, wh), jnp.float32)
        for f in range(F):                                        # F, K small & static
            acc = shifted[0] * w_ref[f * K]
            for k in range(1, K):
                acc = acc + shifted[k] * w_ref[f * K + k]
            acc = jnp.maximum(acc + b_ref[f], 0.0)                # bias + ReLU
            # (Dropout after ReLU = identity in eval mode.)
            for w in range(nq):                                   # max over query windows
                qmax = jnp.maximum(qmax, acc[w * tb:(w + 1) * tb, :])
            for w in range(nq, nw):                               # max over sentence windows
                smax = jnp.maximum(smax, acc[w * tb:(w + 1) * tb, :])

        # The last K-1 lanes hold rolled wrap-around values (conv output length
        # is l_out < wh): zero them so the norm / cosine sums ignore them.
        lane = lax.broadcasted_iota(jnp.int32, (tb, wh), 1)
        valid = lane < l_out
        qmax = jnp.where(valid, qmax, 0.0)
        smax = jnp.where(valid, smax, 0.0)

        # Lane sums emitted lane-dense as (1, tb) via a ones-contraction on the
        # MXU (contract last dims) -- avoids a skinny (tb,1)->(1,tb) transpose.
        ones = jnp.ones((1, wh), jnp.float32)

        def lane_sum_t(v):                                        # (tb, wh) -> (1, tb)
            return lax.dot_general(ones, v, (((1,), (1,)), ((), ())),
                                   preferred_element_type=jnp.float32)

        qsq = lane_sum_t(qmax * qmax)
        ssq = lane_sum_t(smax * smax)
        qs = lane_sum_t(qmax * smax)

        qn = jnp.sqrt(qsq) + 1e-7
        sn = jnp.sqrt(ssq) + 1e-7
        cos = qs * pl.reciprocal(qn * sn, approx=True)            # EUP reciprocal
        out_ref[...] = 1.0 / (1.0 + jnp.exp(-cos))                # sigmoid

    out = pl.pallas_call(
        kernel,
        out_shape=jax.ShapeDtypeStruct((num_tiles, tb), jnp.float32),
        grid=(num_tiles,),
        in_specs=[
            pl.BlockSpec((1, nw * tb, wh), lambda i: (i, 0, 0)),
            pl.BlockSpec(memory_space=pltpu.MemorySpace.SMEM),    # conv weights
            pl.BlockSpec(memory_space=pltpu.MemorySpace.SMEM),    # conv bias
        ],
        out_specs=pl.BlockSpec((1, tb), lambda i: (i, 0)),
        compiler_params=pltpu.CompilerParams(
            dimension_semantics=("parallel",)),   # batch tiles shard across v7x TCs
    )(x, w_flat, b_vec)

    return out.reshape(b_pad)[:B].reshape(B, 1)


# ----------------------------- JAX glue --------------------------------------
def prepare_windows(token_ids, embeddings, window):
    """Embedding lookup + zero-pad + reshape to (B, NW, W*H), matching torch."""
    x = embeddings[token_ids]                     # (B, T, H) frozen embedding
    B, T, H = x.shape
    npad = window - T % window                    # full extra window if T%W==0
    x = jnp.concatenate([x, jnp.zeros((B, npad, H), x.dtype)], axis=1)
    return x.reshape(B, -1, window * H)


# ----------------------------- reference (plain JAX) -------------------------
def cdssm_reference(q_windows, s_windows, conv_w, conv_b):
    F, K = conv_w.shape
    l_out = q_windows.shape[-1] - K + 1

    def branch(x):
        patches = jnp.stack([x[:, :, k:k + l_out] for k in range(K)], axis=-1)
        out = jnp.einsum("bnlk,fk->bnfl", patches, conv_w)
        out = out + conv_b[None, None, :, None]
        out = jnp.maximum(out, 0.0)
        return jnp.max(out, axis=(1, 2))          # (B, L_OUT)

    q = branch(q_windows)
    s = branch(s_windows)
    qn = jnp.linalg.norm(q, axis=-1, keepdims=True) + 1e-7
    sn = jnp.linalg.norm(s, axis=-1, keepdims=True) + 1e-7
    cos = jnp.sum((q / qn) * (s / sn), axis=-1, keepdims=True)
    return jax.nn.sigmoid(cos)


# ----------------------------- main ------------------------------------------
if __name__ == "__main__":
    key = jax.random.PRNGKey(0)
    k_emb, k_w, k_b, k_q, k_s = jax.random.split(key, 5)

    B, QLEN, SLEN = 2, 5, 9

    # Deterministic synthetic parameters (shapes from the module's __init__).
    embeddings = jax.random.normal(k_emb, (VOCAB, EMB_H), jnp.float32) * 0.1
    conv_w = jax.random.normal(k_w, (NFILTER, NKERNEL), jnp.float32) * 0.2
    conv_b = jax.random.normal(k_b, (NFILTER,), jnp.float32) * 0.05
    # self.ffw (Linear(nkernel, nhiddens)) is never used in forward -> omitted.

    query_tok = jax.random.randint(k_q, (B, QLEN), 0, VOCAB, jnp.int32)
    sent_tok = jax.random.randint(k_s, (B, SLEN), 0, VOCAB, jnp.int32)

    q_windows = prepare_windows(query_tok, embeddings, WINDOW)   # (B, 2, 128)
    s_windows = prepare_windows(sent_tok, embeddings, WINDOW)    # (B, 3, 128)

    score = cdssm_pallas(q_windows, s_windows, conv_w, conv_b)
    score = jax.block_until_ready(score)

    # Reference on the same bf16-quantized inputs the kernel consumes.
    q_bf = q_windows.astype(jnp.bfloat16).astype(jnp.float32)
    s_bf = s_windows.astype(jnp.bfloat16).astype(jnp.float32)
    ref = cdssm_reference(q_bf, s_bf, conv_w, conv_b)

    assert score.shape == (B, 1)
    assert jnp.allclose(score, ref, atol=2e-3), (score, ref)

    print("KERNEL_OK")
</pallas_src>

<mosaic_0001>
module attributes {stable_mosaic.version = 11 : i64} {
  func.func @kernel(%arg0: i32, %arg1: memref<1x1280x128xbf16, #tpu.memory_space<vmem>>, %arg2: memref<24xf32, #tpu.memory_space<smem>>, %arg3: memref<8xf32, #tpu.memory_space<smem>>, %arg4: memref<1x256xf32, #tpu.memory_space<vmem>>) attributes {dimension_semantics = [#tpu.dimension_semantics<parallel>], iteration_bounds = array<i64: 1>, scalar_prefetch = 0 : i64, scratch_operands = 0 : i64, tpu.core_type = #tpu.core_type<tc>, window_params = [{transform_indices = @transform_0, window_bounds = array<i64: 1, 1280, 128>}, {transform_indices = @transform_1, window_bounds = array<i64: 24>}, {transform_indices = @transform_2, window_bounds = array<i64: 8>}, {transform_indices = @transform_3, window_bounds = array<i64: 1, 256>}]} {
    %c0 = arith.constant 0 : index
    %c0_0 = arith.constant 0 : index
    %c0_1 = arith.constant 0 : index
    %0 = vector.load %arg1[%c0, %c0_0, %c0_1] : memref<1x1280x128xbf16, #tpu.memory_space<vmem>>, vector<1x1280x128xbf16>
    %1 = vector.shape_cast %0 : vector<1x1280x128xbf16> to vector<1280x128xbf16>
    %2 = arith.extf %1 : vector<1280x128xbf16> to vector<1280x128xf32>
    %c127_i32 = arith.constant 127 : i32
    %3 = tpu.dynamic_rotate %2 by %c127_i32 dim 1 : vector<1280x128xf32>, i32 -> vector<1280x128xf32>
    %c126_i32 = arith.constant 126 : i32
    %4 = tpu.dynamic_rotate %2 by %c126_i32 dim 1 : vector<1280x128xf32>, i32 -> vector<1280x128xf32>
    %cst = arith.constant 0.000000e+00 : f32
    %5 = vector.broadcast %cst : f32 to vector<256x128xf32>
    %cst_2 = arith.constant 0.000000e+00 : f32
    %6 = vector.broadcast %cst_2 : f32 to vector<256x128xf32>
    %c0_3 = arith.constant 0 : index
    %7 = memref.load %arg2[%c0_3] : memref<24xf32, #tpu.memory_space<smem>>
    %8 = vector.broadcast %7 : f32 to vector<1280x128xf32>
    %9 = arith.mulf %2, %8 : vector<1280x128xf32>
    %c1 = arith.constant 1 : index
    %10 = memref.load %arg2[%c1] : memref<24xf32, #tpu.memory_space<smem>>
    %11 = vector.broadcast %10 : f32 to vector<1280x128xf32>
    %12 = arith.mulf %3, %11 : vector<1280x128xf32>
    %13 = arith.addf %9, %12 : vector<1280x128xf32>
    %c2 = arith.constant 2 : index
    %14 = memref.load %arg2[%c2] : memref<24xf32, #tpu.memory_space<smem>>
    %15 = vector.broadcast %14 : f32 to vector<1280x128xf32>
    %16 = arith.mulf %4, %15 : vector<1280x128xf32>
    %17 = arith.addf %13, %16 : vector<1280x128xf32>
    %c0_4 = arith.constant 0 : index
    %18 = memref.load %arg3[%c0_4] : memref<8xf32, #tpu.memory_space<smem>>
    %19 = vector.broadcast %18 : f32 to vector<1280x128xf32>
    %20 = arith.addf %17, %19 : vector<1280x128xf32>
    %cst_5 = arith.constant 0.000000e+00 : f32
    %21 = vector.broadcast %cst_5 : f32 to vector<1280x128xf32>
    %22 = arith.maximumf %20, %21 : vector<1280x128xf32>
    %23 = vector.extract_strided_slice %22 {offsets = [0, 0], sizes = [256, 128], strides = [1, 1]} : vector<1280x128xf32> to vector<256x128xf32>
    %24 = arith.maximumf %5, %23 : vector<256x128xf32>
    %25 = vector.extract_strided_slice %22 {offsets = [256, 0], sizes = [256, 128], strides = [1, 1]} : vector<1280x128xf32> to vector<256x128xf32>
    %26 = arith.maximumf %24, %25 : vector<256x128xf32>
    %27 = vector.extract_strided_slice %22 {offsets = [512, 0], sizes = [256, 128], strides = [1, 1]} : vector<1280x128xf32> to vector<256x128xf32>
    %28 = arith.maximumf %6, %27 : vector<256x128xf32>
    %29 = vector.extract_strided_slice %22 {offsets = [768, 0], sizes = [256, 128], strides = [1, 1]} : vector<1280x128xf32> to vector<256x128xf32>
    %30 = arith.maximumf %28, %29 : vector<256x128xf32>
    %31 = vector.extract_strided_slice %22 {offsets = [1024, 0], sizes = [256, 128], strides = [1, 1]} : vector<1280x128xf32> to vector<256x128xf32>
    %32 = arith.maximumf %30, %31 : vector<256x128xf32>
    %c3 = arith.constant 3 : index
    %33 = memref.load %arg2[%c3] : memref<24xf32, #tpu.memory_space<smem>>
    %34 = vector.broadcast %33 : f32 to vector<1280x128xf32>
    %35 = arith.mulf %2, %34 : vector<1280x128xf32>
    %c4 = arith.constant 4 : index
    %36 = memref.load %arg2[%c4] : memref<24xf32, #tpu.memory_space<smem>>
    %37 = vector.broadcast %36 : f32 to vector<1280x128xf32>
    %38 = arith.mulf %3, %37 : vector<1280x128xf32>
    %39 = arith.addf %35, %38 : vector<1280x128xf32>
    %c5 = arith.constant 5 : index
    %40 = memref.load %arg2[%c5] : memref<24xf32, #tpu.memory_space<smem>>
    %41 = vector.broadcast %40 : f32 to vector<1280x128xf32>
    %42 = arith.mulf %4, %41 : vector<1280x128xf32>
    %43 = arith.addf %39, %42 : vector<1280x128xf32>
    %c1_6 = arith.constant 1 : index
    %44 = memref.load %arg3[%c1_6] : memref<8xf32, #tpu.memory_space<smem>>
    %45 = vector.broadcast %44 : f32 to vector<1280x128xf32>
    %46 = arith.addf %43, %45 : vector<1280x128xf32>
    %cst_7 = arith.constant 0.000000e+00 : f32
    %47 = vector.broadcast %cst_7 : f32 to vector<1280x128xf32>
    %48 = arith.maximumf %46, %47 : vector<1280x128xf32>
    %49 = vector.extract_strided_slice %48 {offsets = [0, 0], sizes = [256, 128], strides = [1, 1]} : vector<1280x128xf32> to vector<256x128xf32>
    %50 = arith.maximumf %26, %49 : vector<256x128xf32>
    %51 = vector.extract_strided_slice %48 {offsets = [256, 0], sizes = [256, 128], strides = [1, 1]} : vector<1280x128xf32> to vector<256x128xf32>
    %52 = arith.maximumf %50, %51 : vector<256x128xf32>
    %53 = vector.extract_strided_slice %48 {offsets = [512, 0], sizes = [256, 128], strides = [1, 1]} : vector<1280x128xf32> to vector<256x128xf32>
    %54 = arith.maximumf %32, %53 : vector<256x128xf32>
    %55 = vector.extract_strided_slice %48 {offsets = [768, 0], sizes = [256, 128], strides = [1, 1]} : vector<1280x128xf32> to vector<256x128xf32>
    %56 = arith.maximumf %54, %55 : vector<256x128xf32>
    %57 = vector.extract_strided_slice %48 {offsets = [1024, 0], sizes = [256, 128], strides = [1, 1]} : vector<1280x128xf32> to vector<256x128xf32>
    %58 = arith.maximumf %56, %57 : vector<256x128xf32>
    %c6 = arith.constant 6 : index
    %59 = memref.load %arg2[%c6] : memref<24xf32, #tpu.memory_space<smem>>
    %60 = vector.broadcast %59 : f32 to vector<1280x128xf32>
    %61 = arith.mulf %2, %60 : vector<1280x128xf32>
    %c7 = arith.constant 7 : index
    %62 = memref.load %arg2[%c7] : memref<24xf32, #tpu.memory_space<smem>>
    %63 = vector.broadcast %62 : f32 to vector<1280x128xf32>
    %64 = arith.mulf %3, %63 : vector<1280x128xf32>
    %65 = arith.addf %61, %64 : vector<1280x128xf32>
    %c8 = arith.constant 8 : index
    %66 = memref.load %arg2[%c8] : memref<24xf32, #tpu.memory_space<smem>>
    %67 = vector.broadcast %66 : f32 to vector<1280x128xf32>
    %68 = arith.mulf %4, %67 : vector<1280x128xf32>
    %69 = arith.addf %65, %68 : vector<1280x128xf32>
    %c2_8 = arith.constant 2 : index
    %70 = memref.load %arg3[%c2_8] : memref<8xf32, #tpu.memory_space<smem>>
    %71 = vector.broadcast %70 : f32 to vector<1280x128xf32>
    %72 = arith.addf %69, %71 : vector<1280x128xf32>
    %cst_9 = arith.constant 0.000000e+00 : f32
    %73 = vector.broadcast %cst_9 : f32 to vector<1280x128xf32>
    %74 = arith.maximumf %72, %73 : vector<1280x128xf32>
    %75 = vector.extract_strided_slice %74 {offsets = [0, 0], sizes = [256, 128], strides = [1, 1]} : vector<1280x128xf32> to vector<256x128xf32>
    %76 = arith.maximumf %52, %75 : vector<256x128xf32>
    %77 = vector.extract_strided_slice %74 {offsets = [256, 0], sizes = [256, 128], strides = [1, 1]} : vector<1280x128xf32> to vector<256x128xf32>
    %78 = arith.maximumf %76, %77 : vector<256x128xf32>
    %79 = vector.extract_strided_slice %74 {offsets = [512, 0], sizes = [256, 128], strides = [1, 1]} : vector<1280x128xf32> to vector<256x128xf32>
    %80 = arith.maximumf %58, %79 : vector<256x128xf32>
    %81 = vector.extract_strided_slice %74 {offsets = [768, 0], sizes = [256, 128], strides = [1, 1]} : vector<1280x128xf32> to vector<256x128xf32>
    %82 = arith.maximumf %80, %81 : vector<256x128xf32>
    %83 = vector.extract_strided_slice %74 {offsets = [1024, 0], sizes = [256, 128], strides = [1, 1]} : vector<1280x128xf32> to vector<256x128xf32>
    %84 = arith.maximumf %82, %83 : vector<256x128xf32>
    %c9 = arith.constant 9 : index
    %85 = memref.load %arg2[%c9] : memref<24xf32, #tpu.memory_space<smem>>
    %86 = vector.broadcast %85 : f32 to vector<1280x128xf32>
    %87 = arith.mulf %2, %86 : vector<1280x128xf32>
    %c10 = arith.constant 10 : index
    %88 = memref.load %arg2[%c10] : memref<24xf32, #tpu.memory_space<smem>>
    %89 = vector.broadcast %88 : f32 to vector<1280x128xf32>
    %90 = arith.mulf %3, %89 : vector<1280x128xf32>
    %91 = arith.addf %87, %90 : vector<1280x128xf32>
    %c11 = arith.constant 11 : index
    %92 = memref.load %arg2[%c11] : memref<24xf32, #tpu.memory_space<smem>>
    %93 = vector.broadcast %92 : f32 to vector<1280x128xf32>
    %94 = arith.mulf %4, %93 : vector<1280x128xf32>
    %95 = arith.addf %91, %94 : vector<1280x128xf32>
    %c3_10 = arith.constant 3 : index
    %96 = memref.load %arg3[%c3_10] : memref<8xf32, #tpu.memory_space<smem>>
    %97 = vector.broadcast %96 : f32 to vector<1280x128xf32>
    %98 = arith.addf %95, %97 : vector<1280x128xf32>
    %cst_11 = arith.constant 0.000000e+00 : f32
    %99 = vector.broadcast %cst_11 : f32 to vector<1280x128xf32>
    %100 = arith.maximumf %98, %99 : vector<1280x128xf32>
    %101 = vector.extract_strided_slice %100 {offsets = [0, 0], sizes = [256, 128], strides = [1, 1]} : vector<1280x128xf32> to vector<256x128xf32>
    %102 = arith.maximumf %78, %101 : vector<256x128xf32>
    %103 = vector.extract_strided_slice %100 {offsets = [256, 0], sizes = [256, 128], strides = [1, 1]} : vector<1280x128xf32> to vector<256x128xf32>
    %104 = arith.maximumf %102, %103 : vector<256x128xf32>
    %105 = vector.extract_strided_slice %100 {offsets = [512, 0], sizes = [256, 128], strides = [1, 1]} : vector<1280x128xf32> to vector<256x128xf32>
    %106 = arith.maximumf %84, %105 : vector<256x128xf32>
    %107 = vector.extract_strided_slice %100 {offsets = [768, 0], sizes = [256, 128], strides = [1, 1]} : vector<1280x128xf32> to vector<256x128xf32>
    %108 = arith.maximumf %106, %107 : vector<256x128xf32>
    %109 = vector.extract_strided_slice %100 {offsets = [1024, 0], sizes = [256, 128], strides = [1, 1]} : vector<1280x128xf32> to vector<256x128xf32>
    %110 = arith.maximumf %108, %109 : vector<256x128xf32>
    %c12 = arith.constant 12 : index
    %111 = memref.load %arg2[%c12] : memref<24xf32, #tpu.memory_space<smem>>
    %112 = vector.broadcast %111 : f32 to vector<1280x128xf32>
    %113 = arith.mulf %2, %112 : vector<1280x128xf32>
    %c13 = arith.constant 13 : index
    %114 = memref.load %arg2[%c13] : memref<24xf32, #tpu.memory_space<smem>>
    %115 = vector.broadcast %114 : f32 to vector<1280x128xf32>
    %116 = arith.mulf %3, %115 : vector<1280x128xf32>
    %117 = arith.addf %113, %116 : vector<1280x128xf32>
    %c14 = arith.constant 14 : index
    %118 = memref.load %arg2[%c14] : memref<24xf32, #tpu.memory_space<smem>>
    %119 = vector.broadcast %118 : f32 to vector<1280x128xf32>
    %120 = arith.mulf %4, %119 : vector<1280x128xf32>
    %121 = arith.addf %117, %120 : vector<1280x128xf32>
    %c4_12 = arith.constant 4 : index
    %122 = memref.load %arg3[%c4_12] : memref<8xf32, #tpu.memory_space<smem>>
    %123 = vector.broadcast %122 : f32 to vector<1280x128xf32>
    %124 = arith.addf %121, %123 : vector<1280x128xf32>
    %cst_13 = arith.constant 0.000000e+00 : f32
    %125 = vector.broadcast %cst_13 : f32 to vector<1280x128xf32>
    %126 = arith.maximumf %124, %125 : vector<1280x128xf32>
    %127 = vector.extract_strided_slice %126 {offsets = [0, 0], sizes = [256, 128], strides = [1, 1]} : vector<1280x128xf32> to vector<256x128xf32>
    %128 = arith.maximumf %104, %127 : vector<256x128xf32>
    %129 = vector.extract_strided_slice %126 {offsets = [256, 0], sizes = [256, 128], strides = [1, 1]} : vector<1280x128xf32> to vector<256x128xf32>
    %130 = arith.maximumf %128, %129 : vector<256x128xf32>
    %131 = vector.extract_strided_slice %126 {offsets = [512, 0], sizes = [256, 128], strides = [1, 1]} : vector<1280x128xf32> to vector<256x128xf32>
    %132 = arith.maximumf %110, %131 : vector<256x128xf32>
    %133 = vector.extract_strided_slice %126 {offsets = [768, 0], sizes = [256, 128], strides = [1, 1]} : vector<1280x128xf32> to vector<256x128xf32>
    %134 = arith.maximumf %132, %133 : vector<256x128xf32>
    %135 = vector.extract_strided_slice %126 {offsets = [1024, 0], sizes = [256, 128], strides = [1, 1]} : vector<1280x128xf32> to vector<256x128xf32>
    %136 = arith.maximumf %134, %135 : vector<256x128xf32>
    %c15 = arith.constant 15 : index
    %137 = memref.load %arg2[%c15] : memref<24xf32, #tpu.memory_space<smem>>
    %138 = vector.broadcast %137 : f32 to vector<1280x128xf32>
    %139 = arith.mulf %2, %138 : vector<1280x128xf32>
    %c16 = arith.constant 16 : index
    %140 = memref.load %arg2[%c16] : memref<24xf32, #tpu.memory_space<smem>>
    %141 = vector.broadcast %140 : f32 to vector<1280x128xf32>
    %142 = arith.mulf %3, %141 : vector<1280x128xf32>
    %143 = arith.addf %139, %142 : vector<1280x128xf32>
    %c17 = arith.constant 17 : index
    %144 = memref.load %arg2[%c17] : memref<24xf32, #tpu.memory_space<smem>>
    %145 = vector.broadcast %144 : f32 to vector<1280x128xf32>
    %146 = arith.mulf %4, %145 : vector<1280x128xf32>
    %147 = arith.addf %143, %146 : vector<1280x128xf32>
    %c5_14 = arith.constant 5 : index
    %148 = memref.load %arg3[%c5_14] : memref<8xf32, #tpu.memory_space<smem>>
    %149 = vector.broadcast %148 : f32 to vector<1280x128xf32>
    %150 = arith.addf %147, %149 : vector<1280x128xf32>
    %cst_15 = arith.constant 0.000000e+00 : f32
    %151 = vector.broadcast %cst_15 : f32 to vector<1280x128xf32>
    %152 = arith.maximumf %150, %151 : vector<1280x128xf32>
    %153 = vector.extract_strided_slice %152 {offsets = [0, 0], sizes = [256, 128], strides = [1, 1]} : vector<1280x128xf32> to vector<256x128xf32>
    %154 = arith.maximumf %130, %153 : vector<256x128xf32>
    %155 = vector.extract_strided_slice %152 {offsets = [256, 0], sizes = [256, 128], strides = [1, 1]} : vector<1280x128xf32> to vector<256x128xf32>
    %156 = arith.maximumf %154, %155 : vector<256x128xf32>
    %157 = vector.extract_strided_slice %152 {offsets = [512, 0], sizes = [256, 128], strides = [1, 1]} : vector<1280x128xf32> to vector<256x128xf32>
    %158 = arith.maximumf %136, %157 : vector<256x128xf32>
    %159 = vector.extract_strided_slice %152 {offsets = [768, 0], sizes = [256, 128], strides = [1, 1]} : vector<1280x128xf32> to vector<256x128xf32>
    %160 = arith.maximumf %158, %159 : vector<256x128xf32>
    %161 = vector.extract_strided_slice %152 {offsets = [1024, 0], sizes = [256, 128], strides = [1, 1]} : vector<1280x128xf32> to vector<256x128xf32>
    %162 = arith.maximumf %160, %161 : vector<256x128xf32>
    %c18 = arith.constant 18 : index
    %163 = memref.load %arg2[%c18] : memref<24xf32, #tpu.memory_space<smem>>
    %164 = vector.broadcast %163 : f32 to vector<1280x128xf32>
    %165 = arith.mulf %2, %164 : vector<1280x128xf32>
    %c19 = arith.constant 19 : index
    %166 = memref.load %arg2[%c19] : memref<24xf32, #tpu.memory_space<smem>>
    %167 = vector.broadcast %166 : f32 to vector<1280x128xf32>
    %168 = arith.mulf %3, %167 : vector<1280x128xf32>
    %169 = arith.addf %165, %168 : vector<1280x128xf32>
    %c20 = arith.constant 20 : index
    %170 = memref.load %arg2[%c20] : memref<24xf32, #tpu.memory_space<smem>>
    %171 = vector.broadcast %170 : f32 to vector<1280x128xf32>
    %172 = arith.mulf %4, %171 : vector<1280x128xf32>
    %173 = arith.addf %169, %172 : vector<1280x128xf32>
    %c6_16 = arith.constant 6 : index
    %174 = memref.load %arg3[%c6_16] : memref<8xf32, #tpu.memory_space<smem>>
    %175 = vector.broadcast %174 : f32 to vector<1280x128xf32>
    %176 = arith.addf %173, %175 : vector<1280x128xf32>
    %cst_17 = arith.constant 0.000000e+00 : f32
    %177 = vector.broadcast %cst_17 : f32 to vector<1280x128xf32>
    %178 = arith.maximumf %176, %177 : vector<1280x128xf32>
    %179 = vector.extract_strided_slice %178 {offsets = [0, 0], sizes = [256, 128], strides = [1, 1]} : vector<1280x128xf32> to vector<256x128xf32>
    %180 = arith.maximumf %156, %179 : vector<256x128xf32>
    %181 = vector.extract_strided_slice %178 {offsets = [256, 0], sizes = [256, 128], strides = [1, 1]} : vector<1280x128xf32> to vector<256x128xf32>
    %182 = arith.maximumf %180, %181 : vector<256x128xf32>
    %183 = vector.extract_strided_slice %178 {offsets = [512, 0], sizes = [256, 128], strides = [1, 1]} : vector<1280x128xf32> to vector<256x128xf32>
    %184 = arith.maximumf %162, %183 : vector<256x128xf32>
    %185 = vector.extract_strided_slice %178 {offsets = [768, 0], sizes = [256, 128], strides = [1, 1]} : vector<1280x128xf32> to vector<256x128xf32>
    %186 = arith.maximumf %184, %185 : vector<256x128xf32>
    %187 = vector.extract_strided_slice %178 {offsets = [1024, 0], sizes = [256, 128], strides = [1, 1]} : vector<1280x128xf32> to vector<256x128xf32>
    %188 = arith.maximumf %186, %187 : vector<256x128xf32>
    %c21 = arith.constant 21 : index
    %189 = memref.load %arg2[%c21] : memref<24xf32, #tpu.memory_space<smem>>
    %190 = vector.broadcast %189 : f32 to vector<1280x128xf32>
    %191 = arith.mulf %2, %190 : vector<1280x128xf32>
    %c22 = arith.constant 22 : index
    %192 = memref.load %arg2[%c22] : memref<24xf32, #tpu.memory_space<smem>>
    %193 = vector.broadcast %192 : f32 to vector<1280x128xf32>
    %194 = arith.mulf %3, %193 : vector<1280x128xf32>
    %195 = arith.addf %191, %194 : vector<1280x128xf32>
    %c23 = arith.constant 23 : index
    %196 = memref.load %arg2[%c23] : memref<24xf32, #tpu.memory_space<smem>>
    %197 = vector.broadcast %196 : f32 to vector<1280x128xf32>
    %198 = arith.mulf %4, %197 : vector<1280x128xf32>
    %199 = arith.addf %195, %198 : vector<1280x128xf32>
    %c7_18 = arith.constant 7 : index
    %200 = memref.load %arg3[%c7_18] : memref<8xf32, #tpu.memory_space<smem>>
    %201 = vector.broadcast %200 : f32 to vector<1280x128xf32>
    %202 = arith.addf %199, %201 : vector<1280x128xf32>
    %cst_19 = arith.constant 0.000000e+00 : f32
    %203 = vector.broadcast %cst_19 : f32 to vector<1280x128xf32>
    %204 = arith.maximumf %202, %203 : vector<1280x128xf32>
    %205 = vector.extract_strided_slice %204 {offsets = [0, 0], sizes = [256, 128], strides = [1, 1]} : vector<1280x128xf32> to vector<256x128xf32>
    %206 = arith.maximumf %182, %205 : vector<256x128xf32>
    %207 = vector.extract_strided_slice %204 {offsets = [256, 0], sizes = [256, 128], strides = [1, 1]} : vector<1280x128xf32> to vector<256x128xf32>
    %208 = arith.maximumf %206, %207 : vector<256x128xf32>
    %209 = vector.extract_strided_slice %204 {offsets = [512, 0], sizes = [256, 128], strides = [1, 1]} : vector<1280x128xf32> to vector<256x128xf32>
    %210 = arith.maximumf %188, %209 : vector<256x128xf32>
    %211 = vector.extract_strided_slice %204 {offsets = [768, 0], sizes = [256, 128], strides = [1, 1]} : vector<1280x128xf32> to vector<256x128xf32>
    %212 = arith.maximumf %210, %211 : vector<256x128xf32>
    %213 = vector.extract_strided_slice %204 {offsets = [1024, 0], sizes = [256, 128], strides = [1, 1]} : vector<1280x128xf32> to vector<256x128xf32>
    %214 = arith.maximumf %212, %213 : vector<256x128xf32>
    %215 = tpu.iota {dimensions = array<i32: 1>} : vector<256x128xi32>
    %c126_i32_20 = arith.constant 126 : i32
    %216 = vector.broadcast %c126_i32_20 : i32 to vector<256x128xi32>
    %217 = arith.cmpi slt, %215, %216 : vector<256x128xi32>
    %cst_21 = arith.constant 0.000000e+00 : f32
    %218 = vector.broadcast %cst_21 : f32 to vector<256x128xf32>
    %219 = arith.select %217, %208, %218 : vector<256x128xi1>, vector<256x128xf32>
    %cst_22 = arith.constant 0.000000e+00 : f32
    %220 = vector.broadcast %cst_22 : f32 to vector<256x128xf32>
    %221 = arith.select %217, %214, %220 : vector<256x128xi1>, vector<256x128xf32>
    %cst_23 = arith.constant 1.000000e+00 : f32
    %222 = vector.broadcast %cst_23 : f32 to vector<1x128xf32>
    %223 = arith.mulf %219, %219 : vector<256x128xf32>
    %cst_24 = arith.constant dense<0.000000e+00> : vector<1x256xf32>
    %224 = tpu.matmul %222, %223, %cst_24 {dimension_numbers = #tpu.dot_dimension_numbers<[1], [1], [0], [0], [0, 0, 1, 0], [], []>} : vector<1x128xf32>, vector<256x128xf32>, vector<1x256xf32> -> vector<1x256xf32>
    %225 = arith.mulf %221, %221 : vector<256x128xf32>
    %cst_25 = arith.constant dense<0.000000e+00> : vector<1x256xf32>
    %226 = tpu.matmul %222, %225, %cst_25 {dimension_numbers = #tpu.dot_dimension_numbers<[1], [1], [0], [0], [0, 0, 1, 0], [], []>} : vector<1x128xf32>, vector<256x128xf32>, vector<1x256xf32> -> vector<1x256xf32>
    %227 = arith.mulf %219, %221 : vector<256x128xf32>
    %cst_26 = arith.constant dense<0.000000e+00> : vector<1x256xf32>
    %228 = tpu.matmul %222, %227, %cst_26 {dimension_numbers = #tpu.dot_dimension_numbers<[1], [1], [0], [0], [0, 0, 1, 0], [], []>} : vector<1x128xf32>, vector<256x128xf32>, vector<1x256xf32> -> vector<1x256xf32>
    %229 = math.sqrt %224 : vector<1x256xf32>
    %cst_27 = arith.constant 1.000000e-07 : f32
    %230 = vector.broadcast %cst_27 : f32 to vector<1x256xf32>
    %231 = arith.addf %229, %230 : vector<1x256xf32>
    %232 = math.sqrt %226 : vector<1x256xf32>
    %cst_28 = arith.constant 1.000000e-07 : f32
    %233 = vector.broadcast %cst_28 : f32 to vector<1x256xf32>
    %234 = arith.addf %232, %233 : vector<1x256xf32>
    %235 = arith.mulf %231, %234 : vector<1x256xf32>
    %236 = tpu.reciprocal %235 {approx = true} : vector<1x256xf32> -> vector<1x256xf32>
    %237 = arith.mulf %228, %236 : vector<1x256xf32>
    %cst_29 = arith.constant 0.000000e+00 : f32
    %238 = vector.broadcast %cst_29 : f32 to vector<1x256xf32>
    %239 = arith.subf %238, %237 : vector<1x256xf32>
    %240 = math.exp %239 : vector<1x256xf32>
    %cst_30 = arith.constant 1.000000e+00 : f32
    %241 = vector.broadcast %cst_30 : f32 to vector<1x256xf32>
    %242 = arith.addf %241, %240 : vector<1x256xf32>
    %cst_31 = arith.constant 1.000000e+00 : f32
    %243 = vector.broadcast %cst_31 : f32 to vector<1x256xf32>
    %244 = arith.divf %243, %242 : vector<1x256xf32>
    %c0_32 = arith.constant 0 : index
    %c0_33 = arith.constant 0 : index
    %245 = vector.load %arg4[%c0_32, %c0_33] : memref<1x256xf32, #tpu.memory_space<vmem>>, vector<1x256xf32>
    tpu.vector_store %arg4[%c0_32, %c0_33], %244 {strides = array<i32>} : memref<1x256xf32, #tpu.memory_space<vmem>>, vector<1x256xf32>,
    return
  }
  func.func @transform_0(%arg0: i32) -> (i32, i32, i32) {
    %c0_i32 = arith.constant 0 : i32
    %c0_i32_0 = arith.constant 0 : i32
    %c0_i32_1 = arith.constant 0 : i32
    return %arg0, %c0_i32, %c0_i32_0 : i32, i32, i32
  }
  func.func @transform_1(%arg0: i32) -> i32 {
    %c0_i32 = arith.constant 0 : i32
    %c0_i32_0 = arith.constant 0 : i32
    return %c0_i32 : i32
  }
  func.func @transform_2(%arg0: i32) -> i32 {
    %c0_i32 = arith.constant 0 : i32
    %c0_i32_0 = arith.constant 0 : i32
    return %c0_i32 : i32
  }
  func.func @transform_3(%arg0: i32) -> (i32, i32) {
    %c0_i32 = arith.constant 0 : i32
    %c0_i32_0 = arith.constant 0 : i32
    return %arg0, %c0_i32 : i32, i32
  }
}

</mosaic_0001>

<llo_original>
// kernel: tpu_custom_call.1
$region0: #{tpu_custom_call.1}
  #allocation0 [shape = 'u32[]', space=smem, size = 0x4, offset = 0x4, fixed_abs, tag = 'smem constant byte address 0x4 - core index']
  #allocation1 [shape = 'u32[72,128]{1,0:T(1,128)}', space=vmem, size = 0x9000, scoped, tag = 'internal scratch']
  %s0 = inlined_call_operand.hbm [shape: bf16[1,1280,128], index: 0, kind: input, shape index: {}]
  %s1 = inlined_call_operand.hbm [shape: f32[24], index: 1, kind: input, shape index: {}]
  %s2 = inlined_call_operand.vmem [shape: f32[8], index: 2, kind: input, shape index: {}]
  %s3 = inlined_call_operand.hbm [shape: f32[1,256], index: 3, kind: output, shape index: {}]
  %s4 = sld [smem:[#allocation0]]
  $region34: #{tpu_custom_call.1} parent=0
    _
  %s6 = ssub.s32 1, %s4
  %s7 = scalar_select 0, %s6, %s4
  $region1: #{tpu_custom_call.1} parent=0
    #allocation2 [shape = 'u8[327680]{0}', space=vmem, size = 0x50000, scoped, tag = 'input window, operand 0, single buffered']
    #allocation3 [shape = 's32[1]{0}', space=sflag, size = 0x4, scoped, tag = 'scoped memory for tpu_custom_call.1']
    #allocation4 [shape = 's32[1]{0}', space=sflag, size = 0x4, scoped, tag = 'scoped memory for tpu_custom_call.1']
    #allocation5 [shape = 's32[1]{0}', space=sflag, size = 0x4, scoped, tag = 'scoped memory for tpu_custom_call.1']
    #allocation6 [shape = 's32[1]{0}', space=sflag, size = 0x4, scoped, tag = 'scoped memory for tpu_custom_call.1']
    #allocation7 [shape = 'u8[512]{0}', space=smem, size = 0x200, scoped, tag = 'input window, operand 1, single buffered']
    #allocation8 [shape = 'u8[512]{0}', space=smem, size = 0x200, scoped, tag = 'input window, operand 2, single buffered']
    #allocation9 [shape = 'u8[1024]{0}', space=vmem, size = 0x400, scoped, tag = 'output window, operand 0, single buffered']
    %8 = vsyncpa [#allocation3], 0
    %9 = vsyncpa [#allocation5], 0
    %10 = vsyncpa [#allocation6], 0
    %11 = vsyncpa [#allocation4], 0
    // Predicated region
    $region2: #{tpu_custom_call.1} parent=1 // pred_check
      _
    $region3: #{tpu_custom_call.1} parent=1 // pred_check_branch
      %13 = sbr.rel (0) target = $region5
    $region4: #{tpu_custom_call.1} parent=1 // pred_region
      %15 = vsyncadd [#allocation3], 0
      %s16 = sshll.u32 %s0, 4
      %s17 = int_to_ptr.hbm [resolvable:$true] %s16
      %s18 = sshll.u32 [#allocation2], 4
      %s19 = int_to_ptr.vmem [resolvable:$true] %s18
      %24 = dma.hbm_to_vmem [thread:$0]  %s17, 10240, %s19, [#allocation3], 64, 64, 4
    $region5: #{tpu_custom_call.1} parent=1 // pred_fallthru
      _
    // Predicated region
    $region6: #{tpu_custom_call.1} parent=1 // pred_check
      _
    $region7: #{tpu_custom_call.1} parent=1 // pred_check_branch
      %26 = sbr.rel (0) target = $region9
    $region8: #{tpu_custom_call.1} parent=1 // pred_region
      %28 = vsyncadd [#allocation5], 0
      %s30 = sshll.u32 %s1, 4
      %s31 = int_to_ptr.hbm [resolvable:$true] %s30
      %33 = dma.hbm_to_smem %s31, 16, [#allocation7], [#allocation5]
    $region9: #{tpu_custom_call.1} parent=1 // pred_fallthru
      _
    // Predicated region
    $region10: #{tpu_custom_call.1} parent=1 // pred_check
      _
    $region11: #{tpu_custom_call.1} parent=1 // pred_check_branch
      %35 = sbr.rel (0) target = $region13
    $region12: #{tpu_custom_call.1} parent=1 // pred_region
      %37 = vsyncadd [#allocation6], 0
      %s39 = sshll.u32 %s2, 4
      %s40 = int_to_ptr.vmem [resolvable:$true] %s39
      %42 = dma.vmem_to_smem %s40, 16, [#allocation8], [#allocation6]
    $region13: #{tpu_custom_call.1} parent=1 // pred_fallthru
      _
    // Predicated region
    $region14: #{tpu_custom_call.1} parent=1 // pred_check
      _
    $region15: #{tpu_custom_call.1} parent=1 // pred_check_branch
      %44 = sbr.rel (0) target = $region17
    $region16: #{tpu_custom_call.1} parent=1 // pred_region
      %46 = dma.done [#allocation3], 10240
    $region17: #{tpu_custom_call.1} parent=1 // pred_fallthru
      _
    // Predicated region
    $region18: #{tpu_custom_call.1} parent=1 // pred_check
      _
    $region19: #{tpu_custom_call.1} parent=1 // pred_check_branch
      %48 = sbr.rel (0) target = $region21
    $region20: #{tpu_custom_call.1} parent=1 // pred_region
      %50 = dma.done [#allocation5], 16
    $region21: #{tpu_custom_call.1} parent=1 // pred_fallthru
      _
    // Predicated region
    $region22: #{tpu_custom_call.1} parent=1 // pred_check
      _
    $region23: #{tpu_custom_call.1} parent=1 // pred_check_branch
      %52 = sbr.rel (0) target = $region25
    $region24: #{tpu_custom_call.1} parent=1 // pred_region
      %54 = dma.done [#allocation6], 16
    $region25: #{tpu_custom_call.1} parent=1 // pred_fallthru
      _
    %55 = sfence
    %v56 = vld [vmem:[#allocation2] sm:$0xf]
    %v57 = vld [vmem:[#allocation2 + $0x4] sm:$0xf]
    %v58 = vld [vmem:[#allocation2 + $0x8] sm:$0xf]
    %v59 = vld [vmem:[#allocation2 + $0xc] sm:$0xf]
    %v60 = vld [vmem:[#allocation2 + $0x10] sm:$0xf]
    %v61 = vld [vmem:[#allocation2 + $0x14] sm:$0xf]
    %v62 = vld [vmem:[#allocation2 + $0x18] sm:$0xf]
    %v63 = vld [vmem:[#allocation2 + $0x1c] sm:$0xf]
    %v64 = vld [vmem:[#allocation2 + $0x20] sm:$0xf]
    %v65 = vld [vmem:[#allocation2 + $0x24] sm:$0xf]
    %v66 = vld [vmem:[#allocation2 + $0x28] sm:$0xf]
    %v67 = vld [vmem:[#allocation2 + $0x2c] sm:$0xf]
    %v68 = vld [vmem:[#allocation2 + $0x30] sm:$0xf]
    %v69 = vld [vmem:[#allocation2 + $0x34] sm:$0xf]
    %v70 = vld [vmem:[#allocation2 + $0x38] sm:$0xf]
    %v71 = vld [vmem:[#allocation2 + $0x3c] sm:$0xf]
    %v72 = vld [vmem:[#allocation2 + $0x40] sm:$0xf]
    %v73 = vld [vmem:[#allocation2 + $0x44] sm:$0xf]
    %v74 = vld [vmem:[#allocation2 + $0x48] sm:$0xf]
    %v75 = vld [vmem:[#allocation2 + $0x4c] sm:$0xf]
    %v76 = vld [vmem:[#allocation2 + $0x50] sm:$0xf]
    %v77 = vld [vmem:[#allocation2 + $0x54] sm:$0xf]
    %v78 = vld [vmem:[#allocation2 + $0x58] sm:$0xf]
    %v79 = vld [vmem:[#allocation2 + $0x5c] sm:$0xf]
    %v80 = vld [vmem:[#allocation2 + $0x60] sm:$0xf]
    %v81 = vld [vmem:[#allocation2 + $0x64] sm:$0xf]
    %v82 = vld [vmem:[#allocation2 + $0x68] sm:$0xf]
    %v83 = vld [vmem:[#allocation2 + $0x6c] sm:$0xf]
    %v84 = vld [vmem:[#allocation2 + $0x70] sm:$0xf]
    %v85 = vld [vmem:[#allocation2 + $0x74] sm:$0xf]
    %v86 = vld [vmem:[#allocation2 + $0x78] sm:$0xf]
    %v87 = vld [vmem:[#allocation2 + $0x7c] sm:$0xf]
    %v88 = vld [vmem:[#allocation2 + $0x80] sm:$0xf]
    %v89 = vld [vmem:[#allocation2 + $0x84] sm:$0xf]
    %v90 = vld [vmem:[#allocation2 + $0x88] sm:$0xf]
    %v91 = vld [vmem:[#allocation2 + $0x8c] sm:$0xf]
    %v92 = vld [vmem:[#allocation2 + $0x90] sm:$0xf]
    %v93 = vld [vmem:[#allocation2 + $0x94] sm:$0xf]
    %v94 = vld [vmem:[#allocation2 + $0x98] sm:$0xf]
    %v95 = vld [vmem:[#allocation2 + $0x9c] sm:$0xf]
    %v96 = vld [vmem:[#allocation2 + $0xa0] sm:$0xf]
    %v97 = vld [vmem:[#allocation2 + $0xa4] sm:$0xf]
    %v98 = vld [vmem:[#allocation2 + $0xa8] sm:$0xf]
    %v99 = vld [vmem:[#allocation2 + $0xac] sm:$0xf]
    %v100 = vld [vmem:[#allocation2 + $0xb0] sm:$0xf]
    %v101 = vld [vmem:[#allocation2 + $0xb4] sm:$0xf]
    %v102 = vld [vmem:[#allocation2 + $0xb8] sm:$0xf]
    %v103 = vld [vmem:[#allocation2 + $0xbc] sm:$0xf]
    %v104 = vld [vmem:[#allocation2 + $0xc0] sm:$0xf]
    %v105 = vld [vmem:[#allocation2 + $0xc4] sm:$0xf]
    %v106 = vld [vmem:[#allocation2 + $0xc8] sm:$0xf]
    %v107 = vld [vmem:[#allocation2 + $0xcc] sm:$0xf]
    %v108 = vld [vmem:[#allocation2 + $0xd0] sm:$0xf]
    %v109 = vld [vmem:[#allocation2 + $0xd4] sm:$0xf]
    %v110 = vld [vmem:[#allocation2 + $0xd8] sm:$0xf]
    %v111 = vld [vmem:[#allocation2 + $0xdc] sm:$0xf]
    %v112 = vld [vmem:[#allocation2 + $0xe0] sm:$0xf]
    %v113 = vld [vmem:[#allocation2 + $0xe4] sm:$0xf]
    %v114 = vld [vmem:[#allocation2 + $0xe8] sm:$0xf]
    %v115 = vld [vmem:[#allocation2 + $0xec] sm:$0xf]
    %v116 = vld [vmem:[#allocation2 + $0xf0] sm:$0xf]
    %v117 = vld [vmem:[#allocation2 + $0xf4] sm:$0xf]
    %v118 = vld [vmem:[#allocation2 + $0xf8] sm:$0xf]
    %v119 = vld [vmem:[#allocation2 + $0xfc] sm:$0xf]
    %v120 = vld [vmem:[#allocation2 + $0x100] sm:$0xf]
    %v121 = vld [vmem:[#allocation2 + $0x104] sm:$0xf]
    %v122 = vld [vmem:[#allocation2 + $0x108] sm:$0xf]
    %v123 = vld [vmem:[#allocation2 + $0x10c] sm:$0xf]
    %v124 = vld [vmem:[#allocation2 + $0x110] sm:$0xf]
    %v125 = vld [vmem:[#allocation2 + $0x114] sm:$0xf]
    %v126 = vld [vmem:[#allocation2 + $0x118] sm:$0xf]
    %v127 = vld [vmem:[#allocation2 + $0x11c] sm:$0xf]
    %v128 = vld [vmem:[#allocation2 + $0x120] sm:$0xf]
    %v129 = vld [vmem:[#allocation2 + $0x124] sm:$0xf]
    %v130 = vld [vmem:[#allocation2 + $0x128] sm:$0xf]
    %v131 = vld [vmem:[#allocation2 + $0x12c] sm:$0xf]
    %v132 = vld [vmem:[#allocation2 + $0x130] sm:$0xf]
    %v133 = vld [vmem:[#allocation2 + $0x134] sm:$0xf]
    %v134 = vld [vmem:[#allocation2 + $0x138] sm:$0xf]
    %v135 = vld [vmem:[#allocation2 + $0x13c] sm:$0xf]
    %v136 = vld [vmem:[#allocation2 + $0x140] sm:$0xf]
    %v137 = vld [vmem:[#allocation2 + $0x144] sm:$0xf]
    %v138 = vld [vmem:[#allocation2 + $0x148] sm:$0xf]
    %v139 = vld [vmem:[#allocation2 + $0x14c] sm:$0xf]
    %v140 = vld [vmem:[#allocation2 + $0x150] sm:$0xf]
    %v141 = vld [vmem:[#allocation2 + $0x154] sm:$0xf]
    %v142 = vld [vmem:[#allocation2 + $0x158] sm:$0xf]
    %v143 = vld [vmem:[#allocation2 + $0x15c] sm:$0xf]
    %v144 = vld [vmem:[#allocation2 + $0x160] sm:$0xf]
    %v145 = vld [vmem:[#allocation2 + $0x164] sm:$0xf]
    %v146 = vld [vmem:[#allocation2 + $0x168] sm:$0xf]
    %v147 = vld [vmem:[#allocation2 + $0x16c] sm:$0xf]
    %v148 = vld [vmem:[#allocation2 + $0x170] sm:$0xf]
    %v149 = vld [vmem:[#allocation2 + $0x174] sm:$0xf]
    %v150 = vld [vmem:[#allocation2 + $0x178] sm:$0xf]
    %v151 = vld [vmem:[#allocation2 + $0x17c] sm:$0xf]
    %v152 = vld [vmem:[#allocation2 + $0x180] sm:$0xf]
    %v153 = vld [vmem:[#allocation2 + $0x184] sm:$0xf]
    %v154 = vld [vmem:[#allocation2 + $0x188] sm:$0xf]
    %v155 = vld [vmem:[#allocation2 + $0x18c] sm:$0xf]
    %v156 = vld [vmem:[#allocation2 + $0x190] sm:$0xf]
    %v157 = vld [vmem:[#allocation2 + $0x194] sm:$0xf]
    %v158 = vld [vmem:[#allocation2 + $0x198] sm:$0xf]
    %v159 = vld [vmem:[#allocation2 + $0x19c] sm:$0xf]
    %v160 = vld [vmem:[#allocation2 + $0x1a0] sm:$0xf]
    %v161 = vld [vmem:[#allocation2 + $0x1a4] sm:$0xf]
    %v162 = vld [vmem:[#allocation2 + $0x1a8] sm:$0xf]
    %v163 = vld [vmem:[#allocation2 + $0x1ac] sm:$0xf]
    %v164 = vld [vmem:[#allocation2 + $0x1b0] sm:$0xf]
    %v165 = vld [vmem:[#allocation2 + $0x1b4] sm:$0xf]
    %v166 = vld [vmem:[#allocation2 + $0x1b8] sm:$0xf]
    %v167 = vld [vmem:[#allocation2 + $0x1bc] sm:$0xf]
    %v168 = vld [vmem:[#allocation2 + $0x1c0] sm:$0xf]
    %v169 = vld [vmem:[#allocation2 + $0x1c4] sm:$0xf]
    %v170 = vld [vmem:[#allocation2 + $0x1c8] sm:$0xf]
    %v171 = vld [vmem:[#allocation2 + $0x1cc] sm:$0xf]
    %v172 = vld [vmem:[#allocation2 + $0x1d0] sm:$0xf]
    %v173 = vld [vmem:[#allocation2 + $0x1d4] sm:$0xf]
    %v174 = vld [vmem:[#allocation2 + $0x1d8] sm:$0xf]
    %v175 = vld [vmem:[#allocation2 + $0x1dc] sm:$0xf]
    %v176 = vld [vmem:[#allocation2 + $0x1e0] sm:$0xf]
    %v177 = vld [vmem:[#allocation2 + $0x1e4] sm:$0xf]
    %v178 = vld [vmem:[#allocation2 + $0x1e8] sm:$0xf]
    %v179 = vld [vmem:[#allocation2 + $0x1ec] sm:$0xf]
    %v180 = vld [vmem:[#allocation2 + $0x1f0] sm:$0xf]
    %v181 = vld [vmem:[#allocation2 + $0x1f4] sm:$0xf]
    %v182 = vld [vmem:[#allocation2 + $0x1f8] sm:$0xf]
    %v183 = vld [vmem:[#allocation2 + $0x1fc] sm:$0xf]
    %v184 = vld [vmem:[#allocation2 + $0x200] sm:$0xf]
    %v185 = vld [vmem:[#allocation2 + $0x204] sm:$0xf]
    %v186 = vld [vmem:[#allocation2 + $0x208] sm:$0xf]
    %v187 = vld [vmem:[#allocation2 + $0x20c] sm:$0xf]
    %v188 = vld [vmem:[#allocation2 + $0x210] sm:$0xf]
    %v189 = vld [vmem:[#allocation2 + $0x214] sm:$0xf]
    %v190 = vld [vmem:[#allocation2 + $0x218] sm:$0xf]
    %v191 = vld [vmem:[#allocation2 + $0x21c] sm:$0xf]
    %v192 = vld [vmem:[#allocation2 + $0x220] sm:$0xf]
    %v193 = vld [vmem:[#allocation2 + $0x224] sm:$0xf]
    %v194 = vld [vmem:[#allocation2 + $0x228] sm:$0xf]
    %v195 = vld [vmem:[#allocation2 + $0x22c] sm:$0xf]
    %v196 = vld [vmem:[#allocation2 + $0x230] sm:$0xf]
    %v197 = vld [vmem:[#allocation2 + $0x234] sm:$0xf]
    %v198 = vld [vmem:[#allocation2 + $0x238] sm:$0xf]
    %v199 = vld [vmem:[#allocation2 + $0x23c] sm:$0xf]
    %v200 = vld [vmem:[#allocation2 + $0x240] sm:$0xf]
    %v201 = vld [vmem:[#allocation2 + $0x244] sm:$0xf]
    %v202 = vld [vmem:[#allocation2 + $0x248] sm:$0xf]
    %v203 = vld [vmem:[#allocation2 + $0x24c] sm:$0xf]
    %v204 = vld [vmem:[#allocation2 + $0x250] sm:$0xf]
    %v205 = vld [vmem:[#allocation2 + $0x254] sm:$0xf]
    %v206 = vld [vmem:[#allocation2 + $0x258] sm:$0xf]
    %v207 = vld [vmem:[#allocation2 + $0x25c] sm:$0xf]
    %v208 = vld [vmem:[#allocation2 + $0x260] sm:$0xf]
    %v209 = vld [vmem:[#allocation2 + $0x264] sm:$0xf]
    %v210 = vld [vmem:[#allocation2 + $0x268] sm:$0xf]
    %v211 = vld [vmem:[#allocation2 + $0x26c] sm:$0xf]
    %v212 = vld [vmem:[#allocation2 + $0x270] sm:$0xf]
    %v213 = vld [vmem:[#allocation2 + $0x274] sm:$0xf]
    %v214 = vld [vmem:[#allocation2 + $0x278] sm:$0xf]
    %v215 = vld [vmem:[#allocation2 + $0x27c] sm:$0xf]
    %v216 = vunpack.c.l.bf16 %v56
    %v217 = vunpack.c.l.bf16 %v57
    %v218 = vunpack.c.l.bf16 %v58
    %v219 = vunpack.c.l.bf16 %v59
    %v220 = vunpack.c.l.bf16 %v60
    %v221 = vunpack.c.l.bf16 %v61
    %v222 = vunpack.c.l.bf16 %v62
    %v223 = vunpack.c.l.bf16 %v63
    %v224 = vunpack.c.l.bf16 %v64
    %v225 = vunpack.c.l.bf16 %v65
    %v226 = vunpack.c.l.bf16 %v66
    %v227 = vunpack.c.l.bf16 %v67
    %v228 = vunpack.c.l.bf16 %v68
    %v229 = vunpack.c.l.bf16 %v69
    %v230 = vunpack.c.l.bf16 %v70
    %v231 = vunpack.c.l.bf16 %v71
    %v232 = vunpack.c.l.bf16 %v72
    %v233 = vunpack.c.l.bf16 %v73
    %v234 = vunpack.c.l.bf16 %v74
    %v235 = vunpack.c.l.bf16 %v75
    %v236 = vunpack.c.l.bf16 %v76
    %v237 = vunpack.c.l.bf16 %v77
    %v238 = vunpack.c.l.bf16 %v78
    %v239 = vunpack.c.l.bf16 %v79
    %v240 = vunpack.c.l.bf16 %v80
    %v241 = vunpack.c.l.bf16 %v81
    %v242 = vunpack.c.l.bf16 %v82
    %v243 = vunpack.c.l.bf16 %v83
    %v244 = vunpack.c.l.bf16 %v84
    %v245 = vunpack.c.l.bf16 %v85
    %v246 = vunpack.c.l.bf16 %v86
    %v247 = vunpack.c.l.bf16 %v87
    %v248 = vunpack.c.l.bf16 %v88
    %v249 = vunpack.c.l.bf16 %v89
    %v250 = vunpack.c.l.bf16 %v90
    %v251 = vunpack.c.l.bf16 %v91
    %v252 = vunpack.c.l.bf16 %v92
    %v253 = vunpack.c.l.bf16 %v93
    %v254 = vunpack.c.l.bf16 %v94
    %v255 = vunpack.c.l.bf16 %v95
    %v256 = vunpack.c.l.bf16 %v96
    %v257 = vunpack.c.l.bf16 %v97
    %v258 = vunpack.c.l.bf16 %v98
    %v259 = vunpack.c.l.bf16 %v99
    %v260 = vunpack.c.l.bf16 %v100
    %v261 = vunpack.c.l.bf16 %v101
    %v262 = vunpack.c.l.bf16 %v102
    %v263 = vunpack.c.l.bf16 %v103
    %v264 = vunpack.c.l.bf16 %v104
    %v265 = vunpack.c.l.bf16 %v105
    %v266 = vunpack.c.l.bf16 %v106
    %v267 = vunpack.c.l.bf16 %v107
    %v268 = vunpack.c.l.bf16 %v108
    %v269 = vunpack.c.l.bf16 %v109
    %v270 = vunpack.c.l.bf16 %v110
    %v271 = vunpack.c.l.bf16 %v111
    %v272 = vunpack.c.l.bf16 %v112
    %v273 = vunpack.c.l.bf16 %v113
    %v274 = vunpack.c.l.bf16 %v114
    %v275 = vunpack.c.l.bf16 %v115
    %v276 = vunpack.c.l.bf16 %v116
    %v277 = vunpack.c.l.bf16 %v117
    %v278 = vunpack.c.l.bf16 %v118
    %v279 = vunpack.c.l.bf16 %v119
    %v280 = vunpack.c.l.bf16 %v120
    %v281 = vunpack.c.l.bf16 %v121
    %v282 = vunpack.c.l.bf16 %v122
    %v283 = vunpack.c.l.bf16 %v123
    %v284 = vunpack.c.l.bf16 %v124
    %v285 = vunpack.c.l.bf16 %v125
    %v286 = vunpack.c.l.bf16 %v126
    %v287 = vunpack.c.l.bf16 %v127
    %v288 = vunpack.c.l.bf16 %v128
    %v289 = vunpack.c.l.bf16 %v129
    %v290 = vunpack.c.l.bf16 %v130
    %v291 = vunpack.c.l.bf16 %v131
    %v292 = vunpack.c.l.bf16 %v132
    %v293 = vunpack.c.l.bf16 %v133
    %v294 = vunpack.c.l.bf16 %v134
    %v295 = vunpack.c.l.bf16 %v135
    %v296 = vunpack.c.l.bf16 %v136
    %v297 = vunpack.c.l.bf16 %v137
    %v298 = vunpack.c.l.bf16 %v138
    %v299 = vunpack.c.l.bf16 %v139
    %v300 = vunpack.c.l.bf16 %v140
    %v301 = vunpack.c.l.bf16 %v141
    %v302 = vunpack.c.l.bf16 %v142
    %v303 = vunpack.c.l.bf16 %v143
    %v304 = vunpack.c.l.bf16 %v144
    %v305 = vunpack.c.l.bf16 %v145
    %v306 = vunpack.c.l.bf16 %v146
    %v307 = vunpack.c.l.bf16 %v147
    %v308 = vunpack.c.l.bf16 %v148
    %v309 = vunpack.c.l.bf16 %v149
    %v310 = vunpack.c.l.bf16 %v150
    %v311 = vunpack.c.l.bf16 %v151
    %v312 = vunpack.c.l.bf16 %v152
    %v313 = vunpack.c.l.bf16 %v153
    %v314 = vunpack.c.l.bf16 %v154
    %v315 = vunpack.c.l.bf16 %v155
    %v316 = vunpack.c.l.bf16 %v156
    %v317 = vunpack.c.l.bf16 %v157
    %v318 = vunpack.c.l.bf16 %v158
    %v319 = vunpack.c.l.bf16 %v159
    %v320 = vunpack.c.l.bf16 %v160
    %v321 = vunpack.c.l.bf16 %v161
    %v322 = vunpack.c.l.bf16 %v162
    %v323 = vunpack.c.l.bf16 %v163
    %v324 = vunpack.c.l.bf16 %v164
    %v325 = vunpack.c.l.bf16 %v165
    %v326 = vunpack.c.l.bf16 %v166
    %v327 = vunpack.c.l.bf16 %v167
    %v328 = vunpack.c.l.bf16 %v168
    %v329 = vunpack.c.l.bf16 %v169
    %v330 = vunpack.c.l.bf16 %v170
    %v331 = vunpack.c.l.bf16 %v171
    %v332 = vunpack.c.l.bf16 %v172
    %v333 = vunpack.c.l.bf16 %v173
    %v334 = vunpack.c.l.bf16 %v174
    %v335 = vunpack.c.l.bf16 %v175
    %v336 = vunpack.c.l.bf16 %v176
    %v337 = vunpack.c.l.bf16 %v177
    %v338 = vunpack.c.l.bf16 %v178
    %v339 = vunpack.c.l.bf16 %v179
    %v340 = vunpack.c.l.bf16 %v180
    %v341 = vunpack.c.l.bf16 %v181
    %v342 = vunpack.c.l.bf16 %v182
    %v343 = vunpack.c.l.bf16 %v183
    %v344 = vunpack.c.l.bf16 %v184
    %v345 = vunpack.c.l.bf16 %v185
    %v346 = vunpack.c.l.bf16 %v186
    %v347 = vunpack.c.l.bf16 %v187
    %v348 = vunpack.c.l.bf16 %v188
    %v349 = vunpack.c.l.bf16 %v189
    %v350 = vunpack.c.l.bf16 %v190
    %v351 = vunpack.c.l.bf16 %v191
    %v352 = vunpack.c.l.bf16 %v192
    %v353 = vunpack.c.l.bf16 %v193
    %v354 = vunpack.c.l.bf16 %v194
    %v355 = vunpack.c.l.bf16 %v195
    %v356 = vunpack.c.l.bf16 %v196
    %v357 = vunpack.c.l.bf16 %v197
    %v358 = vunpack.c.l.bf16 %v198
    %v359 = vunpack.c.l.bf16 %v199
    %v360 = vunpack.c.l.bf16 %v200
    %v361 = vunpack.c.l.bf16 %v201
    %v362 = vunpack.c.l.bf16 %v202
    %v363 = vunpack.c.l.bf16 %v203
    %v364 = vunpack.c.l.bf16 %v204
    %v365 = vunpack.c.l.bf16 %v205
    %v366 = vunpack.c.l.bf16 %v206
    %v367 = vunpack.c.l.bf16 %v207
    %v368 = vunpack.c.l.bf16 %v208
    %v369 = vunpack.c.l.bf16 %v209
    %v370 = vunpack.c.l.bf16 %v210
    %v371 = vunpack.c.l.bf16 %v211
    %v372 = vunpack.c.l.bf16 %v212
    %v373 = vunpack.c.l.bf16 %v213
    %v374 = vunpack.c.l.bf16 %v214
    %v375 = vunpack.c.l.bf16 %v215
    %376 = vrot.lane.b32.xlu0 %v216, 127
    %v377 = vpop.permute.xlu0 %376
    %378 = vrot.lane.b32.xlu0 %v217, 127
    %v379 = vpop.permute.xlu0 %378
    %380 = vrot.lane.b32.xlu0 %v218, 127
    %v381 = vpop.permute.xlu0 %380
    %382 = vrot.lane.b32.xlu0 %v219, 127
    %v383 = vpop.permute.xlu0 %382
    %384 = vrot.lane.b32.xlu0 %v220, 127
    %v385 = vpop.permute.xlu0 %384
    %386 = vrot.lane.b32.xlu0 %v221, 127
    %v387 = vpop.permute.xlu0 %386
    %388 = vrot.lane.b32.xlu0 %v222, 127
    %v389 = vpop.permute.xlu0 %388
    %390 = vrot.lane.b32.xlu0 %v223, 127
    %v391 = vpop.permute.xlu0 %390
    %392 = vrot.lane.b32.xlu0 %v224, 127
    %v393 = vpop.permute.xlu0 %392
    %394 = vrot.lane.b32.xlu0 %v225, 127
    %v395 = vpop.permute.xlu0 %394
    %396 = vrot.lane.b32.xlu0 %v226, 127
    %v397 = vpop.permute.xlu0 %396
    %398 = vrot.lane.b32.xlu0 %v227, 127
    %v399 = vpop.permute.xlu0 %398
    %400 = vrot.lane.b32.xlu0 %v228, 127
    %v401 = vpop.permute.xlu0 %400
    %402 = vrot.lane.b32.xlu0 %v229, 127
    %v403 = vpop.permute.xlu0 %402
    %404 = vrot.lane.b32.xlu0 %v230, 127
    %v405 = vpop.permute.xlu0 %404
    %406 = vrot.lane.b32.xlu0 %v231, 127
    %v407 = vpop.permute.xlu0 %406
    %408 = vrot.lane.b32.xlu0 %v232, 127
    %v409 = vpop.permute.xlu0 %408
    %410 = vrot.lane.b32.xlu0 %v233, 127
    %v411 = vpop.permute.xlu0 %410
    %412 = vrot.lane.b32.xlu0 %v234, 127
    %v413 = vpop.permute.xlu0 %412
    %414 = vrot.lane.b32.xlu0 %v235, 127
    %v415 = vpop.permute.xlu0 %414
    %416 = vrot.lane.b32.xlu0 %v236, 127
    %v417 = vpop.permute.xlu0 %416
    %418 = vrot.lane.b32.xlu0 %v237, 127
    %v419 = vpop.permute.xlu0 %418
    %420 = vrot.lane.b32.xlu0 %v238, 127
    %v421 = vpop.permute.xlu0 %420
    %422 = vrot.lane.b32.xlu0 %v239, 127
    %v423 = vpop.permute.xlu0 %422
    %424 = vrot.lane.b32.xlu0 %v240, 127
    %v425 = vpop.permute.xlu0 %424
    %426 = vrot.lane.b32.xlu0 %v241, 127
    %v427 = vpop.permute.xlu0 %426
    %428 = vrot.lane.b32.xlu0 %v242, 127
    %v429 = vpop.permute.xlu0 %428
    %430 = vrot.lane.b32.xlu0 %v243, 127
    %v431 = vpop.permute.xlu0 %430
    %432 = vrot.lane.b32.xlu0 %v244, 127
    %v433 = vpop.permute.xlu0 %432
    %434 = vrot.lane.b32.xlu0 %v245, 127
    %v435 = vpop.permute.xlu0 %434
    %436 = vrot.lane.b32.xlu0 %v246, 127
    %v437 = vpop.permute.xlu0 %436
    %438 = vrot.lane.b32.xlu0 %v247, 127
    %v439 = vpop.permute.xlu0 %438
    %440 = vrot.lane.b32.xlu0 %v248, 127
    %v441 = vpop.permute.xlu0 %440
    %442 = vrot.lane.b32.xlu0 %v249, 127
    %v443 = vpop.permute.xlu0 %442
    %444 = vrot.lane.b32.xlu0 %v250, 127
    %v445 = vpop.permute.xlu0 %444
    %446 = vrot.lane.b32.xlu0 %v251, 127
    %v447 = vpop.permute.xlu0 %446
    %448 = vrot.lane.b32.xlu0 %v252, 127
    %v449 = vpop.permute.xlu0 %448
    %450 = vrot.lane.b32.xlu0 %v253, 127
    %v451 = vpop.permute.xlu0 %450
    %452 = vrot.lane.b32.xlu0 %v254, 127
    %v453 = vpop.permute.xlu0 %452
    %454 = vrot.lane.b32.xlu0 %v255, 127
    %v455 = vpop.permute.xlu0 %454
    %456 = vrot.lane.b32.xlu0 %v256, 127
    %v457 = vpop.permute.xlu0 %456
    %458 = vrot.lane.b32.xlu0 %v257, 127
    %v459 = vpop.permute.xlu0 %458
    %460 = vrot.lane.b32.xlu0 %v258, 127
    %v461 = vpop.permute.xlu0 %460
    %462 = vrot.lane.b32.xlu0 %v259, 127
    %v463 = vpop.permute.xlu0 %462
    %464 = vrot.lane.b32.xlu0 %v260, 127
    %v465 = vpop.permute.xlu0 %464
    %466 = vrot.lane.b32.xlu0 %v261, 127
    %v467 = vpop.permute.xlu0 %466
    %468 = vrot.lane.b32.xlu0 %v262, 127
    %v469 = vpop.permute.xlu0 %468
    %470 = vrot.lane.b32.xlu0 %v263, 127
    %v471 = vpop.permute.xlu0 %470
    %472 = vrot.lane.b32.xlu0 %v264, 127
    %v473 = vpop.permute.xlu0 %472
    %474 = vrot.lane.b32.xlu0 %v265, 127
    %v475 = vpop.permute.xlu0 %474
    %476 = vrot.lane.b32.xlu0 %v266, 127
    %v477 = vpop.permute.xlu0 %476
    %478 = vrot.lane.b32.xlu0 %v267, 127
    %v479 = vpop.permute.xlu0 %478
    %480 = vrot.lane.b32.xlu0 %v268, 127
    %v481 = vpop.permute.xlu0 %480
    %482 = vrot.lane.b32.xlu0 %v269, 127
    %v483 = vpop.permute.xlu0 %482
    %484 = vrot.lane.b32.xlu0 %v270, 127
    %v485 = vpop.permute.xlu0 %484
    %486 = vrot.lane.b32.xlu0 %v271, 127
    %v487 = vpop.permute.xlu0 %486
    %488 = vrot.lane.b32.xlu0 %v272, 127
    %v489 = vpop.permute.xlu0 %488
    %490 = vrot.lane.b32.xlu0 %v273, 127
    %v491 = vpop.permute.xlu0 %490
    %492 = vrot.lane.b32.xlu0 %v274, 127
    %v493 = vpop.permute.xlu0 %492
    %494 = vrot.lane.b32.xlu0 %v275, 127
    %v495 = vpop.permute.xlu0 %494
    %496 = vrot.lane.b32.xlu0 %v276, 127
    %v497 = vpop.permute.xlu0 %496
    %498 = vrot.lane.b32.xlu0 %v277, 127
    %v499 = vpop.permute.xlu0 %498
    %500 = vrot.lane.b32.xlu0 %v278, 127
    %v501 = vpop.permute.xlu0 %500
    %502 = vrot.lane.b32.xlu0 %v279, 127
    %v503 = vpop.permute.xlu0 %502
    %504 = vrot.lane.b32.xlu0 %v280, 127
    %v505 = vpop.permute.xlu0 %504
    %506 = vrot.lane.b32.xlu0 %v281, 127
    %v507 = vpop.permute.xlu0 %506
    %508 = vrot.lane.b32.xlu0 %v282, 127
    %v509 = vpop.permute.xlu0 %508
    %510 = vrot.lane.b32.xlu0 %v283, 127
    %v511 = vpop.permute.xlu0 %510
    %512 = vrot.lane.b32.xlu0 %v284, 127
    %v513 = vpop.permute.xlu0 %512
    %514 = vrot.lane.b32.xlu0 %v285, 127
    %v515 = vpop.permute.xlu0 %514
    %516 = vrot.lane.b32.xlu0 %v286, 127
    %v517 = vpop.permute.xlu0 %516
    %518 = vrot.lane.b32.xlu0 %v287, 127
    %v519 = vpop.permute.xlu0 %518
    %520 = vrot.lane.b32.xlu0 %v288, 127
    %v521 = vpop.permute.xlu0 %520
    %522 = vrot.lane.b32.xlu0 %v289, 127
    %v523 = vpop.permute.xlu0 %522
    %524 = vrot.lane.b32.xlu0 %v290, 127
    %v525 = vpop.permute.xlu0 %524
    %526 = vrot.lane.b32.xlu0 %v291, 127
    %v527 = vpop.permute.xlu0 %526
    %528 = vrot.lane.b32.xlu0 %v292, 127
    %v529 = vpop.permute.xlu0 %528
    %530 = vrot.lane.b32.xlu0 %v293, 127
    %v531 = vpop.permute.xlu0 %530
    %532 = vrot.lane.b32.xlu0 %v294, 127
    %v533 = vpop.permute.xlu0 %532
    %534 = vrot.lane.b32.xlu0 %v295, 127
    %v535 = vpop.permute.xlu0 %534
    %536 = vrot.lane.b32.xlu0 %v296, 127
    %v537 = vpop.permute.xlu0 %536
    %538 = vrot.lane.b32.xlu0 %v297, 127
    %v539 = vpop.permute.xlu0 %538
    %540 = vrot.lane.b32.xlu0 %v298, 127
    %v541 = vpop.permute.xlu0 %540
    %542 = vrot.lane.b32.xlu0 %v299, 127
    %v543 = vpop.permute.xlu0 %542
    %544 = vrot.lane.b32.xlu0 %v300, 127
    %v545 = vpop.permute.xlu0 %544
    %546 = vrot.lane.b32.xlu0 %v301, 127
    %v547 = vpop.permute.xlu0 %546
    %548 = vrot.lane.b32.xlu0 %v302, 127
    %v549 = vpop.permute.xlu0 %548
    %550 = vrot.lane.b32.xlu0 %v303, 127
    %v551 = vpop.permute.xlu0 %550
    %552 = vrot.lane.b32.xlu0 %v304, 127
    %v553 = vpop.permute.xlu0 %552
    %554 = vrot.lane.b32.xlu0 %v305, 127
    %v555 = vpop.permute.xlu0 %554
    %556 = vrot.lane.b32.xlu0 %v306, 127
    %v557 = vpop.permute.xlu0 %556
    %558 = vrot.lane.b32.xlu0 %v307, 127
    %v559 = vpop.permute.xlu0 %558
    %560 = vrot.lane.b32.xlu0 %v308, 127
    %v561 = vpop.permute.xlu0 %560
    %562 = vrot.lane.b32.xlu0 %v309, 127
    %v563 = vpop.permute.xlu0 %562
    %564 = vrot.lane.b32.xlu0 %v310, 127
    %v565 = vpop.permute.xlu0 %564
    %566 = vrot.lane.b32.xlu0 %v311, 127
    %v567 = vpop.permute.xlu0 %566
    %568 = vrot.lane.b32.xlu0 %v312, 127
    %v569 = vpop.permute.xlu0 %568
    %570 = vrot.lane.b32.xlu0 %v313, 127
    %v571 = vpop.permute.xlu0 %570
    %572 = vrot.lane.b32.xlu0 %v314, 127
    %v573 = vpop.permute.xlu0 %572
    %574 = vrot.lane.b32.xlu0 %v315, 127
    %v575 = vpop.permute.xlu0 %574
    %576 = vrot.lane.b32.xlu0 %v316, 127
    %v577 = vpop.permute.xlu0 %576
    %578 = vrot.lane.b32.xlu0 %v317, 127
    %v579 = vpop.permute.xlu0 %578
    %580 = vrot.lane.b32.xlu0 %v318, 127
    %v581 = vpop.permute.xlu0 %580
    %582 = vrot.lane.b32.xlu0 %v319, 127
    %v583 = vpop.permute.xlu0 %582
    %584 = vrot.lane.b32.xlu0 %v320, 127
    %v585 = vpop.permute.xlu0 %584
    %586 = vrot.lane.b32.xlu0 %v321, 127
    %v587 = vpop.permute.xlu0 %586
    %588 = vrot.lane.b32.xlu0 %v322, 127
    %v589 = vpop.permute.xlu0 %588
    %590 = vrot.lane.b32.xlu0 %v323, 127
    %v591 = vpop.permute.xlu0 %590
    %592 = vrot.lane.b32.xlu0 %v324, 127
    %v593 = vpop.permute.xlu0 %592
    %594 = vrot.lane.b32.xlu0 %v325, 127
    %v595 = vpop.permute.xlu0 %594
    %596 = vrot.lane.b32.xlu0 %v326, 127
    %v597 = vpop.permute.xlu0 %596
    %598 = vrot.lane.b32.xlu0 %v327, 127
    %v599 = vpop.permute.xlu0 %598
    %600 = vrot.lane.b32.xlu0 %v328, 127
    %v601 = vpop.permute.xlu0 %600
    %602 = vrot.lane.b32.xlu0 %v329, 127
    %v603 = vpop.permute.xlu0 %602
    %604 = vrot.lane.b32.xlu0 %v330, 127
    %v605 = vpop.permute.xlu0 %604
    %606 = vrot.lane.b32.xlu0 %v331, 127
    %v607 = vpop.permute.xlu0 %606
    %608 = vrot.lane.b32.xlu0 %v332, 127
    %v609 = vpop.permute.xlu0 %608
    %610 = vrot.lane.b32.xlu0 %v333, 127
    %v611 = vpop.permute.xlu0 %610
    %612 = vrot.lane.b32.xlu0 %v334, 127
    %v613 = vpop.permute.xlu0 %612
    %614 = vrot.lane.b32.xlu0 %v335, 127
    %v615 = vpop.permute.xlu0 %614
    %616 = vrot.lane.b32.xlu0 %v336, 127
    %v617 = vpop.permute.xlu0 %616
    %618 = vrot.lane.b32.xlu0 %v337, 127
    %v619 = vpop.permute.xlu0 %618
    %620 = vrot.lane.b32.xlu0 %v338, 127
    %v621 = vpop.permute.xlu0 %620
    %622 = vrot.lane.b32.xlu0 %v339, 127
    %v623 = vpop.permute.xlu0 %622
    %624 = vrot.lane.b32.xlu0 %v340, 127
    %v625 = vpop.permute.xlu0 %624
    %626 = vrot.lane.b32.xlu0 %v341, 127
    %v627 = vpop.permute.xlu0 %626
    %628 = vrot.lane.b32.xlu0 %v342, 127
    %v629 = vpop.permute.xlu0 %628
    %630 = vrot.lane.b32.xlu0 %v343, 127
    %v631 = vpop.permute.xlu0 %630
    %632 = vrot.lane.b32.xlu0 %v344, 127
    %v633 = vpop.permute.xlu0 %632
    %634 = vrot.lane.b32.xlu0 %v345, 127
    %v635 = vpop.permute.xlu0 %634
    %636 = vrot.lane.b32.xlu0 %v346, 127
    %v637 = vpop.permute.xlu0 %636
    %638 = vrot.lane.b32.xlu0 %v347, 127
    %v639 = vpop.permute.xlu0 %638
    %640 = vrot.lane.b32.xlu0 %v348, 127
    %v641 = vpop.permute.xlu0 %640
    %642 = vrot.lane.b32.xlu0 %v349, 127
    %v643 = vpop.permute.xlu0 %642
    %644 = vrot.lane.b32.xlu0 %v350, 127
    %v645 = vpop.permute.xlu0 %644
    %646 = vrot.lane.b32.xlu0 %v351, 127
    %v647 = vpop.permute.xlu0 %646
    %648 = vrot.lane.b32.xlu0 %v352, 127
    %v649 = vpop.permute.xlu0 %648
    %650 = vrot.lane.b32.xlu0 %v353, 127
    %v651 = vpop.permute.xlu0 %650
    %652 = vrot.lane.b32.xlu0 %v354, 127
    %v653 = vpop.permute.xlu0 %652
    %654 = vrot.lane.b32.xlu0 %v355, 127
    %v655 = vpop.permute.xlu0 %654
    %656 = vrot.lane.b32.xlu0 %v356, 127
    %v657 = vpop.permute.xlu0 %656
    %658 = vrot.lane.b32.xlu0 %v357, 127
    %v659 = vpop.permute.xlu0 %658
    %660 = vrot.lane.b32.xlu0 %v358, 127
    %v661 = vpop.permute.xlu0 %660
    %662 = vrot.lane.b32.xlu0 %v359, 127
    %v663 = vpop.permute.xlu0 %662
    %664 = vrot.lane.b32.xlu0 %v360, 127
    %v665 = vpop.permute.xlu0 %664
    %666 = vrot.lane.b32.xlu0 %v361, 127
    %v667 = vpop.permute.xlu0 %666
    %668 = vrot.lane.b32.xlu0 %v362, 127
    %v669 = vpop.permute.xlu0 %668
    %670 = vrot.lane.b32.xlu0 %v363, 127
    %v671 = vpop.permute.xlu0 %670
    %672 = vrot.lane.b32.xlu0 %v364, 127
    %v673 = vpop.permute.xlu0 %672
    %674 = vrot.lane.b32.xlu0 %v365, 127
    %v675 = vpop.permute.xlu0 %674
    %676 = vrot.lane.b32.xlu0 %v366, 127
    %v677 = vpop.permute.xlu0 %676
    %678 = vrot.lane.b32.xlu0 %v367, 127
    %v679 = vpop.permute.xlu0 %678
    %680 = vrot.lane.b32.xlu0 %v368, 127
    %v681 = vpop.permute.xlu0 %680
    %682 = vrot.lane.b32.xlu0 %v369, 127
    %v683 = vpop.permute.xlu0 %682
    %684 = vrot.lane.b32.xlu0 %v370, 127
    %v685 = vpop.permute.xlu0 %684
    %686 = vrot.lane.b32.xlu0 %v371, 127
    %v687 = vpop.permute.xlu0 %686
    %688 = vrot.lane.b32.xlu0 %v372, 127
    %v689 = vpop.permute.xlu0 %688
    %690 = vrot.lane.b32.xlu0 %v373, 127
    %v691 = vpop.permute.xlu0 %690
    %692 = vrot.lane.b32.xlu0 %v374, 127
    %v693 = vpop.permute.xlu0 %692
    %694 = vrot.lane.b32.xlu0 %v375, 127
    %v695 = vpop.permute.xlu0 %694
    %696 = vrot.lane.b32.xlu0 %v216, 126
    %v697 = vpop.permute.xlu0 %696
    %698 = vrot.lane.b32.xlu0 %v217, 126
    %v699 = vpop.permute.xlu0 %698
    %700 = vrot.lane.b32.xlu0 %v218, 126
    %v701 = vpop.permute.xlu0 %700
    %702 = vrot.lane.b32.xlu0 %v219, 126
    %v703 = vpop.permute.xlu0 %702
    %704 = vrot.lane.b32.xlu0 %v220, 126
    %v705 = vpop.permute.xlu0 %704
    %706 = vrot.lane.b32.xlu0 %v221, 126
    %v707 = vpop.permute.xlu0 %706
    %708 = vrot.lane.b32.xlu0 %v222, 126
    %v709 = vpop.permute.xlu0 %708
    %710 = vrot.lane.b32.xlu0 %v223, 126
    %v711 = vpop.permute.xlu0 %710
    %712 = vrot.lane.b32.xlu0 %v224, 126
    %v713 = vpop.permute.xlu0 %712
    %714 = vrot.lane.b32.xlu0 %v225, 126
    %v715 = vpop.permute.xlu0 %714
    %716 = vrot.lane.b32.xlu0 %v226, 126
    %v717 = vpop.permute.xlu0 %716
    %718 = vrot.lane.b32.xlu0 %v227, 126
    %v719 = vpop.permute.xlu0 %718
    %720 = vrot.lane.b32.xlu0 %v228, 126
    %v721 = vpop.permute.xlu0 %720
    %722 = vrot.lane.b32.xlu0 %v229, 126
    %v723 = vpop.permute.xlu0 %722
    %724 = vrot.lane.b32.xlu0 %v230, 126
    %v725 = vpop.permute.xlu0 %724
    %726 = vrot.lane.b32.xlu0 %v231, 126
    %v727 = vpop.permute.xlu0 %726
    %728 = vrot.lane.b32.xlu0 %v232, 126
    %v729 = vpop.permute.xlu0 %728
    %730 = vrot.lane.b32.xlu0 %v233, 126
    %v731 = vpop.permute.xlu0 %730
    %732 = vrot.lane.b32.xlu0 %v234, 126
    %v733 = vpop.permute.xlu0 %732
    %734 = vrot.lane.b32.xlu0 %v235, 126
    %v735 = vpop.permute.xlu0 %734
    %736 = vrot.lane.b32.xlu0 %v236, 126
    %v737 = vpop.permute.xlu0 %736
    %738 = vrot.lane.b32.xlu0 %v237, 126
    %v739 = vpop.permute.xlu0 %738
    %740 = vrot.lane.b32.xlu0 %v238, 126
    %v741 = vpop.permute.xlu0 %740
    %742 = vrot.lane.b32.xlu0 %v239, 126
    %v743 = vpop.permute.xlu0 %742
    %744 = vrot.lane.b32.xlu0 %v240, 126
    %v745 = vpop.permute.xlu0 %744
    %746 = vrot.lane.b32.xlu0 %v241, 126
    %v747 = vpop.permute.xlu0 %746
    %748 = vrot.lane.b32.xlu0 %v242, 126
    %v749 = vpop.permute.xlu0 %748
    %750 = vrot.lane.b32.xlu0 %v243, 126
    %v751 = vpop.permute.xlu0 %750
    %752 = vrot.lane.b32.xlu0 %v244, 126
    %v753 = vpop.permute.xlu0 %752
    %754 = vrot.lane.b32.xlu0 %v245, 126
    %v755 = vpop.permute.xlu0 %754
    %756 = vrot.lane.b32.xlu0 %v246, 126
    %v757 = vpop.permute.xlu0 %756
    %758 = vrot.lane.b32.xlu0 %v247, 126
    %v759 = vpop.permute.xlu0 %758
    %760 = vrot.lane.b32.xlu0 %v248, 126
    %v761 = vpop.permute.xlu0 %760
    %762 = vrot.lane.b32.xlu0 %v249, 126
    %v763 = vpop.permute.xlu0 %762
    %764 = vrot.lane.b32.xlu0 %v250, 126
    %v765 = vpop.permute.xlu0 %764
    %766 = vrot.lane.b32.xlu0 %v251, 126
    %v767 = vpop.permute.xlu0 %766
    %768 = vrot.lane.b32.xlu0 %v252, 126
    %v769 = vpop.permute.xlu0 %768
    %770 = vrot.lane.b32.xlu0 %v253, 126
    %v771 = vpop.permute.xlu0 %770
    %772 = vrot.lane.b32.xlu0 %v254, 126
    %v773 = vpop.permute.xlu0 %772
    %774 = vrot.lane.b32.xlu0 %v255, 126
    %v775 = vpop.permute.xlu0 %774
    %776 = vrot.lane.b32.xlu0 %v256, 126
    %v777 = vpop.permute.xlu0 %776
    %778 = vrot.lane.b32.xlu0 %v257, 126
    %v779 = vpop.permute.xlu0 %778
    %780 = vrot.lane.b32.xlu0 %v258, 126
    %v781 = vpop.permute.xlu0 %780
    %782 = vrot.lane.b32.xlu0 %v259, 126
    %v783 = vpop.permute.xlu0 %782
    %784 = vrot.lane.b32.xlu0 %v260, 126
    %v785 = vpop.permute.xlu0 %784
    %786 = vrot.lane.b32.xlu0 %v261, 126
    %v787 = vpop.permute.xlu0 %786
    %788 = vrot.lane.b32.xlu0 %v262, 126
    %v789 = vpop.permute.xlu0 %788
    %790 = vrot.lane.b32.xlu0 %v263, 126
    %v791 = vpop.permute.xlu0 %790
    %792 = vrot.lane.b32.xlu0 %v264, 126
    %v793 = vpop.permute.xlu0 %792
    %794 = vrot.lane.b32.xlu0 %v265, 126
    %v795 = vpop.permute.xlu0 %794
    %796 = vrot.lane.b32.xlu0 %v266, 126
    %v797 = vpop.permute.xlu0 %796
    %798 = vrot.lane.b32.xlu0 %v267, 126
    %v799 = vpop.permute.xlu0 %798
    %800 = vrot.lane.b32.xlu0 %v268, 126
    %v801 = vpop.permute.xlu0 %800
    %802 = vrot.lane.b32.xlu0 %v269, 126
    %v803 = vpop.permute.xlu0 %802
    %804 = vrot.lane.b32.xlu0 %v270, 126
    %v805 = vpop.permute.xlu0 %804
    %806 = vrot.lane.b32.xlu0 %v271, 126
    %v807 = vpop.permute.xlu0 %806
    %808 = vrot.lane.b32.xlu0 %v272, 126
    %v809 = vpop.permute.xlu0 %808
    %810 = vrot.lane.b32.xlu0 %v273, 126
    %v811 = vpop.permute.xlu0 %810
    %812 = vrot.lane.b32.xlu0 %v274, 126
    %v813 = vpop.permute.xlu0 %812
    %814 = vrot.lane.b32.xlu0 %v275, 126
    %v815 = vpop.permute.xlu0 %814
    %816 = vrot.lane.b32.xlu0 %v276, 126
    %v817 = vpop.permute.xlu0 %816
    %818 = vrot.lane.b32.xlu0 %v277, 126
    %v819 = vpop.permute.xlu0 %818
    %820 = vrot.lane.b32.xlu0 %v278, 126
    %v821 = vpop.permute.xlu0 %820
    %822 = vrot.lane.b32.xlu0 %v279, 126
    %v823 = vpop.permute.xlu0 %822
    %824 = vrot.lane.b32.xlu0 %v280, 126
    %v825 = vpop.permute.xlu0 %824
    %826 = vrot.lane.b32.xlu0 %v281, 126
    %v827 = vpop.permute.xlu0 %826
    %828 = vrot.lane.b32.xlu0 %v282, 126
    %v829 = vpop.permute.xlu0 %828
    %830 = vrot.lane.b32.xlu0 %v283, 126
    %v831 = vpop.permute.xlu0 %830
    %832 = vrot.lane.b32.xlu0 %v284, 126
    %v833 = vpop.permute.xlu0 %832
    %834 = vrot.lane.b32.xlu0 %v285, 126
    %v835 = vpop.permute.xlu0 %834
    %836 = vrot.lane.b32.xlu0 %v286, 126
    %v837 = vpop.permute.xlu0 %836
    %838 = vrot.lane.b32.xlu0 %v287, 126
    %v839 = vpop.permute.xlu0 %838
    %840 = vrot.lane.b32.xlu0 %v288, 126
    %v841 = vpop.permute.xlu0 %840
    %842 = vrot.lane.b32.xlu0 %v289, 126
    %v843 = vpop.permute.xlu0 %842
    %844 = vrot.lane.b32.xlu0 %v290, 126
    %v845 = vpop.permute.xlu0 %844
    %846 = vrot.lane.b32.xlu0 %v291, 126
    %v847 = vpop.permute.xlu0 %846
    %848 = vrot.lane.b32.xlu0 %v292, 126
    %v849 = vpop.permute.xlu0 %848
    %850 = vrot.lane.b32.xlu0 %v293, 126
    %v851 = vpop.permute.xlu0 %850
    %852 = vrot.lane.b32.xlu0 %v294, 126
    %v853 = vpop.permute.xlu0 %852
    %854 = vrot.lane.b32.xlu0 %v295, 126
    %v855 = vpop.permute.xlu0 %854
    %856 = vrot.lane.b32.xlu0 %v296, 126
    %v857 = vpop.permute.xlu0 %856
    %858 = vrot.lane.b32.xlu0 %v297, 126
    %v859 = vpop.permute.xlu0 %858
    %860 = vrot.lane.b32.xlu0 %v298, 126
    %v861 = vpop.permute.xlu0 %860
    %862 = vrot.lane.b32.xlu0 %v299, 126
    %v863 = vpop.permute.xlu0 %862
    %864 = vrot.lane.b32.xlu0 %v300, 126
    %v865 = vpop.permute.xlu0 %864
    %866 = vrot.lane.b32.xlu0 %v301, 126
    %v867 = vpop.permute.xlu0 %866
    %868 = vrot.lane.b32.xlu0 %v302, 126
    %v869 = vpop.permute.xlu0 %868
    %870 = vrot.lane.b32.xlu0 %v303, 126
    %v871 = vpop.permute.xlu0 %870
    %872 = vrot.lane.b32.xlu0 %v304, 126
    %v873 = vpop.permute.xlu0 %872
    %874 = vrot.lane.b32.xlu0 %v305, 126
    %v875 = vpop.permute.xlu0 %874
    %876 = vrot.lane.b32.xlu0 %v306, 126
    %v877 = vpop.permute.xlu0 %876
    %878 = vrot.lane.b32.xlu0 %v307, 126
    %v879 = vpop.permute.xlu0 %878
    %880 = vrot.lane.b32.xlu0 %v308, 126
    %v881 = vpop.permute.xlu0 %880
    %882 = vrot.lane.b32.xlu0 %v309, 126
    %v883 = vpop.permute.xlu0 %882
    %884 = vrot.lane.b32.xlu0 %v310, 126
    %v885 = vpop.permute.xlu0 %884
    %886 = vrot.lane.b32.xlu0 %v311, 126
    %v887 = vpop.permute.xlu0 %886
    %888 = vrot.lane.b32.xlu0 %v312, 126
    %v889 = vpop.permute.xlu0 %888
    %890 = vrot.lane.b32.xlu0 %v313, 126
    %v891 = vpop.permute.xlu0 %890
    %892 = vrot.lane.b32.xlu0 %v314, 126
    %v893 = vpop.permute.xlu0 %892
    %894 = vrot.lane.b32.xlu0 %v315, 126
    %v895 = vpop.permute.xlu0 %894
    %896 = vrot.lane.b32.xlu0 %v316, 126
    %v897 = vpop.permute.xlu0 %896
    %898 = vrot.lane.b32.xlu0 %v317, 126
    %v899 = vpop.permute.xlu0 %898
    %900 = vrot.lane.b32.xlu0 %v318, 126
    %v901 = vpop.permute.xlu0 %900
    %902 = vrot.lane.b32.xlu0 %v319, 126
    %v903 = vpop.permute.xlu0 %902
    %904 = vrot.lane.b32.xlu0 %v320, 126
    %v905 = vpop.permute.xlu0 %904
    %906 = vrot.lane.b32.xlu0 %v321, 126
    %v907 = vpop.permute.xlu0 %906
    %908 = vrot.lane.b32.xlu0 %v322, 126
    %v909 = vpop.permute.xlu0 %908
    %910 = vrot.lane.b32.xlu0 %v323, 126
    %v911 = vpop.permute.xlu0 %910
    %912 = vrot.lane.b32.xlu0 %v324, 126
    %v913 = vpop.permute.xlu0 %912
    %914 = vrot.lane.b32.xlu0 %v325, 126
    %v915 = vpop.permute.xlu0 %914
    %916 = vrot.lane.b32.xlu0 %v326, 126
    %v917 = vpop.permute.xlu0 %916
    %918 = vrot.lane.b32.xlu0 %v327, 126
    %v919 = vpop.permute.xlu0 %918
    %920 = vrot.lane.b32.xlu0 %v328, 126
    %v921 = vpop.permute.xlu0 %920
    %922 = vrot.lane.b32.xlu0 %v329, 126
    %v923 = vpop.permute.xlu0 %922
    %924 = vrot.lane.b32.xlu0 %v330, 126
    %v925 = vpop.permute.xlu0 %924
    %926 = vrot.lane.b32.xlu0 %v331, 126
    %v927 = vpop.permute.xlu0 %926
    %928 = vrot.lane.b32.xlu0 %v332, 126
    %v929 = vpop.permute.xlu0 %928
    %930 = vrot.lane.b32.xlu0 %v333, 126
    %v931 = vpop.permute.xlu0 %930
    %932 = vrot.lane.b32.xlu0 %v334, 126
    %v933 = vpop.permute.xlu0 %932
    %934 = vrot.lane.b32.xlu0 %v335, 126
    %v935 = vpop.permute.xlu0 %934
    %936 = vrot.lane.b32.xlu0 %v336, 126
    %v937 = vpop.permute.xlu0 %936
    %938 = vrot.lane.b32.xlu0 %v337, 126
    %v939 = vpop.permute.xlu0 %938
    %940 = vrot.lane.b32.xlu0 %v338, 126
    %v941 = vpop.permute.xlu0 %940
    %942 = vrot.lane.b32.xlu0 %v339, 126
    %v943 = vpop.permute.xlu0 %942
    %944 = vrot.lane.b32.xlu0 %v340, 126
    %v945 = vpop.permute.xlu0 %944
    %946 = vrot.lane.b32.xlu0 %v341, 126
    %v947 = vpop.permute.xlu0 %946
    %948 = vrot.lane.b32.xlu0 %v342, 126
    %v949 = vpop.permute.xlu0 %948
    %950 = vrot.lane.b32.xlu0 %v343, 126
    %v951 = vpop.permute.xlu0 %950
    %952 = vrot.lane.b32.xlu0 %v344, 126
    %v953 = vpop.permute.xlu0 %952
    %954 = vrot.lane.b32.xlu0 %v345, 126
    %v955 = vpop.permute.xlu0 %954
    %956 = vrot.lane.b32.xlu0 %v346, 126
    %v957 = vpop.permute.xlu0 %956
    %958 = vrot.lane.b32.xlu0 %v347, 126
    %v959 = vpop.permute.xlu0 %958
    %960 = vrot.lane.b32.xlu0 %v348, 126
    %v961 = vpop.permute.xlu0 %960
    %962 = vrot.lane.b32.xlu0 %v349, 126
    %v963 = vpop.permute.xlu0 %962
    %964 = vrot.lane.b32.xlu0 %v350, 126
    %v965 = vpop.permute.xlu0 %964
    %966 = vrot.lane.b32.xlu0 %v351, 126
    %v967 = vpop.permute.xlu0 %966
    %968 = vrot.lane.b32.xlu0 %v352, 126
    %v969 = vpop.permute.xlu0 %968
    %970 = vrot.lane.b32.xlu0 %v353, 126
    %v971 = vpop.permute.xlu0 %970
    %972 = vrot.lane.b32.xlu0 %v354, 126
    %v973 = vpop.permute.xlu0 %972
    %974 = vrot.lane.b32.xlu0 %v355, 126
    %v975 = vpop.permute.xlu0 %974
    %976 = vrot.lane.b32.xlu0 %v356, 126
    %v977 = vpop.permute.xlu0 %976
    %978 = vrot.lane.b32.xlu0 %v357, 126
    %v979 = vpop.permute.xlu0 %978
    %980 = vrot.lane.b32.xlu0 %v358, 126
    %v981 = vpop.permute.xlu0 %980
    %982 = vrot.lane.b32.xlu0 %v359, 126
    %v983 = vpop.permute.xlu0 %982
    %984 = vrot.lane.b32.xlu0 %v360, 126
    %v985 = vpop.permute.xlu0 %984
    %986 = vrot.lane.b32.xlu0 %v361, 126
    %v987 = vpop.permute.xlu0 %986
    %988 = vrot.lane.b32.xlu0 %v362, 126
    %v989 = vpop.permute.xlu0 %988
    %990 = vrot.lane.b32.xlu0 %v363, 126
    %v991 = vpop.permute.xlu0 %990
    %992 = vrot.lane.b32.xlu0 %v364, 126
    %v993 = vpop.permute.xlu0 %992
    %994 = vrot.lane.b32.xlu0 %v365, 126
    %v995 = vpop.permute.xlu0 %994
    %996 = vrot.lane.b32.xlu0 %v366, 126
    %v997 = vpop.permute.xlu0 %996
    %998 = vrot.lane.b32.xlu0 %v367, 126
    %v999 = vpop.permute.xlu0 %998
    %1000 = vrot.lane.b32.xlu0 %v368, 126
    %v1001 = vpop.permute.xlu0 %1000
    %1002 = vrot.lane.b32.xlu0 %v369, 126
    %v1003 = vpop.permute.xlu0 %1002
    %1004 = vrot.lane.b32.xlu0 %v370, 126
    %v1005 = vpop.permute.xlu0 %1004
    %1006 = vrot.lane.b32.xlu0 %v371, 126
    %v1007 = vpop.permute.xlu0 %1006
    %1008 = vrot.lane.b32.xlu0 %v372, 126
    %v1009 = vpop.permute.xlu0 %1008
    %1010 = vrot.lane.b32.xlu0 %v373, 126
    %v1011 = vpop.permute.xlu0 %1010
    %1012 = vrot.lane.b32.xlu0 %v374, 126
    %v1013 = vpop.permute.xlu0 %1012
    %1014 = vrot.lane.b32.xlu0 %v375, 126
    %v1015 = vpop.permute.xlu0 %1014
    %s1016 = sld [smem:[#allocation7]]
    %v1017 = vstv %s1016
    %v1018 = vmul.f32 %v216, %v1017
    %v1019 = vmul.f32 %v217, %v1017
    %v1020 = vmul.f32 %v218, %v1017
    %v1021 = vmul.f32 %v219, %v1017
    %v1022 = vmul.f32 %v220, %v1017
    %v1023 = vmul.f32 %v221, %v1017
    %v1024 = vmul.f32 %v222, %v1017
    %v1025 = vmul.f32 %v223, %v1017
    %v1026 = vmul.f32 %v224, %v1017
    %v1027 = vmul.f32 %v225, %v1017
    %v1028 = vmul.f32 %v226, %v1017
    %v1029 = vmul.f32 %v227, %v1017
    %v1030 = vmul.f32 %v228, %v1017
    %v1031 = vmul.f32 %v229, %v1017
    %v1032 = vmul.f32 %v230, %v1017
    %v1033 = vmul.f32 %v231, %v1017
    %v1034 = vmul.f32 %v232, %v1017
    %v1035 = vmul.f32 %v233, %v1017
    %v1036 = vmul.f32 %v234, %v1017
    %v1037 = vmul.f32 %v235, %v1017
    %v1038 = vmul.f32 %v236, %v1017
    %v1039 = vmul.f32 %v237, %v1017
    %v1040 = vmul.f32 %v238, %v1017
    %v1041 = vmul.f32 %v239, %v1017
    %v1042 = vmul.f32 %v240, %v1017
    %v1043 = vmul.f32 %v241, %v1017
    %v1044 = vmul.f32 %v242, %v1017
    %v1045 = vmul.f32 %v243, %v1017
    %v1046 = vmul.f32 %v244, %v1017
    %v1047 = vmul.f32 %v245, %v1017
    %v1048 = vmul.f32 %v246, %v1017
    %v1049 = vmul.f32 %v247, %v1017
    %v1050 = vmul.f32 %v248, %v1017
    %v1051 = vmul.f32 %v249, %v1017
    %v1052 = vmul.f32 %v250, %v1017
    %v1053 = vmul.f32 %v251, %v1017
    %v1054 = vmul.f32 %v252, %v1017
    %v1055 = vmul.f32 %v253, %v1017
    %v1056 = vmul.f32 %v254, %v1017
    %v1057 = vmul.f32 %v255, %v1017
    %v1058 = vmul.f32 %v256, %v1017
    %v1059 = vmul.f32 %v257, %v1017
    %v1060 = vmul.f32 %v258, %v1017
    %v1061 = vmul.f32 %v259, %v1017
    %v1062 = vmul.f32 %v260, %v1017
    %v1063 = vmul.f32 %v261, %v1017
    %v1064 = vmul.f32 %v262, %v1017
    %v1065 = vmul.f32 %v263, %v1017
    %v1066 = vmul.f32 %v264, %v1017
    %v1067 = vmul.f32 %v265, %v1017
    %v1068 = vmul.f32 %v266, %v1017
    %v1069 = vmul.f32 %v267, %v1017
    %v1070 = vmul.f32 %v268, %v1017
    %v1071 = vmul.f32 %v269, %v1017
    %v1072 = vmul.f32 %v270, %v1017
    %v1073 = vmul.f32 %v271, %v1017
    %v1074 = vmul.f32 %v272, %v1017
    %v1075 = vmul.f32 %v273, %v1017
    %v1076 = vmul.f32 %v274, %v1017
    %v1077 = vmul.f32 %v275, %v1017
    %v1078 = vmul.f32 %v276, %v1017
    %v1079 = vmul.f32 %v277, %v1017
    %v1080 = vmul.f32 %v278, %v1017
    %v1081 = vmul.f32 %v279, %v1017
    %v1082 = vmul.f32 %v280, %v1017
    %v1083 = vmul.f32 %v281, %v1017
    %v1084 = vmul.f32 %v282, %v1017
    %v1085 = vmul.f32 %v283, %v1017
    %v1086 = vmul.f32 %v284, %v1017
    %v1087 = vmul.f32 %v285, %v1017
    %v1088 = vmul.f32 %v286, %v1017
    %v1089 = vmul.f32 %v287, %v1017
    %v1090 = vmul.f32 %v288, %v1017
    %v1091 = vmul.f32 %v289, %v1017
    %v1092 = vmul.f32 %v290, %v1017
    %v1093 = vmul.f32 %v291, %v1017
    %v1094 = vmul.f32 %v292, %v1017
    %v1095 = vmul.f32 %v293, %v1017
    %v1096 = vmul.f32 %v294, %v1017
    %v1097 = vmul.f32 %v295, %v1017
    %v1098 = vmul.f32 %v296, %v1017
    %v1099 = vmul.f32 %v297, %v1017
    %v1100 = vmul.f32 %v298, %v1017
    %v1101 = vmul.f32 %v299, %v1017
    %v1102 = vmul.f32 %v300, %v1017
    %v1103 = vmul.f32 %v301, %v1017
    %v1104 = vmul.f32 %v302, %v1017
    %v1105 = vmul.f32 %v303, %v1017
    %v1106 = vmul.f32 %v304, %v1017
    %v1107 = vmul.f32 %v305, %v1017
    %v1108 = vmul.f32 %v306, %v1017
    %v1109 = vmul.f32 %v307, %v1017
    %v1110 = vmul.f32 %v308, %v1017
    %v1111 = vmul.f32 %v309, %v1017
    %v1112 = vmul.f32 %v310, %v1017
    %v1113 = vmul.f32 %v311, %v1017
    %v1114 = vmul.f32 %v312, %v1017
    %v1115 = vmul.f32 %v313, %v1017
    %v1116 = vmul.f32 %v314, %v1017
    %v1117 = vmul.f32 %v315, %v1017
    %v1118 = vmul.f32 %v316, %v1017
    %v1119 = vmul.f32 %v317, %v1017
    %v1120 = vmul.f32 %v318, %v1017
    %v1121 = vmul.f32 %v319, %v1017
    %v1122 = vmul.f32 %v320, %v1017
    %v1123 = vmul.f32 %v321, %v1017
    %v1124 = vmul.f32 %v322, %v1017
    %v1125 = vmul.f32 %v323, %v1017
    %v1126 = vmul.f32 %v324, %v1017
    %v1127 = vmul.f32 %v325, %v1017
    %v1128 = vmul.f32 %v326, %v1017
    %v1129 = vmul.f32 %v327, %v1017
    %v1130 = vmul.f32 %v328, %v1017
    %v1131 = vmul.f32 %v329, %v1017
    %v1132 = vmul.f32 %v330, %v1017
    %v1133 = vmul.f32 %v331, %v1017
    %v1134 = vmul.f32 %v332, %v1017
    %v1135 = vmul.f32 %v333, %v1017
    %v1136 = vmul.f32 %v334, %v1017
    %v1137 = vmul.f32 %v335, %v1017
    %v1138 = vmul.f32 %v336, %v1017
    %v1139 = vmul.f32 %v337, %v1017
    %v1140 = vmul.f32 %v338, %v1017
    %v1141 = vmul.f32 %v339, %v1017
    %v1142 = vmul.f32 %v340, %v1017
    %v1143 = vmul.f32 %v341, %v1017
    %v1144 = vmul.f32 %v342, %v1017
    %v1145 = vmul.f32 %v343, %v1017
    %v1146 = vmul.f32 %v344, %v1017
    %v1147 = vmul.f32 %v345, %v1017
    %v1148 = vmul.f32 %v346, %v1017
    %v1149 = vmul.f32 %v347, %v1017
    %v1150 = vmul.f32 %v348, %v1017
    %v1151 = vmul.f32 %v349, %v1017
    %v1152 = vmul.f32 %v350, %v1017
    %v1153 = vmul.f32 %v351, %v1017
    %v1154 = vmul.f32 %v352, %v1017
    %v1155 = vmul.f32 %v353, %v1017
    %v1156 = vmul.f32 %v354, %v1017
    %v1157 = vmul.f32 %v355, %v1017
    %v1158 = vmul.f32 %v356, %v1017
    %v1159 = vmul.f32 %v357, %v1017
    %v1160 = vmul.f32 %v358, %v1017
    %v1161 = vmul.f32 %v359, %v1017
    %v1162 = vmul.f32 %v360, %v1017
    %v1163 = vmul.f32 %v361, %v1017
    %v1164 = vmul.f32 %v362, %v1017
    %v1165 = vmul.f32 %v363, %v1017
    %v1166 = vmul.f32 %v364, %v1017
    %v1167 = vmul.f32 %v365, %v1017
    %v1168 = vmul.f32 %v366, %v1017
    %v1169 = vmul.f32 %v367, %v1017
    %v1170 = vmul.f32 %v368, %v1017
    %v1171 = vmul.f32 %v369, %v1017
    %v1172 = vmul.f32 %v370, %v1017
    %v1173 = vmul.f32 %v371, %v1017
    %v1174 = vmul.f32 %v372, %v1017
    %v1175 = vmul.f32 %v373, %v1017
    %v1176 = vmul.f32 %v374, %v1017
    %v1177 = vmul.f32 %v375, %v1017
    %s1178 = sld [smem:[#allocation7 + $0x1]]
    %v1179 = vstv %s1178
    %v1180 = vmul.f32 %v377, %v1179
    %v1181 = vmul.f32 %v379, %v1179
    %v1182 = vmul.f32 %v381, %v1179
    %v1183 = vmul.f32 %v383, %v1179
    %v1184 = vmul.f32 %v385, %v1179
    %v1185 = vmul.f32 %v387, %v1179
    %v1186 = vmul.f32 %v389, %v1179
    %v1187 = vmul.f32 %v391, %v1179
    %v1188 = vmul.f32 %v393, %v1179
    %v1189 = vmul.f32 %v395, %v1179
    %v1190 = vmul.f32 %v397, %v1179
    %v1191 = vmul.f32 %v399, %v1179
    %v1192 = vmul.f32 %v401, %v1179
    %v1193 = vmul.f32 %v403, %v1179
    %v1194 = vmul.f32 %v405, %v1179
    %v1195 = vmul.f32 %v407, %v1179
    %v1196 = vmul.f32 %v409, %v1179
    %v1197 = vmul.f32 %v411, %v1179
    %v1198 = vmul.f32 %v413, %v1179
    %v1199 = vmul.f32 %v415, %v1179
    %v1200 = vmul.f32 %v417, %v1179
    %v1201 = vmul.f32 %v419, %v1179
    %v1202 = vmul.f32 %v421, %v1179
    %v1203 = vmul.f32 %v423, %v1179
    %v1204 = vmul.f32 %v425, %v1179
    %v1205 = vmul.f32 %v427, %v1179
    %v1206 = vmul.f32 %v429, %v1179
    %v1207 = vmul.f32 %v431, %v1179
    %v1208 = vmul.f32 %v433, %v1179
    %v1209 = vmul.f32 %v435, %v1179
    %v1210 = vmul.f32 %v437, %v1179
    %v1211 = vmul.f32 %v439, %v1179
    %v1212 = vmul.f32 %v441, %v1179
    %v1213 = vmul.f32 %v443, %v1179
    %v1214 = vmul.f32 %v445, %v1179
    %v1215 = vmul.f32 %v447, %v1179
    %v1216 = vmul.f32 %v449, %v1179
    %v1217 = vmul.f32 %v451, %v1179
    %v1218 = vmul.f32 %v453, %v1179
    %v1219 = vmul.f32 %v455, %v1179
    %v1220 = vmul.f32 %v457, %v1179
    %v1221 = vmul.f32 %v459, %v1179
    %v1222 = vmul.f32 %v461, %v1179
    %v1223 = vmul.f32 %v463, %v1179
    %v1224 = vmul.f32 %v465, %v1179
    %v1225 = vmul.f32 %v467, %v1179
    %v1226 = vmul.f32 %v469, %v1179
    %v1227 = vmul.f32 %v471, %v1179
    %v1228 = vmul.f32 %v473, %v1179
    %v1229 = vmul.f32 %v475, %v1179
    %v1230 = vmul.f32 %v477, %v1179
    %v1231 = vmul.f32 %v479, %v1179
    %v1232 = vmul.f32 %v481, %v1179
    %v1233 = vmul.f32 %v483, %v1179
    %v1234 = vmul.f32 %v485, %v1179
    %v1235 = vmul.f32 %v487, %v1179
    %v1236 = vmul.f32 %v489, %v1179
    %v1237 = vmul.f32 %v491, %v1179
    %v1238 = vmul.f32 %v493, %v1179
    %v1239 = vmul.f32 %v495, %v1179
    %v1240 = vmul.f32 %v497, %v1179
    %v1241 = vmul.f32 %v499, %v1179
    %v1242 = vmul.f32 %v501, %v1179
    %v1243 = vmul.f32 %v503, %v1179
    %v1244 = vmul.f32 %v505, %v1179
    %v1245 = vmul.f32 %v507, %v1179
    %v1246 = vmul.f32 %v509, %v1179
    %v1247 = vmul.f32 %v511, %v1179
    %v1248 = vmul.f32 %v513, %v1179
    %v1249 = vmul.f32 %v515, %v1179
    %v1250 = vmul.f32 %v517, %v1179
    %v1251 = vmul.f32 %v519, %v1179
    %v1252 = vmul.f32 %v521, %v1179
    %v1253 = vmul.f32 %v523, %v1179
    %v1254 = vmul.f32 %v525, %v1179
    %v1255 = vmul.f32 %v527, %v1179
    %v1256 = vmul.f32 %v529, %v1179
    %v1257 = vmul.f32 %v531, %v1179
    %v1258 = vmul.f32 %v533, %v1179
    %v1259 = vmul.f32 %v535, %v1179
    %v1260 = vmul.f32 %v537, %v1179
    %v1261 = vmul.f32 %v539, %v1179
    %v1262 = vmul.f32 %v541, %v1179
    %v1263 = vmul.f32 %v543, %v1179
    %v1264 = vmul.f32 %v545, %v1179
    %v1265 = vmul.f32 %v547, %v1179
    %v1266 = vmul.f32 %v549, %v1179
    %v1267 = vmul.f32 %v551, %v1179
    %v1268 = vmul.f32 %v553, %v1179
    %v1269 = vmul.f32 %v555, %v1179
    %v1270 = vmul.f32 %v557, %v1179
    %v1271 = vmul.f32 %v559, %v1179
    %v1272 = vmul.f32 %v561, %v1179
    %v1273 = vmul.f32 %v563, %v1179
    %v1274 = vmul.f32 %v565, %v1179
    %v1275 = vmul.f32 %v567, %v1179
    %v1276 = vmul.f32 %v569, %v1179
    %v1277 = vmul.f32 %v571, %v1179
    %v1278 = vmul.f32 %v573, %v1179
    %v1279 = vmul.f32 %v575, %v1179
    %v1280 = vmul.f32 %v577, %v1179
    %v1281 = vmul.f32 %v579, %v1179
    %v1282 = vmul.f32 %v581, %v1179
    %v1283 = vmul.f32 %v583, %v1179
    %v1284 = vmul.f32 %v585, %v1179
    %v1285 = vmul.f32 %v587, %v1179
    %v1286 = vmul.f32 %v589, %v1179
    %v1287 = vmul.f32 %v591, %v1179
    %v1288 = vmul.f32 %v593, %v1179
    %v1289 = vmul.f32 %v595, %v1179
    %v1290 = vmul.f32 %v597, %v1179
    %v1291 = vmul.f32 %v599, %v1179
    %v1292 = vmul.f32 %v601, %v1179
    %v1293 = vmul.f32 %v603, %v1179
    %v1294 = vmul.f32 %v605, %v1179
    %v1295 = vmul.f32 %v607, %v1179
    %v1296 = vmul.f32 %v609, %v1179
    %v1297 = vmul.f32 %v611, %v1179
    %v1298 = vmul.f32 %v613, %v1179
    %v1299 = vmul.f32 %v615, %v1179
    %v1300 = vmul.f32 %v617, %v1179
    %v1301 = vmul.f32 %v619, %v1179
    %v1302 = vmul.f32 %v621, %v1179
    %v1303 = vmul.f32 %v623, %v1179
    %v1304 = vmul.f32 %v625, %v1179
    %v1305 = vmul.f32 %v627, %v1179
    %v1306 = vmul.f32 %v629, %v1179
    %v1307 = vmul.f32 %v631, %v1179
    %v1308 = vmul.f32 %v633, %v1179
    %v1309 = vmul.f32 %v635, %v1179
    %v1310 = vmul.f32 %v637, %v1179
    %v1311 = vmul.f32 %v639, %v1179
    %v1312 = vmul.f32 %v641, %v1179
    %v1313 = vmul.f32 %v643, %v1179
    %v1314 = vmul.f32 %v645, %v1179
    %v1315 = vmul.f32 %v647, %v1179
    %v1316 = vmul.f32 %v649, %v1179
    %v1317 = vmul.f32 %v651, %v1179
    %v1318 = vmul.f32 %v653, %v1179
    %v1319 = vmul.f32 %v655, %v1179
    %v1320 = vmul.f32 %v657, %v1179
    %v1321 = vmul.f32 %v659, %v1179
    %v1322 = vmul.f32 %v661, %v1179
    %v1323 = vmul.f32 %v663, %v1179
    %v1324 = vmul.f32 %v665, %v1179
    %v1325 = vmul.f32 %v667, %v1179
    %v1326 = vmul.f32 %v669, %v1179
    %v1327 = vmul.f32 %v671, %v1179
    %v1328 = vmul.f32 %v673, %v1179
    %v1329 = vmul.f32 %v675, %v1179
    %v1330 = vmul.f32 %v677, %v1179
    %v1331 = vmul.f32 %v679, %v1179
    %v1332 = vmul.f32 %v681, %v1179
    %v1333 = vmul.f32 %v683, %v1179
    %v1334 = vmul.f32 %v685, %v1179
    %v1335 = vmul.f32 %v687, %v1179
    %v1336 = vmul.f32 %v689, %v1179
    %v1337 = vmul.f32 %v691, %v1179
    %v1338 = vmul.f32 %v693, %v1179
    %v1339 = vmul.f32 %v695, %v1179
    %v1340 = vadd.f32 %v1018, %v1180
    %v1341 = vadd.f32 %v1019, %v1181
    %v1342 = vadd.f32 %v1020, %v1182
    %v1343 = vadd.f32 %v1021, %v1183
    %v1344 = vadd.f32 %v1022, %v1184
    %v1345 = vadd.f32 %v1023, %v1185
    %v1346 = vadd.f32 %v1024, %v1186
    %v1347 = vadd.f32 %v1025, %v1187
    %v1348 = vadd.f32 %v1026, %v1188
    %v1349 = vadd.f32 %v1027, %v1189
    %v1350 = vadd.f32 %v1028, %v1190
    %v1351 = vadd.f32 %v1029, %v1191
    %v1352 = vadd.f32 %v1030, %v1192
    %v1353 = vadd.f32 %v1031, %v1193
    %v1354 = vadd.f32 %v1032, %v1194
    %v1355 = vadd.f32 %v1033, %v1195
    %v1356 = vadd.f32 %v1034, %v1196
    %v1357 = vadd.f32 %v1035, %v1197
    %v1358 = vadd.f32 %v1036, %v1198
    %v1359 = vadd.f32 %v1037, %v1199
    %v1360 = vadd.f32 %v1038, %v1200
    %v1361 = vadd.f32 %v1039, %v1201
    %v1362 = vadd.f32 %v1040, %v1202
    %v1363 = vadd.f32 %v1041, %v1203
    %v1364 = vadd.f32 %v1042, %v1204
    %v1365 = vadd.f32 %v1043, %v1205
    %v1366 = vadd.f32 %v1044, %v1206
    %v1367 = vadd.f32 %v1045, %v1207
    %v1368 = vadd.f32 %v1046, %v1208
    %v1369 = vadd.f32 %v1047, %v1209
    %v1370 = vadd.f32 %v1048, %v1210
    %v1371 = vadd.f32 %v1049, %v1211
    %v1372 = vadd.f32 %v1050, %v1212
    %v1373 = vadd.f32 %v1051, %v1213
    %v1374 = vadd.f32 %v1052, %v1214
    %v1375 = vadd.f32 %v1053, %v1215
    %v1376 = vadd.f32 %v1054, %v1216
    %v1377 = vadd.f32 %v1055, %v1217
    %v1378 = vadd.f32 %v1056, %v1218
    %v1379 = vadd.f32 %v1057, %v1219
    %v1380 = vadd.f32 %v1058, %v1220
    %v1381 = vadd.f32 %v1059, %v1221
    %v1382 = vadd.f32 %v1060, %v1222
    %v1383 = vadd.f32 %v1061, %v1223
    %v1384 = vadd.f32 %v1062, %v1224
    %v1385 = vadd.f32 %v1063, %v1225
    %v1386 = vadd.f32 %v1064, %v1226
    %v1387 = vadd.f32 %v1065, %v1227
    %v1388 = vadd.f32 %v1066, %v1228
    %v1389 = vadd.f32 %v1067, %v1229
    %v1390 = vadd.f32 %v1068, %v1230
    %v1391 = vadd.f32 %v1069, %v1231
    %v1392 = vadd.f32 %v1070, %v1232
    %v1393 = vadd.f32 %v1071, %v1233
    %v1394 = vadd.f32 %v1072, %v1234
    %v1395 = vadd.f32 %v1073, %v1235
    %v1396 = vadd.f32 %v1074, %v1236
    %v1397 = vadd.f32 %v1075, %v1237
    %v1398 = vadd.f32 %v1076, %v1238
    %v1399 = vadd.f32 %v1077, %v1239
    %v1400 = vadd.f32 %v1078, %v1240
    %v1401 = vadd.f32 %v1079, %v1241
    %v1402 = vadd.f32 %v1080, %v1242
    %v1403 = vadd.f32 %v1081, %v1243
    %v1404 = vadd.f32 %v1082, %v1244
    %v1405 = vadd.f32 %v1083, %v1245
    %v1406 = vadd.f32 %v1084, %v1246
    %v1407 = vadd.f32 %v1085, %v1247
    %v1408 = vadd.f32 %v1086, %v1248
    %v1409 = vadd.f32 %v1087, %v1249
    %v1410 = vadd.f32 %v1088, %v1250
    %v1411 = vadd.f32 %v1089, %v1251
    %v1412 = vadd.f32 %v1090, %v1252
    %v1413 = vadd.f32 %v1091, %v1253
    %v1414 = vadd.f32 %v1092, %v1254
    %v1415 = vadd.f32 %v1093, %v1255
    %v1416 = vadd.f32 %v1094, %v1256
    %v1417 = vadd.f32 %v1095, %v1257
    %v1418 = vadd.f32 %v1096, %v1258
    %v1419 = vadd.f32 %v1097, %v1259
    %v1420 = vadd.f32 %v1098, %v1260
    %v1421 = vadd.f32 %v1099, %v1261
    %v1422 = vadd.f32 %v1100, %v1262
    %v1423 = vadd.f32 %v1101, %v1263
    %v1424 = vadd.f32 %v1102, %v1264
    %v1425 = vadd.f32 %v1103, %v1265
    %v1426 = vadd.f32 %v1104, %v1266
    %v1427 = vadd.f32 %v1105, %v1267
    %v1428 = vadd.f32 %v1106, %v1268
    %v1429 = vadd.f32 %v1107, %v1269
    %v1430 = vadd.f32 %v1108, %v1270
    %v1431 = vadd.f32 %v1109, %v1271
    %v1432 = vadd.f32 %v1110, %v1272
    %v1433 = vadd.f32 %v1111, %v1273
    %v1434 = vadd.f32 %v1112, %v1274
    %v1435 = vadd.f32 %v1113, %v1275
    %v1436 = vadd.f32 %v1114, %v1276
    %v1437 = vadd.f32 %v1115, %v1277
    %v1438 = vadd.f32 %v1116, %v1278
    %v1439 = vadd.f32 %v1117, %v1279
    %v1440 = vadd.f32 %v1118, %v1280
    %v1441 = vadd.f32 %v1119, %v1281
    %v1442 = vadd.f32 %v1120, %v1282
    %v1443 = vadd.f32 %v1121, %v1283
    %v1444 = vadd.f32 %v1122, %v1284
    %v1445 = vadd.f32 %v1123, %v1285
    %v1446 = vadd.f32 %v1124, %v1286
    %v1447 = vadd.f32 %v1125, %v1287
    %v1448 = vadd.f32 %v1126, %v1288
    %v1449 = vadd.f32 %v1127, %v1289
    %v1450 = vadd.f32 %v1128, %v1290
    %v1451 = vadd.f32 %v1129, %v1291
    %v1452 = vadd.f32 %v1130, %v1292
    %v1453 = vadd.f32 %v1131, %v1293
    %v1454 = vadd.f32 %v1132, %v1294
    %v1455 = vadd.f32 %v1133, %v1295
    %v1456 = vadd.f32 %v1134, %v1296
    %v1457 = vadd.f32 %v1135, %v1297
    %v1458 = vadd.f32 %v1136, %v1298
    %v1459 = vadd.f32 %v1137, %v1299
    %v1460 = vadd.f32 %v1138, %v1300
    %v1461 = vadd.f32 %v1139, %v1301
    %v1462 = vadd.f32 %v1140, %v1302
    %v1463 = vadd.f32 %v1141, %v1303
    %v1464 = vadd.f32 %v1142, %v1304
    %v1465 = vadd.f32 %v1143, %v1305
    %v1466 = vadd.f32 %v1144, %v1306
    %v1467 = vadd.f32 %v1145, %v1307
    %v1468 = vadd.f32 %v1146, %v1308
    %v1469 = vadd.f32 %v1147, %v1309
    %v1470 = vadd.f32 %v1148, %v1310
    %v1471 = vadd.f32 %v1149, %v1311
    %v1472 = vadd.f32 %v1150, %v1312
    %v1473 = vadd.f32 %v1151, %v1313
    %v1474 = vadd.f32 %v1152, %v1314
    %v1475 = vadd.f32 %v1153, %v1315
    %v1476 = vadd.f32 %v1154, %v1316
    %v1477 = vadd.f32 %v1155, %v1317
    %v1478 = vadd.f32 %v1156, %v1318
    %v1479 = vadd.f32 %v1157, %v1319
    %v1480 = vadd.f32 %v1158, %v1320
    %v1481 = vadd.f32 %v1159, %v1321
    %v1482 = vadd.f32 %v1160, %v1322
    %v1483 = vadd.f32 %v1161, %v1323
    %v1484 = vadd.f32 %v1162, %v1324
    %v1485 = vadd.f32 %v1163, %v1325
    %v1486 = vadd.f32 %v1164, %v1326
    %v1487 = vadd.f32 %v1165, %v1327
    %v1488 = vadd.f32 %v1166, %v1328
    %v1489 = vadd.f32 %v1167, %v1329
    %v1490 = vadd.f32 %v1168, %v1330
    %v1491 = vadd.f32 %v1169, %v1331
    %v1492 = vadd.f32 %v1170, %v1332
    %v1493 = vadd.f32 %v1171, %v1333
    %v1494 = vadd.f32 %v1172, %v1334
    %v1495 = vadd.f32 %v1173, %v1335
    %v1496 = vadd.f32 %v1174, %v1336
    %v1497 = vadd.f32 %v1175, %v1337
    %v1498 = vadd.f32 %v1176, %v1338
    %v1499 = vadd.f32 %v1177, %v1339
    %s1500 = sld [smem:[#allocation7 + $0x2]]
    %v1501 = vstv %s1500
    %v1502 = vmul.f32 %v697, %v1501
    %v1503 = vmul.f32 %v699, %v1501
    %v1504 = vmul.f32 %v701, %v1501
    %v1505 = vmul.f32 %v703, %v1501
    %v1506 = vmul.f32 %v705, %v1501
    %v1507 = vmul.f32 %v707, %v1501
    %v1508 = vmul.f32 %v709, %v1501
    %v1509 = vmul.f32 %v711, %v1501
    %v1510 = vmul.f32 %v713, %v1501
    %v1511 = vmul.f32 %v715, %v1501
    %v1512 = vmul.f32 %v717, %v1501
    %v1513 = vmul.f32 %v719, %v1501
    %v1514 = vmul.f32 %v721, %v1501
    %v1515 = vmul.f32 %v723, %v1501
    %v1516 = vmul.f32 %v725, %v1501
    %v1517 = vmul.f32 %v727, %v1501
    %v1518 = vmul.f32 %v729, %v1501
    %v1519 = vmul.f32 %v731, %v1501
    %v1520 = vmul.f32 %v733, %v1501
    %v1521 = vmul.f32 %v735, %v1501
    %v1522 = vmul.f32 %v737, %v1501
    %v1523 = vmul.f32 %v739, %v1501
    %v1524 = vmul.f32 %v741, %v1501
    %v1525 = vmul.f32 %v743, %v1501
    %v1526 = vmul.f32 %v745, %v1501
    %v1527 = vmul.f32 %v747, %v1501
    %v1528 = vmul.f32 %v749, %v1501
    %v1529 = vmul.f32 %v751, %v1501
    %v1530 = vmul.f32 %v753, %v1501
    %v1531 = vmul.f32 %v755, %v1501
    %v1532 = vmul.f32 %v757, %v1501
    %v1533 = vmul.f32 %v759, %v1501
    %v1534 = vmul.f32 %v761, %v1501
    %v1535 = vmul.f32 %v763, %v1501
    %v1536 = vmul.f32 %v765, %v1501
    %v1537 = vmul.f32 %v767, %v1501
    %v1538 = vmul.f32 %v769, %v1501
    %v1539 = vmul.f32 %v771, %v1501
    %v1540 = vmul.f32 %v773, %v1501
    %v1541 = vmul.f32 %v775, %v1501
    %v1542 = vmul.f32 %v777, %v1501
    %v1543 = vmul.f32 %v779, %v1501
    %v1544 = vmul.f32 %v781, %v1501
    %v1545 = vmul.f32 %v783, %v1501
    %v1546 = vmul.f32 %v785, %v1501
    %v1547 = vmul.f32 %v787, %v1501
    %v1548 = vmul.f32 %v789, %v1501
    %v1549 = vmul.f32 %v791, %v1501
    %v1550 = vmul.f32 %v793, %v1501
    %v1551 = vmul.f32 %v795, %v1501
    %v1552 = vmul.f32 %v797, %v1501
    %v1553 = vmul.f32 %v799, %v1501
    %v1554 = vmul.f32 %v801, %v1501
    %v1555 = vmul.f32 %v803, %v1501
    %v1556 = vmul.f32 %v805, %v1501
    %v1557 = vmul.f32 %v807, %v1501
    %v1558 = vmul.f32 %v809, %v1501
    %v1559 = vmul.f32 %v811, %v1501
    %v1560 = vmul.f32 %v813, %v1501
    %v1561 = vmul.f32 %v815, %v1501
    %v1562 = vmul.f32 %v817, %v1501
    %v1563 = vmul.f32 %v819, %v1501
    %v1564 = vmul.f32 %v821, %v1501
    %v1565 = vmul.f32 %v823, %v1501
    %v1566 = vmul.f32 %v825, %v1501
    %v1567 = vmul.f32 %v827, %v1501
    %v1568 = vmul.f32 %v829, %v1501
    %v1569 = vmul.f32 %v831, %v1501
    %v1570 = vmul.f32 %v833, %v1501
    %v1571 = vmul.f32 %v835, %v1501
    %v1572 = vmul.f32 %v837, %v1501
    %v1573 = vmul.f32 %v839, %v1501
    %v1574 = vmul.f32 %v841, %v1501
    %v1575 = vmul.f32 %v843, %v1501
    %v1576 = vmul.f32 %v845, %v1501
    %v1577 = vmul.f32 %v847, %v1501
    %v1578 = vmul.f32 %v849, %v1501
    %v1579 = vmul.f32 %v851, %v1501
    %v1580 = vmul.f32 %v853, %v1501
    %v1581 = vmul.f32 %v855, %v1501
    %v1582 = vmul.f32 %v857, %v1501
    %v1583 = vmul.f32 %v859, %v1501
    %v1584 = vmul.f32 %v861, %v1501
    %v1585 = vmul.f32 %v863, %v1501
    %v1586 = vmul.f32 %v865, %v1501
    %v1587 = vmul.f32 %v867, %v1501
    %v1588 = vmul.f32 %v869, %v1501
    %v1589 = vmul.f32 %v871, %v1501
    %v1590 = vmul.f32 %v873, %v1501
    %v1591 = vmul.f32 %v875, %v1501
    %v1592 = vmul.f32 %v877, %v1501
    %v1593 = vmul.f32 %v879, %v1501
    %v1594 = vmul.f32 %v881, %v1501
    %v1595 = vmul.f32 %v883, %v1501
    %v1596 = vmul.f32 %v885, %v1501
    %v1597 = vmul.f32 %v887, %v1501
    %v1598 = vmul.f32 %v889, %v1501
    %v1599 = vmul.f32 %v891, %v1501
    %v1600 = vmul.f32 %v893, %v1501
    %v1601 = vmul.f32 %v895, %v1501
    %v1602 = vmul.f32 %v897, %v1501
    %v1603 = vmul.f32 %v899, %v1501
    %v1604 = vmul.f32 %v901, %v1501
    %v1605 = vmul.f32 %v903, %v1501
    %v1606 = vmul.f32 %v905, %v1501
    %v1607 = vmul.f32 %v907, %v1501
    %v1608 = vmul.f32 %v909, %v1501
    %v1609 = vmul.f32 %v911, %v1501
    %v1610 = vmul.f32 %v913, %v1501
    %v1611 = vmul.f32 %v915, %v1501
    %v1612 = vmul.f32 %v917, %v1501
    %v1613 = vmul.f32 %v919, %v1501
    %v1614 = vmul.f32 %v921, %v1501
    %v1615 = vmul.f32 %v923, %v1501
    %v1616 = vmul.f32 %v925, %v1501
    %v1617 = vmul.f32 %v927, %v1501
    %v1618 = vmul.f32 %v929, %v1501
    %v1619 = vmul.f32 %v931, %v1501
    %v1620 = vmul.f32 %v933, %v1501
    %v1621 = vmul.f32 %v935, %v1501
    %v1622 = vmul.f32 %v937, %v1501
    %v1623 = vmul.f32 %v939, %v1501
    %v1624 = vmul.f32 %v941, %v1501
    %v1625 = vmul.f32 %v943, %v1501
    %v1626 = vmul.f32 %v945, %v1501
    %v1627 = vmul.f32 %v947, %v1501
    %v1628 = vmul.f32 %v949, %v1501
    %v1629 = vmul.f32 %v951, %v1501
    %v1630 = vmul.f32 %v953, %v1501
    %v1631 = vmul.f32 %v955, %v1501
    %v1632 = vmul.f32 %v957, %v1501
    %v1633 = vmul.f32 %v959, %v1501
    %v1634 = vmul.f32 %v961, %v1501
    %v1635 = vmul.f32 %v963, %v1501
    %v1636 = vmul.f32 %v965, %v1501
    %v1637 = vmul.f32 %v967, %v1501
    %v1638 = vmul.f32 %v969, %v1501
    %v1639 = vmul.f32 %v971, %v1501
    %v1640 = vmul.f32 %v973, %v1501
    %v1641 = vmul.f32 %v975, %v1501
    %v1642 = vmul.f32 %v977, %v1501
    %v1643 = vmul.f32 %v979, %v1501
    %v1644 = vmul.f32 %v981, %v1501
    %v1645 = vmul.f32 %v983, %v1501
    %v1646 = vmul.f32 %v985, %v1501
    %v1647 = vmul.f32 %v987, %v1501
    %v1648 = vmul.f32 %v989, %v1501
    %v1649 = vmul.f32 %v991, %v1501
    %v1650 = vmul.f32 %v993, %v1501
    %v1651 = vmul.f32 %v995, %v1501
    %v1652 = vmul.f32 %v997, %v1501
    %v1653 = vmul.f32 %v999, %v1501
    %v1654 = vmul.f32 %v1001, %v1501
    %v1655 = vmul.f32 %v1003, %v1501
    %v1656 = vmul.f32 %v1005, %v1501
    %v1657 = vmul.f32 %v1007, %v1501
    %v1658 = vmul.f32 %v1009, %v1501
    %v1659 = vmul.f32 %v1011, %v1501
    %v1660 = vmul.f32 %v1013, %v1501
    %v1661 = vmul.f32 %v1015, %v1501
    %v1662 = vadd.f32 %v1340, %v1502
    %v1663 = vadd.f32 %v1341, %v1503
    %v1664 = vadd.f32 %v1342, %v1504
    %v1665 = vadd.f32 %v1343, %v1505
    %v1666 = vadd.f32 %v1344, %v1506
    %v1667 = vadd.f32 %v1345, %v1507
    %v1668 = vadd.f32 %v1346, %v1508
    %v1669 = vadd.f32 %v1347, %v1509
    %v1670 = vadd.f32 %v1348, %v1510
    %v1671 = vadd.f32 %v1349, %v1511
    %v1672 = vadd.f32 %v1350, %v1512
    %v1673 = vadd.f32 %v1351, %v1513
    %v1674 = vadd.f32 %v1352, %v1514
    %v1675 = vadd.f32 %v1353, %v1515
    %v1676 = vadd.f32 %v1354, %v1516
    %v1677 = vadd.f32 %v1355, %v1517
    %v1678 = vadd.f32 %v1356, %v1518
    %v1679 = vadd.f32 %v1357, %v1519
    %v1680 = vadd.f32 %v1358, %v1520
    %v1681 = vadd.f32 %v1359, %v1521
    %v1682 = vadd.f32 %v1360, %v1522
    %v1683 = vadd.f32 %v1361, %v1523
    %v1684 = vadd.f32 %v1362, %v1524
    %v1685 = vadd.f32 %v1363, %v1525
    %v1686 = vadd.f32 %v1364, %v1526
    %v1687 = vadd.f32 %v1365, %v1527
    %v1688 = vadd.f32 %v1366, %v1528
    %v1689 = vadd.f32 %v1367, %v1529
    %v1690 = vadd.f32 %v1368, %v1530
    %v1691 = vadd.f32 %v1369, %v1531
    %v1692 = vadd.f32 %v1370, %v1532
    %v1693 = vadd.f32 %v1371, %v1533
    %v1694 = vadd.f32 %v1372, %v1534
    %v1695 = vadd.f32 %v1373, %v1535
    %v1696 = vadd.f32 %v1374, %v1536
    %v1697 = vadd.f32 %v1375, %v1537
    %v1698 = vadd.f32 %v1376, %v1538
    %v1699 = vadd.f32 %v1377, %v1539
    %v1700 = vadd.f32 %v1378, %v1540
    %v1701 = vadd.f32 %v1379, %v1541
    %v1702 = vadd.f32 %v1380, %v1542
    %v1703 = vadd.f32 %v1381, %v1543
    %v1704 = vadd.f32 %v1382, %v1544
    %v1705 = vadd.f32 %v1383, %v1545
    %v1706 = vadd.f32 %v1384, %v1546
    %v1707 = vadd.f32 %v1385, %v1547
    %v1708 = vadd.f32 %v1386, %v1548
    %v1709 = vadd.f32 %v1387, %v1549
    %v1710 = vadd.f32 %v1388, %v1550
    %v1711 = vadd.f32 %v1389, %v1551
    %v1712 = vadd.f32 %v1390, %v1552
    %v1713 = vadd.f32 %v1391, %v1553
    %v1714 = vadd.f32 %v1392, %v1554
    %v1715 = vadd.f32 %v1393, %v1555
    %v1716 = vadd.f32 %v1394, %v1556
    %v1717 = vadd.f32 %v1395, %v1557
    %v1718 = vadd.f32 %v1396, %v1558
    %v1719 = vadd.f32 %v1397, %v1559
    %v1720 = vadd.f32 %v1398, %v1560
    %v1721 = vadd.f32 %v1399, %v1561
    %v1722 = vadd.f32 %v1400, %v1562
    %v1723 = vadd.f32 %v1401, %v1563
    %v1724 = vadd.f32 %v1402, %v1564
    %v1725 = vadd.f32 %v1403, %v1565
    %v1726 = vadd.f32 %v1404, %v1566
    %v1727 = vadd.f32 %v1405, %v1567
    %v1728 = vadd.f32 %v1406, %v1568
    %v1729 = vadd.f32 %v1407, %v1569
    %v1730 = vadd.f32 %v1408, %v1570
    %v1731 = vadd.f32 %v1409, %v1571
    %v1732 = vadd.f32 %v1410, %v1572
    %v1733 = vadd.f32 %v1411, %v1573
    %v1734 = vadd.f32 %v1412, %v1574
    %v1735 = vadd.f32 %v1413, %v1575
    %v1736 = vadd.f32 %v1414, %v1576
    %v1737 = vadd.f32 %v1415, %v1577
    %v1738 = vadd.f32 %v1416, %v1578
    %v1739 = vadd.f32 %v1417, %v1579
    %v1740 = vadd.f32 %v1418, %v1580
    %v1741 = vadd.f32 %v1419, %v1581
    %v1742 = vadd.f32 %v1420, %v1582
    %v1743 = vadd.f32 %v1421, %v1583
    %v1744 = vadd.f32 %v1422, %v1584
    %v1745 = vadd.f32 %v1423, %v1585
    %v1746 = vadd.f32 %v1424, %v1586
    %v1747 = vadd.f32 %v1425, %v1587
    %v1748 = vadd.f32 %v1426, %v1588
    %v1749 = vadd.f32 %v1427, %v1589
    %v1750 = vadd.f32 %v1428, %v1590
    %v1751 = vadd.f32 %v1429, %v1591
    %v1752 = vadd.f32 %v1430, %v1592
    %v1753 = vadd.f32 %v1431, %v1593
    %v1754 = vadd.f32 %v1432, %v1594
    %v1755 = vadd.f32 %v1433, %v1595
    %v1756 = vadd.f32 %v1434, %v1596
    %v1757 = vadd.f32 %v1435, %v1597
    %v1758 = vadd.f32 %v1436, %v1598
    %v1759 = vadd.f32 %v1437, %v1599
    %v1760 = vadd.f32 %v1438, %v1600
    %v1761 = vadd.f32 %v1439, %v1601
    %v1762 = vadd.f32 %v1440, %v1602
    %v1763 = vadd.f32 %v1441, %v1603
    %v1764 = vadd.f32 %v1442, %v1604
    %v1765 = vadd.f32 %v1443, %v1605
    %v1766 = vadd.f32 %v1444, %v1606
    %v1767 = vadd.f32 %v1445, %v1607
    %v1768 = vadd.f32 %v1446, %v1608
    %v1769 = vadd.f32 %v1447, %v1609
    %v1770 = vadd.f32 %v1448, %v1610
    %v1771 = vadd.f32 %v1449, %v1611
    %v1772 = vadd.f32 %v1450, %v1612
    %v1773 = vadd.f32 %v1451, %v1613
    %v1774 = vadd.f32 %v1452, %v1614
    %v1775 = vadd.f32 %v1453, %v1615
    %v1776 = vadd.f32 %v1454, %v1616
    %v1777 = vadd.f32 %v1455, %v1617
    %v1778 = vadd.f32 %v1456, %v1618
    %v1779 = vadd.f32 %v1457, %v1619
    %v1780 = vadd.f32 %v1458, %v1620
    %v1781 = vadd.f32 %v1459, %v1621
    %v1782 = vadd.f32 %v1460, %v1622
    %v1783 = vadd.f32 %v1461, %v1623
    %v1784 = vadd.f32 %v1462, %v1624
    %v1785 = vadd.f32 %v1463, %v1625
    %v1786 = vadd.f32 %v1464, %v1626
    %v1787 = vadd.f32 %v1465, %v1627
    %v1788 = vadd.f32 %v1466, %v1628
    %v1789 = vadd.f32 %v1467, %v1629
    %v1790 = vadd.f32 %v1468, %v1630
    %v1791 = vadd.f32 %v1469, %v1631
    %v1792 = vadd.f32 %v1470, %v1632
    %v1793 = vadd.f32 %v1471, %v1633
    %v1794 = vadd.f32 %v1472, %v1634
    %v1795 = vadd.f32 %v1473, %v1635
    %v1796 = vadd.f32 %v1474, %v1636
    %v1797 = vadd.f32 %v1475, %v1637
    %v1798 = vadd.f32 %v1476, %v1638
    %v1799 = vadd.f32 %v1477, %v1639
    %v1800 = vadd.f32 %v1478, %v1640
    %v1801 = vadd.f32 %v1479, %v1641
    %v1802 = vadd.f32 %v1480, %v1642
    %v1803 = vadd.f32 %v1481, %v1643
    %v1804 = vadd.f32 %v1482, %v1644
    %v1805 = vadd.f32 %v1483, %v1645
    %v1806 = vadd.f32 %v1484, %v1646
    %v1807 = vadd.f32 %v1485, %v1647
    %v1808 = vadd.f32 %v1486, %v1648
    %v1809 = vadd.f32 %v1487, %v1649
    %v1810 = vadd.f32 %v1488, %v1650
    %v1811 = vadd.f32 %v1489, %v1651
    %v1812 = vadd.f32 %v1490, %v1652
    %v1813 = vadd.f32 %v1491, %v1653
    %v1814 = vadd.f32 %v1492, %v1654
    %v1815 = vadd.f32 %v1493, %v1655
    %v1816 = vadd.f32 %v1494, %v1656
    %v1817 = vadd.f32 %v1495, %v1657
    %v1818 = vadd.f32 %v1496, %v1658
    %v1819 = vadd.f32 %v1497, %v1659
    %v1820 = vadd.f32 %v1498, %v1660
    %v1821 = vadd.f32 %v1499, %v1661
    %s1822 = sld [smem:[#allocation8]]
    %v1823 = vstv %s1822
    %v1824 = vadd.f32 %v1662, %v1823
    %v1825 = vadd.f32 %v1663, %v1823
    %v1826 = vadd.f32 %v1664, %v1823
    %v1827 = vadd.f32 %v1665, %v1823
    %v1828 = vadd.f32 %v1666, %v1823
    %v1829 = vadd.f32 %v1667, %v1823
    %v1830 = vadd.f32 %v1668, %v1823
    %v1831 = vadd.f32 %v1669, %v1823
    %v1832 = vadd.f32 %v1670, %v1823
    %v1833 = vadd.f32 %v1671, %v1823
    %v1834 = vadd.f32 %v1672, %v1823
    %v1835 = vadd.f32 %v1673, %v1823
    %v1836 = vadd.f32 %v1674, %v1823
    %v1837 = vadd.f32 %v1675, %v1823
    %v1838 = vadd.f32 %v1676, %v1823
    %v1839 = vadd.f32 %v1677, %v1823
    %v1840 = vadd.f32 %v1678, %v1823
    %v1841 = vadd.f32 %v1679, %v1823
    %v1842 = vadd.f32 %v1680, %v1823
    %v1843 = vadd.f32 %v1681, %v1823
    %v1844 = vadd.f32 %v1682, %v1823
    %v1845 = vadd.f32 %v1683, %v1823
    %v1846 = vadd.f32 %v1684, %v1823
    %v1847 = vadd.f32 %v1685, %v1823
    %v1848 = vadd.f32 %v1686, %v1823
    %v1849 = vadd.f32 %v1687, %v1823
    %v1850 = vadd.f32 %v1688, %v1823
    %v1851 = vadd.f32 %v1689, %v1823
    %v1852 = vadd.f32 %v1690, %v1823
    %v1853 = vadd.f32 %v1691, %v1823
    %v1854 = vadd.f32 %v1692, %v1823
    %v1855 = vadd.f32 %v1693, %v1823
    %v1856 = vadd.f32 %v1694, %v1823
    %v1857 = vadd.f32 %v1695, %v1823
    %v1858 = vadd.f32 %v1696, %v1823
    %v1859 = vadd.f32 %v1697, %v1823
    %v1860 = vadd.f32 %v1698, %v1823
    %v1861 = vadd.f32 %v1699, %v1823
    %v1862 = vadd.f32 %v1700, %v1823
    %v1863 = vadd.f32 %v1701, %v1823
    %v1864 = vadd.f32 %v1702, %v1823
    %v1865 = vadd.f32 %v1703, %v1823
    %v1866 = vadd.f32 %v1704, %v1823
    %v1867 = vadd.f32 %v1705, %v1823
    %v1868 = vadd.f32 %v1706, %v1823
    %v1869 = vadd.f32 %v1707, %v1823
    %v1870 = vadd.f32 %v1708, %v1823
    %v1871 = vadd.f32 %v1709, %v1823
    %v1872 = vadd.f32 %v1710, %v1823
    %v1873 = vadd.f32 %v1711, %v1823
    %v1874 = vadd.f32 %v1712, %v1823
    %v1875 = vadd.f32 %v1713, %v1823
    %v1876 = vadd.f32 %v1714, %v1823
    %v1877 = vadd.f32 %v1715, %v1823
    %v1878 = vadd.f32 %v1716, %v1823
    %v1879 = vadd.f32 %v1717, %v1823
    %v1880 = vadd.f32 %v1718, %v1823
    %v1881 = vadd.f32 %v1719, %v1823
    %v1882 = vadd.f32 %v1720, %v1823
    %v1883 = vadd.f32 %v1721, %v1823
    %v1884 = vadd.f32 %v1722, %v1823
    %v1885 = vadd.f32 %v1723, %v1823
    %v1886 = vadd.f32 %v1724, %v1823
    %v1887 = vadd.f32 %v1725, %v1823
    %v1888 = vadd.f32 %v1726, %v1823
    %v1889 = vadd.f32 %v1727, %v1823
    %v1890 = vadd.f32 %v1728, %v1823
    %v1891 = vadd.f32 %v1729, %v1823
    %v1892 = vadd.f32 %v1730, %v1823
    %v1893 = vadd.f32 %v1731, %v1823
    %v1894 = vadd.f32 %v1732, %v1823
    %v1895 = vadd.f32 %v1733, %v1823
    %v1896 = vadd.f32 %v1734, %v1823
    %v1897 = vadd.f32 %v1735, %v1823
    %v1898 = vadd.f32 %v1736, %v1823
    %v1899 = vadd.f32 %v1737, %v1823
    %v1900 = vadd.f32 %v1738, %v1823
    %v1901 = vadd.f32 %v1739, %v1823
    %v1902 = vadd.f32 %v1740, %v1823
    %v1903 = vadd.f32 %v1741, %v1823
    %v1904 = vadd.f32 %v1742, %v1823
    %v1905 = vadd.f32 %v1743, %v1823
    %v1906 = vadd.f32 %v1744, %v1823
    %v1907 = vadd.f32 %v1745, %v1823
    %v1908 = vadd.f32 %v1746, %v1823
    %v1909 = vadd.f32 %v1747, %v1823
    %v1910 = vadd.f32 %v1748, %v1823
    %v1911 = vadd.f32 %v1749, %v1823
    %v1912 = vadd.f32 %v1750, %v1823
    %v1913 = vadd.f32 %v1751, %v1823
    %v1914 = vadd.f32 %v1752, %v1823
    %v1915 = vadd.f32 %v1753, %v1823
    %v1916 = vadd.f32 %v1754, %v1823
    %v1917 = vadd.f32 %v1755, %v1823
    %v1918 = vadd.f32 %v1756, %v1823
    %v1919 = vadd.f32 %v1757, %v1823
    %v1920 = vadd.f32 %v1758, %v1823
    %v1921 = vadd.f32 %v1759, %v1823
    %v1922 = vadd.f32 %v1760, %v1823
    %v1923 = vadd.f32 %v1761, %v1823
    %v1924 = vadd.f32 %v1762, %v1823
    %v1925 = vadd.f32 %v1763, %v1823
    %v1926 = vadd.f32 %v1764, %v1823
    %v1927 = vadd.f32 %v1765, %v1823
    %v1928 = vadd.f32 %v1766, %v1823
    %v1929 = vadd.f32 %v1767, %v1823
    %v1930 = vadd.f32 %v1768, %v1823
    %v1931 = vadd.f32 %v1769, %v1823
    %v1932 = vadd.f32 %v1770, %v1823
    %v1933 = vadd.f32 %v1771, %v1823
    %v1934 = vadd.f32 %v1772, %v1823
    %v1935 = vadd.f32 %v1773, %v1823
    %v1936 = vadd.f32 %v1774, %v1823
    %v1937 = vadd.f32 %v1775, %v1823
    %v1938 = vadd.f32 %v1776, %v1823
    %v1939 = vadd.f32 %v1777, %v1823
    %v1940 = vadd.f32 %v1778, %v1823
    %v1941 = vadd.f32 %v1779, %v1823
    %v1942 = vadd.f32 %v1780, %v1823
    %v1943 = vadd.f32 %v1781, %v1823
    %v1944 = vadd.f32 %v1782, %v1823
    %v1945 = vadd.f32 %v1783, %v1823
    %v1946 = vadd.f32 %v1784, %v1823
    %v1947 = vadd.f32 %v1785, %v1823
    %v1948 = vadd.f32 %v1786, %v1823
    %v1949 = vadd.f32 %v1787, %v1823
    %v1950 = vadd.f32 %v1788, %v1823
    %v1951 = vadd.f32 %v1789, %v1823
    %v1952 = vadd.f32 %v1790, %v1823
    %v1953 = vadd.f32 %v1791, %v1823
    %v1954 = vadd.f32 %v1792, %v1823
    %v1955 = vadd.f32 %v1793, %v1823
    %v1956 = vadd.f32 %v1794, %v1823
    %v1957 = vadd.f32 %v1795, %v1823
    %v1958 = vadd.f32 %v1796, %v1823
    %v1959 = vadd.f32 %v1797, %v1823
    %v1960 = vadd.f32 %v1798, %v1823
    %v1961 = vadd.f32 %v1799, %v1823
    %v1962 = vadd.f32 %v1800, %v1823
    %v1963 = vadd.f32 %v1801, %v1823
    %v1964 = vadd.f32 %v1802, %v1823
    %v1965 = vadd.f32 %v1803, %v1823
    %v1966 = vadd.f32 %v1804, %v1823
    %v1967 = vadd.f32 %v1805, %v1823
    %v1968 = vadd.f32 %v1806, %v1823
    %v1969 = vadd.f32 %v1807, %v1823
    %v1970 = vadd.f32 %v1808, %v1823
    %v1971 = vadd.f32 %v1809, %v1823
    %v1972 = vadd.f32 %v1810, %v1823
    %v1973 = vadd.f32 %v1811, %v1823
    %v1974 = vadd.f32 %v1812, %v1823
    %v1975 = vadd.f32 %v1813, %v1823
    %v1976 = vadd.f32 %v1814, %v1823
    %v1977 = vadd.f32 %v1815, %v1823
    %v1978 = vadd.f32 %v1816, %v1823
    %v1979 = vadd.f32 %v1817, %v1823
    %v1980 = vadd.f32 %v1818, %v1823
    %v1981 = vadd.f32 %v1819, %v1823
    %v1982 = vadd.f32 %v1820, %v1823
    %v1983 = vadd.f32 %v1821, %v1823
    %v1984 = vmax.f32 %v1824, 0.0
    %v1985 = vmax.f32 %v1825, 0.0
    %v1986 = vmax.f32 %v1826, 0.0
    %v1987 = vmax.f32 %v1827, 0.0
    %v1988 = vmax.f32 %v1828, 0.0
    %v1989 = vmax.f32 %v1829, 0.0
    %v1990 = vmax.f32 %v1830, 0.0
    %v1991 = vmax.f32 %v1831, 0.0
    %v1992 = vmax.f32 %v1832, 0.0
    %v1993 = vmax.f32 %v1833, 0.0
    %v1994 = vmax.f32 %v1834, 0.0
    %v1995 = vmax.f32 %v1835, 0.0
    %v1996 = vmax.f32 %v1836, 0.0
    %v1997 = vmax.f32 %v1837, 0.0
    %v1998 = vmax.f32 %v1838, 0.0
    %v1999 = vmax.f32 %v1839, 0.0
    %v2000 = vmax.f32 %v1840, 0.0
    %v2001 = vmax.f32 %v1841, 0.0
    %v2002 = vmax.f32 %v1842, 0.0
    %v2003 = vmax.f32 %v1843, 0.0
    %v2004 = vmax.f32 %v1844, 0.0
    %v2005 = vmax.f32 %v1845, 0.0
    %v2006 = vmax.f32 %v1846, 0.0
    %v2007 = vmax.f32 %v1847, 0.0
    %v2008 = vmax.f32 %v1848, 0.0
    %v2009 = vmax.f32 %v1849, 0.0
    %v2010 = vmax.f32 %v1850, 0.0
    %v2011 = vmax.f32 %v1851, 0.0
    %v2012 = vmax.f32 %v1852, 0.0
    %v2013 = vmax.f32 %v1853, 0.0
    %v2014 = vmax.f32 %v1854, 0.0
    %v2015 = vmax.f32 %v1855, 0.0
    %v2016 = vmax.f32 %v1856, 0.0
    %v2017 = vmax.f32 %v1857, 0.0
    %v2018 = vmax.f32 %v1858, 0.0
    %v2019 = vmax.f32 %v1859, 0.0
    %v2020 = vmax.f32 %v1860, 0.0
    %v2021 = vmax.f32 %v1861, 0.0
    %v2022 = vmax.f32 %v1862, 0.0
    %v2023 = vmax.f32 %v1863, 0.0
    %v2024 = vmax.f32 %v1864, 0.0
    %v2025 = vmax.f32 %v1865, 0.0
    %v2026 = vmax.f32 %v1866, 0.0
    %v2027 = vmax.f32 %v1867, 0.0
    %v2028 = vmax.f32 %v1868, 0.0
    %v2029 = vmax.f32 %v1869, 0.0
    %v2030 = vmax.f32 %v1870, 0.0
    %v2031 = vmax.f32 %v1871, 0.0
    %v2032 = vmax.f32 %v1872, 0.0
    %v2033 = vmax.f32 %v1873, 0.0
    %v2034 = vmax.f32 %v1874, 0.0
    %v2035 = vmax.f32 %v1875, 0.0
    %v2036 = vmax.f32 %v1876, 0.0
    %v2037 = vmax.f32 %v1877, 0.0
    %v2038 = vmax.f32 %v1878, 0.0
    %v2039 = vmax.f32 %v1879, 0.0
    %v2040 = vmax.f32 %v1880, 0.0
    %v2041 = vmax.f32 %v1881, 0.0
    %v2042 = vmax.f32 %v1882, 0.0
    %v2043 = vmax.f32 %v1883, 0.0
    %v2044 = vmax.f32 %v1884, 0.0
    %v2045 = vmax.f32 %v1885, 0.0
    %v2046 = vmax.f32 %v1886, 0.0
    %v2047 = vmax.f32 %v1887, 0.0
    %v2048 = vmax.f32 %v1888, 0.0
    %v2049 = vmax.f32 %v1889, 0.0
    %v2050 = vmax.f32 %v1890, 0.0
    %v2051 = vmax.f32 %v1891, 0.0
    %v2052 = vmax.f32 %v1892, 0.0
    %v2053 = vmax.f32 %v1893, 0.0
    %v2054 = vmax.f32 %v1894, 0.0
    %v2055 = vmax.f32 %v1895, 0.0
    %v2056 = vmax.f32 %v1896, 0.0
    %v2057 = vmax.f32 %v1897, 0.0
    %v2058 = vmax.f32 %v1898, 0.0
    %v2059 = vmax.f32 %v1899, 0.0
    %v2060 = vmax.f32 %v1900, 0.0
    %v2061 = vmax.f32 %v1901, 0.0
    %v2062 = vmax.f32 %v1902, 0.0
    %v2063 = vmax.f32 %v1903, 0.0
    %v2064 = vmax.f32 %v1904, 0.0
    %v2065 = vmax.f32 %v1905, 0.0
    %v2066 = vmax.f32 %v1906, 0.0
    %v2067 = vmax.f32 %v1907, 0.0
    %v2068 = vmax.f32 %v1908, 0.0
    %v2069 = vmax.f32 %v1909, 0.0
    %v2070 = vmax.f32 %v1910, 0.0
    %v2071 = vmax.f32 %v1911, 0.0
    %v2072 = vmax.f32 %v1912, 0.0
    %v2073 = vmax.f32 %v1913, 0.0
    %v2074 = vmax.f32 %v1914, 0.0
    %v2075 = vmax.f32 %v1915, 0.0
    %v2076 = vmax.f32 %v1916, 0.0
    %v2077 = vmax.f32 %v1917, 0.0
    %v2078 = vmax.f32 %v1918, 0.0
    %v2079 = vmax.f32 %v1919, 0.0
    %v2080 = vmax.f32 %v1920, 0.0
    %v2081 = vmax.f32 %v1921, 0.0
    %v2082 = vmax.f32 %v1922, 0.0
    %v2083 = vmax.f32 %v1923, 0.0
    %v2084 = vmax.f32 %v1924, 0.0
    %v2085 = vmax.f32 %v1925, 0.0
    %v2086 = vmax.f32 %v1926, 0.0
    %v2087 = vmax.f32 %v1927, 0.0
    %v2088 = vmax.f32 %v1928, 0.0
    %v2089 = vmax.f32 %v1929, 0.0
    %v2090 = vmax.f32 %v1930, 0.0
    %v2091 = vmax.f32 %v1931, 0.0
    %v2092 = vmax.f32 %v1932, 0.0
    %v2093 = vmax.f32 %v1933, 0.0
    %v2094 = vmax.f32 %v1934, 0.0
    %v2095 = vmax.f32 %v1935, 0.0
    %v2096 = vmax.f32 %v1936, 0.0
    %v2097 = vmax.f32 %v1937, 0.0
    %v2098 = vmax.f32 %v1938, 0.0
    %v2099 = vmax.f32 %v1939, 0.0
    %v2100 = vmax.f32 %v1940, 0.0
    %v2101 = vmax.f32 %v1941, 0.0
    %v2102 = vmax.f32 %v1942, 0.0
    %v2103 = vmax.f32 %v1943, 0.0
    %v2104 = vmax.f32 %v1944, 0.0
    %v2105 = vmax.f32 %v1945, 0.0
    %v2106 = vmax.f32 %v1946, 0.0
    %v2107 = vmax.f32 %v1947, 0.0
    %v2108 = vmax.f32 %v1948, 0.0
    %v2109 = vmax.f32 %v1949, 0.0
    %v2110 = vmax.f32 %v1950, 0.0
    %v2111 = vmax.f32 %v1951, 0.0
    %v2112 = vmax.f32 %v1952, 0.0
    %v2113 = vmax.f32 %v1953, 0.0
    %v2114 = vmax.f32 %v1954, 0.0
    %v2115 = vmax.f32 %v1955, 0.0
    %v2116 = vmax.f32 %v1956, 0.0
    %v2117 = vmax.f32 %v1957, 0.0
    %v2118 = vmax.f32 %v1958, 0.0
    %v2119 = vmax.f32 %v1959, 0.0
    %v2120 = vmax.f32 %v1960, 0.0
    %v2121 = vmax.f32 %v1961, 0.0
    %v2122 = vmax.f32 %v1962, 0.0
    %v2123 = vmax.f32 %v1963, 0.0
    %v2124 = vmax.f32 %v1964, 0.0
    %v2125 = vmax.f32 %v1965, 0.0
    %v2126 = vmax.f32 %v1966, 0.0
    %v2127 = vmax.f32 %v1967, 0.0
    %v2128 = vmax.f32 %v1968, 0.0
    %v2129 = vmax.f32 %v1969, 0.0
    %v2130 = vmax.f32 %v1970, 0.0
    %v2131 = vmax.f32 %v1971, 0.0
    %v2132 = vmax.f32 %v1972, 0.0
    %v2133 = vmax.f32 %v1973, 0.0
    %v2134 = vmax.f32 %v1974, 0.0
    %v2135 = vmax.f32 %v1975, 0.0
    %v2136 = vmax.f32 %v1976, 0.0
    %v2137 = vmax.f32 %v1977, 0.0
    %v2138 = vmax.f32 %v1978, 0.0
    %v2139 = vmax.f32 %v1979, 0.0
    %v2140 = vmax.f32 %v1980, 0.0
    %v2141 = vmax.f32 %v1981, 0.0
    %v2142 = vmax.f32 %v1982, 0.0
    %v2143 = vmax.f32 %v1983, 0.0
    %v2144 = vmax.f32 %v1984, 0.0
    %v2145 = vmax.f32 %v1985, 0.0
    %v2146 = vmax.f32 %v1986, 0.0
    %v2147 = vmax.f32 %v1987, 0.0
    %v2148 = vmax.f32 %v1988, 0.0
    %v2149 = vmax.f32 %v1989, 0.0
    %v2150 = vmax.f32 %v1990, 0.0
    %v2151 = vmax.f32 %v1991, 0.0
    %v2152 = vmax.f32 %v1992, 0.0
    %v2153 = vmax.f32 %v1993, 0.0
    %v2154 = vmax.f32 %v1994, 0.0
    %v2155 = vmax.f32 %v1995, 0.0
    %v2156 = vmax.f32 %v1996, 0.0
    %v2157 = vmax.f32 %v1997, 0.0
    %v2158 = vmax.f32 %v1998, 0.0
    %v2159 = vmax.f32 %v1999, 0.0
    %v2160 = vmax.f32 %v2000, 0.0
    %v2161 = vmax.f32 %v2001, 0.0
    %v2162 = vmax.f32 %v2002, 0.0
    %v2163 = vmax.f32 %v2003, 0.0
    %v2164 = vmax.f32 %v2004, 0.0
    %v2165 = vmax.f32 %v2005, 0.0
    %v2166 = vmax.f32 %v2006, 0.0
    %v2167 = vmax.f32 %v2007, 0.0
    %v2168 = vmax.f32 %v2008, 0.0
    %v2169 = vmax.f32 %v2009, 0.0
    %v2170 = vmax.f32 %v2010, 0.0
    %v2171 = vmax.f32 %v2011, 0.0
    %v2172 = vmax.f32 %v2012, 0.0
    %v2173 = vmax.f32 %v2013, 0.0
    %v2174 = vmax.f32 %v2014, 0.0
    %v2175 = vmax.f32 %v2015, 0.0
    %v2176 = vmax.f32 %v2144, %v2016
    %v2177 = vmax.f32 %v2145, %v2017
    %v2178 = vmax.f32 %v2146, %v2018
    %v2179 = vmax.f32 %v2147, %v2019
    %v2180 = vmax.f32 %v2148, %v2020
    %v2181 = vmax.f32 %v2149, %v2021
    %v2182 = vmax.f32 %v2150, %v2022
    %v2183 = vmax.f32 %v2151, %v2023
    %v2184 = vmax.f32 %v2152, %v2024
    %v2185 = vmax.f32 %v2153, %v2025
    %v2186 = vmax.f32 %v2154, %v2026
    %v2187 = vmax.f32 %v2155, %v2027
    %v2188 = vmax.f32 %v2156, %v2028
    %v2189 = vmax.f32 %v2157, %v2029
    %v2190 = vmax.f32 %v2158, %v2030
    %v2191 = vmax.f32 %v2159, %v2031
    %v2192 = vmax.f32 %v2160, %v2032
    %v2193 = vmax.f32 %v2161, %v2033
    %v2194 = vmax.f32 %v2162, %v2034
    %v2195 = vmax.f32 %v2163, %v2035
    %v2196 = vmax.f32 %v2164, %v2036
    %v2197 = vmax.f32 %v2165, %v2037
    %v2198 = vmax.f32 %v2166, %v2038
    %v2199 = vmax.f32 %v2167, %v2039
    %v2200 = vmax.f32 %v2168, %v2040
    %v2201 = vmax.f32 %v2169, %v2041
    %v2202 = vmax.f32 %v2170, %v2042
    %v2203 = vmax.f32 %v2171, %v2043
    %v2204 = vmax.f32 %v2172, %v2044
    %v2205 = vmax.f32 %v2173, %v2045
    %v2206 = vmax.f32 %v2174, %v2046
    %v2207 = vmax.f32 %v2175, %v2047
    %v2208 = vmax.f32 %v2048, 0.0
    %v2209 = vmax.f32 %v2049, 0.0
    %v2210 = vmax.f32 %v2050, 0.0
    %v2211 = vmax.f32 %v2051, 0.0
    %v2212 = vmax.f32 %v2052, 0.0
    %v2213 = vmax.f32 %v2053, 0.0
    %v2214 = vmax.f32 %v2054, 0.0
    %v2215 = vmax.f32 %v2055, 0.0
    %v2216 = vmax.f32 %v2056, 0.0
    %v2217 = vmax.f32 %v2057, 0.0
    %v2218 = vmax.f32 %v2058, 0.0
    %v2219 = vmax.f32 %v2059, 0.0
    %v2220 = vmax.f32 %v2060, 0.0
    %v2221 = vmax.f32 %v2061, 0.0
    %v2222 = vmax.f32 %v2062, 0.0
    %v2223 = vmax.f32 %v2063, 0.0
    %v2224 = vmax.f32 %v2064, 0.0
    %v2225 = vmax.f32 %v2065, 0.0
    %v2226 = vmax.f32 %v2066, 0.0
    %v2227 = vmax.f32 %v2067, 0.0
    %v2228 = vmax.f32 %v2068, 0.0
    %v2229 = vmax.f32 %v2069, 0.0
    %v2230 = vmax.f32 %v2070, 0.0
    %v2231 = vmax.f32 %v2071, 0.0
    %v2232 = vmax.f32 %v2072, 0.0
    %v2233 = vmax.f32 %v2073, 0.0
    %v2234 = vmax.f32 %v2074, 0.0
    %v2235 = vmax.f32 %v2075, 0.0
    %v2236 = vmax.f32 %v2076, 0.0
    %v2237 = vmax.f32 %v2077, 0.0
    %v2238 = vmax.f32 %v2078, 0.0
    %v2239 = vmax.f32 %v2079, 0.0
    %v2240 = vmax.f32 %v2208, %v2080
    %v2241 = vmax.f32 %v2209, %v2081
    %v2242 = vmax.f32 %v2210, %v2082
    %v2243 = vmax.f32 %v2211, %v2083
    %v2244 = vmax.f32 %v2212, %v2084
    %v2245 = vmax.f32 %v2213, %v2085
    %v2246 = vmax.f32 %v2214, %v2086
    %v2247 = vmax.f32 %v2215, %v2087
    %v2248 = vmax.f32 %v2216, %v2088
    %v2249 = vmax.f32 %v2217, %v2089
    %v2250 = vmax.f32 %v2218, %v2090
    %v2251 = vmax.f32 %v2219, %v2091
    %v2252 = vmax.f32 %v2220, %v2092
    %v2253 = vmax.f32 %v2221, %v2093
    %v2254 = vmax.f32 %v2222, %v2094
    %v2255 = vmax.f32 %v2223, %v2095
    %v2256 = vmax.f32 %v2224, %v2096
    %v2257 = vmax.f32 %v2225, %v2097
    %v2258 = vmax.f32 %v2226, %v2098
    %v2259 = vmax.f32 %v2227, %v2099
    %v2260 = vmax.f32 %v2228, %v2100
    %v2261 = vmax.f32 %v2229, %v2101
    %v2262 = vmax.f32 %v2230, %v2102
    %v2263 = vmax.f32 %v2231, %v2103
    %v2264 = vmax.f32 %v2232, %v2104
    %v2265 = vmax.f32 %v2233, %v2105
    %v2266 = vmax.f32 %v2234, %v2106
    %v2267 = vmax.f32 %v2235, %v2107
    %v2268 = vmax.f32 %v2236, %v2108
    %v2269 = vmax.f32 %v2237, %v2109
    %v2270 = vmax.f32 %v2238, %v2110
    %v2271 = vmax.f32 %v2239, %v2111
    %v2272 = vmax.f32 %v2240, %v2112
    %v2273 = vmax.f32 %v2241, %v2113
    %v2274 = vmax.f32 %v2242, %v2114
    %v2275 = vmax.f32 %v2243, %v2115
    %v2276 = vmax.f32 %v2244, %v2116
    %v2277 = vmax.f32 %v2245, %v2117
    %v2278 = vmax.f32 %v2246, %v2118
    %v2279 = vmax.f32 %v2247, %v2119
    %v2280 = vmax.f32 %v2248, %v2120
    %v2281 = vmax.f32 %v2249, %v2121
    %v2282 = vmax.f32 %v2250, %v2122
    %v2283 = vmax.f32 %v2251, %v2123
    %v2284 = vmax.f32 %v2252, %v2124
    %v2285 = vmax.f32 %v2253, %v2125
    %v2286 = vmax.f32 %v2254, %v2126
    %v2287 = vmax.f32 %v2255, %v2127
    %v2288 = vmax.f32 %v2256, %v2128
    %v2289 = vmax.f32 %v2257, %v2129
    %v2290 = vmax.f32 %v2258, %v2130
    %v2291 = vmax.f32 %v2259, %v2131
    %v2292 = vmax.f32 %v2260, %v2132
    %v2293 = vmax.f32 %v2261, %v2133
    %v2294 = vmax.f32 %v2262, %v2134
    %v2295 = vmax.f32 %v2263, %v2135
    %v2296 = vmax.f32 %v2264, %v2136
    %v2297 = vmax.f32 %v2265, %v2137
    %v2298 = vmax.f32 %v2266, %v2138
    %v2299 = vmax.f32 %v2267, %v2139
    %v2300 = vmax.f32 %v2268, %v2140
    %v2301 = vmax.f32 %v2269, %v2141
    %v2302 = vmax.f32 %v2270, %v2142
    %v2303 = vmax.f32 %v2271, %v2143
    %s2304 = sld [smem:[#allocation7 + $0x3]]
    %v2305 = vstv %s2304
    %v2306 = vmul.f32 %v216, %v2305
    %v2307 = vmul.f32 %v217, %v2305
    %v2308 = vmul.f32 %v218, %v2305
    %v2309 = vmul.f32 %v219, %v2305
    %v2310 = vmul.f32 %v220, %v2305
    %v2311 = vmul.f32 %v221, %v2305
    %v2312 = vmul.f32 %v222, %v2305
    %v2313 = vmul.f32 %v223, %v2305
    %v2314 = vmul.f32 %v224, %v2305
    %v2315 = vmul.f32 %v225, %v2305
    %v2316 = vmul.f32 %v226, %v2305
    %v2317 = vmul.f32 %v227, %v2305
    %v2318 = vmul.f32 %v228, %v2305
    %v2319 = vmul.f32 %v229, %v2305
    %v2320 = vmul.f32 %v230, %v2305
    %v2321 = vmul.f32 %v231, %v2305
    %v2322 = vmul.f32 %v232, %v2305
    %v2323 = vmul.f32 %v233, %v2305
    %v2324 = vmul.f32 %v234, %v2305
    %v2325 = vmul.f32 %v235, %v2305
    %v2326 = vmul.f32 %v236, %v2305
    %v2327 = vmul.f32 %v237, %v2305
    %v2328 = vmul.f32 %v238, %v2305
    %v2329 = vmul.f32 %v239, %v2305
    %v2330 = vmul.f32 %v240, %v2305
    %v2331 = vmul.f32 %v241, %v2305
    %v2332 = vmul.f32 %v242, %v2305
    %v2333 = vmul.f32 %v243, %v2305
    %v2334 = vmul.f32 %v244, %v2305
    %v2335 = vmul.f32 %v245, %v2305
    %v2336 = vmul.f32 %v246, %v2305
    %v2337 = vmul.f32 %v247, %v2305
    %v2338 = vmul.f32 %v248, %v2305
    %v2339 = vmul.f32 %v249, %v2305
    %v2340 = vmul.f32 %v250, %v2305
    %v2341 = vmul.f32 %v251, %v2305
    %v2342 = vmul.f32 %v252, %v2305
    %v2343 = vmul.f32 %v253, %v2305
    %v2344 = vmul.f32 %v254, %v2305
    %v2345 = vmul.f32 %v255, %v2305
    %v2346 = vmul.f32 %v256, %v2305
    %v2347 = vmul.f32 %v257, %v2305
    %v2348 = vmul.f32 %v258, %v2305
    %v2349 = vmul.f32 %v259, %v2305
    %v2350 = vmul.f32 %v260, %v2305
    %v2351 = vmul.f32 %v261, %v2305
    %v2352 = vmul.f32 %v262, %v2305
    %v2353 = vmul.f32 %v263, %v2305
    %v2354 = vmul.f32 %v264, %v2305
    %v2355 = vmul.f32 %v265, %v2305
    %v2356 = vmul.f32 %v266, %v2305
    %v2357 = vmul.f32 %v267, %v2305
    %v2358 = vmul.f32 %v268, %v2305
    %v2359 = vmul.f32 %v269, %v2305
    %v2360 = vmul.f32 %v270, %v2305
    %v2361 = vmul.f32 %v271, %v2305
    %v2362 = vmul.f32 %v272, %v2305
    %v2363 = vmul.f32 %v273, %v2305
    %v2364 = vmul.f32 %v274, %v2305
    %v2365 = vmul.f32 %v275, %v2305
    %v2366 = vmul.f32 %v276, %v2305
    %v2367 = vmul.f32 %v277, %v2305
    %v2368 = vmul.f32 %v278, %v2305
    %v2369 = vmul.f32 %v279, %v2305
    %v2370 = vmul.f32 %v280, %v2305
    %v2371 = vmul.f32 %v281, %v2305
    %v2372 = vmul.f32 %v282, %v2305
    %v2373 = vmul.f32 %v283, %v2305
    %v2374 = vmul.f32 %v284, %v2305
    %v2375 = vmul.f32 %v285, %v2305
    %v2376 = vmul.f32 %v286, %v2305
    %v2377 = vmul.f32 %v287, %v2305
    %v2378 = vmul.f32 %v288, %v2305
    %v2379 = vmul.f32 %v289, %v2305
    %v2380 = vmul.f32 %v290, %v2305
    %v2381 = vmul.f32 %v291, %v2305
    %v2382 = vmul.f32 %v292, %v2305
    %v2383 = vmul.f32 %v293, %v2305
    %v2384 = vmul.f32 %v294, %v2305
    %v2385 = vmul.f32 %v295, %v2305
    %v2386 = vmul.f32 %v296, %v2305
    %v2387 = vmul.f32 %v297, %v2305
    %v2388 = vmul.f32 %v298, %v2305
    %v2389 = vmul.f32 %v299, %v2305
    %v2390 = vmul.f32 %v300, %v2305
    %v2391 = vmul.f32 %v301, %v2305
    %v2392 = vmul.f32 %v302, %v2305
    %v2393 = vmul.f32 %v303, %v2305
    %v2394 = vmul.f32 %v304, %v2305
    %v2395 = vmul.f32 %v305, %v2305
    %v2396 = vmul.f32 %v306, %v2305
    %v2397 = vmul.f32 %v307, %v2305
    %v2398 = vmul.f32 %v308, %v2305
    %v2399 = vmul.f32 %v309, %v2305
    %v2400 = vmul.f32 %v310, %v2305
    %v2401 = vmul.f32 %v311, %v2305
    %v2402 = vmul.f32 %v312, %v2305
    %v2403 = vmul.f32 %v313, %v2305
    %v2404 = vmul.f32 %v314, %v2305
    %v2405 = vmul.f32 %v315, %v2305
    %v2406 = vmul.f32 %v316, %v2305
    %v2407 = vmul.f32 %v317, %v2305
    %v2408 = vmul.f32 %v318, %v2305
    %v2409 = vmul.f32 %v319, %v2305
    %v2410 = vmul.f32 %v320, %v2305
    %v2411 = vmul.f32 %v321, %v2305
    %v2412 = vmul.f32 %v322, %v2305
    %v2413 = vmul.f32 %v323, %v2305
    %v2414 = vmul.f32 %v324, %v2305
    %v2415 = vmul.f32 %v325, %v2305
    %v2416 = vmul.f32 %v326, %v2305
    %v2417 = vmul.f32 %v327, %v2305
    %v2418 = vmul.f32 %v328, %v2305
    %v2419 = vmul.f32 %v329, %v2305
    %v2420 = vmul.f32 %v330, %v2305
    %v2421 = vmul.f32 %v331, %v2305
    %v2422 = vmul.f32 %v332, %v2305
    %v2423 = vmul.f32 %v333, %v2305
    %v2424 = vmul.f32 %v334, %v2305
    %v2425 = vmul.f32 %v335, %v2305
    %v2426 = vmul.f32 %v336, %v2305
    %v2427 = vmul.f32 %v337, %v2305
    %v2428 = vmul.f32 %v338, %v2305
    %v2429 = vmul.f32 %v339, %v2305
    %v2430 = vmul.f32 %v340, %v2305
    %v2431 = vmul.f32 %v341, %v2305
    %v2432 = vmul.f32 %v342, %v2305
    %v2433 = vmul.f32 %v343, %v2305
    %v2434 = vmul.f32 %v344, %v2305
    %v2435 = vmul.f32 %v345, %v2305
    %v2436 = vmul.f32 %v346, %v2305
    %v2437 = vmul.f32 %v347, %v2305
    %v2438 = vmul.f32 %v348, %v2305
    %v2439 = vmul.f32 %v349, %v2305
    %v2440 = vmul.f32 %v350, %v2305
    %v2441 = vmul.f32 %v351, %v2305
    %v2442 = vmul.f32 %v352, %v2305
    %v2443 = vmul.f32 %v353, %v2305
    %v2444 = vmul.f32 %v354, %v2305
    %v2445 = vmul.f32 %v355, %v2305
    %v2446 = vmul.f32 %v356, %v2305
    %v2447 = vmul.f32 %v357, %v2305
    %v2448 = vmul.f32 %v358, %v2305
    %v2449 = vmul.f32 %v359, %v2305
    %v2450 = vmul.f32 %v360, %v2305
    %v2451 = vmul.f32 %v361, %v2305
    %v2452 = vmul.f32 %v362, %v2305
    %v2453 = vmul.f32 %v363, %v2305
    %v2454 = vmul.f32 %v364, %v2305
    %v2455 = vmul.f32 %v365, %v2305
    %v2456 = vmul.f32 %v366, %v2305
    %v2457 = vmul.f32 %v367, %v2305
    %v2458 = vmul.f32 %v368, %v2305
    %v2459 = vmul.f32 %v369, %v2305
    %v2460 = vmul.f32 %v370, %v2305
    %v2461 = vmul.f32 %v371, %v2305
    %v2462 = vmul.f32 %v372, %v2305
    %v2463 = vmul.f32 %v373, %v2305
    %v2464 = vmul.f32 %v374, %v2305
    %v2465 = vmul.f32 %v375, %v2305
    %s2466 = sld [smem:[#allocation7 + $0x4]]
    %v2467 = vstv %s2466
    %v2468 = vmul.f32 %v377, %v2467
    %v2469 = vmul.f32 %v379, %v2467
    %v2470 = vmul.f32 %v381, %v2467
    %v2471 = vmul.f32 %v383, %v2467
    %v2472 = vmul.f32 %v385, %v2467
    %v2473 = vmul.f32 %v387, %v2467
    %v2474 = vmul.f32 %v389, %v2467
    %v2475 = vmul.f32 %v391, %v2467
    %v2476 = vmul.f32 %v393, %v2467
    %v2477 = vmul.f32 %v395, %v2467
    %v2478 = vmul.f32 %v397, %v2467
    %v2479 = vmul.f32 %v399, %v2467
    %v2480 = vmul.f32 %v401, %v2467
    %v2481 = vmul.f32 %v403, %v2467
    %v2482 = vmul.f32 %v405, %v2467
    %v2483 = vmul.f32 %v407, %v2467
    %v2484 = vmul.f32 %v409, %v2467
    %v2485 = vmul.f32 %v411, %v2467
    %v2486 = vmul.f32 %v413, %v2467
    %v2487 = vmul.f32 %v415, %v2467
    %v2488 = vmul.f32 %v417, %v2467
    %v2489 = vmul.f32 %v419, %v2467
    %v2490 = vmul.f32 %v421, %v2467
    %v2491 = vmul.f32 %v423, %v2467
    %v2492 = vmul.f32 %v425, %v2467
    %v2493 = vmul.f32 %v427, %v2467
    %v2494 = vmul.f32 %v429, %v2467
    %v2495 = vmul.f32 %v431, %v2467
    %v2496 = vmul.f32 %v433, %v2467
    %v2497 = vmul.f32 %v435, %v2467
    %v2498 = vmul.f32 %v437, %v2467
    %v2499 = vmul.f32 %v439, %v2467
    %v2500 = vmul.f32 %v441, %v2467
    %v2501 = vmul.f32 %v443, %v2467
    %v2502 = vmul.f32 %v445, %v2467
    %v2503 = vmul.f32 %v447, %v2467
    %v2504 = vmul.f32 %v449, %v2467
    %v2505 = vmul.f32 %v451, %v2467
    %v2506 = vmul.f32 %v453, %v2467
    %v2507 = vmul.f32 %v455, %v2467
    %v2508 = vmul.f32 %v457, %v2467
    %v2509 = vmul.f32 %v459, %v2467
    %v2510 = vmul.f32 %v461, %v2467
    %v2511 = vmul.f32 %v463, %v2467
    %v2512 = vmul.f32 %v465, %v2467
    %v2513 = vmul.f32 %v467, %v2467
    %v2514 = vmul.f32 %v469, %v2467
    %v2515 = vmul.f32 %v471, %v2467
    %v2516 = vmul.f32 %v473, %v2467
    %v2517 = vmul.f32 %v475, %v2467
    %v2518 = vmul.f32 %v477, %v2467
    %v2519 = vmul.f32 %v479, %v2467
    %v2520 = vmul.f32 %v481, %v2467
    %v2521 = vmul.f32 %v483, %v2467
    %v2522 = vmul.f32 %v485, %v2467
    %v2523 = vmul.f32 %v487, %v2467
    %v2524 = vmul.f32 %v489, %v2467
    %v2525 = vmul.f32 %v491, %v2467
    %v2526 = vmul.f32 %v493, %v2467
    %v2527 = vmul.f32 %v495, %v2467
    %v2528 = vmul.f32 %v497, %v2467
    %v2529 = vmul.f32 %v499, %v2467
    %v2530 = vmul.f32 %v501, %v2467
    %v2531 = vmul.f32 %v503, %v2467
    %v2532 = vmul.f32 %v505, %v2467
    %v2533 = vmul.f32 %v507, %v2467
    %v2534 = vmul.f32 %v509, %v2467
    %v2535 = vmul.f32 %v511, %v2467
    %v2536 = vmul.f32 %v513, %v2467
    %v2537 = vmul.f32 %v515, %v2467
    %v2538 = vmul.f32 %v517, %v2467
    %v2539 = vmul.f32 %v519, %v2467
    %v2540 = vmul.f32 %v521, %v2467
    %v2541 = vmul.f32 %v523, %v2467
    %v2542 = vmul.f32 %v525, %v2467
    %v2543 = vmul.f32 %v527, %v2467
    %v2544 = vmul.f32 %v529, %v2467
    %v2545 = vmul.f32 %v531, %v2467
    %v2546 = vmul.f32 %v533, %v2467
    %v2547 = vmul.f32 %v535, %v2467
    %v2548 = vmul.f32 %v537, %v2467
    %v2549 = vmul.f32 %v539, %v2467
    %v2550 = vmul.f32 %v541, %v2467
    %v2551 = vmul.f32 %v543, %v2467
    %v2552 = vmul.f32 %v545, %v2467
    %v2553 = vmul.f32 %v547, %v2467
    %v2554 = vmul.f32 %v549, %v2467
    %v2555 = vmul.f32 %v551, %v2467
    %v2556 = vmul.f32 %v553, %v2467
    %v2557 = vmul.f32 %v555, %v2467
    %v2558 = vmul.f32 %v557, %v2467
    %v2559 = vmul.f32 %v559, %v2467
    %v2560 = vmul.f32 %v561, %v2467
    %v2561 = vmul.f32 %v563, %v2467
    %v2562 = vmul.f32 %v565, %v2467
    %v2563 = vmul.f32 %v567, %v2467
    %v2564 = vmul.f32 %v569, %v2467
    %v2565 = vmul.f32 %v571, %v2467
    %v2566 = vmul.f32 %v573, %v2467
    %v2567 = vmul.f32 %v575, %v2467
    %v2568 = vmul.f32 %v577, %v2467
    %v2569 = vmul.f32 %v579, %v2467
    %v2570 = vmul.f32 %v581, %v2467
    %v2571 = vmul.f32 %v583, %v2467
    %v2572 = vmul.f32 %v585, %v2467
    %v2573 = vmul.f32 %v587, %v2467
    %v2574 = vmul.f32 %v589, %v2467
    %v2575 = vmul.f32 %v591, %v2467
    %v2576 = vmul.f32 %v593, %v2467
    %v2577 = vmul.f32 %v595, %v2467
    %v2578 = vmul.f32 %v597, %v2467
    %v2579 = vmul.f32 %v599, %v2467
    %v2580 = vmul.f32 %v601, %v2467
    %v2581 = vmul.f32 %v603, %v2467
    %v2582 = vmul.f32 %v605, %v2467
    %v2583 = vmul.f32 %v607, %v2467
    %v2584 = vmul.f32 %v609, %v2467
    %v2585 = vmul.f32 %v611, %v2467
    %v2586 = vmul.f32 %v613, %v2467
    %v2587 = vmul.f32 %v615, %v2467
    %v2588 = vmul.f32 %v617, %v2467
    %v2589 = vmul.f32 %v619, %v2467
    %v2590 = vmul.f32 %v621, %v2467
    %v2591 = vmul.f32 %v623, %v2467
    %v2592 = vmul.f32 %v625, %v2467
    %v2593 = vmul.f32 %v627, %v2467
    %v2594 = vmul.f32 %v629, %v2467
    %v2595 = vmul.f32 %v631, %v2467
    %v2596 = vmul.f32 %v633, %v2467
    %v2597 = vmul.f32 %v635, %v2467
    %v2598 = vmul.f32 %v637, %v2467
    %v2599 = vmul.f32 %v639, %v2467
    %v2600 = vmul.f32 %v641, %v2467
    %v2601 = vmul.f32 %v643, %v2467
    %v2602 = vmul.f32 %v645, %v2467
    %v2603 = vmul.f32 %v647, %v2467
    %v2604 = vmul.f32 %v649, %v2467
    %v2605 = vmul.f32 %v651, %v2467
    %v2606 = vmul.f32 %v653, %v2467
    %v2607 = vmul.f32 %v655, %v2467
    %v2608 = vmul.f32 %v657, %v2467
    %v2609 = vmul.f32 %v659, %v2467
    %v2610 = vmul.f32 %v661, %v2467
    %v2611 = vmul.f32 %v663, %v2467
    %v2612 = vmul.f32 %v665, %v2467
    %v2613 = vmul.f32 %v667, %v2467
    %v2614 = vmul.f32 %v669, %v2467
    %v2615 = vmul.f32 %v671, %v2467
    %v2616 = vmul.f32 %v673, %v2467
    %v2617 = vmul.f32 %v675, %v2467
    %v2618 = vmul.f32 %v677, %v2467
    %v2619 = vmul.f32 %v679, %v2467
    %v2620 = vmul.f32 %v681, %v2467
    %v2621 = vmul.f32 %v683, %v2467
    %v2622 = vmul.f32 %v685, %v2467
    %v2623 = vmul.f32 %v687, %v2467
    %v2624 = vmul.f32 %v689, %v2467
    %v2625 = vmul.f32 %v691, %v2467
    %v2626 = vmul.f32 %v693, %v2467
    %v2627 = vmul.f32 %v695, %v2467
    %v2628 = vadd.f32 %v2306, %v2468
    %v2629 = vadd.f32 %v2307, %v2469
    %v2630 = vadd.f32 %v2308, %v2470
    %v2631 = vadd.f32 %v2309, %v2471
    %v2632 = vadd.f32 %v2310, %v2472
    %v2633 = vadd.f32 %v2311, %v2473
    %v2634 = vadd.f32 %v2312, %v2474
    %v2635 = vadd.f32 %v2313, %v2475
    %v2636 = vadd.f32 %v2314, %v2476
    %v2637 = vadd.f32 %v2315, %v2477
    %v2638 = vadd.f32 %v2316, %v2478
    %v2639 = vadd.f32 %v2317, %v2479
    %v2640 = vadd.f32 %v2318, %v2480
    %v2641 = vadd.f32 %v2319, %v2481
    %v2642 = vadd.f32 %v2320, %v2482
    %v2643 = vadd.f32 %v2321, %v2483
    %v2644 = vadd.f32 %v2322, %v2484
    %v2645 = vadd.f32 %v2323, %v2485
    %v2646 = vadd.f32 %v2324, %v2486
    %v2647 = vadd.f32 %v2325, %v2487
    %v2648 = vadd.f32 %v2326, %v2488
    %v2649 = vadd.f32 %v2327, %v2489
    %v2650 = vadd.f32 %v2328, %v2490
    %v2651 = vadd.f32 %v2329, %v2491
    %v2652 = vadd.f32 %v2330, %v2492
    %v2653 = vadd.f32 %v2331, %v2493
    %v2654 = vadd.f32 %v2332, %v2494
    %v2655 = vadd.f32 %v2333, %v2495
    %v2656 = vadd.f32 %v2334, %v2496
    %v2657 = vadd.f32 %v2335, %v2497
    %v2658 = vadd.f32 %v2336, %v2498
    %v2659 = vadd.f32 %v2337, %v2499
    %v2660 = vadd.f32 %v2338, %v2500
    %v2661 = vadd.f32 %v2339, %v2501
    %v2662 = vadd.f32 %v2340, %v2502
    %v2663 = vadd.f32 %v2341, %v2503
    %v2664 = vadd.f32 %v2342, %v2504
    %v2665 = vadd.f32 %v2343, %v2505
    %v2666 = vadd.f32 %v2344, %v2506
    %v2667 = vadd.f32 %v2345, %v2507
    %v2668 = vadd.f32 %v2346, %v2508
    %v2669 = vadd.f32 %v2347, %v2509
    %v2670 = vadd.f32 %v2348, %v2510
    %v2671 = vadd.f32 %v2349, %v2511
    %v2672 = vadd.f32 %v2350, %v2512
    %v2673 = vadd.f32 %v2351, %v2513
    %v2674 = vadd.f32 %v2352, %v2514
    %v2675 = vadd.f32 %v2353, %v2515
    %v2676 = vadd.f32 %v2354, %v2516
    %v2677 = vadd.f32 %v2355, %v2517
    %v2678 = vadd.f32 %v2356, %v2518
    %v2679 = vadd.f32 %v2357, %v2519
    %v2680 = vadd.f32 %v2358, %v2520
    %v2681 = vadd.f32 %v2359, %v2521
    %v2682 = vadd.f32 %v2360, %v2522
    %v2683 = vadd.f32 %v2361, %v2523
    %v2684 = vadd.f32 %v2362, %v2524
    %v2685 = vadd.f32 %v2363, %v2525
    %v2686 = vadd.f32 %v2364, %v2526
    %v2687 = vadd.f32 %v2365, %v2527
    %v2688 = vadd.f32 %v2366, %v2528
    %v2689 = vadd.f32 %v2367, %v2529
    %v2690 = vadd.f32 %v2368, %v2530
    %v2691 = vadd.f32 %v2369, %v2531
    %v2692 = vadd.f32 %v2370, %v2532
    %v2693 = vadd.f32 %v2371, %v2533
    %v2694 = vadd.f32 %v2372, %v2534
    %v2695 = vadd.f32 %v2373, %v2535
    %v2696 = vadd.f32 %v2374, %v2536
    %v2697 = vadd.f32 %v2375, %v2537
    %v2698 = vadd.f32 %v2376, %v2538
    %v2699 = vadd.f32 %v2377, %v2539
    %v2700 = vadd.f32 %v2378, %v2540
    %v2701 = vadd.f32 %v2379, %v2541
    %v2702 = vadd.f32 %v2380, %v2542
    %v2703 = vadd.f32 %v2381, %v2543
    %v2704 = vadd.f32 %v2382, %v2544
    %v2705 = vadd.f32 %v2383, %v2545
    %v2706 = vadd.f32 %v2384, %v2546
    %v2707 = vadd.f32 %v2385, %v2547
    %v2708 = vadd.f32 %v2386, %v2548
    %v2709 = vadd.f32 %v2387, %v2549
    %v2710 = vadd.f32 %v2388, %v2550
    %v2711 = vadd.f32 %v2389, %v2551
    %v2712 = vadd.f32 %v2390, %v2552
    %v2713 = vadd.f32 %v2391, %v2553
    %v2714 = vadd.f32 %v2392, %v2554
    %v2715 = vadd.f32 %v2393, %v2555
    %v2716 = vadd.f32 %v2394, %v2556
    %v2717 = vadd.f32 %v2395, %v2557
    %v2718 = vadd.f32 %v2396, %v2558
    %v2719 = vadd.f32 %v2397, %v2559
    %v2720 = vadd.f32 %v2398, %v2560
    %v2721 = vadd.f32 %v2399, %v2561
    %v2722 = vadd.f32 %v2400, %v2562
    %v2723 = vadd.f32 %v2401, %v2563
    %v2724 = vadd.f32 %v2402, %v2564
    %v2725 = vadd.f32 %v2403, %v2565
    %v2726 = vadd.f32 %v2404, %v2566
    %v2727 = vadd.f32 %v2405, %v2567
    %v2728 = vadd.f32 %v2406, %v2568
    %v2729 = vadd.f32 %v2407, %v2569
    %v2730 = vadd.f32 %v2408, %v2570
    %v2731 = vadd.f32 %v2409, %v2571
    %v2732 = vadd.f32 %v2410, %v2572
    %v2733 = vadd.f32 %v2411, %v2573
    %v2734 = vadd.f32 %v2412, %v2574
    %v2735 = vadd.f32 %v2413, %v2575
    %v2736 = vadd.f32 %v2414, %v2576
    %v2737 = vadd.f32 %v2415, %v2577
    %v2738 = vadd.f32 %v2416, %v2578
    %v2739 = vadd.f32 %v2417, %v2579
    %v2740 = vadd.f32 %v2418, %v2580
    %v2741 = vadd.f32 %v2419, %v2581
    %v2742 = vadd.f32 %v2420, %v2582
    %v2743 = vadd.f32 %v2421, %v2583
    %v2744 = vadd.f32 %v2422, %v2584
    %v2745 = vadd.f32 %v2423, %v2585
    %v2746 = vadd.f32 %v2424, %v2586
    %v2747 = vadd.f32 %v2425, %v2587
    %v2748 = vadd.f32 %v2426, %v2588
    %v2749 = vadd.f32 %v2427, %v2589
    %v2750 = vadd.f32 %v2428, %v2590
    %v2751 = vadd.f32 %v2429, %v2591
    %v2752 = vadd.f32 %v2430, %v2592
    %v2753 = vadd.f32 %v2431, %v2593
    %v2754 = vadd.f32 %v2432, %v2594
    %v2755 = vadd.f32 %v2433, %v2595
    %v2756 = vadd.f32 %v2434, %v2596
    %v2757 = vadd.f32 %v2435, %v2597
    %v2758 = vadd.f32 %v2436, %v2598
    %v2759 = vadd.f32 %v2437, %v2599
    %v2760 = vadd.f32 %v2438, %v2600
    %v2761 = vadd.f32 %v2439, %v2601
    %v2762 = vadd.f32 %v2440, %v2602
    %v2763 = vadd.f32 %v2441, %v2603
    %v2764 = vadd.f32 %v2442, %v2604
    %v2765 = vadd.f32 %v2443, %v2605
    %v2766 = vadd.f32 %v2444, %v2606
    %v2767 = vadd.f32 %v2445, %v2607
    %v2768 = vadd.f32 %v2446, %v2608
    %v2769 = vadd.f32 %v2447, %v2609
    %v2770 = vadd.f32 %v2448, %v2610
    %v2771 = vadd.f32 %v2449, %v2611
    %v2772 = vadd.f32 %v2450, %v2612
    %v2773 = vadd.f32 %v2451, %v2613
    %v2774 = vadd.f32 %v2452, %v2614
    %v2775 = vadd.f32 %v2453, %v2615
    %v2776 = vadd.f32 %v2454, %v2616
    %v2777 = vadd.f32 %v2455, %v2617
    %v2778 = vadd.f32 %v2456, %v2618
    %v2779 = vadd.f32 %v2457, %v2619
    %v2780 = vadd.f32 %v2458, %v2620
    %v2781 = vadd.f32 %v2459, %v2621
    %v2782 = vadd.f32 %v2460, %v2622
    %v2783 = vadd.f32 %v2461, %v2623
    %v2784 = vadd.f32 %v2462, %v2624
    %v2785 = vadd.f32 %v2463, %v2625
    %v2786 = vadd.f32 %v2464, %v2626
    %v2787 = vadd.f32 %v2465, %v2627
    %s2788 = sld [smem:[#allocation7 + $0x5]]
    %v2789 = vstv %s2788
    %v2790 = vmul.f32 %v697, %v2789
    %v2791 = vmul.f32 %v699, %v2789
    %v2792 = vmul.f32 %v701, %v2789
    %v2793 = vmul.f32 %v703, %v2789
    %v2794 = vmul.f32 %v705, %v2789
    %v2795 = vmul.f32 %v707, %v2789
    %v2796 = vmul.f32 %v709, %v2789
    %v2797 = vmul.f32 %v711, %v2789
    %v2798 = vmul.f32 %v713, %v2789
    %v2799 = vmul.f32 %v715, %v2789
    %v2800 = vmul.f32 %v717, %v2789
    %v2801 = vmul.f32 %v719, %v2789
    %v2802 = vmul.f32 %v721, %v2789
    %v2803 = vmul.f32 %v723, %v2789
    %v2804 = vmul.f32 %v725, %v2789
    %v2805 = vmul.f32 %v727, %v2789
    %v2806 = vmul.f32 %v729, %v2789
    %v2807 = vmul.f32 %v731, %v2789
    %v2808 = vmul.f32 %v733, %v2789
    %v2809 = vmul.f32 %v735, %v2789
    %v2810 = vmul.f32 %v737, %v2789
    %v2811 = vmul.f32 %v739, %v2789
    %v2812 = vmul.f32 %v741, %v2789
    %v2813 = vmul.f32 %v743, %v2789
    %v2814 = vmul.f32 %v745, %v2789
    %v2815 = vmul.f32 %v747, %v2789
    %v2816 = vmul.f32 %v749, %v2789
    %v2817 = vmul.f32 %v751, %v2789
    %v2818 = vmul.f32 %v753, %v2789
    %v2819 = vmul.f32 %v755, %v2789
    %v2820 = vmul.f32 %v757, %v2789
    %v2821 = vmul.f32 %v759, %v2789
    %v2822 = vmul.f32 %v761, %v2789
    %v2823 = vmul.f32 %v763, %v2789
    %v2824 = vmul.f32 %v765, %v2789
    %v2825 = vmul.f32 %v767, %v2789
    %v2826 = vmul.f32 %v769, %v2789
    %v2827 = vmul.f32 %v771, %v2789
    %v2828 = vmul.f32 %v773, %v2789
    %v2829 = vmul.f32 %v775, %v2789
    %v2830 = vmul.f32 %v777, %v2789
    %v2831 = vmul.f32 %v779, %v2789
    %v2832 = vmul.f32 %v781, %v2789
    %v2833 = vmul.f32 %v783, %v2789
    %v2834 = vmul.f32 %v785, %v2789
    %v2835 = vmul.f32 %v787, %v2789
    %v2836 = vmul.f32 %v789, %v2789
    %v2837 = vmul.f32 %v791, %v2789
    %v2838 = vmul.f32 %v793, %v2789
    %v2839 = vmul.f32 %v795, %v2789
    %v2840 = vmul.f32 %v797, %v2789
    %v2841 = vmul.f32 %v799, %v2789
    %v2842 = vmul.f32 %v801, %v2789
    %v2843 = vmul.f32 %v803, %v2789
    %v2844 = vmul.f32 %v805, %v2789
    %v2845 = vmul.f32 %v807, %v2789
    %v2846 = vmul.f32 %v809, %v2789
    %v2847 = vmul.f32 %v811, %v2789
    %v2848 = vmul.f32 %v813, %v2789
    %v2849 = vmul.f32 %v815, %v2789
    %v2850 = vmul.f32 %v817, %v2789
    %v2851 = vmul.f32 %v819, %v2789
    %v2852 = vmul.f32 %v821, %v2789
    %v2853 = vmul.f32 %v823, %v2789
    %v2854 = vmul.f32 %v825, %v2789
    %v2855 = vmul.f32 %v827, %v2789
    %v2856 = vmul.f32 %v829, %v2789
    %v2857 = vmul.f32 %v831, %v2789
    %v2858 = vmul.f32 %v833, %v2789
    %v2859 = vmul.f32 %v835, %v2789
    %v2860 = vmul.f32 %v837, %v2789
    %v2861 = vmul.f32 %v839, %v2789
    %v2862 = vmul.f32 %v841, %v2789
    %v2863 = vmul.f32 %v843, %v2789
    %v2864 = vmul.f32 %v845, %v2789
    %v2865 = vmul.f32 %v847, %v2789
    %v2866 = vmul.f32 %v849, %v2789
    %v2867 = vmul.f32 %v851, %v2789
    %v2868 = vmul.f32 %v853, %v2789
    %v2869 = vmul.f32 %v855, %v2789
    %v2870 = vmul.f32 %v857, %v2789
    %v2871 = vmul.f32 %v859, %v2789
    %v2872 = vmul.f32 %v861, %v2789
    %v2873 = vmul.f32 %v863, %v2789
    %v2874 = vmul.f32 %v865, %v2789
    %v2875 = vmul.f32 %v867, %v2789
    %v2876 = vmul.f32 %v869, %v2789
    %v2877 = vmul.f32 %v871, %v2789
    %v2878 = vmul.f32 %v873, %v2789
    %v2879 = vmul.f32 %v875, %v2789
    %v2880 = vmul.f32 %v877, %v2789
    %v2881 = vmul.f32 %v879, %v2789
    %v2882 = vmul.f32 %v881, %v2789
    %v2883 = vmul.f32 %v883, %v2789
    %v2884 = vmul.f32 %v885, %v2789
    %v2885 = vmul.f32 %v887, %v2789
    %v2886 = vmul.f32 %v889, %v2789
    %v2887 = vmul.f32 %v891, %v2789
    %v2888 = vmul.f32 %v893, %v2789
    %v2889 = vmul.f32 %v895, %v2789
    %v2890 = vmul.f32 %v897, %v2789
    %v2891 = vmul.f32 %v899, %v2789
    %v2892 = vmul.f32 %v901, %v2789
    %v2893 = vmul.f32 %v903, %v2789
    %v2894 = vmul.f32 %v905, %v2789
    %v2895 = vmul.f32 %v907, %v2789
    %v2896 = vmul.f32 %v909, %v2789
    %v2897 = vmul.f32 %v911, %v2789
    %v2898 = vmul.f32 %v913, %v2789
    %v2899 = vmul.f32 %v915, %v2789
    %v2900 = vmul.f32 %v917, %v2789
    %v2901 = vmul.f32 %v919, %v2789
    %v2902 = vmul.f32 %v921, %v2789
    %v2903 = vmul.f32 %v923, %v2789
    %v2904 = vmul.f32 %v925, %v2789
    %v2905 = vmul.f32 %v927, %v2789
    %v2906 = vmul.f32 %v929, %v2789
    %v2907 = vmul.f32 %v931, %v2789
    %v2908 = vmul.f32 %v933, %v2789
    %v2909 = vmul.f32 %v935, %v2789
    %v2910 = vmul.f32 %v937, %v2789
    %v2911 = vmul.f32 %v939, %v2789
    %v2912 = vmul.f32 %v941, %v2789
    %v2913 = vmul.f32 %v943, %v2789
    %v2914 = vmul.f32 %v945, %v2789
    %v2915 = vmul.f32 %v947, %v2789
    %v2916 = vmul.f32 %v949, %v2789
    %v2917 = vmul.f32 %v951, %v2789
    %v2918 = vmul.f32 %v953, %v2789
    %v2919 = vmul.f32 %v955, %v2789
    %v2920 = vmul.f32 %v957, %v2789
    %v2921 = vmul.f32 %v959, %v2789
    %v2922 = vmul.f32 %v961, %v2789
    %v2923 = vmul.f32 %v963, %v2789
    %v2924 = vmul.f32 %v965, %v2789
    %v2925 = vmul.f32 %v967, %v2789
    %v2926 = vmul.f32 %v969, %v2789
    %v2927 = vmul.f32 %v971, %v2789
    %v2928 = vmul.f32 %v973, %v2789
    %v2929 = vmul.f32 %v975, %v2789
    %v2930 = vmul.f32 %v977, %v2789
    %v2931 = vmul.f32 %v979, %v2789
    %v2932 = vmul.f32 %v981, %v2789
    %v2933 = vmul.f32 %v983, %v2789
    %v2934 = vmul.f32 %v985, %v2789
    %v2935 = vmul.f32 %v987, %v2789
    %v2936 = vmul.f32 %v989, %v2789
    %v2937 = vmul.f32 %v991, %v2789
    %v2938 = vmul.f32 %v993, %v2789
    %v2939 = vmul.f32 %v995, %v2789
    %v2940 = vmul.f32 %v997, %v2789
    %v2941 = vmul.f32 %v999, %v2789
    %v2942 = vmul.f32 %v1001, %v2789
    %v2943 = vmul.f32 %v1003, %v2789
    %v2944 = vmul.f32 %v1005, %v2789
    %v2945 = vmul.f32 %v1007, %v2789
    %v2946 = vmul.f32 %v1009, %v2789
    %v2947 = vmul.f32 %v1011, %v2789
    %v2948 = vmul.f32 %v1013, %v2789
    %v2949 = vmul.f32 %v1015, %v2789
    %v2950 = vadd.f32 %v2628, %v2790
    %v2951 = vadd.f32 %v2629, %v2791
    %v2952 = vadd.f32 %v2630, %v2792
    %v2953 = vadd.f32 %v2631, %v2793
    %v2954 = vadd.f32 %v2632, %v2794
    %v2955 = vadd.f32 %v2633, %v2795
    %v2956 = vadd.f32 %v2634, %v2796
    %v2957 = vadd.f32 %v2635, %v2797
    %v2958 = vadd.f32 %v2636, %v2798
    %v2959 = vadd.f32 %v2637, %v2799
    %v2960 = vadd.f32 %v2638, %v2800
    %v2961 = vadd.f32 %v2639, %v2801
    %v2962 = vadd.f32 %v2640, %v2802
    %v2963 = vadd.f32 %v2641, %v2803
    %v2964 = vadd.f32 %v2642, %v2804
    %v2965 = vadd.f32 %v2643, %v2805
    %v2966 = vadd.f32 %v2644, %v2806
    %v2967 = vadd.f32 %v2645, %v2807
    %v2968 = vadd.f32 %v2646, %v2808
    %v2969 = vadd.f32 %v2647, %v2809
    %v2970 = vadd.f32 %v2648, %v2810
    %v2971 = vadd.f32 %v2649, %v2811
    %v2972 = vadd.f32 %v2650, %v2812
    %v2973 = vadd.f32 %v2651, %v2813
    %v2974 = vadd.f32 %v2652, %v2814
    %v2975 = vadd.f32 %v2653, %v2815
    %v2976 = vadd.f32 %v2654, %v2816
    %v2977 = vadd.f32 %v2655, %v2817
    %v2978 = vadd.f32 %v2656, %v2818
    %v2979 = vadd.f32 %v2657, %v2819
    %v2980 = vadd.f32 %v2658, %v2820
    %v2981 = vadd.f32 %v2659, %v2821
    %v2982 = vadd.f32 %v2660, %v2822
    %v2983 = vadd.f32 %v2661, %v2823
    %v2984 = vadd.f32 %v2662, %v2824
    %v2985 = vadd.f32 %v2663, %v2825
    %v2986 = vadd.f32 %v2664, %v2826
    %v2987 = vadd.f32 %v2665, %v2827
    %v2988 = vadd.f32 %v2666, %v2828
    %v2989 = vadd.f32 %v2667, %v2829
    %v2990 = vadd.f32 %v2668, %v2830
    %v2991 = vadd.f32 %v2669, %v2831
    %v2992 = vadd.f32 %v2670, %v2832
    %v2993 = vadd.f32 %v2671, %v2833
    %v2994 = vadd.f32 %v2672, %v2834
    %v2995 = vadd.f32 %v2673, %v2835
    %v2996 = vadd.f32 %v2674, %v2836
    %v2997 = vadd.f32 %v2675, %v2837
    %v2998 = vadd.f32 %v2676, %v2838
    %v2999 = vadd.f32 %v2677, %v2839
    %v3000 = vadd.f32 %v2678, %v2840
    %v3001 = vadd.f32 %v2679, %v2841
    %v3002 = vadd.f32 %v2680, %v2842
    %v3003 = vadd.f32 %v2681, %v2843
    %v3004 = vadd.f32 %v2682, %v2844
    %v3005 = vadd.f32 %v2683, %v2845
    %v3006 = vadd.f32 %v2684, %v2846
    %v3007 = vadd.f32 %v2685, %v2847
    %v3008 = vadd.f32 %v2686, %v2848
    %v3009 = vadd.f32 %v2687, %v2849
    %v3010 = vadd.f32 %v2688, %v2850
    %v3011 = vadd.f32 %v2689, %v2851
    %v3012 = vadd.f32 %v2690, %v2852
    %v3013 = vadd.f32 %v2691, %v2853
    %v3014 = vadd.f32 %v2692, %v2854
    %v3015 = vadd.f32 %v2693, %v2855
    %v3016 = vadd.f32 %v2694, %v2856
    %v3017 = vadd.f32 %v2695, %v2857
    %v3018 = vadd.f32 %v2696, %v2858
    %v3019 = vadd.f32 %v2697, %v2859
    %v3020 = vadd.f32 %v2698, %v2860
    %v3021 = vadd.f32 %v2699, %v2861
    %v3022 = vadd.f32 %v2700, %v2862
    %v3023 = vadd.f32 %v2701, %v2863
    %v3024 = vadd.f32 %v2702, %v2864
    %v3025 = vadd.f32 %v2703, %v2865
    %v3026 = vadd.f32 %v2704, %v2866
    %v3027 = vadd.f32 %v2705, %v2867
    %v3028 = vadd.f32 %v2706, %v2868
    %v3029 = vadd.f32 %v2707, %v2869
    %v3030 = vadd.f32 %v2708, %v2870
    %v3031 = vadd.f32 %v2709, %v2871
    %v3032 = vadd.f32 %v2710, %v2872
    %v3033 = vadd.f32 %v2711, %v2873
    %v3034 = vadd.f32 %v2712, %v2874
    %v3035 = vadd.f32 %v2713, %v2875
    %v3036 = vadd.f32 %v2714, %v2876
    %v3037 = vadd.f32 %v2715, %v2877
    %v3038 = vadd.f32 %v2716, %v2878
    %v3039 = vadd.f32 %v2717, %v2879
    %v3040 = vadd.f32 %v2718, %v2880
    %v3041 = vadd.f32 %v2719, %v2881
    %v3042 = vadd.f32 %v2720, %v2882
    %v3043 = vadd.f32 %v2721, %v2883
    %v3044 = vadd.f32 %v2722, %v2884
    %v3045 = vadd.f32 %v2723, %v2885
    %v3046 = vadd.f32 %v2724, %v2886
    %v3047 = vadd.f32 %v2725, %v2887
    %v3048 = vadd.f32 %v2726, %v2888
    %v3049 = vadd.f32 %v2727, %v2889
    %v3050 = vadd.f32 %v2728, %v2890
    %v3051 = vadd.f32 %v2729, %v2891
    %v3052 = vadd.f32 %v2730, %v2892
    %v3053 = vadd.f32 %v2731, %v2893
    %v3054 = vadd.f32 %v2732, %v2894
    %v3055 = vadd.f32 %v2733, %v2895
    %v3056 = vadd.f32 %v2734, %v2896
    %v3057 = vadd.f32 %v2735, %v2897
    %v3058 = vadd.f32 %v2736, %v2898
    %v3059 = vadd.f32 %v2737, %v2899
    %v3060 = vadd.f32 %v2738, %v2900
    %v3061 = vadd.f32 %v2739, %v2901
    %v3062 = vadd.f32 %v2740, %v2902
    %v3063 = vadd.f32 %v2741, %v2903
    %v3064 = vadd.f32 %v2742, %v2904
    %v3065 = vadd.f32 %v2743, %v2905
    %v3066 = vadd.f32 %v2744, %v2906
    %v3067 = vadd.f32 %v2745, %v2907
    %v3068 = vadd.f32 %v2746, %v2908
    %v3069 = vadd.f32 %v2747, %v2909
    %v3070 = vadd.f32 %v2748, %v2910
    %v3071 = vadd.f32 %v2749, %v2911
    %v3072 = vadd.f32 %v2750, %v2912
    %v3073 = vadd.f32 %v2751, %v2913
    %v3074 = vadd.f32 %v2752, %v2914
    %v3075 = vadd.f32 %v2753, %v2915
    %v3076 = vadd.f32 %v2754, %v2916
    %v3077 = vadd.f32 %v2755, %v2917
    %v3078 = vadd.f32 %v2756, %v2918
    %v3079 = vadd.f32 %v2757, %v2919
    %v3080 = vadd.f32 %v2758, %v2920
    %v3081 = vadd.f32 %v2759, %v2921
    %v3082 = vadd.f32 %v2760, %v2922
    %v3083 = vadd.f32 %v2761, %v2923
    %v3084 = vadd.f32 %v2762, %v2924
    %v3085 = vadd.f32 %v2763, %v2925
    %v3086 = vadd.f32 %v2764, %v2926
    %v3087 = vadd.f32 %v2765, %v2927
    %v3088 = vadd.f32 %v2766, %v2928
    %v3089 = vadd.f32 %v2767, %v2929
    %v3090 = vadd.f32 %v2768, %v2930
    %v3091 = vadd.f32 %v2769, %v2931
    %v3092 = vadd.f32 %v2770, %v2932
    %v3093 = vadd.f32 %v2771, %v2933
    %v3094 = vadd.f32 %v2772, %v2934
    %v3095 = vadd.f32 %v2773, %v2935
    %v3096 = vadd.f32 %v2774, %v2936
    %v3097 = vadd.f32 %v2775, %v2937
    %v3098 = vadd.f32 %v2776, %v2938
    %v3099 = vadd.f32 %v2777, %v2939
    %v3100 = vadd.f32 %v2778, %v2940
    %v3101 = vadd.f32 %v2779, %v2941
    %v3102 = vadd.f32 %v2780, %v2942
    %v3103 = vadd.f32 %v2781, %v2943
    %v3104 = vadd.f32 %v2782, %v2944
    %v3105 = vadd.f32 %v2783, %v2945
    %v3106 = vadd.f32 %v2784, %v2946
    %v3107 = vadd.f32 %v2785, %v2947
    %v3108 = vadd.f32 %v2786, %v2948
    %v3109 = vadd.f32 %v2787, %v2949
    %s3110 = sld [smem:[#allocation8 + $0x1]]
    %v3111 = vstv %s3110
    %v3112 = vadd.f32 %v2950, %v3111
    %v3113 = vadd.f32 %v2951, %v3111
    %v3114 = vadd.f32 %v2952, %v3111
    %v3115 = vadd.f32 %v2953, %v3111
    %v3116 = vadd.f32 %v2954, %v3111
    %v3117 = vadd.f32 %v2955, %v3111
    %v3118 = vadd.f32 %v2956, %v3111
    %v3119 = vadd.f32 %v2957, %v3111
    %v3120 = vadd.f32 %v2958, %v3111
    %v3121 = vadd.f32 %v2959, %v3111
    %v3122 = vadd.f32 %v2960, %v3111
    %v3123 = vadd.f32 %v2961, %v3111
    %v3124 = vadd.f32 %v2962, %v3111
    %v3125 = vadd.f32 %v2963, %v3111
    %v3126 = vadd.f32 %v2964, %v3111
    %v3127 = vadd.f32 %v2965, %v3111
    %v3128 = vadd.f32 %v2966, %v3111
    %v3129 = vadd.f32 %v2967, %v3111
    %v3130 = vadd.f32 %v2968, %v3111
    %v3131 = vadd.f32 %v2969, %v3111
    %v3132 = vadd.f32 %v2970, %v3111
    %v3133 = vadd.f32 %v2971, %v3111
    %v3134 = vadd.f32 %v2972, %v3111
    %v3135 = vadd.f32 %v2973, %v3111
    %v3136 = vadd.f32 %v2974, %v3111
    %v3137 = vadd.f32 %v2975, %v3111
    %v3138 = vadd.f32 %v2976, %v3111
    %v3139 = vadd.f32 %v2977, %v3111
    %v3140 = vadd.f32 %v2978, %v3111
    %v3141 = vadd.f32 %v2979, %v3111
    %v3142 = vadd.f32 %v2980, %v3111
    %v3143 = vadd.f32 %v2981, %v3111
    %v3144 = vadd.f32 %v2982, %v3111
    %v3145 = vadd.f32 %v2983, %v3111
    %v3146 = vadd.f32 %v2984, %v3111
    %v3147 = vadd.f32 %v2985, %v3111
    %v3148 = vadd.f32 %v2986, %v3111
    %v3149 = vadd.f32 %v2987, %v3111
    %v3150 = vadd.f32 %v2988, %v3111
    %v3151 = vadd.f32 %v2989, %v3111
    %v3152 = vadd.f32 %v2990, %v3111
    %v3153 = vadd.f32 %v2991, %v3111
    %v3154 = vadd.f32 %v2992, %v3111
    %v3155 = vadd.f32 %v2993, %v3111
    %v3156 = vadd.f32 %v2994, %v3111
    %v3157 = vadd.f32 %v2995, %v3111
    %v3158 = vadd.f32 %v2996, %v3111
    %v3159 = vadd.f32 %v2997, %v3111
    %v3160 = vadd.f32 %v2998, %v3111
    %v3161 = vadd.f32 %v2999, %v3111
    %v3162 = vadd.f32 %v3000, %v3111
    %v3163 = vadd.f32 %v3001, %v3111
    %v3164 = vadd.f32 %v3002, %v3111
    %v3165 = vadd.f32 %v3003, %v3111
    %v3166 = vadd.f32 %v3004, %v3111
    %v3167 = vadd.f32 %v3005, %v3111
    %v3168 = vadd.f32 %v3006, %v3111
    %v3169 = vadd.f32 %v3007, %v3111
    %v3170 = vadd.f32 %v3008, %v3111
    %v3171 = vadd.f32 %v3009, %v3111
    %v3172 = vadd.f32 %v3010, %v3111
    %v3173 = vadd.f32 %v3011, %v3111
    %v3174 = vadd.f32 %v3012, %v3111
    %v3175 = vadd.f32 %v3013, %v3111
    %v3176 = vadd.f32 %v3014, %v3111
    %v3177 = vadd.f32 %v3015, %v3111
    %v3178 = vadd.f32 %v3016, %v3111
    %v3179 = vadd.f32 %v3017, %v3111
    %v3180 = vadd.f32 %v3018, %v3111
    %v3181 = vadd.f32 %v3019, %v3111
    %v3182 = vadd.f32 %v3020, %v3111
    %v3183 = vadd.f32 %v3021, %v3111
    %v3184 = vadd.f32 %v3022, %v3111
    %v3185 = vadd.f32 %v3023, %v3111
    %v3186 = vadd.f32 %v3024, %v3111
    %v3187 = vadd.f32 %v3025, %v3111
    %v3188 = vadd.f32 %v3026, %v3111
    %v3189 = vadd.f32 %v3027, %v3111
    %v3190 = vadd.f32 %v3028, %v3111
    %v3191 = vadd.f32 %v3029, %v3111
    %v3192 = vadd.f32 %v3030, %v3111
    %v3193 = vadd.f32 %v3031, %v3111
    %v3194 = vadd.f32 %v3032, %v3111
    %v3195 = vadd.f32 %v3033, %v3111
    %v3196 = vadd.f32 %v3034, %v3111
    %v3197 = vadd.f32 %v3035, %v3111
    %v3198 = vadd.f32 %v3036, %v3111
    %v3199 = vadd.f32 %v3037, %v3111
    %v3200 = vadd.f32 %v3038, %v3111
    %v3201 = vadd.f32 %v3039, %v3111
    %v3202 = vadd.f32 %v3040, %v3111
    %v3203 = vadd.f32 %v3041, %v3111
    %v3204 = vadd.f32 %v3042, %v3111
    %v3205 = vadd.f32 %v3043, %v3111
    %v3206 = vadd.f32 %v3044, %v3111
    %v3207 = vadd.f32 %v3045, %v3111
    %v3208 = vadd.f32 %v3046, %v3111
    %v3209 = vadd.f32 %v3047, %v3111
    %v3210 = vadd.f32 %v3048, %v3111
    %v3211 = vadd.f32 %v3049, %v3111
    %v3212 = vadd.f32 %v3050, %v3111
    %v3213 = vadd.f32 %v3051, %v3111
    %v3214 = vadd.f32 %v3052, %v3111
    %v3215 = vadd.f32 %v3053, %v3111
    %v3216 = vadd.f32 %v3054, %v3111
    %v3217 = vadd.f32 %v3055, %v3111
    %v3218 = vadd.f32 %v3056, %v3111
    %v3219 = vadd.f32 %v3057, %v3111
    %v3220 = vadd.f32 %v3058, %v3111
    %v3221 = vadd.f32 %v3059, %v3111
    %v3222 = vadd.f32 %v3060, %v3111
    %v3223 = vadd.f32 %v3061, %v3111
    %v3224 = vadd.f32 %v3062, %v3111
    %v3225 = vadd.f32 %v3063, %v3111
    %v3226 = vadd.f32 %v3064, %v3111
    %v3227 = vadd.f32 %v3065, %v3111
    %v3228 = vadd.f32 %v3066, %v3111
    %v3229 = vadd.f32 %v3067, %v3111
    %v3230 = vadd.f32 %v3068, %v3111
    %v3231 = vadd.f32 %v3069, %v3111
    %v3232 = vadd.f32 %v3070, %v3111
    %v3233 = vadd.f32 %v3071, %v3111
    %v3234 = vadd.f32 %v3072, %v3111
    %v3235 = vadd.f32 %v3073, %v3111
    %v3236 = vadd.f32 %v3074, %v3111
    %v3237 = vadd.f32 %v3075, %v3111
    %v3238 = vadd.f32 %v3076, %v3111
    %v3239 = vadd.f32 %v3077, %v3111
    %v3240 = vadd.f32 %v3078, %v3111
    %v3241 = vadd.f32 %v3079, %v3111
    %v3242 = vadd.f32 %v3080, %v3111
    %v3243 = vadd.f32 %v3081, %v3111
    %v3244 = vadd.f32 %v3082, %v3111
    %v3245 = vadd.f32 %v3083, %v3111
    %v3246 = vadd.f32 %v3084, %v3111
    %v3247 = vadd.f32 %v3085, %v3111
    %v3248 = vadd.f32 %v3086, %v3111
    %v3249 = vadd.f32 %v3087, %v3111
    %v3250 = vadd.f32 %v3088, %v3111
    %v3251 = vadd.f32 %v3089, %v3111
    %v3252 = vadd.f32 %v3090, %v3111
    %v3253 = vadd.f32 %v3091, %v3111
    %v3254 = vadd.f32 %v3092, %v3111
    %v3255 = vadd.f32 %v3093, %v3111
    %v3256 = vadd.f32 %v3094, %v3111
    %v3257 = vadd.f32 %v3095, %v3111
    %v3258 = vadd.f32 %v3096, %v3111
    %v3259 = vadd.f32 %v3097, %v3111
    %v3260 = vadd.f32 %v3098, %v3111
    %v3261 = vadd.f32 %v3099, %v3111
    %v3262 = vadd.f32 %v3100, %v3111
    %v3263 = vadd.f32 %v3101, %v3111
    %v3264 = vadd.f32 %v3102, %v3111
    %v3265 = vadd.f32 %v3103, %v3111
    %v3266 = vadd.f32 %v3104, %v3111
    %v3267 = vadd.f32 %v3105, %v3111
    %v3268 = vadd.f32 %v3106, %v3111
    %v3269 = vadd.f32 %v3107, %v3111
    %v3270 = vadd.f32 %v3108, %v3111
    %v3271 = vadd.f32 %v3109, %v3111
    %v3272 = vmax.f32 %v3112, 0.0
    %v3273 = vmax.f32 %v3113, 0.0
    %v3274 = vmax.f32 %v3114, 0.0
    %v3275 = vmax.f32 %v3115, 0.0
    %v3276 = vmax.f32 %v3116, 0.0
    %v3277 = vmax.f32 %v3117, 0.0
    %v3278 = vmax.f32 %v3118, 0.0
    %v3279 = vmax.f32 %v3119, 0.0
    %v3280 = vmax.f32 %v3120, 0.0
    %v3281 = vmax.f32 %v3121, 0.0
    %v3282 = vmax.f32 %v3122, 0.0
    %v3283 = vmax.f32 %v3123, 0.0
    %v3284 = vmax.f32 %v3124, 0.0
    %v3285 = vmax.f32 %v3125, 0.0
    %v3286 = vmax.f32 %v3126, 0.0
    %v3287 = vmax.f32 %v3127, 0.0
    %v3288 = vmax.f32 %v3128, 0.0
    %v3289 = vmax.f32 %v3129, 0.0
    %v3290 = vmax.f32 %v3130, 0.0
    %v3291 = vmax.f32 %v3131, 0.0
    %v3292 = vmax.f32 %v3132, 0.0
    %v3293 = vmax.f32 %v3133, 0.0
    %v3294 = vmax.f32 %v3134, 0.0
    %v3295 = vmax.f32 %v3135, 0.0
    %v3296 = vmax.f32 %v3136, 0.0
    %v3297 = vmax.f32 %v3137, 0.0
    %v3298 = vmax.f32 %v3138, 0.0
    %v3299 = vmax.f32 %v3139, 0.0
    %v3300 = vmax.f32 %v3140, 0.0
    %v3301 = vmax.f32 %v3141, 0.0
    %v3302 = vmax.f32 %v3142, 0.0
    %v3303 = vmax.f32 %v3143, 0.0
    %v3304 = vmax.f32 %v3144, 0.0
    %v3305 = vmax.f32 %v3145, 0.0
    %v3306 = vmax.f32 %v3146, 0.0
    %v3307 = vmax.f32 %v3147, 0.0
    %v3308 = vmax.f32 %v3148, 0.0
    %v3309 = vmax.f32 %v3149, 0.0
    %v3310 = vmax.f32 %v3150, 0.0
    %v3311 = vmax.f32 %v3151, 0.0
    %v3312 = vmax.f32 %v3152, 0.0
    %v3313 = vmax.f32 %v3153, 0.0
    %v3314 = vmax.f32 %v3154, 0.0
    %v3315 = vmax.f32 %v3155, 0.0
    %v3316 = vmax.f32 %v3156, 0.0
    %v3317 = vmax.f32 %v3157, 0.0
    %v3318 = vmax.f32 %v3158, 0.0
    %v3319 = vmax.f32 %v3159, 0.0
    %v3320 = vmax.f32 %v3160, 0.0
    %v3321 = vmax.f32 %v3161, 0.0
    %v3322 = vmax.f32 %v3162, 0.0
    %v3323 = vmax.f32 %v3163, 0.0
    %v3324 = vmax.f32 %v3164, 0.0
    %v3325 = vmax.f32 %v3165, 0.0
    %v3326 = vmax.f32 %v3166, 0.0
    %v3327 = vmax.f32 %v3167, 0.0
    %v3328 = vmax.f32 %v3168, 0.0
    %v3329 = vmax.f32 %v3169, 0.0
    %v3330 = vmax.f32 %v3170, 0.0
    %v3331 = vmax.f32 %v3171, 0.0
    %v3332 = vmax.f32 %v3172, 0.0
    %v3333 = vmax.f32 %v3173, 0.0
    %v3334 = vmax.f32 %v3174, 0.0
    %v3335 = vmax.f32 %v3175, 0.0
    %v3336 = vmax.f32 %v3176, 0.0
    %v3337 = vmax.f32 %v3177, 0.0
    %v3338 = vmax.f32 %v3178, 0.0
    %v3339 = vmax.f32 %v3179, 0.0
    %v3340 = vmax.f32 %v3180, 0.0
    %v3341 = vmax.f32 %v3181, 0.0
    %v3342 = vmax.f32 %v3182, 0.0
    %v3343 = vmax.f32 %v3183, 0.0
    %v3344 = vmax.f32 %v3184, 0.0
    %v3345 = vmax.f32 %v3185, 0.0
    %v3346 = vmax.f32 %v3186, 0.0
    %v3347 = vmax.f32 %v3187, 0.0
    %v3348 = vmax.f32 %v3188, 0.0
    %v3349 = vmax.f32 %v3189, 0.0
    %v3350 = vmax.f32 %v3190, 0.0
    %v3351 = vmax.f32 %v3191, 0.0
    %v3352 = vmax.f32 %v3192, 0.0
    %v3353 = vmax.f32 %v3193, 0.0
    %v3354 = vmax.f32 %v3194, 0.0
    %v3355 = vmax.f32 %v3195, 0.0
    %v3356 = vmax.f32 %v3196, 0.0
    %v3357 = vmax.f32 %v3197, 0.0
    %v3358 = vmax.f32 %v3198, 0.0
    %v3359 = vmax.f32 %v3199, 0.0
    %v3360 = vmax.f32 %v3200, 0.0
    %v3361 = vmax.f32 %v3201, 0.0
    %v3362 = vmax.f32 %v3202, 0.0
    %v3363 = vmax.f32 %v3203, 0.0
    %v3364 = vmax.f32 %v3204, 0.0
    %v3365 = vmax.f32 %v3205, 0.0
    %v3366 = vmax.f32 %v3206, 0.0
    %v3367 = vmax.f32 %v3207, 0.0
    %v3368 = vmax.f32 %v3208, 0.0
    %v3369 = vmax.f32 %v3209, 0.0
    %v3370 = vmax.f32 %v3210, 0.0
    %v3371 = vmax.f32 %v3211, 0.0
    %v3372 = vmax.f32 %v3212, 0.0
    %v3373 = vmax.f32 %v3213, 0.0
    %v3374 = vmax.f32 %v3214, 0.0
    %v3375 = vmax.f32 %v3215, 0.0
    %v3376 = vmax.f32 %v3216, 0.0
    %v3377 = vmax.f32 %v3217, 0.0
    %v3378 = vmax.f32 %v3218, 0.0
    %v3379 = vmax.f32 %v3219, 0.0
    %v3380 = vmax.f32 %v3220, 0.0
    %v3381 = vmax.f32 %v3221, 0.0
    %v3382 = vmax.f32 %v3222, 0.0
    %v3383 = vmax.f32 %v3223, 0.0
    %v3384 = vmax.f32 %v3224, 0.0
    %v3385 = vmax.f32 %v3225, 0.0
    %v3386 = vmax.f32 %v3226, 0.0
    %v3387 = vmax.f32 %v3227, 0.0
    %v3388 = vmax.f32 %v3228, 0.0
    %v3389 = vmax.f32 %v3229, 0.0
    %v3390 = vmax.f32 %v3230, 0.0
    %v3391 = vmax.f32 %v3231, 0.0
    %v3392 = vmax.f32 %v3232, 0.0
    %v3393 = vmax.f32 %v3233, 0.0
    %v3394 = vmax.f32 %v3234, 0.0
    %v3395 = vmax.f32 %v3235, 0.0
    %v3396 = vmax.f32 %v3236, 0.0
    %v3397 = vmax.f32 %v3237, 0.0
    %v3398 = vmax.f32 %v3238, 0.0
    %v3399 = vmax.f32 %v3239, 0.0
    %v3400 = vmax.f32 %v3240, 0.0
    %v3401 = vmax.f32 %v3241, 0.0
    %v3402 = vmax.f32 %v3242, 0.0
    %v3403 = vmax.f32 %v3243, 0.0
    %v3404 = vmax.f32 %v3244, 0.0
    %v3405 = vmax.f32 %v3245, 0.0
    %v3406 = vmax.f32 %v3246, 0.0
    %v3407 = vmax.f32 %v3247, 0.0
    %v3408 = vmax.f32 %v3248, 0.0
    %v3409 = vmax.f32 %v3249, 0.0
    %v3410 = vmax.f32 %v3250, 0.0
    %v3411 = vmax.f32 %v3251, 0.0
    %v3412 = vmax.f32 %v3252, 0.0
    %v3413 = vmax.f32 %v3253, 0.0
    %v3414 = vmax.f32 %v3254, 0.0
    %v3415 = vmax.f32 %v3255, 0.0
    %v3416 = vmax.f32 %v3256, 0.0
    %v3417 = vmax.f32 %v3257, 0.0
    %v3418 = vmax.f32 %v3258, 0.0
    %v3419 = vmax.f32 %v3259, 0.0
    %v3420 = vmax.f32 %v3260, 0.0
    %v3421 = vmax.f32 %v3261, 0.0
    %v3422 = vmax.f32 %v3262, 0.0
    %v3423 = vmax.f32 %v3263, 0.0
    %v3424 = vmax.f32 %v3264, 0.0
    %v3425 = vmax.f32 %v3265, 0.0
    %v3426 = vmax.f32 %v3266, 0.0
    %v3427 = vmax.f32 %v3267, 0.0
    %v3428 = vmax.f32 %v3268, 0.0
    %v3429 = vmax.f32 %v3269, 0.0
    %v3430 = vmax.f32 %v3270, 0.0
    %v3431 = vmax.f32 %v3271, 0.0
    %v3432 = vmax.f32 %v2176, %v3272
    %v3433 = vmax.f32 %v2177, %v3273
    %v3434 = vmax.f32 %v2178, %v3274
    %v3435 = vmax.f32 %v2179, %v3275
    %v3436 = vmax.f32 %v2180, %v3276
    %v3437 = vmax.f32 %v2181, %v3277
    %v3438 = vmax.f32 %v2182, %v3278
    %v3439 = vmax.f32 %v2183, %v3279
    %v3440 = vmax.f32 %v2184, %v3280
    %v3441 = vmax.f32 %v2185, %v3281
    %v3442 = vmax.f32 %v2186, %v3282
    %v3443 = vmax.f32 %v2187, %v3283
    %v3444 = vmax.f32 %v2188, %v3284
    %v3445 = vmax.f32 %v2189, %v3285
    %v3446 = vmax.f32 %v2190, %v3286
    %v3447 = vmax.f32 %v2191, %v3287
    %v3448 = vmax.f32 %v2192, %v3288
    %v3449 = vmax.f32 %v2193, %v3289
    %v3450 = vmax.f32 %v2194, %v3290
    %v3451 = vmax.f32 %v2195, %v3291
    %v3452 = vmax.f32 %v2196, %v3292
    %v3453 = vmax.f32 %v2197, %v3293
    %v3454 = vmax.f32 %v2198, %v3294
    %v3455 = vmax.f32 %v2199, %v3295
    %v3456 = vmax.f32 %v2200, %v3296
    %v3457 = vmax.f32 %v2201, %v3297
    %v3458 = vmax.f32 %v2202, %v3298
    %v3459 = vmax.f32 %v2203, %v3299
    %v3460 = vmax.f32 %v2204, %v3300
    %v3461 = vmax.f32 %v2205, %v3301
    %v3462 = vmax.f32 %v2206, %v3302
    %v3463 = vmax.f32 %v2207, %v3303
    %v3464 = vmax.f32 %v3432, %v3304
    %v3465 = vmax.f32 %v3433, %v3305
    %v3466 = vmax.f32 %v3434, %v3306
    %v3467 = vmax.f32 %v3435, %v3307
    %v3468 = vmax.f32 %v3436, %v3308
    %v3469 = vmax.f32 %v3437, %v3309
    %v3470 = vmax.f32 %v3438, %v3310
    %v3471 = vmax.f32 %v3439, %v3311
    %v3472 = vmax.f32 %v3440, %v3312
    %v3473 = vmax.f32 %v3441, %v3313
    %v3474 = vmax.f32 %v3442, %v3314
    %v3475 = vmax.f32 %v3443, %v3315
    %v3476 = vmax.f32 %v3444, %v3316
    %v3477 = vmax.f32 %v3445, %v3317
    %v3478 = vmax.f32 %v3446, %v3318
    %v3479 = vmax.f32 %v3447, %v3319
    %v3480 = vmax.f32 %v3448, %v3320
    %v3481 = vmax.f32 %v3449, %v3321
    %v3482 = vmax.f32 %v3450, %v3322
    %v3483 = vmax.f32 %v3451, %v3323
    %v3484 = vmax.f32 %v3452, %v3324
    %v3485 = vmax.f32 %v3453, %v3325
    %v3486 = vmax.f32 %v3454, %v3326
    %v3487 = vmax.f32 %v3455, %v3327
    %v3488 = vmax.f32 %v3456, %v3328
    %v3489 = vmax.f32 %v3457, %v3329
    %v3490 = vmax.f32 %v3458, %v3330
    %v3491 = vmax.f32 %v3459, %v3331
    %v3492 = vmax.f32 %v3460, %v3332
    %v3493 = vmax.f32 %v3461, %v3333
    %v3494 = vmax.f32 %v3462, %v3334
    %v3495 = vmax.f32 %v3463, %v3335
    %v3496 = vmax.f32 %v2272, %v3336
    %v3497 = vmax.f32 %v2273, %v3337
    %v3498 = vmax.f32 %v2274, %v3338
    %v3499 = vmax.f32 %v2275, %v3339
    %v3500 = vmax.f32 %v2276, %v3340
    %v3501 = vmax.f32 %v2277, %v3341
    %v3502 = vmax.f32 %v2278, %v3342
    %v3503 = vmax.f32 %v2279, %v3343
    %v3504 = vmax.f32 %v2280, %v3344
    %v3505 = vmax.f32 %v2281, %v3345
    %v3506 = vmax.f32 %v2282, %v3346
    %v3507 = vmax.f32 %v2283, %v3347
    %v3508 = vmax.f32 %v2284, %v3348
    %v3509 = vmax.f32 %v2285, %v3349
    %v3510 = vmax.f32 %v2286, %v3350
    %v3511 = vmax.f32 %v2287, %v3351
    %v3512 = vmax.f32 %v2288, %v3352
    %v3513 = vmax.f32 %v2289, %v3353
    %v3514 = vmax.f32 %v2290, %v3354
    %v3515 = vmax.f32 %v2291, %v3355
    %v3516 = vmax.f32 %v2292, %v3356
    %v3517 = vmax.f32 %v2293, %v3357
    %v3518 = vmax.f32 %v2294, %v3358
    %v3519 = vmax.f32 %v2295, %v3359
    %v3520 = vmax.f32 %v2296, %v3360
    %v3521 = vmax.f32 %v2297, %v3361
    %v3522 = vmax.f32 %v2298, %v3362
    %v3523 = vmax.f32 %v2299, %v3363
    %v3524 = vmax.f32 %v2300, %v3364
    %v3525 = vmax.f32 %v2301, %v3365
    %v3526 = vmax.f32 %v2302, %v3366
    %v3527 = vmax.f32 %v2303, %v3367
    %v3528 = vmax.f32 %v3496, %v3368
    %v3529 = vmax.f32 %v3497, %v3369
    %v3530 = vmax.f32 %v3498, %v3370
    %v3531 = vmax.f32 %v3499, %v3371
    %v3532 = vmax.f32 %v3500, %v3372
    %v3533 = vmax.f32 %v3501, %v3373
    %v3534 = vmax.f32 %v3502, %v3374
    %v3535 = vmax.f32 %v3503, %v3375
    %v3536 = vmax.f32 %v3504, %v3376
    %v3537 = vmax.f32 %v3505, %v3377
    %v3538 = vmax.f32 %v3506, %v3378
    %v3539 = vmax.f32 %v3507, %v3379
    %v3540 = vmax.f32 %v3508, %v3380
    %v3541 = vmax.f32 %v3509, %v3381
    %v3542 = vmax.f32 %v3510, %v3382
    %v3543 = vmax.f32 %v3511, %v3383
    %v3544 = vmax.f32 %v3512, %v3384
    %v3545 = vmax.f32 %v3513, %v3385
    %v3546 = vmax.f32 %v3514, %v3386
    %v3547 = vmax.f32 %v3515, %v3387
    %v3548 = vmax.f32 %v3516, %v3388
    %v3549 = vmax.f32 %v3517, %v3389
    %v3550 = vmax.f32 %v3518, %v3390
    %v3551 = vmax.f32 %v3519, %v3391
    %v3552 = vmax.f32 %v3520, %v3392
    %v3553 = vmax.f32 %v3521, %v3393
    %v3554 = vmax.f32 %v3522, %v3394
    %v3555 = vmax.f32 %v3523, %v3395
    %v3556 = vmax.f32 %v3524, %v3396
    %v3557 = vmax.f32 %v3525, %v3397
    %v3558 = vmax.f32 %v3526, %v3398
    %v3559 = vmax.f32 %v3527, %v3399
    %v3560 = vmax.f32 %v3528, %v3400
    %v3561 = vmax.f32 %v3529, %v3401
    %v3562 = vmax.f32 %v3530, %v3402
    %v3563 = vmax.f32 %v3531, %v3403
    %v3564 = vmax.f32 %v3532, %v3404
    %v3565 = vmax.f32 %v3533, %v3405
    %v3566 = vmax.f32 %v3534, %v3406
    %v3567 = vmax.f32 %v3535, %v3407
    %v3568 = vmax.f32 %v3536, %v3408
    %v3569 = vmax.f32 %v3537, %v3409
    %v3570 = vmax.f32 %v3538, %v3410
    %v3571 = vmax.f32 %v3539, %v3411
    %v3572 = vmax.f32 %v3540, %v3412
    %v3573 = vmax.f32 %v3541, %v3413
    %v3574 = vmax.f32 %v3542, %v3414
    %v3575 = vmax.f32 %v3543, %v3415
    %v3576 = vmax.f32 %v3544, %v3416
    %v3577 = vmax.f32 %v3545, %v3417
    %v3578 = vmax.f32 %v3546, %v3418
    %v3579 = vmax.f32 %v3547, %v3419
    %v3580 = vmax.f32 %v3548, %v3420
    %v3581 = vmax.f32 %v3549, %v3421
    %v3582 = vmax.f32 %v3550, %v3422
    %v3583 = vmax.f32 %v3551, %v3423
    %v3584 = vmax.f32 %v3552, %v3424
    %v3585 = vmax.f32 %v3553, %v3425
    %v3586 = vmax.f32 %v3554, %v3426
    %v3587 = vmax.f32 %v3555, %v3427
    %v3588 = vmax.f32 %v3556, %v3428
    %v3589 = vmax.f32 %v3557, %v3429
    %v3590 = vmax.f32 %v3558, %v3430
    %v3591 = vmax.f32 %v3559, %v3431
    %s3592 = sld [smem:[#allocation7 + $0x6]]
    %v3593 = vstv %s3592
    %v3594 = vmul.f32 %v216, %v3593
    %v3595 = vmul.f32 %v217, %v3593
    %v3596 = vmul.f32 %v218, %v3593
    %v3597 = vmul.f32 %v219, %v3593
    %v3598 = vmul.f32 %v220, %v3593
    %v3599 = vmul.f32 %v221, %v3593
    %v3600 = vmul.f32 %v222, %v3593
    %v3601 = vmul.f32 %v223, %v3593
    %v3602 = vmul.f32 %v224, %v3593
    %v3603 = vmul.f32 %v225, %v3593
    %v3604 = vmul.f32 %v226, %v3593
    %v3605 = vmul.f32 %v227, %v3593
    %v3606 = vmul.f32 %v228, %v3593
    %v3607 = vmul.f32 %v229, %v3593
    %v3608 = vmul.f32 %v230, %v3593
    %v3609 = vmul.f32 %v231, %v3593
    %v3610 = vmul.f32 %v232, %v3593
    %v3611 = vmul.f32 %v233, %v3593
    %v3612 = vmul.f32 %v234, %v3593
    %v3613 = vmul.f32 %v235, %v3593
    %v3614 = vmul.f32 %v236, %v3593
    %v3615 = vmul.f32 %v237, %v3593
    %v3616 = vmul.f32 %v238, %v3593
    %v3617 = vmul.f32 %v239, %v3593
    %v3618 = vmul.f32 %v240, %v3593
    %v3619 = vmul.f32 %v241, %v3593
    %v3620 = vmul.f32 %v242, %v3593
    %v3621 = vmul.f32 %v243, %v3593
    %v3622 = vmul.f32 %v244, %v3593
    %v3623 = vmul.f32 %v245, %v3593
    %v3624 = vmul.f32 %v246, %v3593
    %v3625 = vmul.f32 %v247, %v3593
    %v3626 = vmul.f32 %v248, %v3593
    %v3627 = vmul.f32 %v249, %v3593
    %v3628 = vmul.f32 %v250, %v3593
    %v3629 = vmul.f32 %v251, %v3593
    %v3630 = vmul.f32 %v252, %v3593
    %v3631 = vmul.f32 %v253, %v3593
    %v3632 = vmul.f32 %v254, %v3593
    %v3633 = vmul.f32 %v255, %v3593
    %v3634 = vmul.f32 %v256, %v3593
    %v3635 = vmul.f32 %v257, %v3593
    %v3636 = vmul.f32 %v258, %v3593
    %v3637 = vmul.f32 %v259, %v3593
    %v3638 = vmul.f32 %v260, %v3593
    %v3639 = vmul.f32 %v261, %v3593
    %v3640 = vmul.f32 %v262, %v3593
    %v3641 = vmul.f32 %v263, %v3593
    %v3642 = vmul.f32 %v264, %v3593
    %v3643 = vmul.f32 %v265, %v3593
    %v3644 = vmul.f32 %v266, %v3593
    %v3645 = vmul.f32 %v267, %v3593
    %v3646 = vmul.f32 %v268, %v3593
    %v3647 = vmul.f32 %v269, %v3593
    %v3648 = vmul.f32 %v270, %v3593
    %v3649 = vmul.f32 %v271, %v3593
    %v3650 = vmul.f32 %v272, %v3593
    %v3651 = vmul.f32 %v273, %v3593
    %v3652 = vmul.f32 %v274, %v3593
    %v3653 = vmul.f32 %v275, %v3593
    %v3654 = vmul.f32 %v276, %v3593
    %v3655 = vmul.f32 %v277, %v3593
    %v3656 = vmul.f32 %v278, %v3593
    %v3657 = vmul.f32 %v279, %v3593
    %v3658 = vmul.f32 %v280, %v3593
    %v3659 = vmul.f32 %v281, %v3593
    %v3660 = vmul.f32 %v282, %v3593
    %v3661 = vmul.f32 %v283, %v3593
    %v3662 = vmul.f32 %v284, %v3593
    %v3663 = vmul.f32 %v285, %v3593
    %v3664 = vmul.f32 %v286, %v3593
    %v3665 = vmul.f32 %v287, %v3593
    %v3666 = vmul.f32 %v288, %v3593
    %v3667 = vmul.f32 %v289, %v3593
    %v3668 = vmul.f32 %v290, %v3593
    %v3669 = vmul.f32 %v291, %v3593
    %v3670 = vmul.f32 %v292, %v3593
    %v3671 = vmul.f32 %v293, %v3593
    %v3672 = vmul.f32 %v294, %v3593
    %v3673 = vmul.f32 %v295, %v3593
    %v3674 = vmul.f32 %v296, %v3593
    %v3675 = vmul.f32 %v297, %v3593
    %v3676 = vmul.f32 %v298, %v3593
    %v3677 = vmul.f32 %v299, %v3593
    %v3678 = vmul.f32 %v300, %v3593
    %v3679 = vmul.f32 %v301, %v3593
    %v3680 = vmul.f32 %v302, %v3593
    %v3681 = vmul.f32 %v303, %v3593
    %v3682 = vmul.f32 %v304, %v3593
    %v3683 = vmul.f32 %v305, %v3593
    %v3684 = vmul.f32 %v306, %v3593
    %v3685 = vmul.f32 %v307, %v3593
    %v3686 = vmul.f32 %v308, %v3593
    %v3687 = vmul.f32 %v309, %v3593
    %v3688 = vmul.f32 %v310, %v3593
    %v3689 = vmul.f32 %v311, %v3593
    %v3690 = vmul.f32 %v312, %v3593
    %v3691 = vmul.f32 %v313, %v3593
    %v3692 = vmul.f32 %v314, %v3593
    %v3693 = vmul.f32 %v315, %v3593
    %v3694 = vmul.f32 %v316, %v3593
    %v3695 = vmul.f32 %v317, %v3593
    %v3696 = vmul.f32 %v318, %v3593
    %v3697 = vmul.f32 %v319, %v3593
    %v3698 = vmul.f32 %v320, %v3593
    %v3699 = vmul.f32 %v321, %v3593
    %v3700 = vmul.f32 %v322, %v3593
    %v3701 = vmul.f32 %v323, %v3593
    %v3702 = vmul.f32 %v324, %v3593
    %v3703 = vmul.f32 %v325, %v3593
    %v3704 = vmul.f32 %v326, %v3593
    %v3705 = vmul.f32 %v327, %v3593
    %v3706 = vmul.f32 %v328, %v3593
    %v3707 = vmul.f32 %v329, %v3593
    %v3708 = vmul.f32 %v330, %v3593
    %v3709 = vmul.f32 %v331, %v3593
    %v3710 = vmul.f32 %v332, %v3593
    %v3711 = vmul.f32 %v333, %v3593
    %v3712 = vmul.f32 %v334, %v3593
    %v3713 = vmul.f32 %v335, %v3593
    %v3714 = vmul.f32 %v336, %v3593
    %v3715 = vmul.f32 %v337, %v3593
    %v3716 = vmul.f32 %v338, %v3593
    %v3717 = vmul.f32 %v339, %v3593
    %v3718 = vmul.f32 %v340, %v3593
    %v3719 = vmul.f32 %v341, %v3593
    %v3720 = vmul.f32 %v342, %v3593
    %v3721 = vmul.f32 %v343, %v3593
    %v3722 = vmul.f32 %v344, %v3593
    %v3723 = vmul.f32 %v345, %v3593
    %v3724 = vmul.f32 %v346, %v3593
    %v3725 = vmul.f32 %v347, %v3593
    %v3726 = vmul.f32 %v348, %v3593
    %v3727 = vmul.f32 %v349, %v3593
    %v3728 = vmul.f32 %v350, %v3593
    %v3729 = vmul.f32 %v351, %v3593
    %v3730 = vmul.f32 %v352, %v3593
    %v3731 = vmul.f32 %v353, %v3593
    %v3732 = vmul.f32 %v354, %v3593
    %v3733 = vmul.f32 %v355, %v3593
    %v3734 = vmul.f32 %v356, %v3593
    %v3735 = vmul.f32 %v357, %v3593
    %v3736 = vmul.f32 %v358, %v3593
    %v3737 = vmul.f32 %v359, %v3593
    %v3738 = vmul.f32 %v360, %v3593
    %v3739 = vmul.f32 %v361, %v3593
    %v3740 = vmul.f32 %v362, %v3593
    %v3741 = vmul.f32 %v363, %v3593
    %v3742 = vmul.f32 %v364, %v3593
    %v3743 = vmul.f32 %v365, %v3593
    %v3744 = vmul.f32 %v366, %v3593
    %v3745 = vmul.f32 %v367, %v3593
    %v3746 = vmul.f32 %v368, %v3593
    %v3747 = vmul.f32 %v369, %v3593
    %v3748 = vmul.f32 %v370, %v3593
    %v3749 = vmul.f32 %v371, %v3593
    %v3750 = vmul.f32 %v372, %v3593
    %v3751 = vmul.f32 %v373, %v3593
    %v3752 = vmul.f32 %v374, %v3593
    %v3753 = vmul.f32 %v375, %v3593
    %s3754 = sld [smem:[#allocation7 + $0x7]]
    %v3755 = vstv %s3754
    %v3756 = vmul.f32 %v377, %v3755
    %v3757 = vmul.f32 %v379, %v3755
    %v3758 = vmul.f32 %v381, %v3755
    %v3759 = vmul.f32 %v383, %v3755
    %v3760 = vmul.f32 %v385, %v3755
    %v3761 = vmul.f32 %v387, %v3755
    %v3762 = vmul.f32 %v389, %v3755
    %v3763 = vmul.f32 %v391, %v3755
    %v3764 = vmul.f32 %v393, %v3755
    %v3765 = vmul.f32 %v395, %v3755
    %v3766 = vmul.f32 %v397, %v3755
    %v3767 = vmul.f32 %v399, %v3755
    %v3768 = vmul.f32 %v401, %v3755
    %v3769 = vmul.f32 %v403, %v3755
    %v3770 = vmul.f32 %v405, %v3755
    %v3771 = vmul.f32 %v407, %v3755
    %v3772 = vmul.f32 %v409, %v3755
    %v3773 = vmul.f32 %v411, %v3755
    %v3774 = vmul.f32 %v413, %v3755
    %v3775 = vmul.f32 %v415, %v3755
    %v3776 = vmul.f32 %v417, %v3755
    %v3777 = vmul.f32 %v419, %v3755
    %v3778 = vmul.f32 %v421, %v3755
    %v3779 = vmul.f32 %v423, %v3755
    %v3780 = vmul.f32 %v425, %v3755
    %v3781 = vmul.f32 %v427, %v3755
    %v3782 = vmul.f32 %v429, %v3755
    %v3783 = vmul.f32 %v431, %v3755
    %v3784 = vmul.f32 %v433, %v3755
    %v3785 = vmul.f32 %v435, %v3755
    %v3786 = vmul.f32 %v437, %v3755
    %v3787 = vmul.f32 %v439, %v3755
    %v3788 = vmul.f32 %v441, %v3755
    %v3789 = vmul.f32 %v443, %v3755
    %v3790 = vmul.f32 %v445, %v3755
    %v3791 = vmul.f32 %v447, %v3755
    %v3792 = vmul.f32 %v449, %v3755
    %v3793 = vmul.f32 %v451, %v3755
    %v3794 = vmul.f32 %v453, %v3755
    %v3795 = vmul.f32 %v455, %v3755
    %v3796 = vmul.f32 %v457, %v3755
    %v3797 = vmul.f32 %v459, %v3755
    %v3798 = vmul.f32 %v461, %v3755
    %v3799 = vmul.f32 %v463, %v3755
    %v3800 = vmul.f32 %v465, %v3755
    %v3801 = vmul.f32 %v467, %v3755
    %v3802 = vmul.f32 %v469, %v3755
    %v3803 = vmul.f32 %v471, %v3755
    %v3804 = vmul.f32 %v473, %v3755
    %v3805 = vmul.f32 %v475, %v3755
    %v3806 = vmul.f32 %v477, %v3755
    %v3807 = vmul.f32 %v479, %v3755
    %v3808 = vmul.f32 %v481, %v3755
    %v3809 = vmul.f32 %v483, %v3755
    %v3810 = vmul.f32 %v485, %v3755
    %v3811 = vmul.f32 %v487, %v3755
    %v3812 = vmul.f32 %v489, %v3755
    %v3813 = vmul.f32 %v491, %v3755
    %v3814 = vmul.f32 %v493, %v3755
    %v3815 = vmul.f32 %v495, %v3755
    %v3816 = vmul.f32 %v497, %v3755
    %v3817 = vmul.f32 %v499, %v3755
    %v3818 = vmul.f32 %v501, %v3755
    %v3819 = vmul.f32 %v503, %v3755
    %v3820 = vmul.f32 %v505, %v3755
    %v3821 = vmul.f32 %v507, %v3755
    %v3822 = vmul.f32 %v509, %v3755
    %v3823 = vmul.f32 %v511, %v3755
    %v3824 = vmul.f32 %v513, %v3755
    %v3825 = vmul.f32 %v515, %v3755
    %v3826 = vmul.f32 %v517, %v3755
    %v3827 = vmul.f32 %v519, %v3755
    %v3828 = vmul.f32 %v521, %v3755
    %v3829 = vmul.f32 %v523, %v3755
    %v3830 = vmul.f32 %v525, %v3755
    %v3831 = vmul.f32 %v527, %v3755
    %v3832 = vmul.f32 %v529, %v3755
    %v3833 = vmul.f32 %v531, %v3755
    %v3834 = vmul.f32 %v533, %v3755
    %v3835 = vmul.f32 %v535, %v3755
    %v3836 = vmul.f32 %v537, %v3755
    %v3837 = vmul.f32 %v539, %v3755
    %v3838 = vmul.f32 %v541, %v3755
    %v3839 = vmul.f32 %v543, %v3755
    %v3840 = vmul.f32 %v545, %v3755
    %v3841 = vmul.f32 %v547, %v3755
    %v3842 = vmul.f32 %v549, %v3755
    %v3843 = vmul.f32 %v551, %v3755
    %v3844 = vmul.f32 %v553, %v3755
    %v3845 = vmul.f32 %v555, %v3755
    %v3846 = vmul.f32 %v557, %v3755
    %v3847 = vmul.f32 %v559, %v3755
    %v3848 = vmul.f32 %v561, %v3755
    %v3849 = vmul.f32 %v563, %v3755
    %v3850 = vmul.f32 %v565, %v3755
    %v3851 = vmul.f32 %v567, %v3755
    %v3852 = vmul.f32 %v569, %v3755
    %v3853 = vmul.f32 %v571, %v3755
    %v3854 = vmul.f32 %v573, %v3755
    %v3855 = vmul.f32 %v575, %v3755
    %v3856 = vmul.f32 %v577, %v3755
    %v3857 = vmul.f32 %v579, %v3755
    %v3858 = vmul.f32 %v581, %v3755
    %v3859 = vmul.f32 %v583, %v3755
    %v3860 = vmul.f32 %v585, %v3755
    %v3861 = vmul.f32 %v587, %v3755
    %v3862 = vmul.f32 %v589, %v3755
    %v3863 = vmul.f32 %v591, %v3755
    %v3864 = vmul.f32 %v593, %v3755
    %v3865 = vmul.f32 %v595, %v3755
    %v3866 = vmul.f32 %v597, %v3755
    %v3867 = vmul.f32 %v599, %v3755
    %v3868 = vmul.f32 %v601, %v3755
    %v3869 = vmul.f32 %v603, %v3755
    %v3870 = vmul.f32 %v605, %v3755
    %v3871 = vmul.f32 %v607, %v3755
    %v3872 = vmul.f32 %v609, %v3755
    %v3873 = vmul.f32 %v611, %v3755
    %v3874 = vmul.f32 %v613, %v3755
    %v3875 = vmul.f32 %v615, %v3755
    %v3876 = vmul.f32 %v617, %v3755
    %v3877 = vmul.f32 %v619, %v3755
    %v3878 = vmul.f32 %v621, %v3755
    %v3879 = vmul.f32 %v623, %v3755
    %v3880 = vmul.f32 %v625, %v3755
    %v3881 = vmul.f32 %v627, %v3755
    %v3882 = vmul.f32 %v629, %v3755
    %v3883 = vmul.f32 %v631, %v3755
    %v3884 = vmul.f32 %v633, %v3755
    %v3885 = vmul.f32 %v635, %v3755
    %v3886 = vmul.f32 %v637, %v3755
    %v3887 = vmul.f32 %v639, %v3755
    %v3888 = vmul.f32 %v641, %v3755
    %v3889 = vmul.f32 %v643, %v3755
    %v3890 = vmul.f32 %v645, %v3755
    %v3891 = vmul.f32 %v647, %v3755
    %v3892 = vmul.f32 %v649, %v3755
    %v3893 = vmul.f32 %v651, %v3755
    %v3894 = vmul.f32 %v653, %v3755
    %v3895 = vmul.f32 %v655, %v3755
    %v3896 = vmul.f32 %v657, %v3755
    %v3897 = vmul.f32 %v659, %v3755
    %v3898 = vmul.f32 %v661, %v3755
    %v3899 = vmul.f32 %v663, %v3755
    %v3900 = vmul.f32 %v665, %v3755
    %v3901 = vmul.f32 %v667, %v3755
    %v3902 = vmul.f32 %v669, %v3755
    %v3903 = vmul.f32 %v671, %v3755
    %v3904 = vmul.f32 %v673, %v3755
    %v3905 = vmul.f32 %v675, %v3755
    %v3906 = vmul.f32 %v677, %v3755
    %v3907 = vmul.f32 %v679, %v3755
    %v3908 = vmul.f32 %v681, %v3755
    %v3909 = vmul.f32 %v683, %v3755
    %v3910 = vmul.f32 %v685, %v3755
    %v3911 = vmul.f32 %v687, %v3755
    %v3912 = vmul.f32 %v689, %v3755
    %v3913 = vmul.f32 %v691, %v3755
    %v3914 = vmul.f32 %v693, %v3755
    %v3915 = vmul.f32 %v695, %v3755
    %v3916 = vadd.f32 %v3594, %v3756
    %v3917 = vadd.f32 %v3595, %v3757
    %v3918 = vadd.f32 %v3596, %v3758
    %v3919 = vadd.f32 %v3597, %v3759
    %v3920 = vadd.f32 %v3598, %v3760
    %v3921 = vadd.f32 %v3599, %v3761
    %v3922 = vadd.f32 %v3600, %v3762
    %v3923 = vadd.f32 %v3601, %v3763
    %v3924 = vadd.f32 %v3602, %v3764
    %v3925 = vadd.f32 %v3603, %v3765
    %v3926 = vadd.f32 %v3604, %v3766
    %v3927 = vadd.f32 %v3605, %v3767
    %v3928 = vadd.f32 %v3606, %v3768
    %v3929 = vadd.f32 %v3607, %v3769
    %v3930 = vadd.f32 %v3608, %v3770
    %v3931 = vadd.f32 %v3609, %v3771
    %v3932 = vadd.f32 %v3610, %v3772
    %v3933 = vadd.f32 %v3611, %v3773
    %v3934 = vadd.f32 %v3612, %v3774
    %v3935 = vadd.f32 %v3613, %v3775
    %v3936 = vadd.f32 %v3614, %v3776
    %v3937 = vadd.f32 %v3615, %v3777
    %v3938 = vadd.f32 %v3616, %v3778
    %v3939 = vadd.f32 %v3617, %v3779
    %v3940 = vadd.f32 %v3618, %v3780
    %v3941 = vadd.f32 %v3619, %v3781
    %v3942 = vadd.f32 %v3620, %v3782
    %v3943 = vadd.f32 %v3621, %v3783
    %v3944 = vadd.f32 %v3622, %v3784
    %v3945 = vadd.f32 %v3623, %v3785
    %v3946 = vadd.f32 %v3624, %v3786
    %v3947 = vadd.f32 %v3625, %v3787
    %v3948 = vadd.f32 %v3626, %v3788
    %v3949 = vadd.f32 %v3627, %v3789
    %v3950 = vadd.f32 %v3628, %v3790
    %v3951 = vadd.f32 %v3629, %v3791
    %v3952 = vadd.f32 %v3630, %v3792
    %v3953 = vadd.f32 %v3631, %v3793
    %v3954 = vadd.f32 %v3632, %v3794
    %v3955 = vadd.f32 %v3633, %v3795
    %v3956 = vadd.f32 %v3634, %v3796
    %v3957 = vadd.f32 %v3635, %v3797
    %v3958 = vadd.f32 %v3636, %v3798
    %v3959 = vadd.f32 %v3637, %v3799
    %v3960 = vadd.f32 %v3638, %v3800
    %v3961 = vadd.f32 %v3639, %v3801
    %v3962 = vadd.f32 %v3640, %v3802
    %v3963 = vadd.f32 %v3641, %v3803
    %v3964 = vadd.f32 %v3642, %v3804
    %v3965 = vadd.f32 %v3643, %v3805
    %v3966 = vadd.f32 %v3644, %v3806
    %v3967 = vadd.f32 %v3645, %v3807
    %v3968 = vadd.f32 %v3646, %v3808
    %v3969 = vadd.f32 %v3647, %v3809
    %v3970 = vadd.f32 %v3648, %v3810
    %v3971 = vadd.f32 %v3649, %v3811
    %v3972 = vadd.f32 %v3650, %v3812
    %v3973 = vadd.f32 %v3651, %v3813
    %v3974 = vadd.f32 %v3652, %v3814
    %v3975 = vadd.f32 %v3653, %v3815
    %v3976 = vadd.f32 %v3654, %v3816
    %v3977 = vadd.f32 %v3655, %v3817
    %v3978 = vadd.f32 %v3656, %v3818
    %v3979 = vadd.f32 %v3657, %v3819
    %v3980 = vadd.f32 %v3658, %v3820
    %v3981 = vadd.f32 %v3659, %v3821
    %v3982 = vadd.f32 %v3660, %v3822
    %v3983 = vadd.f32 %v3661, %v3823
    %v3984 = vadd.f32 %v3662, %v3824
    %v3985 = vadd.f32 %v3663, %v3825
    %v3986 = vadd.f32 %v3664, %v3826
    %v3987 = vadd.f32 %v3665, %v3827
    %v3988 = vadd.f32 %v3666, %v3828
    %v3989 = vadd.f32 %v3667, %v3829
    %v3990 = vadd.f32 %v3668, %v3830
    %v3991 = vadd.f32 %v3669, %v3831
    %v3992 = vadd.f32 %v3670, %v3832
    %v3993 = vadd.f32 %v3671, %v3833
    %v3994 = vadd.f32 %v3672, %v3834
    %v3995 = vadd.f32 %v3673, %v3835
    %v3996 = vadd.f32 %v3674, %v3836
    %v3997 = vadd.f32 %v3675, %v3837
    %v3998 = vadd.f32 %v3676, %v3838
    %v3999 = vadd.f32 %v3677, %v3839
    %v4000 = vadd.f32 %v3678, %v3840
    %v4001 = vadd.f32 %v3679, %v3841
    %v4002 = vadd.f32 %v3680, %v3842
    %v4003 = vadd.f32 %v3681, %v3843
    %v4004 = vadd.f32 %v3682, %v3844
    %v4005 = vadd.f32 %v3683, %v3845
    %v4006 = vadd.f32 %v3684, %v3846
    %v4007 = vadd.f32 %v3685, %v3847
    %v4008 = vadd.f32 %v3686, %v3848
    %v4009 = vadd.f32 %v3687, %v3849
    %v4010 = vadd.f32 %v3688, %v3850
    %v4011 = vadd.f32 %v3689, %v3851
    %v4012 = vadd.f32 %v3690, %v3852
    %v4013 = vadd.f32 %v3691, %v3853
    %v4014 = vadd.f32 %v3692, %v3854
    %v4015 = vadd.f32 %v3693, %v3855
    %v4016 = vadd.f32 %v3694, %v3856
    %v4017 = vadd.f32 %v3695, %v3857
    %v4018 = vadd.f32 %v3696, %v3858
    %v4019 = vadd.f32 %v3697, %v3859
    %v4020 = vadd.f32 %v3698, %v3860
    %v4021 = vadd.f32 %v3699, %v3861
    %v4022 = vadd.f32 %v3700, %v3862
    %v4023 = vadd.f32 %v3701, %v3863
    %v4024 = vadd.f32 %v3702, %v3864
    %v4025 = vadd.f32 %v3703, %v3865
    %v4026 = vadd.f32 %v3704, %v3866
    %v4027 = vadd.f32 %v3705, %v3867
    %v4028 = vadd.f32 %v3706, %v3868
    %v4029 = vadd.f32 %v3707, %v3869
    %v4030 = vadd.f32 %v3708, %v3870
    %v4031 = vadd.f32 %v3709, %v3871
    %v4032 = vadd.f32 %v3710, %v3872
    %v4033 = vadd.f32 %v3711, %v3873
    %v4034 = vadd.f32 %v3712, %v3874
    %v4035 = vadd.f32 %v3713, %v3875
    %v4036 = vadd.f32 %v3714, %v3876
    %v4037 = vadd.f32 %v3715, %v3877
    %v4038 = vadd.f32 %v3716, %v3878
    %v4039 = vadd.f32 %v3717, %v3879
    %v4040 = vadd.f32 %v3718, %v3880
    %v4041 = vadd.f32 %v3719, %v3881
    %v4042 = vadd.f32 %v3720, %v3882
    %v4043 = vadd.f32 %v3721, %v3883
    %v4044 = vadd.f32 %v3722, %v3884
    %v4045 = vadd.f32 %v3723, %v3885
    %v4046 = vadd.f32 %v3724, %v3886
    %v4047 = vadd.f32 %v3725, %v3887
    %v4048 = vadd.f32 %v3726, %v3888
    %v4049 = vadd.f32 %v3727, %v3889
    %v4050 = vadd.f32 %v3728, %v3890
    %v4051 = vadd.f32 %v3729, %v3891
    %v4052 = vadd.f32 %v3730, %v3892
    %v4053 = vadd.f32 %v3731, %v3893
    %v4054 = vadd.f32 %v3732, %v3894
    %v4055 = vadd.f32 %v3733, %v3895
    %v4056 = vadd.f32 %v3734, %v3896
    %v4057 = vadd.f32 %v3735, %v3897
    %v4058 = vadd.f32 %v3736, %v3898
    %v4059 = vadd.f32 %v3737, %v3899
    %v4060 = vadd.f32 %v3738, %v3900
    %v4061 = vadd.f32 %v3739, %v3901
    %v4062 = vadd.f32 %v3740, %v3902
    %v4063 = vadd.f32 %v3741, %v3903
    %v4064 = vadd.f32 %v3742, %v3904
    %v4065 = vadd.f32 %v3743, %v3905
    %v4066 = vadd.f32 %v3744, %v3906
    %v4067 = vadd.f32 %v3745, %v3907
    %v4068 = vadd.f32 %v3746, %v3908
    %v4069 = vadd.f32 %v3747, %v3909
    %v4070 = vadd.f32 %v3748, %v3910
    %v4071 = vadd.f32 %v3749, %v3911
    %v4072 = vadd.f32 %v3750, %v3912
    %v4073 = vadd.f32 %v3751, %v3913
    %v4074 = vadd.f32 %v3752, %v3914
    %v4075 = vadd.f32 %v3753, %v3915
    %s4076 = sld [smem:[#allocation7 + $0x8]]
    %v4077 = vstv %s4076
    %v4078 = vmul.f32 %v697, %v4077
    %v4079 = vmul.f32 %v699, %v4077
    %v4080 = vmul.f32 %v701, %v4077
    %v4081 = vmul.f32 %v703, %v4077
    %v4082 = vmul.f32 %v705, %v4077
    %v4083 = vmul.f32 %v707, %v4077
    %v4084 = vmul.f32 %v709, %v4077
    %v4085 = vmul.f32 %v711, %v4077
    %v4086 = vmul.f32 %v713, %v4077
    %v4087 = vmul.f32 %v715, %v4077
    %v4088 = vmul.f32 %v717, %v4077
    %v4089 = vmul.f32 %v719, %v4077
    %v4090 = vmul.f32 %v721, %v4077
    %v4091 = vmul.f32 %v723, %v4077
    %v4092 = vmul.f32 %v725, %v4077
    %v4093 = vmul.f32 %v727, %v4077
    %v4094 = vmul.f32 %v729, %v4077
    %v4095 = vmul.f32 %v731, %v4077
    %v4096 = vmul.f32 %v733, %v4077
    %v4097 = vmul.f32 %v735, %v4077
    %v4098 = vmul.f32 %v737, %v4077
    %v4099 = vmul.f32 %v739, %v4077
    %v4100 = vmul.f32 %v741, %v4077
    %v4101 = vmul.f32 %v743, %v4077
    %v4102 = vmul.f32 %v745, %v4077
    %v4103 = vmul.f32 %v747, %v4077
    %v4104 = vmul.f32 %v749, %v4077
    %v4105 = vmul.f32 %v751, %v4077
    %v4106 = vmul.f32 %v753, %v4077
    %v4107 = vmul.f32 %v755, %v4077
    %v4108 = vmul.f32 %v757, %v4077
    %v4109 = vmul.f32 %v759, %v4077
    %v4110 = vmul.f32 %v761, %v4077
    %v4111 = vmul.f32 %v763, %v4077
    %v4112 = vmul.f32 %v765, %v4077
    %v4113 = vmul.f32 %v767, %v4077
    %v4114 = vmul.f32 %v769, %v4077
    %v4115 = vmul.f32 %v771, %v4077
    %v4116 = vmul.f32 %v773, %v4077
    %v4117 = vmul.f32 %v775, %v4077
    %v4118 = vmul.f32 %v777, %v4077
    %v4119 = vmul.f32 %v779, %v4077
    %v4120 = vmul.f32 %v781, %v4077
    %v4121 = vmul.f32 %v783, %v4077
    %v4122 = vmul.f32 %v785, %v4077
    %v4123 = vmul.f32 %v787, %v4077
    %v4124 = vmul.f32 %v789, %v4077
    %v4125 = vmul.f32 %v791, %v4077
    %v4126 = vmul.f32 %v793, %v4077
    %v4127 = vmul.f32 %v795, %v4077
    %v4128 = vmul.f32 %v797, %v4077
    %v4129 = vmul.f32 %v799, %v4077
    %v4130 = vmul.f32 %v801, %v4077
    %v4131 = vmul.f32 %v803, %v4077
    %v4132 = vmul.f32 %v805, %v4077
    %v4133 = vmul.f32 %v807, %v4077
    %v4134 = vmul.f32 %v809, %v4077
    %v4135 = vmul.f32 %v811, %v4077
    %v4136 = vmul.f32 %v813, %v4077
    %v4137 = vmul.f32 %v815, %v4077
    %v4138 = vmul.f32 %v817, %v4077
    %v4139 = vmul.f32 %v819, %v4077
    %v4140 = vmul.f32 %v821, %v4077
    %v4141 = vmul.f32 %v823, %v4077
    %v4142 = vmul.f32 %v825, %v4077
    %v4143 = vmul.f32 %v827, %v4077
    %v4144 = vmul.f32 %v829, %v4077
    %v4145 = vmul.f32 %v831, %v4077
    %v4146 = vmul.f32 %v833, %v4077
    %v4147 = vmul.f32 %v835, %v4077
    %v4148 = vmul.f32 %v837, %v4077
    %v4149 = vmul.f32 %v839, %v4077
    %v4150 = vmul.f32 %v841, %v4077
    %v4151 = vmul.f32 %v843, %v4077
    %v4152 = vmul.f32 %v845, %v4077
    %v4153 = vmul.f32 %v847, %v4077
    %v4154 = vmul.f32 %v849, %v4077
    %v4155 = vmul.f32 %v851, %v4077
    %v4156 = vmul.f32 %v853, %v4077
    %v4157 = vmul.f32 %v855, %v4077
    %v4158 = vmul.f32 %v857, %v4077
    %v4159 = vmul.f32 %v859, %v4077
    %v4160 = vmul.f32 %v861, %v4077
    %v4161 = vmul.f32 %v863, %v4077
    %v4162 = vmul.f32 %v865, %v4077
    %v4163 = vmul.f32 %v867, %v4077
    %v4164 = vmul.f32 %v869, %v4077
    %v4165 = vmul.f32 %v871, %v4077
    %v4166 = vmul.f32 %v873, %v4077
    %v4167 = vmul.f32 %v875, %v4077
    %v4168 = vmul.f32 %v877, %v4077
    %v4169 = vmul.f32 %v879, %v4077
    %v4170 = vmul.f32 %v881, %v4077
    %v4171 = vmul.f32 %v883, %v4077
    %v4172 = vmul.f32 %v885, %v4077
    %v4173 = vmul.f32 %v887, %v4077
    %v4174 = vmul.f32 %v889, %v4077
    %v4175 = vmul.f32 %v891, %v4077
    %v4176 = vmul.f32 %v893, %v4077
    %v4177 = vmul.f32 %v895, %v4077
    %v4178 = vmul.f32 %v897, %v4077
    %v4179 = vmul.f32 %v899, %v4077
    %v4180 = vmul.f32 %v901, %v4077
    %v4181 = vmul.f32 %v903, %v4077
    %v4182 = vmul.f32 %v905, %v4077
    %v4183 = vmul.f32 %v907, %v4077
    %v4184 = vmul.f32 %v909, %v4077
    %v4185 = vmul.f32 %v911, %v4077
    %v4186 = vmul.f32 %v913, %v4077
    %v4187 = vmul.f32 %v915, %v4077
    %v4188 = vmul.f32 %v917, %v4077
    %v4189 = vmul.f32 %v919, %v4077
    %v4190 = vmul.f32 %v921, %v4077
    %v4191 = vmul.f32 %v923, %v4077
    %v4192 = vmul.f32 %v925, %v4077
    %v4193 = vmul.f32 %v927, %v4077
    %v4194 = vmul.f32 %v929, %v4077
    %v4195 = vmul.f32 %v931, %v4077
    %v4196 = vmul.f32 %v933, %v4077
    %v4197 = vmul.f32 %v935, %v4077
    %v4198 = vmul.f32 %v937, %v4077
    %v4199 = vmul.f32 %v939, %v4077
    %v4200 = vmul.f32 %v941, %v4077
    %v4201 = vmul.f32 %v943, %v4077
    %v4202 = vmul.f32 %v945, %v4077
    %v4203 = vmul.f32 %v947, %v4077
    %v4204 = vmul.f32 %v949, %v4077
    %v4205 = vmul.f32 %v951, %v4077
    %v4206 = vmul.f32 %v953, %v4077
    %v4207 = vmul.f32 %v955, %v4077
    %v4208 = vmul.f32 %v957, %v4077
    %v4209 = vmul.f32 %v959, %v4077
    %v4210 = vmul.f32 %v961, %v4077
    %v4211 = vmul.f32 %v963, %v4077
    %v4212 = vmul.f32 %v965, %v4077
    %v4213 = vmul.f32 %v967, %v4077
    %v4214 = vmul.f32 %v969, %v4077
    %v4215 = vmul.f32 %v971, %v4077
    %v4216 = vmul.f32 %v973, %v4077
    %v4217 = vmul.f32 %v975, %v4077
    %v4218 = vmul.f32 %v977, %v4077
    %v4219 = vmul.f32 %v979, %v4077
    %v4220 = vmul.f32 %v981, %v4077
    %v4221 = vmul.f32 %v983, %v4077
    %v4222 = vmul.f32 %v985, %v4077
    %v4223 = vmul.f32 %v987, %v4077
    %v4224 = vmul.f32 %v989, %v4077
    %v4225 = vmul.f32 %v991, %v4077
    %v4226 = vmul.f32 %v993, %v4077
    %v4227 = vmul.f32 %v995, %v4077
    %v4228 = vmul.f32 %v997, %v4077
    %v4229 = vmul.f32 %v999, %v4077
    %v4230 = vmul.f32 %v1001, %v4077
    %v4231 = vmul.f32 %v1003, %v4077
    %v4232 = vmul.f32 %v1005, %v4077
    %v4233 = vmul.f32 %v1007, %v4077
    %v4234 = vmul.f32 %v1009, %v4077
    %v4235 = vmul.f32 %v1011, %v4077
    %v4236 = vmul.f32 %v1013, %v4077
    %v4237 = vmul.f32 %v1015, %v4077
    %v4238 = vadd.f32 %v3916, %v4078
    %v4239 = vadd.f32 %v3917, %v4079
    %v4240 = vadd.f32 %v3918, %v4080
    %v4241 = vadd.f32 %v3919, %v4081
    %v4242 = vadd.f32 %v3920, %v4082
    %v4243 = vadd.f32 %v3921, %v4083
    %v4244 = vadd.f32 %v3922, %v4084
    %v4245 = vadd.f32 %v3923, %v4085
    %v4246 = vadd.f32 %v3924, %v4086
    %v4247 = vadd.f32 %v3925, %v4087
    %v4248 = vadd.f32 %v3926, %v4088
    %v4249 = vadd.f32 %v3927, %v4089
    %v4250 = vadd.f32 %v3928, %v4090
    %v4251 = vadd.f32 %v3929, %v4091
    %v4252 = vadd.f32 %v3930, %v4092
    %v4253 = vadd.f32 %v3931, %v4093
    %v4254 = vadd.f32 %v3932, %v4094
    %v4255 = vadd.f32 %v3933, %v4095
    %v4256 = vadd.f32 %v3934, %v4096
    %v4257 = vadd.f32 %v3935, %v4097
    %v4258 = vadd.f32 %v3936, %v4098
    %v4259 = vadd.f32 %v3937, %v4099
    %v4260 = vadd.f32 %v3938, %v4100
    %v4261 = vadd.f32 %v3939, %v4101
    %v4262 = vadd.f32 %v3940, %v4102
    %v4263 = vadd.f32 %v3941, %v4103
    %v4264 = vadd.f32 %v3942, %v4104
    %v4265 = vadd.f32 %v3943, %v4105
    %v4266 = vadd.f32 %v3944, %v4106
    %v4267 = vadd.f32 %v3945, %v4107
    %v4268 = vadd.f32 %v3946, %v4108
    %v4269 = vadd.f32 %v3947, %v4109
    %v4270 = vadd.f32 %v3948, %v4110
    %v4271 = vadd.f32 %v3949, %v4111
    %v4272 = vadd.f32 %v3950, %v4112
    %v4273 = vadd.f32 %v3951, %v4113
    %v4274 = vadd.f32 %v3952, %v4114
    %v4275 = vadd.f32 %v3953, %v4115
    %v4276 = vadd.f32 %v3954, %v4116
    %v4277 = vadd.f32 %v3955, %v4117
    %v4278 = vadd.f32 %v3956, %v4118
    %v4279 = vadd.f32 %v3957, %v4119
    %v4280 = vadd.f32 %v3958, %v4120
    %v4281 = vadd.f32 %v3959, %v4121
    %v4282 = vadd.f32 %v3960, %v4122
    %v4283 = vadd.f32 %v3961, %v4123
    %v4284 = vadd.f32 %v3962, %v4124
    %v4285 = vadd.f32 %v3963, %v4125
    %v4286 = vadd.f32 %v3964, %v4126
    %v4287 = vadd.f32 %v3965, %v4127
    %v4288 = vadd.f32 %v3966, %v4128
    %v4289 = vadd.f32 %v3967, %v4129
    %v4290 = vadd.f32 %v3968, %v4130
    %v4291 = vadd.f32 %v3969, %v4131
    %v4292 = vadd.f32 %v3970, %v4132
    %v4293 = vadd.f32 %v3971, %v4133
    %v4294 = vadd.f32 %v3972, %v4134
    %v4295 = vadd.f32 %v3973, %v4135
    %v4296 = vadd.f32 %v3974, %v4136
    %v4297 = vadd.f32 %v3975, %v4137
    %v4298 = vadd.f32 %v3976, %v4138
    %v4299 = vadd.f32 %v3977, %v4139
    %v4300 = vadd.f32 %v3978, %v4140
    %v4301 = vadd.f32 %v3979, %v4141
    %v4302 = vadd.f32 %v3980, %v4142
    %v4303 = vadd.f32 %v3981, %v4143
    %v4304 = vadd.f32 %v3982, %v4144
    %v4305 = vadd.f32 %v3983, %v4145
    %v4306 = vadd.f32 %v3984, %v4146
    %v4307 = vadd.f32 %v3985, %v4147
    %v4308 = vadd.f32 %v3986, %v4148
    %v4309 = vadd.f32 %v3987, %v4149
    %v4310 = vadd.f32 %v3988, %v4150
    %v4311 = vadd.f32 %v3989, %v4151
    %v4312 = vadd.f32 %v3990, %v4152
    %v4313 = vadd.f32 %v3991, %v4153
    %v4314 = vadd.f32 %v3992, %v4154
    %v4315 = vadd.f32 %v3993, %v4155
    %v4316 = vadd.f32 %v3994, %v4156
    %v4317 = vadd.f32 %v3995, %v4157
    %v4318 = vadd.f32 %v3996, %v4158
    %v4319 = vadd.f32 %v3997, %v4159
    %v4320 = vadd.f32 %v3998, %v4160
    %v4321 = vadd.f32 %v3999, %v4161
    %v4322 = vadd.f32 %v4000, %v4162
    %v4323 = vadd.f32 %v4001, %v4163
    %v4324 = vadd.f32 %v4002, %v4164
    %v4325 = vadd.f32 %v4003, %v4165
    %v4326 = vadd.f32 %v4004, %v4166
    %v4327 = vadd.f32 %v4005, %v4167
    %v4328 = vadd.f32 %v4006, %v4168
    %v4329 = vadd.f32 %v4007, %v4169
    %v4330 = vadd.f32 %v4008, %v4170
    %v4331 = vadd.f32 %v4009, %v4171
    %v4332 = vadd.f32 %v4010, %v4172
    %v4333 = vadd.f32 %v4011, %v4173
    %v4334 = vadd.f32 %v4012, %v4174
    %v4335 = vadd.f32 %v4013, %v4175
    %v4336 = vadd.f32 %v4014, %v4176
    %v4337 = vadd.f32 %v4015, %v4177
    %v4338 = vadd.f32 %v4016, %v4178
    %v4339 = vadd.f32 %v4017, %v4179
    %v4340 = vadd.f32 %v4018, %v4180
    %v4341 = vadd.f32 %v4019, %v4181
    %v4342 = vadd.f32 %v4020, %v4182
    %v4343 = vadd.f32 %v4021, %v4183
    %v4344 = vadd.f32 %v4022, %v4184
    %v4345 = vadd.f32 %v4023, %v4185
    %v4346 = vadd.f32 %v4024, %v4186
    %v4347 = vadd.f32 %v4025, %v4187
    %v4348 = vadd.f32 %v4026, %v4188
    %v4349 = vadd.f32 %v4027, %v4189
    %v4350 = vadd.f32 %v4028, %v4190
    %v4351 = vadd.f32 %v4029, %v4191
    %v4352 = vadd.f32 %v4030, %v4192
    %v4353 = vadd.f32 %v4031, %v4193
    %v4354 = vadd.f32 %v4032, %v4194
    %v4355 = vadd.f32 %v4033, %v4195
    %v4356 = vadd.f32 %v4034, %v4196
    %v4357 = vadd.f32 %v4035, %v4197
    %v4358 = vadd.f32 %v4036, %v4198
    %v4359 = vadd.f32 %v4037, %v4199
    %v4360 = vadd.f32 %v4038, %v4200
    %v4361 = vadd.f32 %v4039, %v4201
    %v4362 = vadd.f32 %v4040, %v4202
    %v4363 = vadd.f32 %v4041, %v4203
    %v4364 = vadd.f32 %v4042, %v4204
    %v4365 = vadd.f32 %v4043, %v4205
    %v4366 = vadd.f32 %v4044, %v4206
    %v4367 = vadd.f32 %v4045, %v4207
    %v4368 = vadd.f32 %v4046, %v4208
    %v4369 = vadd.f32 %v4047, %v4209
    %v4370 = vadd.f32 %v4048, %v4210
    %v4371 = vadd.f32 %v4049, %v4211
    %v4372 = vadd.f32 %v4050, %v4212
    %v4373 = vadd.f32 %v4051, %v4213
    %v4374 = vadd.f32 %v4052, %v4214
    %v4375 = vadd.f32 %v4053, %v4215
    %v4376 = vadd.f32 %v4054, %v4216
    %v4377 = vadd.f32 %v4055, %v4217
    %v4378 = vadd.f32 %v4056, %v4218
    %v4379 = vadd.f32 %v4057, %v4219
    %v4380 = vadd.f32 %v4058, %v4220
    %v4381 = vadd.f32 %v4059, %v4221
    %v4382 = vadd.f32 %v4060, %v4222
    %v4383 = vadd.f32 %v4061, %v4223
    %v4384 = vadd.f32 %v4062, %v4224
    %v4385 = vadd.f32 %v4063, %v4225
    %v4386 = vadd.f32 %v4064, %v4226
    %v4387 = vadd.f32 %v4065, %v4227
    %v4388 = vadd.f32 %v4066, %v4228
    %v4389 = vadd.f32 %v4067, %v4229
    %v4390 = vadd.f32 %v4068, %v4230
    %v4391 = vadd.f32 %v4069, %v4231
    %v4392 = vadd.f32 %v4070, %v4232
    %v4393 = vadd.f32 %v4071, %v4233
    %v4394 = vadd.f32 %v4072, %v4234
    %v4395 = vadd.f32 %v4073, %v4235
    %v4396 = vadd.f32 %v4074, %v4236
    %v4397 = vadd.f32 %v4075, %v4237
    %s4398 = sld [smem:[#allocation8 + $0x2]]
    %v4399 = vstv %s4398
    %v4400 = vadd.f32 %v4238, %v4399
    %v4401 = vadd.f32 %v4239, %v4399
    %v4402 = vadd.f32 %v4240, %v4399
    %v4403 = vadd.f32 %v4241, %v4399
    %v4404 = vadd.f32 %v4242, %v4399
    %v4405 = vadd.f32 %v4243, %v4399
    %v4406 = vadd.f32 %v4244, %v4399
    %v4407 = vadd.f32 %v4245, %v4399
    %v4408 = vadd.f32 %v4246, %v4399
    %v4409 = vadd.f32 %v4247, %v4399
    %v4410 = vadd.f32 %v4248, %v4399
    %v4411 = vadd.f32 %v4249, %v4399
    %v4412 = vadd.f32 %v4250, %v4399
    %v4413 = vadd.f32 %v4251, %v4399
    %v4414 = vadd.f32 %v4252, %v4399
    %v4415 = vadd.f32 %v4253, %v4399
    %v4416 = vadd.f32 %v4254, %v4399
    %v4417 = vadd.f32 %v4255, %v4399
    %v4418 = vadd.f32 %v4256, %v4399
    %v4419 = vadd.f32 %v4257, %v4399
    %v4420 = vadd.f32 %v4258, %v4399
    %v4421 = vadd.f32 %v4259, %v4399
    %v4422 = vadd.f32 %v4260, %v4399
    %v4423 = vadd.f32 %v4261, %v4399
    %v4424 = vadd.f32 %v4262, %v4399
    %v4425 = vadd.f32 %v4263, %v4399
    %v4426 = vadd.f32 %v4264, %v4399
    %v4427 = vadd.f32 %v4265, %v4399
    %v4428 = vadd.f32 %v4266, %v4399
    %v4429 = vadd.f32 %v4267, %v4399
    %v4430 = vadd.f32 %v4268, %v4399
    %v4431 = vadd.f32 %v4269, %v4399
    %v4432 = vadd.f32 %v4270, %v4399
    %v4433 = vadd.f32 %v4271, %v4399
    %v4434 = vadd.f32 %v4272, %v4399
    %v4435 = vadd.f32 %v4273, %v4399
    %v4436 = vadd.f32 %v4274, %v4399
    %v4437 = vadd.f32 %v4275, %v4399
    %v4438 = vadd.f32 %v4276, %v4399
    %v4439 = vadd.f32 %v4277, %v4399
    %v4440 = vadd.f32 %v4278, %v4399
    %v4441 = vadd.f32 %v4279, %v4399
    %v4442 = vadd.f32 %v4280, %v4399
    %v4443 = vadd.f32 %v4281, %v4399
    %v4444 = vadd.f32 %v4282, %v4399
    %v4445 = vadd.f32 %v4283, %v4399
    %v4446 = vadd.f32 %v4284, %v4399
    %v4447 = vadd.f32 %v4285, %v4399
    %v4448 = vadd.f32 %v4286, %v4399
    %v4449 = vadd.f32 %v4287, %v4399
    %v4450 = vadd.f32 %v4288, %v4399
    %v4451 = vadd.f32 %v4289, %v4399
    %v4452 = vadd.f32 %v4290, %v4399
    %v4453 = vadd.f32 %v4291, %v4399
    %v4454 = vadd.f32 %v4292, %v4399
    %v4455 = vadd.f32 %v4293, %v4399
    %v4456 = vadd.f32 %v4294, %v4399
    %v4457 = vadd.f32 %v4295, %v4399
    %v4458 = vadd.f32 %v4296, %v4399
    %v4459 = vadd.f32 %v4297, %v4399
    %v4460 = vadd.f32 %v4298, %v4399
    %v4461 = vadd.f32 %v4299, %v4399
    %v4462 = vadd.f32 %v4300, %v4399
    %v4463 = vadd.f32 %v4301, %v4399
    %v4464 = vadd.f32 %v4302, %v4399
    %v4465 = vadd.f32 %v4303, %v4399
    %v4466 = vadd.f32 %v4304, %v4399
    %v4467 = vadd.f32 %v4305, %v4399
    %v4468 = vadd.f32 %v4306, %v4399
    %v4469 = vadd.f32 %v4307, %v4399
    %v4470 = vadd.f32 %v4308, %v4399
    %v4471 = vadd.f32 %v4309, %v4399
    %v4472 = vadd.f32 %v4310, %v4399
    %v4473 = vadd.f32 %v4311, %v4399
    %v4474 = vadd.f32 %v4312, %v4399
    %v4475 = vadd.f32 %v4313, %v4399
    %v4476 = vadd.f32 %v4314, %v4399
    %v4477 = vadd.f32 %v4315, %v4399
    %v4478 = vadd.f32 %v4316, %v4399
    %v4479 = vadd.f32 %v4317, %v4399
    %v4480 = vadd.f32 %v4318, %v4399
    %v4481 = vadd.f32 %v4319, %v4399
    %v4482 = vadd.f32 %v4320, %v4399
    %v4483 = vadd.f32 %v4321, %v4399
    %v4484 = vadd.f32 %v4322, %v4399
    %v4485 = vadd.f32 %v4323, %v4399
    %v4486 = vadd.f32 %v4324, %v4399
    %v4487 = vadd.f32 %v4325, %v4399
    %v4488 = vadd.f32 %v4326, %v4399
    %v4489 = vadd.f32 %v4327, %v4399
    %v4490 = vadd.f32 %v4328, %v4399
    %v4491 = vadd.f32 %v4329, %v4399
    %v4492 = vadd.f32 %v4330, %v4399
    %v4493 = vadd.f32 %v4331, %v4399
    %v4494 = vadd.f32 %v4332, %v4399
    %v4495 = vadd.f32 %v4333, %v4399
    %v4496 = vadd.f32 %v4334, %v4399
    %v4497 = vadd.f32 %v4335, %v4399
    %v4498 = vadd.f32 %v4336, %v4399
    %v4499 = vadd.f32 %v4337, %v4399
    %v4500 = vadd.f32 %v4338, %v4399
    %v4501 = vadd.f32 %v4339, %v4399
    %v4502 = vadd.f32 %v4340, %v4399
    %v4503 = vadd.f32 %v4341, %v4399
    %v4504 = vadd.f32 %v4342, %v4399
    %v4505 = vadd.f32 %v4343, %v4399
    %v4506 = vadd.f32 %v4344, %v4399
    %v4507 = vadd.f32 %v4345, %v4399
    %v4508 = vadd.f32 %v4346, %v4399
    %v4509 = vadd.f32 %v4347, %v4399
    %v4510 = vadd.f32 %v4348, %v4399
    %v4511 = vadd.f32 %v4349, %v4399
    %v4512 = vadd.f32 %v4350, %v4399
    %v4513 = vadd.f32 %v4351, %v4399
    %v4514 = vadd.f32 %v4352, %v4399
    %v4515 = vadd.f32 %v4353, %v4399
    %v4516 = vadd.f32 %v4354, %v4399
    %v4517 = vadd.f32 %v4355, %v4399
    %v4518 = vadd.f32 %v4356, %v4399
    %v4519 = vadd.f32 %v4357, %v4399
    %v4520 = vadd.f32 %v4358, %v4399
    %v4521 = vadd.f32 %v4359, %v4399
    %v4522 = vadd.f32 %v4360, %v4399
    %v4523 = vadd.f32 %v4361, %v4399
    %v4524 = vadd.f32 %v4362, %v4399
    %v4525 = vadd.f32 %v4363, %v4399
    %v4526 = vadd.f32 %v4364, %v4399
    %v4527 = vadd.f32 %v4365, %v4399
    %v4528 = vadd.f32 %v4366, %v4399
    %v4529 = vadd.f32 %v4367, %v4399
    %v4530 = vadd.f32 %v4368, %v4399
    %v4531 = vadd.f32 %v4369, %v4399
    %v4532 = vadd.f32 %v4370, %v4399
    %v4533 = vadd.f32 %v4371, %v4399
    %v4534 = vadd.f32 %v4372, %v4399
    %v4535 = vadd.f32 %v4373, %v4399
    %v4536 = vadd.f32 %v4374, %v4399
    %v4537 = vadd.f32 %v4375, %v4399
    %v4538 = vadd.f32 %v4376, %v4399
    %v4539 = vadd.f32 %v4377, %v4399
    %v4540 = vadd.f32 %v4378, %v4399
    %v4541 = vadd.f32 %v4379, %v4399
    %v4542 = vadd.f32 %v4380, %v4399
    %v4543 = vadd.f32 %v4381, %v4399
    %v4544 = vadd.f32 %v4382, %v4399
    %v4545 = vadd.f32 %v4383, %v4399
    %v4546 = vadd.f32 %v4384, %v4399
    %v4547 = vadd.f32 %v4385, %v4399
    %v4548 = vadd.f32 %v4386, %v4399
    %v4549 = vadd.f32 %v4387, %v4399
    %v4550 = vadd.f32 %v4388, %v4399
    %v4551 = vadd.f32 %v4389, %v4399
    %v4552 = vadd.f32 %v4390, %v4399
    %v4553 = vadd.f32 %v4391, %v4399
    %v4554 = vadd.f32 %v4392, %v4399
    %v4555 = vadd.f32 %v4393, %v4399
    %v4556 = vadd.f32 %v4394, %v4399
    %v4557 = vadd.f32 %v4395, %v4399
    %v4558 = vadd.f32 %v4396, %v4399
    %v4559 = vadd.f32 %v4397, %v4399
    %v4560 = vmax.f32 %v4400, 0.0
    %v4561 = vmax.f32 %v4401, 0.0
    %v4562 = vmax.f32 %v4402, 0.0
    %v4563 = vmax.f32 %v4403, 0.0
    %v4564 = vmax.f32 %v4404, 0.0
    %v4565 = vmax.f32 %v4405, 0.0
    %v4566 = vmax.f32 %v4406, 0.0
    %v4567 = vmax.f32 %v4407, 0.0
    %v4568 = vmax.f32 %v4408, 0.0
    %v4569 = vmax.f32 %v4409, 0.0
    %v4570 = vmax.f32 %v4410, 0.0
    %v4571 = vmax.f32 %v4411, 0.0
    %v4572 = vmax.f32 %v4412, 0.0
    %v4573 = vmax.f32 %v4413, 0.0
    %v4574 = vmax.f32 %v4414, 0.0
    %v4575 = vmax.f32 %v4415, 0.0
    %v4576 = vmax.f32 %v4416, 0.0
    %v4577 = vmax.f32 %v4417, 0.0
    %v4578 = vmax.f32 %v4418, 0.0
    %v4579 = vmax.f32 %v4419, 0.0
    %v4580 = vmax.f32 %v4420, 0.0
    %v4581 = vmax.f32 %v4421, 0.0
    %v4582 = vmax.f32 %v4422, 0.0
    %v4583 = vmax.f32 %v4423, 0.0
    %v4584 = vmax.f32 %v4424, 0.0
    %v4585 = vmax.f32 %v4425, 0.0
    %v4586 = vmax.f32 %v4426, 0.0
    %v4587 = vmax.f32 %v4427, 0.0
    %v4588 = vmax.f32 %v4428, 0.0
    %v4589 = vmax.f32 %v4429, 0.0
    %v4590 = vmax.f32 %v4430, 0.0
    %v4591 = vmax.f32 %v4431, 0.0
    %v4592 = vmax.f32 %v4432, 0.0
    %v4593 = vmax.f32 %v4433, 0.0
    %v4594 = vmax.f32 %v4434, 0.0
    %v4595 = vmax.f32 %v4435, 0.0
    %v4596 = vmax.f32 %v4436, 0.0
    %v4597 = vmax.f32 %v4437, 0.0
    %v4598 = vmax.f32 %v4438, 0.0
    %v4599 = vmax.f32 %v4439, 0.0
    %v4600 = vmax.f32 %v4440, 0.0
    %v4601 = vmax.f32 %v4441, 0.0
    %v4602 = vmax.f32 %v4442, 0.0
    %v4603 = vmax.f32 %v4443, 0.0
    %v4604 = vmax.f32 %v4444, 0.0
    %v4605 = vmax.f32 %v4445, 0.0
    %v4606 = vmax.f32 %v4446, 0.0
    %v4607 = vmax.f32 %v4447, 0.0
    %v4608 = vmax.f32 %v4448, 0.0
    %v4609 = vmax.f32 %v4449, 0.0
    %v4610 = vmax.f32 %v4450, 0.0
    %v4611 = vmax.f32 %v4451, 0.0
    %v4612 = vmax.f32 %v4452, 0.0
    %v4613 = vmax.f32 %v4453, 0.0
    %v4614 = vmax.f32 %v4454, 0.0
    %v4615 = vmax.f32 %v4455, 0.0
    %v4616 = vmax.f32 %v4456, 0.0
    %v4617 = vmax.f32 %v4457, 0.0
    %v4618 = vmax.f32 %v4458, 0.0
    %v4619 = vmax.f32 %v4459, 0.0
    %v4620 = vmax.f32 %v4460, 0.0
    %v4621 = vmax.f32 %v4461, 0.0
    %v4622 = vmax.f32 %v4462, 0.0
    %v4623 = vmax.f32 %v4463, 0.0
    %v4624 = vmax.f32 %v4464, 0.0
    %v4625 = vmax.f32 %v4465, 0.0
    %v4626 = vmax.f32 %v4466, 0.0
    %v4627 = vmax.f32 %v4467, 0.0
    %v4628 = vmax.f32 %v4468, 0.0
    %v4629 = vmax.f32 %v4469, 0.0
    %v4630 = vmax.f32 %v4470, 0.0
    %v4631 = vmax.f32 %v4471, 0.0
    %v4632 = vmax.f32 %v4472, 0.0
    %v4633 = vmax.f32 %v4473, 0.0
    %v4634 = vmax.f32 %v4474, 0.0
    %v4635 = vmax.f32 %v4475, 0.0
    %v4636 = vmax.f32 %v4476, 0.0
    %v4637 = vmax.f32 %v4477, 0.0
    %v4638 = vmax.f32 %v4478, 0.0
    %v4639 = vmax.f32 %v4479, 0.0
    %v4640 = vmax.f32 %v4480, 0.0
    %v4641 = vmax.f32 %v4481, 0.0
    %v4642 = vmax.f32 %v4482, 0.0
    %v4643 = vmax.f32 %v4483, 0.0
    %v4644 = vmax.f32 %v4484, 0.0
    %v4645 = vmax.f32 %v4485, 0.0
    %v4646 = vmax.f32 %v4486, 0.0
    %v4647 = vmax.f32 %v4487, 0.0
    %v4648 = vmax.f32 %v4488, 0.0
    %v4649 = vmax.f32 %v4489, 0.0
    %v4650 = vmax.f32 %v4490, 0.0
    %v4651 = vmax.f32 %v4491, 0.0
    %v4652 = vmax.f32 %v4492, 0.0
    %v4653 = vmax.f32 %v4493, 0.0
    %v4654 = vmax.f32 %v4494, 0.0
    %v4655 = vmax.f32 %v4495, 0.0
    %v4656 = vmax.f32 %v4496, 0.0
    %v4657 = vmax.f32 %v4497, 0.0
    %v4658 = vmax.f32 %v4498, 0.0
    %v4659 = vmax.f32 %v4499, 0.0
    %v4660 = vmax.f32 %v4500, 0.0
    %v4661 = vmax.f32 %v4501, 0.0
    %v4662 = vmax.f32 %v4502, 0.0
    %v4663 = vmax.f32 %v4503, 0.0
    %v4664 = vmax.f32 %v4504, 0.0
    %v4665 = vmax.f32 %v4505, 0.0
    %v4666 = vmax.f32 %v4506, 0.0
    %v4667 = vmax.f32 %v4507, 0.0
    %v4668 = vmax.f32 %v4508, 0.0
    %v4669 = vmax.f32 %v4509, 0.0
    %v4670 = vmax.f32 %v4510, 0.0
    %v4671 = vmax.f32 %v4511, 0.0
    %v4672 = vmax.f32 %v4512, 0.0
    %v4673 = vmax.f32 %v4513, 0.0
    %v4674 = vmax.f32 %v4514, 0.0
    %v4675 = vmax.f32 %v4515, 0.0
    %v4676 = vmax.f32 %v4516, 0.0
    %v4677 = vmax.f32 %v4517, 0.0
    %v4678 = vmax.f32 %v4518, 0.0
    %v4679 = vmax.f32 %v4519, 0.0
    %v4680 = vmax.f32 %v4520, 0.0
    %v4681 = vmax.f32 %v4521, 0.0
    %v4682 = vmax.f32 %v4522, 0.0
    %v4683 = vmax.f32 %v4523, 0.0
    %v4684 = vmax.f32 %v4524, 0.0
    %v4685 = vmax.f32 %v4525, 0.0
    %v4686 = vmax.f32 %v4526, 0.0
    %v4687 = vmax.f32 %v4527, 0.0
    %v4688 = vmax.f32 %v4528, 0.0
    %v4689 = vmax.f32 %v4529, 0.0
    %v4690 = vmax.f32 %v4530, 0.0
    %v4691 = vmax.f32 %v4531, 0.0
    %v4692 = vmax.f32 %v4532, 0.0
    %v4693 = vmax.f32 %v4533, 0.0
    %v4694 = vmax.f32 %v4534, 0.0
    %v4695 = vmax.f32 %v4535, 0.0
    %v4696 = vmax.f32 %v4536, 0.0
    %v4697 = vmax.f32 %v4537, 0.0
    %v4698 = vmax.f32 %v4538, 0.0
    %v4699 = vmax.f32 %v4539, 0.0
    %v4700 = vmax.f32 %v4540, 0.0
    %v4701 = vmax.f32 %v4541, 0.0
    %v4702 = vmax.f32 %v4542, 0.0
    %v4703 = vmax.f32 %v4543, 0.0
    %v4704 = vmax.f32 %v4544, 0.0
    %v4705 = vmax.f32 %v4545, 0.0
    %v4706 = vmax.f32 %v4546, 0.0
    %v4707 = vmax.f32 %v4547, 0.0
    %v4708 = vmax.f32 %v4548, 0.0
    %v4709 = vmax.f32 %v4549, 0.0
    %v4710 = vmax.f32 %v4550, 0.0
    %v4711 = vmax.f32 %v4551, 0.0
    %v4712 = vmax.f32 %v4552, 0.0
    %v4713 = vmax.f32 %v4553, 0.0
    %v4714 = vmax.f32 %v4554, 0.0
    %v4715 = vmax.f32 %v4555, 0.0
    %v4716 = vmax.f32 %v4556, 0.0
    %v4717 = vmax.f32 %v4557, 0.0
    %v4718 = vmax.f32 %v4558, 0.0
    %v4719 = vmax.f32 %v4559, 0.0
    %v4720 = vmax.f32 %v3464, %v4560
    %v4721 = vmax.f32 %v3465, %v4561
    %v4722 = vmax.f32 %v3466, %v4562
    %v4723 = vmax.f32 %v3467, %v4563
    %v4724 = vmax.f32 %v3468, %v4564
    %v4725 = vmax.f32 %v3469, %v4565
    %v4726 = vmax.f32 %v3470, %v4566
    %v4727 = vmax.f32 %v3471, %v4567
    %v4728 = vmax.f32 %v3472, %v4568
    %v4729 = vmax.f32 %v3473, %v4569
    %v4730 = vmax.f32 %v3474, %v4570
    %v4731 = vmax.f32 %v3475, %v4571
    %v4732 = vmax.f32 %v3476, %v4572
    %v4733 = vmax.f32 %v3477, %v4573
    %v4734 = vmax.f32 %v3478, %v4574
    %v4735 = vmax.f32 %v3479, %v4575
    %v4736 = vmax.f32 %v3480, %v4576
    %v4737 = vmax.f32 %v3481, %v4577
    %v4738 = vmax.f32 %v3482, %v4578
    %v4739 = vmax.f32 %v3483, %v4579
    %v4740 = vmax.f32 %v3484, %v4580
    %v4741 = vmax.f32 %v3485, %v4581
    %v4742 = vmax.f32 %v3486, %v4582
    %v4743 = vmax.f32 %v3487, %v4583
    %v4744 = vmax.f32 %v3488, %v4584
    %v4745 = vmax.f32 %v3489, %v4585
    %v4746 = vmax.f32 %v3490, %v4586
    %v4747 = vmax.f32 %v3491, %v4587
    %v4748 = vmax.f32 %v3492, %v4588
    %v4749 = vmax.f32 %v3493, %v4589
    %v4750 = vmax.f32 %v3494, %v4590
    %v4751 = vmax.f32 %v3495, %v4591
    %v4752 = vmax.f32 %v4720, %v4592
    %v4753 = vmax.f32 %v4721, %v4593
    %v4754 = vmax.f32 %v4722, %v4594
    %v4755 = vmax.f32 %v4723, %v4595
    %v4756 = vmax.f32 %v4724, %v4596
    %v4757 = vmax.f32 %v4725, %v4597
    %v4758 = vmax.f32 %v4726, %v4598
    %v4759 = vmax.f32 %v4727, %v4599
    %v4760 = vmax.f32 %v4728, %v4600
    %v4761 = vmax.f32 %v4729, %v4601
    %v4762 = vmax.f32 %v4730, %v4602
    %v4763 = vmax.f32 %v4731, %v4603
    %v4764 = vmax.f32 %v4732, %v4604
    %v4765 = vmax.f32 %v4733, %v4605
    %v4766 = vmax.f32 %v4734, %v4606
    %v4767 = vmax.f32 %v4735, %v4607
    %v4768 = vmax.f32 %v4736, %v4608
    %v4769 = vmax.f32 %v4737, %v4609
    %v4770 = vmax.f32 %v4738, %v4610
    %v4771 = vmax.f32 %v4739, %v4611
    %v4772 = vmax.f32 %v4740, %v4612
    %v4773 = vmax.f32 %v4741, %v4613
    %v4774 = vmax.f32 %v4742, %v4614
    %v4775 = vmax.f32 %v4743, %v4615
    %v4776 = vmax.f32 %v4744, %v4616
    %v4777 = vmax.f32 %v4745, %v4617
    %v4778 = vmax.f32 %v4746, %v4618
    %v4779 = vmax.f32 %v4747, %v4619
    %v4780 = vmax.f32 %v4748, %v4620
    %v4781 = vmax.f32 %v4749, %v4621
    %v4782 = vmax.f32 %v4750, %v4622
    %v4783 = vmax.f32 %v4751, %v4623
    %v4784 = vmax.f32 %v3560, %v4624
    %v4785 = vmax.f32 %v3561, %v4625
    %v4786 = vmax.f32 %v3562, %v4626
    %v4787 = vmax.f32 %v3563, %v4627
    %v4788 = vmax.f32 %v3564, %v4628
    %v4789 = vmax.f32 %v3565, %v4629
    %v4790 = vmax.f32 %v3566, %v4630
    %v4791 = vmax.f32 %v3567, %v4631
    %v4792 = vmax.f32 %v3568, %v4632
    %v4793 = vmax.f32 %v3569, %v4633
    %v4794 = vmax.f32 %v3570, %v4634
    %v4795 = vmax.f32 %v3571, %v4635
    %v4796 = vmax.f32 %v3572, %v4636
    %v4797 = vmax.f32 %v3573, %v4637
    %v4798 = vmax.f32 %v3574, %v4638
    %v4799 = vmax.f32 %v3575, %v4639
    %v4800 = vmax.f32 %v3576, %v4640
    %v4801 = vmax.f32 %v3577, %v4641
    %v4802 = vmax.f32 %v3578, %v4642
    %v4803 = vmax.f32 %v3579, %v4643
    %v4804 = vmax.f32 %v3580, %v4644
    %v4805 = vmax.f32 %v3581, %v4645
    %v4806 = vmax.f32 %v3582, %v4646
    %v4807 = vmax.f32 %v3583, %v4647
    %v4808 = vmax.f32 %v3584, %v4648
    %v4809 = vmax.f32 %v3585, %v4649
    %v4810 = vmax.f32 %v3586, %v4650
    %v4811 = vmax.f32 %v3587, %v4651
    %v4812 = vmax.f32 %v3588, %v4652
    %v4813 = vmax.f32 %v3589, %v4653
    %v4814 = vmax.f32 %v3590, %v4654
    %v4815 = vmax.f32 %v3591, %v4655
    %v4816 = vmax.f32 %v4784, %v4656
    %v4817 = vmax.f32 %v4785, %v4657
    %v4818 = vmax.f32 %v4786, %v4658
    %v4819 = vmax.f32 %v4787, %v4659
    %v4820 = vmax.f32 %v4788, %v4660
    %v4821 = vmax.f32 %v4789, %v4661
    %v4822 = vmax.f32 %v4790, %v4662
    %v4823 = vmax.f32 %v4791, %v4663
    %v4824 = vmax.f32 %v4792, %v4664
    %v4825 = vmax.f32 %v4793, %v4665
    %v4826 = vmax.f32 %v4794, %v4666
    %v4827 = vmax.f32 %v4795, %v4667
    %v4828 = vmax.f32 %v4796, %v4668
    %v4829 = vmax.f32 %v4797, %v4669
    %v4830 = vmax.f32 %v4798, %v4670
    %v4831 = vmax.f32 %v4799, %v4671
    %v4832 = vmax.f32 %v4800, %v4672
    %v4833 = vmax.f32 %v4801, %v4673
    %v4834 = vmax.f32 %v4802, %v4674
    %v4835 = vmax.f32 %v4803, %v4675
    %v4836 = vmax.f32 %v4804, %v4676
    %v4837 = vmax.f32 %v4805, %v4677
    %v4838 = vmax.f32 %v4806, %v4678
    %v4839 = vmax.f32 %v4807, %v4679
    %v4840 = vmax.f32 %v4808, %v4680
    %v4841 = vmax.f32 %v4809, %v4681
    %v4842 = vmax.f32 %v4810, %v4682
    %v4843 = vmax.f32 %v4811, %v4683
    %v4844 = vmax.f32 %v4812, %v4684
    %v4845 = vmax.f32 %v4813, %v4685
    %v4846 = vmax.f32 %v4814, %v4686
    %v4847 = vmax.f32 %v4815, %v4687
    %v4848 = vmax.f32 %v4816, %v4688
    %v4849 = vmax.f32 %v4817, %v4689
    %v4850 = vmax.f32 %v4818, %v4690
    %v4851 = vmax.f32 %v4819, %v4691
    %v4852 = vmax.f32 %v4820, %v4692
    %v4853 = vmax.f32 %v4821, %v4693
    %v4854 = vmax.f32 %v4822, %v4694
    %v4855 = vmax.f32 %v4823, %v4695
    %v4856 = vmax.f32 %v4824, %v4696
    %v4857 = vmax.f32 %v4825, %v4697
    %v4858 = vmax.f32 %v4826, %v4698
    %v4859 = vmax.f32 %v4827, %v4699
    %v4860 = vmax.f32 %v4828, %v4700
    %v4861 = vmax.f32 %v4829, %v4701
    %v4862 = vmax.f32 %v4830, %v4702
    %v4863 = vmax.f32 %v4831, %v4703
    %v4864 = vmax.f32 %v4832, %v4704
    %v4865 = vmax.f32 %v4833, %v4705
    %v4866 = vmax.f32 %v4834, %v4706
    %v4867 = vmax.f32 %v4835, %v4707
    %v4868 = vmax.f32 %v4836, %v4708
    %v4869 = vmax.f32 %v4837, %v4709
    %v4870 = vmax.f32 %v4838, %v4710
    %v4871 = vmax.f32 %v4839, %v4711
    %v4872 = vmax.f32 %v4840, %v4712
    %v4873 = vmax.f32 %v4841, %v4713
    %v4874 = vmax.f32 %v4842, %v4714
    %v4875 = vmax.f32 %v4843, %v4715
    %v4876 = vmax.f32 %v4844, %v4716
    %v4877 = vmax.f32 %v4845, %v4717
    %v4878 = vmax.f32 %v4846, %v4718
    %v4879 = vmax.f32 %v4847, %v4719
    %s4880 = sld [smem:[#allocation7 + $0x9]]
    %v4881 = vstv %s4880
    %v4882 = vmul.f32 %v216, %v4881
    %v4883 = vmul.f32 %v217, %v4881
    %v4884 = vmul.f32 %v218, %v4881
    %v4885 = vmul.f32 %v219, %v4881
    %v4886 = vmul.f32 %v220, %v4881
    %v4887 = vmul.f32 %v221, %v4881
    %v4888 = vmul.f32 %v222, %v4881
    %v4889 = vmul.f32 %v223, %v4881
    %v4890 = vmul.f32 %v224, %v4881
    %v4891 = vmul.f32 %v225, %v4881
    %v4892 = vmul.f32 %v226, %v4881
    %v4893 = vmul.f32 %v227, %v4881
    %v4894 = vmul.f32 %v228, %v4881
    %v4895 = vmul.f32 %v229, %v4881
    %v4896 = vmul.f32 %v230, %v4881
    %v4897 = vmul.f32 %v231, %v4881
    %v4898 = vmul.f32 %v232, %v4881
    %v4899 = vmul.f32 %v233, %v4881
    %v4900 = vmul.f32 %v234, %v4881
    %v4901 = vmul.f32 %v235, %v4881
    %v4902 = vmul.f32 %v236, %v4881
    %v4903 = vmul.f32 %v237, %v4881
    %v4904 = vmul.f32 %v238, %v4881
    %v4905 = vmul.f32 %v239, %v4881
    %v4906 = vmul.f32 %v240, %v4881
    %v4907 = vmul.f32 %v241, %v4881
    %v4908 = vmul.f32 %v242, %v4881
    %v4909 = vmul.f32 %v243, %v4881
    %v4910 = vmul.f32 %v244, %v4881
    %v4911 = vmul.f32 %v245, %v4881
    %v4912 = vmul.f32 %v246, %v4881
    %v4913 = vmul.f32 %v247, %v4881
    %v4914 = vmul.f32 %v248, %v4881
    %v4915 = vmul.f32 %v249, %v4881
    %v4916 = vmul.f32 %v250, %v4881
    %v4917 = vmul.f32 %v251, %v4881
    %v4918 = vmul.f32 %v252, %v4881
    %v4919 = vmul.f32 %v253, %v4881
    %v4920 = vmul.f32 %v254, %v4881
    %v4921 = vmul.f32 %v255, %v4881
    %v4922 = vmul.f32 %v256, %v4881
    %v4923 = vmul.f32 %v257, %v4881
    %v4924 = vmul.f32 %v258, %v4881
    %v4925 = vmul.f32 %v259, %v4881
    %v4926 = vmul.f32 %v260, %v4881
    %v4927 = vmul.f32 %v261, %v4881
    %v4928 = vmul.f32 %v262, %v4881
    %v4929 = vmul.f32 %v263, %v4881
    %v4930 = vmul.f32 %v264, %v4881
    %v4931 = vmul.f32 %v265, %v4881
    %v4932 = vmul.f32 %v266, %v4881
    %v4933 = vmul.f32 %v267, %v4881
    %v4934 = vmul.f32 %v268, %v4881
    %v4935 = vmul.f32 %v269, %v4881
    %v4936 = vmul.f32 %v270, %v4881
    %v4937 = vmul.f32 %v271, %v4881
    %v4938 = vmul.f32 %v272, %v4881
    %v4939 = vmul.f32 %v273, %v4881
    %v4940 = vmul.f32 %v274, %v4881
    %v4941 = vmul.f32 %v275, %v4881
    %v4942 = vmul.f32 %v276, %v4881
    %v4943 = vmul.f32 %v277, %v4881
    %v4944 = vmul.f32 %v278, %v4881
    %v4945 = vmul.f32 %v279, %v4881
    %v4946 = vmul.f32 %v280, %v4881
    %v4947 = vmul.f32 %v281, %v4881
    %v4948 = vmul.f32 %v282, %v4881
    %v4949 = vmul.f32 %v283, %v4881
    %v4950 = vmul.f32 %v284, %v4881
    %v4951 = vmul.f32 %v285, %v4881
    %v4952 = vmul.f32 %v286, %v4881
    %v4953 = vmul.f32 %v287, %v4881
    %v4954 = vmul.f32 %v288, %v4881
    %v4955 = vmul.f32 %v289, %v4881
    %v4956 = vmul.f32 %v290, %v4881
    %v4957 = vmul.f32 %v291, %v4881
    %v4958 = vmul.f32 %v292, %v4881
    %v4959 = vmul.f32 %v293, %v4881
    %v4960 = vmul.f32 %v294, %v4881
    %v4961 = vmul.f32 %v295, %v4881
    %v4962 = vmul.f32 %v296, %v4881
    %v4963 = vmul.f32 %v297, %v4881
    %v4964 = vmul.f32 %v298, %v4881
    %v4965 = vmul.f32 %v299, %v4881
    %v4966 = vmul.f32 %v300, %v4881
    %v4967 = vmul.f32 %v301, %v4881
    %v4968 = vmul.f32 %v302, %v4881
    %v4969 = vmul.f32 %v303, %v4881
    %v4970 = vmul.f32 %v304, %v4881
    %v4971 = vmul.f32 %v305, %v4881
    %v4972 = vmul.f32 %v306, %v4881
    %v4973 = vmul.f32 %v307, %v4881
    %v4974 = vmul.f32 %v308, %v4881
    %v4975 = vmul.f32 %v309, %v4881
    %v4976 = vmul.f32 %v310, %v4881
    %v4977 = vmul.f32 %v311, %v4881
    %v4978 = vmul.f32 %v312, %v4881
    %v4979 = vmul.f32 %v313, %v4881
    %v4980 = vmul.f32 %v314, %v4881
    %v4981 = vmul.f32 %v315, %v4881
    %v4982 = vmul.f32 %v316, %v4881
    %v4983 = vmul.f32 %v317, %v4881
    %v4984 = vmul.f32 %v318, %v4881
    %v4985 = vmul.f32 %v319, %v4881
    %v4986 = vmul.f32 %v320, %v4881
    %v4987 = vmul.f32 %v321, %v4881
    %v4988 = vmul.f32 %v322, %v4881
    %v4989 = vmul.f32 %v323, %v4881
    %v4990 = vmul.f32 %v324, %v4881
    %v4991 = vmul.f32 %v325, %v4881
    %v4992 = vmul.f32 %v326, %v4881
    %v4993 = vmul.f32 %v327, %v4881
    %v4994 = vmul.f32 %v328, %v4881
    %v4995 = vmul.f32 %v329, %v4881
    %v4996 = vmul.f32 %v330, %v4881
    %v4997 = vmul.f32 %v331, %v4881
    %v4998 = vmul.f32 %v332, %v4881
    %v4999 = vmul.f32 %v333, %v4881
    %v5000 = vmul.f32 %v334, %v4881
    %v5001 = vmul.f32 %v335, %v4881
    %v5002 = vmul.f32 %v336, %v4881
    %v5003 = vmul.f32 %v337, %v4881
    %v5004 = vmul.f32 %v338, %v4881
    %v5005 = vmul.f32 %v339, %v4881
    %v5006 = vmul.f32 %v340, %v4881
    %v5007 = vmul.f32 %v341, %v4881
    %v5008 = vmul.f32 %v342, %v4881
    %v5009 = vmul.f32 %v343, %v4881
    %v5010 = vmul.f32 %v344, %v4881
    %v5011 = vmul.f32 %v345, %v4881
    %v5012 = vmul.f32 %v346, %v4881
    %v5013 = vmul.f32 %v347, %v4881
    %v5014 = vmul.f32 %v348, %v4881
    %v5015 = vmul.f32 %v349, %v4881
    %v5016 = vmul.f32 %v350, %v4881
    %v5017 = vmul.f32 %v351, %v4881
    %v5018 = vmul.f32 %v352, %v4881
    %v5019 = vmul.f32 %v353, %v4881
    %v5020 = vmul.f32 %v354, %v4881
    %v5021 = vmul.f32 %v355, %v4881
    %v5022 = vmul.f32 %v356, %v4881
    %v5023 = vmul.f32 %v357, %v4881
    %v5024 = vmul.f32 %v358, %v4881
    %v5025 = vmul.f32 %v359, %v4881
    %v5026 = vmul.f32 %v360, %v4881
    %v5027 = vmul.f32 %v361, %v4881
    %v5028 = vmul.f32 %v362, %v4881
    %v5029 = vmul.f32 %v363, %v4881
    %v5030 = vmul.f32 %v364, %v4881
    %v5031 = vmul.f32 %v365, %v4881
    %v5032 = vmul.f32 %v366, %v4881
    %v5033 = vmul.f32 %v367, %v4881
    %v5034 = vmul.f32 %v368, %v4881
    %v5035 = vmul.f32 %v369, %v4881
    %v5036 = vmul.f32 %v370, %v4881
    %v5037 = vmul.f32 %v371, %v4881
    %v5038 = vmul.f32 %v372, %v4881
    %v5039 = vmul.f32 %v373, %v4881
    %v5040 = vmul.f32 %v374, %v4881
    %v5041 = vmul.f32 %v375, %v4881
    %s5042 = sld [smem:[#allocation7 + $0xa]]
    %v5043 = vstv %s5042
    %v5044 = vmul.f32 %v377, %v5043
    %v5045 = vmul.f32 %v379, %v5043
    %v5046 = vmul.f32 %v381, %v5043
    %v5047 = vmul.f32 %v383, %v5043
    %v5048 = vmul.f32 %v385, %v5043
    %v5049 = vmul.f32 %v387, %v5043
    %v5050 = vmul.f32 %v389, %v5043
    %v5051 = vmul.f32 %v391, %v5043
    %v5052 = vmul.f32 %v393, %v5043
    %v5053 = vmul.f32 %v395, %v5043
    %v5054 = vmul.f32 %v397, %v5043
    %v5055 = vmul.f32 %v399, %v5043
    %v5056 = vmul.f32 %v401, %v5043
    %v5057 = vmul.f32 %v403, %v5043
    %v5058 = vmul.f32 %v405, %v5043
    %v5059 = vmul.f32 %v407, %v5043
    %v5060 = vmul.f32 %v409, %v5043
    %v5061 = vmul.f32 %v411, %v5043
    %v5062 = vmul.f32 %v413, %v5043
    %v5063 = vmul.f32 %v415, %v5043
    %v5064 = vmul.f32 %v417, %v5043
    %v5065 = vmul.f32 %v419, %v5043
    %v5066 = vmul.f32 %v421, %v5043
    %v5067 = vmul.f32 %v423, %v5043
    %v5068 = vmul.f32 %v425, %v5043
    %v5069 = vmul.f32 %v427, %v5043
    %v5070 = vmul.f32 %v429, %v5043
    %v5071 = vmul.f32 %v431, %v5043
    %v5072 = vmul.f32 %v433, %v5043
    %v5073 = vmul.f32 %v435, %v5043
    %v5074 = vmul.f32 %v437, %v5043
    %v5075 = vmul.f32 %v439, %v5043
    %v5076 = vmul.f32 %v441, %v5043
    %v5077 = vmul.f32 %v443, %v5043
    %v5078 = vmul.f32 %v445, %v5043
    %v5079 = vmul.f32 %v447, %v5043
    %v5080 = vmul.f32 %v449, %v5043
    %v5081 = vmul.f32 %v451, %v5043
    %v5082 = vmul.f32 %v453, %v5043
    %v5083 = vmul.f32 %v455, %v5043
    %v5084 = vmul.f32 %v457, %v5043
    %v5085 = vmul.f32 %v459, %v5043
    %v5086 = vmul.f32 %v461, %v5043
    %v5087 = vmul.f32 %v463, %v5043
    %v5088 = vmul.f32 %v465, %v5043
    %v5089 = vmul.f32 %v467, %v5043
    %v5090 = vmul.f32 %v469, %v5043
    %v5091 = vmul.f32 %v471, %v5043
    %v5092 = vmul.f32 %v473, %v5043
    %v5093 = vmul.f32 %v475, %v5043
    %v5094 = vmul.f32 %v477, %v5043
    %v5095 = vmul.f32 %v479, %v5043
    %v5096 = vmul.f32 %v481, %v5043
    %v5097 = vmul.f32 %v483, %v5043
    %v5098 = vmul.f32 %v485, %v5043
    %v5099 = vmul.f32 %v487, %v5043
    %v5100 = vmul.f32 %v489, %v5043
    %v5101 = vmul.f32 %v491, %v5043
    %v5102 = vmul.f32 %v493, %v5043
    %v5103 = vmul.f32 %v495, %v5043
    %v5104 = vmul.f32 %v497, %v5043
    %v5105 = vmul.f32 %v499, %v5043
    %v5106 = vmul.f32 %v501, %v5043
    %v5107 = vmul.f32 %v503, %v5043
    %v5108 = vmul.f32 %v505, %v5043
    %v5109 = vmul.f32 %v507, %v5043
    %v5110 = vmul.f32 %v509, %v5043
    %v5111 = vmul.f32 %v511, %v5043
    %v5112 = vmul.f32 %v513, %v5043
    %v5113 = vmul.f32 %v515, %v5043
    %v5114 = vmul.f32 %v517, %v5043
    %v5115 = vmul.f32 %v519, %v5043
    %v5116 = vmul.f32 %v521, %v5043
    %v5117 = vmul.f32 %v523, %v5043
    %v5118 = vmul.f32 %v525, %v5043
    %v5119 = vmul.f32 %v527, %v5043
    %v5120 = vmul.f32 %v529, %v5043
    %v5121 = vmul.f32 %v531, %v5043
    %v5122 = vmul.f32 %v533, %v5043
    %v5123 = vmul.f32 %v535, %v5043
    %v5124 = vmul.f32 %v537, %v5043
    %v5125 = vmul.f32 %v539, %v5043
    %v5126 = vmul.f32 %v541, %v5043
    %v5127 = vmul.f32 %v543, %v5043
    %v5128 = vmul.f32 %v545, %v5043
    %v5129 = vmul.f32 %v547, %v5043
    %v5130 = vmul.f32 %v549, %v5043
    %v5131 = vmul.f32 %v551, %v5043
    %v5132 = vmul.f32 %v553, %v5043
    %v5133 = vmul.f32 %v555, %v5043
    %v5134 = vmul.f32 %v557, %v5043
    %v5135 = vmul.f32 %v559, %v5043
    %v5136 = vmul.f32 %v561, %v5043
    %v5137 = vmul.f32 %v563, %v5043
    %v5138 = vmul.f32 %v565, %v5043
    %v5139 = vmul.f32 %v567, %v5043
    %v5140 = vmul.f32 %v569, %v5043
    %v5141 = vmul.f32 %v571, %v5043
    %v5142 = vmul.f32 %v573, %v5043
    %v5143 = vmul.f32 %v575, %v5043
    %v5144 = vmul.f32 %v577, %v5043
    %v5145 = vmul.f32 %v579, %v5043
    %v5146 = vmul.f32 %v581, %v5043
    %v5147 = vmul.f32 %v583, %v5043
    %v5148 = vmul.f32 %v585, %v5043
    %v5149 = vmul.f32 %v587, %v5043
    %v5150 = vmul.f32 %v589, %v5043
    %v5151 = vmul.f32 %v591, %v5043
    %v5152 = vmul.f32 %v593, %v5043
    %v5153 = vmul.f32 %v595, %v5043
    %v5154 = vmul.f32 %v597, %v5043
    %v5155 = vmul.f32 %v599, %v5043
    %v5156 = vmul.f32 %v601, %v5043
    %v5157 = vmul.f32 %v603, %v5043
    %v5158 = vmul.f32 %v605, %v5043
    %v5159 = vmul.f32 %v607, %v5043
    %v5160 = vmul.f32 %v609, %v5043
    %v5161 = vmul.f32 %v611, %v5043
    %v5162 = vmul.f32 %v613, %v5043
    %v5163 = vmul.f32 %v615, %v5043
    %v5164 = vmul.f32 %v617, %v5043
    %v5165 = vmul.f32 %v619, %v5043
    %v5166 = vmul.f32 %v621, %v5043
    %v5167 = vmul.f32 %v623, %v5043
    %v5168 = vmul.f32 %v625, %v5043
    %v5169 = vmul.f32 %v627, %v5043
    %v5170 = vmul.f32 %v629, %v5043
    %v5171 = vmul.f32 %v631, %v5043
    %v5172 = vmul.f32 %v633, %v5043
    %v5173 = vmul.f32 %v635, %v5043
    %v5174 = vmul.f32 %v637, %v5043
    %v5175 = vmul.f32 %v639, %v5043
    %v5176 = vmul.f32 %v641, %v5043
    %v5177 = vmul.f32 %v643, %v5043
    %v5178 = vmul.f32 %v645, %v5043
    %v5179 = vmul.f32 %v647, %v5043
    %v5180 = vmul.f32 %v649, %v5043
    %v5181 = vmul.f32 %v651, %v5043
    %v5182 = vmul.f32 %v653, %v5043
    %v5183 = vmul.f32 %v655, %v5043
    %v5184 = vmul.f32 %v657, %v5043
    %v5185 = vmul.f32 %v659, %v5043
    %v5186 = vmul.f32 %v661, %v5043
    %v5187 = vmul.f32 %v663, %v5043
    %v5188 = vmul.f32 %v665, %v5043
    %v5189 = vmul.f32 %v667, %v5043
    %v5190 = vmul.f32 %v669, %v5043
    %v5191 = vmul.f32 %v671, %v5043
    %v5192 = vmul.f32 %v673, %v5043
    %v5193 = vmul.f32 %v675, %v5043
    %v5194 = vmul.f32 %v677, %v5043
    %v5195 = vmul.f32 %v679, %v5043
    %v5196 = vmul.f32 %v681, %v5043
    %v5197 = vmul.f32 %v683, %v5043
    %v5198 = vmul.f32 %v685, %v5043
    %v5199 = vmul.f32 %v687, %v5043
    %v5200 = vmul.f32 %v689, %v5043
    %v5201 = vmul.f32 %v691, %v5043
    %v5202 = vmul.f32 %v693, %v5043
    %v5203 = vmul.f32 %v695, %v5043
    %v5204 = vadd.f32 %v4882, %v5044
    %v5205 = vadd.f32 %v4883, %v5045
    %v5206 = vadd.f32 %v4884, %v5046
    %v5207 = vadd.f32 %v4885, %v5047
    %v5208 = vadd.f32 %v4886, %v5048
    %v5209 = vadd.f32 %v4887, %v5049
    %v5210 = vadd.f32 %v4888, %v5050
    %v5211 = vadd.f32 %v4889, %v5051
    %v5212 = vadd.f32 %v4890, %v5052
    %v5213 = vadd.f32 %v4891, %v5053
    %v5214 = vadd.f32 %v4892, %v5054
    %v5215 = vadd.f32 %v4893, %v5055
    %v5216 = vadd.f32 %v4894, %v5056
    %v5217 = vadd.f32 %v4895, %v5057
    %v5218 = vadd.f32 %v4896, %v5058
    %v5219 = vadd.f32 %v4897, %v5059
    %v5220 = vadd.f32 %v4898, %v5060
    %v5221 = vadd.f32 %v4899, %v5061
    %v5222 = vadd.f32 %v4900, %v5062
    %v5223 = vadd.f32 %v4901, %v5063
    %v5224 = vadd.f32 %v4902, %v5064
    %v5225 = vadd.f32 %v4903, %v5065
    %v5226 = vadd.f32 %v4904, %v5066
    %v5227 = vadd.f32 %v4905, %v5067
    %v5228 = vadd.f32 %v4906, %v5068
    %v5229 = vadd.f32 %v4907, %v5069
    %v5230 = vadd.f32 %v4908, %v5070
    %v5231 = vadd.f32 %v4909, %v5071
    %v5232 = vadd.f32 %v4910, %v5072
    %v5233 = vadd.f32 %v4911, %v5073
    %v5234 = vadd.f32 %v4912, %v5074
    %v5235 = vadd.f32 %v4913, %v5075
    %v5236 = vadd.f32 %v4914, %v5076
    %v5237 = vadd.f32 %v4915, %v5077
    %v5238 = vadd.f32 %v4916, %v5078
    %v5239 = vadd.f32 %v4917, %v5079
    %v5240 = vadd.f32 %v4918, %v5080
    %v5241 = vadd.f32 %v4919, %v5081
    %v5242 = vadd.f32 %v4920, %v5082
    %v5243 = vadd.f32 %v4921, %v5083
    %v5244 = vadd.f32 %v4922, %v5084
    %v5245 = vadd.f32 %v4923, %v5085
    %v5246 = vadd.f32 %v4924, %v5086
    %v5247 = vadd.f32 %v4925, %v5087
    %v5248 = vadd.f32 %v4926, %v5088
    %v5249 = vadd.f32 %v4927, %v5089
    %v5250 = vadd.f32 %v4928, %v5090
    %v5251 = vadd.f32 %v4929, %v5091
    %v5252 = vadd.f32 %v4930, %v5092
    %v5253 = vadd.f32 %v4931, %v5093
    %v5254 = vadd.f32 %v4932, %v5094
    %v5255 = vadd.f32 %v4933, %v5095
    %v5256 = vadd.f32 %v4934, %v5096
    %v5257 = vadd.f32 %v4935, %v5097
    %v5258 = vadd.f32 %v4936, %v5098
    %v5259 = vadd.f32 %v4937, %v5099
    %v5260 = vadd.f32 %v4938, %v5100
    %v5261 = vadd.f32 %v4939, %v5101
    %v5262 = vadd.f32 %v4940, %v5102
    %v5263 = vadd.f32 %v4941, %v5103
    %v5264 = vadd.f32 %v4942, %v5104
    %v5265 = vadd.f32 %v4943, %v5105
    %v5266 = vadd.f32 %v4944, %v5106
    %v5267 = vadd.f32 %v4945, %v5107
    %v5268 = vadd.f32 %v4946, %v5108
    %v5269 = vadd.f32 %v4947, %v5109
    %v5270 = vadd.f32 %v4948, %v5110
    %v5271 = vadd.f32 %v4949, %v5111
    %v5272 = vadd.f32 %v4950, %v5112
    %v5273 = vadd.f32 %v4951, %v5113
    %v5274 = vadd.f32 %v4952, %v5114
    %v5275 = vadd.f32 %v4953, %v5115
    %v5276 = vadd.f32 %v4954, %v5116
    %v5277 = vadd.f32 %v4955, %v5117
    %v5278 = vadd.f32 %v4956, %v5118
    %v5279 = vadd.f32 %v4957, %v5119
    %v5280 = vadd.f32 %v4958, %v5120
    %v5281 = vadd.f32 %v4959, %v5121
    %v5282 = vadd.f32 %v4960, %v5122
    %v5283 = vadd.f32 %v4961, %v5123
    %v5284 = vadd.f32 %v4962, %v5124
    %v5285 = vadd.f32 %v4963, %v5125
    %v5286 = vadd.f32 %v4964, %v5126
    %v5287 = vadd.f32 %v4965, %v5127
    %v5288 = vadd.f32 %v4966, %v5128
    %v5289 = vadd.f32 %v4967, %v5129
    %v5290 = vadd.f32 %v4968, %v5130
    %v5291 = vadd.f32 %v4969, %v5131
    %v5292 = vadd.f32 %v4970, %v5132
    %v5293 = vadd.f32 %v4971, %v5133
    %v5294 = vadd.f32 %v4972, %v5134
    %v5295 = vadd.f32 %v4973, %v5135
    %v5296 = vadd.f32 %v4974, %v5136
    %v5297 = vadd.f32 %v4975, %v5137
    %v5298 = vadd.f32 %v4976, %v5138
    %v5299 = vadd.f32 %v4977, %v5139
    %v5300 = vadd.f32 %v4978, %v5140
    %v5301 = vadd.f32 %v4979, %v5141
    %v5302 = vadd.f32 %v4980, %v5142
    %v5303 = vadd.f32 %v4981, %v5143
    %v5304 = vadd.f32 %v4982, %v5144
    %v5305 = vadd.f32 %v4983, %v5145
    %v5306 = vadd.f32 %v4984, %v5146
    %v5307 = vadd.f32 %v4985, %v5147
    %v5308 = vadd.f32 %v4986, %v5148
    %v5309 = vadd.f32 %v4987, %v5149
    %v5310 = vadd.f32 %v4988, %v5150
    %v5311 = vadd.f32 %v4989, %v5151
    %v5312 = vadd.f32 %v4990, %v5152
    %v5313 = vadd.f32 %v4991, %v5153
    %v5314 = vadd.f32 %v4992, %v5154
    %v5315 = vadd.f32 %v4993, %v5155
    %v5316 = vadd.f32 %v4994, %v5156
    %v5317 = vadd.f32 %v4995, %v5157
    %v5318 = vadd.f32 %v4996, %v5158
    %v5319 = vadd.f32 %v4997, %v5159
    %v5320 = vadd.f32 %v4998, %v5160
    %v5321 = vadd.f32 %v4999, %v5161
    %v5322 = vadd.f32 %v5000, %v5162
    %v5323 = vadd.f32 %v5001, %v5163
    %v5324 = vadd.f32 %v5002, %v5164
    %v5325 = vadd.f32 %v5003, %v5165
    %v5326 = vadd.f32 %v5004, %v5166
    %v5327 = vadd.f32 %v5005, %v5167
    %v5328 = vadd.f32 %v5006, %v5168
    %v5329 = vadd.f32 %v5007, %v5169
    %v5330 = vadd.f32 %v5008, %v5170
    %v5331 = vadd.f32 %v5009, %v5171
    %v5332 = vadd.f32 %v5010, %v5172
    %v5333 = vadd.f32 %v5011, %v5173
    %v5334 = vadd.f32 %v5012, %v5174
    %v5335 = vadd.f32 %v5013, %v5175
    %v5336 = vadd.f32 %v5014, %v5176
    %v5337 = vadd.f32 %v5015, %v5177
    %v5338 = vadd.f32 %v5016, %v5178
    %v5339 = vadd.f32 %v5017, %v5179
    %v5340 = vadd.f32 %v5018, %v5180
    %v5341 = vadd.f32 %v5019, %v5181
    %v5342 = vadd.f32 %v5020, %v5182
    %v5343 = vadd.f32 %v5021, %v5183
    %v5344 = vadd.f32 %v5022, %v5184
    %v5345 = vadd.f32 %v5023, %v5185
    %v5346 = vadd.f32 %v5024, %v5186
    %v5347 = vadd.f32 %v5025, %v5187
    %v5348 = vadd.f32 %v5026, %v5188
    %v5349 = vadd.f32 %v5027, %v5189
    %v5350 = vadd.f32 %v5028, %v5190
    %v5351 = vadd.f32 %v5029, %v5191
    %v5352 = vadd.f32 %v5030, %v5192
    %v5353 = vadd.f32 %v5031, %v5193
    %v5354 = vadd.f32 %v5032, %v5194
    %v5355 = vadd.f32 %v5033, %v5195
    %v5356 = vadd.f32 %v5034, %v5196
    %v5357 = vadd.f32 %v5035, %v5197
    %v5358 = vadd.f32 %v5036, %v5198
    %v5359 = vadd.f32 %v5037, %v5199
    %v5360 = vadd.f32 %v5038, %v5200
    %v5361 = vadd.f32 %v5039, %v5201
    %v5362 = vadd.f32 %v5040, %v5202
    %v5363 = vadd.f32 %v5041, %v5203
    %s5364 = sld [smem:[#allocation7 + $0xb]]
    %v5365 = vstv %s5364
    %v5366 = vmul.f32 %v697, %v5365
    %v5367 = vmul.f32 %v699, %v5365
    %v5368 = vmul.f32 %v701, %v5365
    %v5369 = vmul.f32 %v703, %v5365
    %v5370 = vmul.f32 %v705, %v5365
    %v5371 = vmul.f32 %v707, %v5365
    %v5372 = vmul.f32 %v709, %v5365
    %v5373 = vmul.f32 %v711, %v5365
    %v5374 = vmul.f32 %v713, %v5365
    %v5375 = vmul.f32 %v715, %v5365
    %v5376 = vmul.f32 %v717, %v5365
    %v5377 = vmul.f32 %v719, %v5365
    %v5378 = vmul.f32 %v721, %v5365
    %v5379 = vmul.f32 %v723, %v5365
    %v5380 = vmul.f32 %v725, %v5365
    %v5381 = vmul.f32 %v727, %v5365
    %v5382 = vmul.f32 %v729, %v5365
    %v5383 = vmul.f32 %v731, %v5365
    %v5384 = vmul.f32 %v733, %v5365
    %v5385 = vmul.f32 %v735, %v5365
    %v5386 = vmul.f32 %v737, %v5365
    %v5387 = vmul.f32 %v739, %v5365
    %v5388 = vmul.f32 %v741, %v5365
    %v5389 = vmul.f32 %v743, %v5365
    %v5390 = vmul.f32 %v745, %v5365
    %v5391 = vmul.f32 %v747, %v5365
    %v5392 = vmul.f32 %v749, %v5365
    %v5393 = vmul.f32 %v751, %v5365
    %v5394 = vmul.f32 %v753, %v5365
    %v5395 = vmul.f32 %v755, %v5365
    %v5396 = vmul.f32 %v757, %v5365
    %v5397 = vmul.f32 %v759, %v5365
    %v5398 = vmul.f32 %v761, %v5365
    %v5399 = vmul.f32 %v763, %v5365
    %v5400 = vmul.f32 %v765, %v5365
    %v5401 = vmul.f32 %v767, %v5365
    %v5402 = vmul.f32 %v769, %v5365
    %v5403 = vmul.f32 %v771, %v5365
    %v5404 = vmul.f32 %v773, %v5365
    %v5405 = vmul.f32 %v775, %v5365
    %v5406 = vmul.f32 %v777, %v5365
    %v5407 = vmul.f32 %v779, %v5365
    %v5408 = vmul.f32 %v781, %v5365
    %v5409 = vmul.f32 %v783, %v5365
    %v5410 = vmul.f32 %v785, %v5365
    %v5411 = vmul.f32 %v787, %v5365
    %v5412 = vmul.f32 %v789, %v5365
    %v5413 = vmul.f32 %v791, %v5365
    %v5414 = vmul.f32 %v793, %v5365
    %v5415 = vmul.f32 %v795, %v5365
    %v5416 = vmul.f32 %v797, %v5365
    %v5417 = vmul.f32 %v799, %v5365
    %v5418 = vmul.f32 %v801, %v5365
    %v5419 = vmul.f32 %v803, %v5365
    %v5420 = vmul.f32 %v805, %v5365
    %v5421 = vmul.f32 %v807, %v5365
    %v5422 = vmul.f32 %v809, %v5365
    %v5423 = vmul.f32 %v811, %v5365
    %v5424 = vmul.f32 %v813, %v5365
    %v5425 = vmul.f32 %v815, %v5365
    %v5426 = vmul.f32 %v817, %v5365
    %v5427 = vmul.f32 %v819, %v5365
    %v5428 = vmul.f32 %v821, %v5365
    %v5429 = vmul.f32 %v823, %v5365
    %v5430 = vmul.f32 %v825, %v5365
    %v5431 = vmul.f32 %v827, %v5365
    %v5432 = vmul.f32 %v829, %v5365
    %v5433 = vmul.f32 %v831, %v5365
    %v5434 = vmul.f32 %v833, %v5365
    %v5435 = vmul.f32 %v835, %v5365
    %v5436 = vmul.f32 %v837, %v5365
    %v5437 = vmul.f32 %v839, %v5365
    %v5438 = vmul.f32 %v841, %v5365
    %v5439 = vmul.f32 %v843, %v5365
    %v5440 = vmul.f32 %v845, %v5365
    %v5441 = vmul.f32 %v847, %v5365
    %v5442 = vmul.f32 %v849, %v5365
    %v5443 = vmul.f32 %v851, %v5365
    %v5444 = vmul.f32 %v853, %v5365
    %v5445 = vmul.f32 %v855, %v5365
    %v5446 = vmul.f32 %v857, %v5365
    %v5447 = vmul.f32 %v859, %v5365
    %v5448 = vmul.f32 %v861, %v5365
    %v5449 = vmul.f32 %v863, %v5365
    %v5450 = vmul.f32 %v865, %v5365
    %v5451 = vmul.f32 %v867, %v5365
    %v5452 = vmul.f32 %v869, %v5365
    %v5453 = vmul.f32 %v871, %v5365
    %v5454 = vmul.f32 %v873, %v5365
    %v5455 = vmul.f32 %v875, %v5365
    %v5456 = vmul.f32 %v877, %v5365
    %v5457 = vmul.f32 %v879, %v5365
    %v5458 = vmul.f32 %v881, %v5365
    %v5459 = vmul.f32 %v883, %v5365
    %v5460 = vmul.f32 %v885, %v5365
    %v5461 = vmul.f32 %v887, %v5365
    %v5462 = vmul.f32 %v889, %v5365
    %v5463 = vmul.f32 %v891, %v5365
    %v5464 = vmul.f32 %v893, %v5365
    %v5465 = vmul.f32 %v895, %v5365
    %v5466 = vmul.f32 %v897, %v5365
    %v5467 = vmul.f32 %v899, %v5365
    %v5468 = vmul.f32 %v901, %v5365
    %v5469 = vmul.f32 %v903, %v5365
    %v5470 = vmul.f32 %v905, %v5365
    %v5471 = vmul.f32 %v907, %v5365
    %v5472 = vmul.f32 %v909, %v5365
    %v5473 = vmul.f32 %v911, %v5365
    %v5474 = vmul.f32 %v913, %v5365
    %v5475 = vmul.f32 %v915, %v5365
    %v5476 = vmul.f32 %v917, %v5365
    %v5477 = vmul.f32 %v919, %v5365
    %v5478 = vmul.f32 %v921, %v5365
    %v5479 = vmul.f32 %v923, %v5365
    %v5480 = vmul.f32 %v925, %v5365
    %v5481 = vmul.f32 %v927, %v5365
    %v5482 = vmul.f32 %v929, %v5365
    %v5483 = vmul.f32 %v931, %v5365
    %v5484 = vmul.f32 %v933, %v5365
    %v5485 = vmul.f32 %v935, %v5365
    %v5486 = vmul.f32 %v937, %v5365
    %v5487 = vmul.f32 %v939, %v5365
    %v5488 = vmul.f32 %v941, %v5365
    %v5489 = vmul.f32 %v943, %v5365
    %v5490 = vmul.f32 %v945, %v5365
    %v5491 = vmul.f32 %v947, %v5365
    %v5492 = vmul.f32 %v949, %v5365
    %v5493 = vmul.f32 %v951, %v5365
    %v5494 = vmul.f32 %v953, %v5365
    %v5495 = vmul.f32 %v955, %v5365
    %v5496 = vmul.f32 %v957, %v5365
    %v5497 = vmul.f32 %v959, %v5365
    %v5498 = vmul.f32 %v961, %v5365
    %v5499 = vmul.f32 %v963, %v5365
    %v5500 = vmul.f32 %v965, %v5365
    %v5501 = vmul.f32 %v967, %v5365
    %v5502 = vmul.f32 %v969, %v5365
    %v5503 = vmul.f32 %v971, %v5365
    %v5504 = vmul.f32 %v973, %v5365
    %v5505 = vmul.f32 %v975, %v5365
    %v5506 = vmul.f32 %v977, %v5365
    %v5507 = vmul.f32 %v979, %v5365
    %v5508 = vmul.f32 %v981, %v5365
    %v5509 = vmul.f32 %v983, %v5365
    %v5510 = vmul.f32 %v985, %v5365
    %v5511 = vmul.f32 %v987, %v5365
    %v5512 = vmul.f32 %v989, %v5365
    %v5513 = vmul.f32 %v991, %v5365
    %v5514 = vmul.f32 %v993, %v5365
    %v5515 = vmul.f32 %v995, %v5365
    %v5516 = vmul.f32 %v997, %v5365
    %v5517 = vmul.f32 %v999, %v5365
    %v5518 = vmul.f32 %v1001, %v5365
    %v5519 = vmul.f32 %v1003, %v5365
    %v5520 = vmul.f32 %v1005, %v5365
    %v5521 = vmul.f32 %v1007, %v5365
    %v5522 = vmul.f32 %v1009, %v5365
    %v5523 = vmul.f32 %v1011, %v5365
    %v5524 = vmul.f32 %v1013, %v5365
    %v5525 = vmul.f32 %v1015, %v5365
    %v5526 = vadd.f32 %v5204, %v5366
    %v5527 = vadd.f32 %v5205, %v5367
    %v5528 = vadd.f32 %v5206, %v5368
    %v5529 = vadd.f32 %v5207, %v5369
    %v5530 = vadd.f32 %v5208, %v5370
    %v5531 = vadd.f32 %v5209, %v5371
    %v5532 = vadd.f32 %v5210, %v5372
    %v5533 = vadd.f32 %v5211, %v5373
    %v5534 = vadd.f32 %v5212, %v5374
    %v5535 = vadd.f32 %v5213, %v5375
    %v5536 = vadd.f32 %v5214, %v5376
    %v5537 = vadd.f32 %v5215, %v5377
    %v5538 = vadd.f32 %v5216, %v5378
    %v5539 = vadd.f32 %v5217, %v5379
    %v5540 = vadd.f32 %v5218, %v5380
    %v5541 = vadd.f32 %v5219, %v5381
    %v5542 = vadd.f32 %v5220, %v5382
    %v5543 = vadd.f32 %v5221, %v5383
    %v5544 = vadd.f32 %v5222, %v5384
    %v5545 = vadd.f32 %v5223, %v5385
    %v5546 = vadd.f32 %v5224, %v5386
    %v5547 = vadd.f32 %v5225, %v5387
    %v5548 = vadd.f32 %v5226, %v5388
    %v5549 = vadd.f32 %v5227, %v5389
    %v5550 = vadd.f32 %v5228, %v5390
    %v5551 = vadd.f32 %v5229, %v5391
    %v5552 = vadd.f32 %v5230, %v5392
    %v5553 = vadd.f32 %v5231, %v5393
    %v5554 = vadd.f32 %v5232, %v5394
    %v5555 = vadd.f32 %v5233, %v5395
    %v5556 = vadd.f32 %v5234, %v5396
    %v5557 = vadd.f32 %v5235, %v5397
    %v5558 = vadd.f32 %v5236, %v5398
    %v5559 = vadd.f32 %v5237, %v5399
    %v5560 = vadd.f32 %v5238, %v5400
    %v5561 = vadd.f32 %v5239, %v5401
    %v5562 = vadd.f32 %v5240, %v5402
    %v5563 = vadd.f32 %v5241, %v5403
    %v5564 = vadd.f32 %v5242, %v5404
    %v5565 = vadd.f32 %v5243, %v5405
    %v5566 = vadd.f32 %v5244, %v5406
    %v5567 = vadd.f32 %v5245, %v5407
    %v5568 = vadd.f32 %v5246, %v5408
    %v5569 = vadd.f32 %v5247, %v5409
    %v5570 = vadd.f32 %v5248, %v5410
    %v5571 = vadd.f32 %v5249, %v5411
    %v5572 = vadd.f32 %v5250, %v5412
    %v5573 = vadd.f32 %v5251, %v5413
    %v5574 = vadd.f32 %v5252, %v5414
    %v5575 = vadd.f32 %v5253, %v5415
    %v5576 = vadd.f32 %v5254, %v5416
    %v5577 = vadd.f32 %v5255, %v5417
    %v5578 = vadd.f32 %v5256, %v5418
    %v5579 = vadd.f32 %v5257, %v5419
    %v5580 = vadd.f32 %v5258, %v5420
    %v5581 = vadd.f32 %v5259, %v5421
    %v5582 = vadd.f32 %v5260, %v5422
    %v5583 = vadd.f32 %v5261, %v5423
    %v5584 = vadd.f32 %v5262, %v5424
    %v5585 = vadd.f32 %v5263, %v5425
    %v5586 = vadd.f32 %v5264, %v5426
    %v5587 = vadd.f32 %v5265, %v5427
    %v5588 = vadd.f32 %v5266, %v5428
    %v5589 = vadd.f32 %v5267, %v5429
    %v5590 = vadd.f32 %v5268, %v5430
    %v5591 = vadd.f32 %v5269, %v5431
    %v5592 = vadd.f32 %v5270, %v5432
    %v5593 = vadd.f32 %v5271, %v5433
    %v5594 = vadd.f32 %v5272, %v5434
    %v5595 = vadd.f32 %v5273, %v5435
    %v5596 = vadd.f32 %v5274, %v5436
    %v5597 = vadd.f32 %v5275, %v5437
    %v5598 = vadd.f32 %v5276, %v5438
    %v5599 = vadd.f32 %v5277, %v5439
    %v5600 = vadd.f32 %v5278, %v5440
    %v5601 = vadd.f32 %v5279, %v5441
    %v5602 = vadd.f32 %v5280, %v5442
    %v5603 = vadd.f32 %v5281, %v5443
    %v5604 = vadd.f32 %v5282, %v5444
    %v5605 = vadd.f32 %v5283, %v5445
    %v5606 = vadd.f32 %v5284, %v5446
    %v5607 = vadd.f32 %v5285, %v5447
    %v5608 = vadd.f32 %v5286, %v5448
    %v5609 = vadd.f32 %v5287, %v5449
    %v5610 = vadd.f32 %v5288, %v5450
    %v5611 = vadd.f32 %v5289, %v5451
    %v5612 = vadd.f32 %v5290, %v5452
    %v5613 = vadd.f32 %v5291, %v5453
    %v5614 = vadd.f32 %v5292, %v5454
    %v5615 = vadd.f32 %v5293, %v5455
    %v5616 = vadd.f32 %v5294, %v5456
    %v5617 = vadd.f32 %v5295, %v5457
    %v5618 = vadd.f32 %v5296, %v5458
    %v5619 = vadd.f32 %v5297, %v5459
    %v5620 = vadd.f32 %v5298, %v5460
    %v5621 = vadd.f32 %v5299, %v5461
    %v5622 = vadd.f32 %v5300, %v5462
    %v5623 = vadd.f32 %v5301, %v5463
    %v5624 = vadd.f32 %v5302, %v5464
    %v5625 = vadd.f32 %v5303, %v5465
    %v5626 = vadd.f32 %v5304, %v5466
    %v5627 = vadd.f32 %v5305, %v5467
    %v5628 = vadd.f32 %v5306, %v5468
    %v5629 = vadd.f32 %v5307, %v5469
    %v5630 = vadd.f32 %v5308, %v5470
    %v5631 = vadd.f32 %v5309, %v5471
    %v5632 = vadd.f32 %v5310, %v5472
    %v5633 = vadd.f32 %v5311, %v5473
    %v5634 = vadd.f32 %v5312, %v5474
    %v5635 = vadd.f32 %v5313, %v5475
    %v5636 = vadd.f32 %v5314, %v5476
    %v5637 = vadd.f32 %v5315, %v5477
    %v5638 = vadd.f32 %v5316, %v5478
    %v5639 = vadd.f32 %v5317, %v5479
    %v5640 = vadd.f32 %v5318, %v5480
    %v5641 = vadd.f32 %v5319, %v5481
    %v5642 = vadd.f32 %v5320, %v5482
    %v5643 = vadd.f32 %v5321, %v5483
    %v5644 = vadd.f32 %v5322, %v5484
    %v5645 = vadd.f32 %v5323, %v5485
    %v5646 = vadd.f32 %v5324, %v5486
    %v5647 = vadd.f32 %v5325, %v5487
    %v5648 = vadd.f32 %v5326, %v5488
    %v5649 = vadd.f32 %v5327, %v5489
    %v5650 = vadd.f32 %v5328, %v5490
    %v5651 = vadd.f32 %v5329, %v5491
    %v5652 = vadd.f32 %v5330, %v5492
    %v5653 = vadd.f32 %v5331, %v5493
    %v5654 = vadd.f32 %v5332, %v5494
    %v5655 = vadd.f32 %v5333, %v5495
    %v5656 = vadd.f32 %v5334, %v5496
    %v5657 = vadd.f32 %v5335, %v5497
    %v5658 = vadd.f32 %v5336, %v5498
    %v5659 = vadd.f32 %v5337, %v5499
    %v5660 = vadd.f32 %v5338, %v5500
    %v5661 = vadd.f32 %v5339, %v5501
    %v5662 = vadd.f32 %v5340, %v5502
    %v5663 = vadd.f32 %v5341, %v5503
    %v5664 = vadd.f32 %v5342, %v5504
    %v5665 = vadd.f32 %v5343, %v5505
    %v5666 = vadd.f32 %v5344, %v5506
    %v5667 = vadd.f32 %v5345, %v5507
    %v5668 = vadd.f32 %v5346, %v5508
    %v5669 = vadd.f32 %v5347, %v5509
    %v5670 = vadd.f32 %v5348, %v5510
    %v5671 = vadd.f32 %v5349, %v5511
    %v5672 = vadd.f32 %v5350, %v5512
    %v5673 = vadd.f32 %v5351, %v5513
    %v5674 = vadd.f32 %v5352, %v5514
    %v5675 = vadd.f32 %v5353, %v5515
    %v5676 = vadd.f32 %v5354, %v5516
    %v5677 = vadd.f32 %v5355, %v5517
    %v5678 = vadd.f32 %v5356, %v5518
    %v5679 = vadd.f32 %v5357, %v5519
    %v5680 = vadd.f32 %v5358, %v5520
    %v5681 = vadd.f32 %v5359, %v5521
    %v5682 = vadd.f32 %v5360, %v5522
    %v5683 = vadd.f32 %v5361, %v5523
    %v5684 = vadd.f32 %v5362, %v5524
    %v5685 = vadd.f32 %v5363, %v5525
    %s5686 = sld [smem:[#allocation8 + $0x3]]
    %v5687 = vstv %s5686
    %v5688 = vadd.f32 %v5526, %v5687
    %v5689 = vadd.f32 %v5527, %v5687
    %v5690 = vadd.f32 %v5528, %v5687
    %v5691 = vadd.f32 %v5529, %v5687
    %v5692 = vadd.f32 %v5530, %v5687
    %v5693 = vadd.f32 %v5531, %v5687
    %v5694 = vadd.f32 %v5532, %v5687
    %v5695 = vadd.f32 %v5533, %v5687
    %v5696 = vadd.f32 %v5534, %v5687
    %v5697 = vadd.f32 %v5535, %v5687
    %v5698 = vadd.f32 %v5536, %v5687
    %v5699 = vadd.f32 %v5537, %v5687
    %v5700 = vadd.f32 %v5538, %v5687
    %v5701 = vadd.f32 %v5539, %v5687
    %v5702 = vadd.f32 %v5540, %v5687
    %v5703 = vadd.f32 %v5541, %v5687
    %v5704 = vadd.f32 %v5542, %v5687
    %v5705 = vadd.f32 %v5543, %v5687
    %v5706 = vadd.f32 %v5544, %v5687
    %v5707 = vadd.f32 %v5545, %v5687
    %v5708 = vadd.f32 %v5546, %v5687
    %v5709 = vadd.f32 %v5547, %v5687
    %v5710 = vadd.f32 %v5548, %v5687
    %v5711 = vadd.f32 %v5549, %v5687
    %v5712 = vadd.f32 %v5550, %v5687
    %v5713 = vadd.f32 %v5551, %v5687
    %v5714 = vadd.f32 %v5552, %v5687
    %v5715 = vadd.f32 %v5553, %v5687
    %v5716 = vadd.f32 %v5554, %v5687
    %v5717 = vadd.f32 %v5555, %v5687
    %v5718 = vadd.f32 %v5556, %v5687
    %v5719 = vadd.f32 %v5557, %v5687
    %v5720 = vadd.f32 %v5558, %v5687
    %v5721 = vadd.f32 %v5559, %v5687
    %v5722 = vadd.f32 %v5560, %v5687
    %v5723 = vadd.f32 %v5561, %v5687
    %v5724 = vadd.f32 %v5562, %v5687
    %v5725 = vadd.f32 %v5563, %v5687
    %v5726 = vadd.f32 %v5564, %v5687
    %v5727 = vadd.f32 %v5565, %v5687
    %v5728 = vadd.f32 %v5566, %v5687
    %v5729 = vadd.f32 %v5567, %v5687
    %v5730 = vadd.f32 %v5568, %v5687
    %v5731 = vadd.f32 %v5569, %v5687
    %v5732 = vadd.f32 %v5570, %v5687
    %v5733 = vadd.f32 %v5571, %v5687
    %v5734 = vadd.f32 %v5572, %v5687
    %v5735 = vadd.f32 %v5573, %v5687
    %v5736 = vadd.f32 %v5574, %v5687
    %v5737 = vadd.f32 %v5575, %v5687
    %v5738 = vadd.f32 %v5576, %v5687
    %v5739 = vadd.f32 %v5577, %v5687
    %v5740 = vadd.f32 %v5578, %v5687
    %v5741 = vadd.f32 %v5579, %v5687
    %v5742 = vadd.f32 %v5580, %v5687
    %v5743 = vadd.f32 %v5581, %v5687
    %v5744 = vadd.f32 %v5582, %v5687
    %v5745 = vadd.f32 %v5583, %v5687
    %v5746 = vadd.f32 %v5584, %v5687
    %v5747 = vadd.f32 %v5585, %v5687
    %v5748 = vadd.f32 %v5586, %v5687
    %v5749 = vadd.f32 %v5587, %v5687
    %v5750 = vadd.f32 %v5588, %v5687
    %v5751 = vadd.f32 %v5589, %v5687
    %v5752 = vadd.f32 %v5590, %v5687
    %v5753 = vadd.f32 %v5591, %v5687
    %v5754 = vadd.f32 %v5592, %v5687
    %v5755 = vadd.f32 %v5593, %v5687
    %v5756 = vadd.f32 %v5594, %v5687
    %v5757 = vadd.f32 %v5595, %v5687
    %v5758 = vadd.f32 %v5596, %v5687
    %v5759 = vadd.f32 %v5597, %v5687
    %v5760 = vadd.f32 %v5598, %v5687
    %v5761 = vadd.f32 %v5599, %v5687
    %v5762 = vadd.f32 %v5600, %v5687
    %v5763 = vadd.f32 %v5601, %v5687
    %v5764 = vadd.f32 %v5602, %v5687
    %v5765 = vadd.f32 %v5603, %v5687
    %v5766 = vadd.f32 %v5604, %v5687
    %v5767 = vadd.f32 %v5605, %v5687
    %v5768 = vadd.f32 %v5606, %v5687
    %v5769 = vadd.f32 %v5607, %v5687
    %v5770 = vadd.f32 %v5608, %v5687
    %v5771 = vadd.f32 %v5609, %v5687
    %v5772 = vadd.f32 %v5610, %v5687
    %v5773 = vadd.f32 %v5611, %v5687
    %v5774 = vadd.f32 %v5612, %v5687
    %v5775 = vadd.f32 %v5613, %v5687
    %v5776 = vadd.f32 %v5614, %v5687
    %v5777 = vadd.f32 %v5615, %v5687
    %v5778 = vadd.f32 %v5616, %v5687
    %v5779 = vadd.f32 %v5617, %v5687
    %v5780 = vadd.f32 %v5618, %v5687
    %v5781 = vadd.f32 %v5619, %v5687
    %v5782 = vadd.f32 %v5620, %v5687
    %v5783 = vadd.f32 %v5621, %v5687
    %v5784 = vadd.f32 %v5622, %v5687
    %v5785 = vadd.f32 %v5623, %v5687
    %v5786 = vadd.f32 %v5624, %v5687
    %v5787 = vadd.f32 %v5625, %v5687
    %v5788 = vadd.f32 %v5626, %v5687
    %v5789 = vadd.f32 %v5627, %v5687
    %v5790 = vadd.f32 %v5628, %v5687
    %v5791 = vadd.f32 %v5629, %v5687
    %v5792 = vadd.f32 %v5630, %v5687
    %v5793 = vadd.f32 %v5631, %v5687
    %v5794 = vadd.f32 %v5632, %v5687
    %v5795 = vadd.f32 %v5633, %v5687
    %v5796 = vadd.f32 %v5634, %v5687
    %v5797 = vadd.f32 %v5635, %v5687
    %v5798 = vadd.f32 %v5636, %v5687
    %v5799 = vadd.f32 %v5637, %v5687
    %v5800 = vadd.f32 %v5638, %v5687
    %v5801 = vadd.f32 %v5639, %v5687
    %v5802 = vadd.f32 %v5640, %v5687
    %v5803 = vadd.f32 %v5641, %v5687
    %v5804 = vadd.f32 %v5642, %v5687
    %v5805 = vadd.f32 %v5643, %v5687
    %v5806 = vadd.f32 %v5644, %v5687
    %v5807 = vadd.f32 %v5645, %v5687
    %v5808 = vadd.f32 %v5646, %v5687
    %v5809 = vadd.f32 %v5647, %v5687
    %v5810 = vadd.f32 %v5648, %v5687
    %v5811 = vadd.f32 %v5649, %v5687
    %v5812 = vadd.f32 %v5650, %v5687
    %v5813 = vadd.f32 %v5651, %v5687
    %v5814 = vadd.f32 %v5652, %v5687
    %v5815 = vadd.f32 %v5653, %v5687
    %v5816 = vadd.f32 %v5654, %v5687
    %v5817 = vadd.f32 %v5655, %v5687
    %v5818 = vadd.f32 %v5656, %v5687
    %v5819 = vadd.f32 %v5657, %v5687
    %v5820 = vadd.f32 %v5658, %v5687
    %v5821 = vadd.f32 %v5659, %v5687
    %v5822 = vadd.f32 %v5660, %v5687
    %v5823 = vadd.f32 %v5661, %v5687
    %v5824 = vadd.f32 %v5662, %v5687
    %v5825 = vadd.f32 %v5663, %v5687
    %v5826 = vadd.f32 %v5664, %v5687
    %v5827 = vadd.f32 %v5665, %v5687
    %v5828 = vadd.f32 %v5666, %v5687
    %v5829 = vadd.f32 %v5667, %v5687
    %v5830 = vadd.f32 %v5668, %v5687
    %v5831 = vadd.f32 %v5669, %v5687
    %v5832 = vadd.f32 %v5670, %v5687
    %v5833 = vadd.f32 %v5671, %v5687
    %v5834 = vadd.f32 %v5672, %v5687
    %v5835 = vadd.f32 %v5673, %v5687
    %v5836 = vadd.f32 %v5674, %v5687
    %v5837 = vadd.f32 %v5675, %v5687
    %v5838 = vadd.f32 %v5676, %v5687
    %v5839 = vadd.f32 %v5677, %v5687
    %v5840 = vadd.f32 %v5678, %v5687
    %v5841 = vadd.f32 %v5679, %v5687
    %v5842 = vadd.f32 %v5680, %v5687
    %v5843 = vadd.f32 %v5681, %v5687
    %v5844 = vadd.f32 %v5682, %v5687
    %v5845 = vadd.f32 %v5683, %v5687
    %v5846 = vadd.f32 %v5684, %v5687
    %v5847 = vadd.f32 %v5685, %v5687
    %v5848 = vmax.f32 %v5688, 0.0
    %v5849 = vmax.f32 %v5689, 0.0
    %v5850 = vmax.f32 %v5690, 0.0
    %v5851 = vmax.f32 %v5691, 0.0
    %v5852 = vmax.f32 %v5692, 0.0
    %v5853 = vmax.f32 %v5693, 0.0
    %v5854 = vmax.f32 %v5694, 0.0
    %v5855 = vmax.f32 %v5695, 0.0
    %v5856 = vmax.f32 %v5696, 0.0
    %v5857 = vmax.f32 %v5697, 0.0
    %v5858 = vmax.f32 %v5698, 0.0
    %v5859 = vmax.f32 %v5699, 0.0
    %v5860 = vmax.f32 %v5700, 0.0
    %v5861 = vmax.f32 %v5701, 0.0
    %v5862 = vmax.f32 %v5702, 0.0
    %v5863 = vmax.f32 %v5703, 0.0
    %v5864 = vmax.f32 %v5704, 0.0
    %v5865 = vmax.f32 %v5705, 0.0
    %v5866 = vmax.f32 %v5706, 0.0
    %v5867 = vmax.f32 %v5707, 0.0
    %v5868 = vmax.f32 %v5708, 0.0
    %v5869 = vmax.f32 %v5709, 0.0
    %v5870 = vmax.f32 %v5710, 0.0
    %v5871 = vmax.f32 %v5711, 0.0
    %v5872 = vmax.f32 %v5712, 0.0
    %v5873 = vmax.f32 %v5713, 0.0
    %v5874 = vmax.f32 %v5714, 0.0
    %v5875 = vmax.f32 %v5715, 0.0
    %v5876 = vmax.f32 %v5716, 0.0
    %v5877 = vmax.f32 %v5717, 0.0
    %v5878 = vmax.f32 %v5718, 0.0
    %v5879 = vmax.f32 %v5719, 0.0
    %v5880 = vmax.f32 %v5720, 0.0
    %v5881 = vmax.f32 %v5721, 0.0
    %v5882 = vmax.f32 %v5722, 0.0
    %v5883 = vmax.f32 %v5723, 0.0
    %v5884 = vmax.f32 %v5724, 0.0
    %v5885 = vmax.f32 %v5725, 0.0
    %v5886 = vmax.f32 %v5726, 0.0
    %v5887 = vmax.f32 %v5727, 0.0
    %v5888 = vmax.f32 %v5728, 0.0
    %v5889 = vmax.f32 %v5729, 0.0
    %v5890 = vmax.f32 %v5730, 0.0
    %v5891 = vmax.f32 %v5731, 0.0
    %v5892 = vmax.f32 %v5732, 0.0
    %v5893 = vmax.f32 %v5733, 0.0
    %v5894 = vmax.f32 %v5734, 0.0
    %v5895 = vmax.f32 %v5735, 0.0
    %v5896 = vmax.f32 %v5736, 0.0
    %v5897 = vmax.f32 %v5737, 0.0
    %v5898 = vmax.f32 %v5738, 0.0
    %v5899 = vmax.f32 %v5739, 0.0
    %v5900 = vmax.f32 %v5740, 0.0
    %v5901 = vmax.f32 %v5741, 0.0
    %v5902 = vmax.f32 %v5742, 0.0
    %v5903 = vmax.f32 %v5743, 0.0
    %v5904 = vmax.f32 %v5744, 0.0
    %v5905 = vmax.f32 %v5745, 0.0
    %v5906 = vmax.f32 %v5746, 0.0
    %v5907 = vmax.f32 %v5747, 0.0
    %v5908 = vmax.f32 %v5748, 0.0
    %v5909 = vmax.f32 %v5749, 0.0
    %v5910 = vmax.f32 %v5750, 0.0
    %v5911 = vmax.f32 %v5751, 0.0
    %v5912 = vmax.f32 %v5752, 0.0
    %v5913 = vmax.f32 %v5753, 0.0
    %v5914 = vmax.f32 %v5754, 0.0
    %v5915 = vmax.f32 %v5755, 0.0
    %v5916 = vmax.f32 %v5756, 0.0
    %v5917 = vmax.f32 %v5757, 0.0
    %v5918 = vmax.f32 %v5758, 0.0
    %v5919 = vmax.f32 %v5759, 0.0
    %v5920 = vmax.f32 %v5760, 0.0
    %v5921 = vmax.f32 %v5761, 0.0
    %v5922 = vmax.f32 %v5762, 0.0
    %v5923 = vmax.f32 %v5763, 0.0
    %v5924 = vmax.f32 %v5764, 0.0
    %v5925 = vmax.f32 %v5765, 0.0
    %v5926 = vmax.f32 %v5766, 0.0
    %v5927 = vmax.f32 %v5767, 0.0
    %v5928 = vmax.f32 %v5768, 0.0
    %v5929 = vmax.f32 %v5769, 0.0
    %v5930 = vmax.f32 %v5770, 0.0
    %v5931 = vmax.f32 %v5771, 0.0
    %v5932 = vmax.f32 %v5772, 0.0
    %v5933 = vmax.f32 %v5773, 0.0
    %v5934 = vmax.f32 %v5774, 0.0
    %v5935 = vmax.f32 %v5775, 0.0
    %v5936 = vmax.f32 %v5776, 0.0
    %v5937 = vmax.f32 %v5777, 0.0
    %v5938 = vmax.f32 %v5778, 0.0
    %v5939 = vmax.f32 %v5779, 0.0
    %v5940 = vmax.f32 %v5780, 0.0
    %v5941 = vmax.f32 %v5781, 0.0
    %v5942 = vmax.f32 %v5782, 0.0
    %v5943 = vmax.f32 %v5783, 0.0
    %v5944 = vmax.f32 %v5784, 0.0
    %v5945 = vmax.f32 %v5785, 0.0
    %v5946 = vmax.f32 %v5786, 0.0
    %v5947 = vmax.f32 %v5787, 0.0
    %v5948 = vmax.f32 %v5788, 0.0
    %v5949 = vmax.f32 %v5789, 0.0
    %v5950 = vmax.f32 %v5790, 0.0
    %v5951 = vmax.f32 %v5791, 0.0
    %v5952 = vmax.f32 %v5792, 0.0
    %v5953 = vmax.f32 %v5793, 0.0
    %v5954 = vmax.f32 %v5794, 0.0
    %v5955 = vmax.f32 %v5795, 0.0
    %v5956 = vmax.f32 %v5796, 0.0
    %v5957 = vmax.f32 %v5797, 0.0
    %v5958 = vmax.f32 %v5798, 0.0
    %v5959 = vmax.f32 %v5799, 0.0
    %v5960 = vmax.f32 %v5800, 0.0
    %v5961 = vmax.f32 %v5801, 0.0
    %v5962 = vmax.f32 %v5802, 0.0
    %v5963 = vmax.f32 %v5803, 0.0
    %v5964 = vmax.f32 %v5804, 0.0
    %v5965 = vmax.f32 %v5805, 0.0
    %v5966 = vmax.f32 %v5806, 0.0
    %v5967 = vmax.f32 %v5807, 0.0
    %v5968 = vmax.f32 %v5808, 0.0
    %v5969 = vmax.f32 %v5809, 0.0
    %v5970 = vmax.f32 %v5810, 0.0
    %v5971 = vmax.f32 %v5811, 0.0
    %v5972 = vmax.f32 %v5812, 0.0
    %v5973 = vmax.f32 %v5813, 0.0
    %v5974 = vmax.f32 %v5814, 0.0
    %v5975 = vmax.f32 %v5815, 0.0
    %v5976 = vmax.f32 %v5816, 0.0
    %v5977 = vmax.f32 %v5817, 0.0
    %v5978 = vmax.f32 %v5818, 0.0
    %v5979 = vmax.f32 %v5819, 0.0
    %v5980 = vmax.f32 %v5820, 0.0
    %v5981 = vmax.f32 %v5821, 0.0
    %v5982 = vmax.f32 %v5822, 0.0
    %v5983 = vmax.f32 %v5823, 0.0
    %v5984 = vmax.f32 %v5824, 0.0
    %v5985 = vmax.f32 %v5825, 0.0
    %v5986 = vmax.f32 %v5826, 0.0
    %v5987 = vmax.f32 %v5827, 0.0
    %v5988 = vmax.f32 %v5828, 0.0
    %v5989 = vmax.f32 %v5829, 0.0
    %v5990 = vmax.f32 %v5830, 0.0
    %v5991 = vmax.f32 %v5831, 0.0
    %v5992 = vmax.f32 %v5832, 0.0
    %v5993 = vmax.f32 %v5833, 0.0
    %v5994 = vmax.f32 %v5834, 0.0
    %v5995 = vmax.f32 %v5835, 0.0
    %v5996 = vmax.f32 %v5836, 0.0
    %v5997 = vmax.f32 %v5837, 0.0
    %v5998 = vmax.f32 %v5838, 0.0
    %v5999 = vmax.f32 %v5839, 0.0
    %v6000 = vmax.f32 %v5840, 0.0
    %v6001 = vmax.f32 %v5841, 0.0
    %v6002 = vmax.f32 %v5842, 0.0
    %v6003 = vmax.f32 %v5843, 0.0
    %v6004 = vmax.f32 %v5844, 0.0
    %v6005 = vmax.f32 %v5845, 0.0
    %v6006 = vmax.f32 %v5846, 0.0
    %v6007 = vmax.f32 %v5847, 0.0
    %v6008 = vmax.f32 %v4752, %v5848
    %v6009 = vmax.f32 %v4753, %v5849
    %v6010 = vmax.f32 %v4754, %v5850
    %v6011 = vmax.f32 %v4755, %v5851
    %v6012 = vmax.f32 %v4756, %v5852
    %v6013 = vmax.f32 %v4757, %v5853
    %v6014 = vmax.f32 %v4758, %v5854
    %v6015 = vmax.f32 %v4759, %v5855
    %v6016 = vmax.f32 %v4760, %v5856
    %v6017 = vmax.f32 %v4761, %v5857
    %v6018 = vmax.f32 %v4762, %v5858
    %v6019 = vmax.f32 %v4763, %v5859
    %v6020 = vmax.f32 %v4764, %v5860
    %v6021 = vmax.f32 %v4765, %v5861
    %v6022 = vmax.f32 %v4766, %v5862
    %v6023 = vmax.f32 %v4767, %v5863
    %v6024 = vmax.f32 %v4768, %v5864
    %v6025 = vmax.f32 %v4769, %v5865
    %v6026 = vmax.f32 %v4770, %v5866
    %v6027 = vmax.f32 %v4771, %v5867
    %v6028 = vmax.f32 %v4772, %v5868
    %v6029 = vmax.f32 %v4773, %v5869
    %v6030 = vmax.f32 %v4774, %v5870
    %v6031 = vmax.f32 %v4775, %v5871
    %v6032 = vmax.f32 %v4776, %v5872
    %v6033 = vmax.f32 %v4777, %v5873
    %v6034 = vmax.f32 %v4778, %v5874
    %v6035 = vmax.f32 %v4779, %v5875
    %v6036 = vmax.f32 %v4780, %v5876
    %v6037 = vmax.f32 %v4781, %v5877
    %v6038 = vmax.f32 %v4782, %v5878
    %v6039 = vmax.f32 %v4783, %v5879
    %v6040 = vmax.f32 %v6008, %v5880
    %v6041 = vmax.f32 %v6009, %v5881
    %v6042 = vmax.f32 %v6010, %v5882
    %v6043 = vmax.f32 %v6011, %v5883
    %v6044 = vmax.f32 %v6012, %v5884
    %v6045 = vmax.f32 %v6013, %v5885
    %v6046 = vmax.f32 %v6014, %v5886
    %v6047 = vmax.f32 %v6015, %v5887
    %v6048 = vmax.f32 %v6016, %v5888
    %v6049 = vmax.f32 %v6017, %v5889
    %v6050 = vmax.f32 %v6018, %v5890
    %v6051 = vmax.f32 %v6019, %v5891
    %v6052 = vmax.f32 %v6020, %v5892
    %v6053 = vmax.f32 %v6021, %v5893
    %v6054 = vmax.f32 %v6022, %v5894
    %v6055 = vmax.f32 %v6023, %v5895
    %v6056 = vmax.f32 %v6024, %v5896
    %v6057 = vmax.f32 %v6025, %v5897
    %v6058 = vmax.f32 %v6026, %v5898
    %v6059 = vmax.f32 %v6027, %v5899
    %v6060 = vmax.f32 %v6028, %v5900
    %v6061 = vmax.f32 %v6029, %v5901
    %v6062 = vmax.f32 %v6030, %v5902
    %v6063 = vmax.f32 %v6031, %v5903
    %v6064 = vmax.f32 %v6032, %v5904
    %v6065 = vmax.f32 %v6033, %v5905
    %v6066 = vmax.f32 %v6034, %v5906
    %v6067 = vmax.f32 %v6035, %v5907
    %v6068 = vmax.f32 %v6036, %v5908
    %v6069 = vmax.f32 %v6037, %v5909
    %v6070 = vmax.f32 %v6038, %v5910
    %v6071 = vmax.f32 %v6039, %v5911
    %v6072 = vmax.f32 %v4848, %v5912
    %v6073 = vmax.f32 %v4849, %v5913
    %v6074 = vmax.f32 %v4850, %v5914
    %v6075 = vmax.f32 %v4851, %v5915
    %v6076 = vmax.f32 %v4852, %v5916
    %v6077 = vmax.f32 %v4853, %v5917
    %v6078 = vmax.f32 %v4854, %v5918
    %v6079 = vmax.f32 %v4855, %v5919
    %v6080 = vmax.f32 %v4856, %v5920
    %v6081 = vmax.f32 %v4857, %v5921
    %v6082 = vmax.f32 %v4858, %v5922
    %v6083 = vmax.f32 %v4859, %v5923
    %v6084 = vmax.f32 %v4860, %v5924
    %v6085 = vmax.f32 %v4861, %v5925
    %v6086 = vmax.f32 %v4862, %v5926
    %v6087 = vmax.f32 %v4863, %v5927
    %v6088 = vmax.f32 %v4864, %v5928
    %v6089 = vmax.f32 %v4865, %v5929
    %v6090 = vmax.f32 %v4866, %v5930
    %v6091 = vmax.f32 %v4867, %v5931
    %v6092 = vmax.f32 %v4868, %v5932
    %v6093 = vmax.f32 %v4869, %v5933
    %v6094 = vmax.f32 %v4870, %v5934
    %v6095 = vmax.f32 %v4871, %v5935
    %v6096 = vmax.f32 %v4872, %v5936
    %v6097 = vmax.f32 %v4873, %v5937
    %v6098 = vmax.f32 %v4874, %v5938
    %v6099 = vmax.f32 %v4875, %v5939
    %v6100 = vmax.f32 %v4876, %v5940
    %v6101 = vmax.f32 %v4877, %v5941
    %v6102 = vmax.f32 %v4878, %v5942
    %v6103 = vmax.f32 %v4879, %v5943
    %v6104 = vmax.f32 %v6072, %v5944
    %v6105 = vmax.f32 %v6073, %v5945
    %v6106 = vmax.f32 %v6074, %v5946
    %v6107 = vmax.f32 %v6075, %v5947
    %v6108 = vmax.f32 %v6076, %v5948
    %v6109 = vmax.f32 %v6077, %v5949
    %v6110 = vmax.f32 %v6078, %v5950
    %v6111 = vmax.f32 %v6079, %v5951
    %v6112 = vmax.f32 %v6080, %v5952
    %v6113 = vmax.f32 %v6081, %v5953
    %v6114 = vmax.f32 %v6082, %v5954
    %v6115 = vmax.f32 %v6083, %v5955
    %v6116 = vmax.f32 %v6084, %v5956
    %v6117 = vmax.f32 %v6085, %v5957
    %v6118 = vmax.f32 %v6086, %v5958
    %v6119 = vmax.f32 %v6087, %v5959
    %v6120 = vmax.f32 %v6088, %v5960
    %v6121 = vmax.f32 %v6089, %v5961
    %v6122 = vmax.f32 %v6090, %v5962
    %v6123 = vmax.f32 %v6091, %v5963
    %v6124 = vmax.f32 %v6092, %v5964
    %v6125 = vmax.f32 %v6093, %v5965
    %v6126 = vmax.f32 %v6094, %v5966
    %v6127 = vmax.f32 %v6095, %v5967
    %v6128 = vmax.f32 %v6096, %v5968
    %v6129 = vmax.f32 %v6097, %v5969
    %v6130 = vmax.f32 %v6098, %v5970
    %v6131 = vmax.f32 %v6099, %v5971
    %v6132 = vmax.f32 %v6100, %v5972
    %v6133 = vmax.f32 %v6101, %v5973
    %v6134 = vmax.f32 %v6102, %v5974
    %v6135 = vmax.f32 %v6103, %v5975
    %v6136 = vmax.f32 %v6104, %v5976
    %v6137 = vmax.f32 %v6105, %v5977
    %v6138 = vmax.f32 %v6106, %v5978
    %v6139 = vmax.f32 %v6107, %v5979
    %v6140 = vmax.f32 %v6108, %v5980
    %v6141 = vmax.f32 %v6109, %v5981
    %v6142 = vmax.f32 %v6110, %v5982
    %v6143 = vmax.f32 %v6111, %v5983
    %v6144 = vmax.f32 %v6112, %v5984
    %v6145 = vmax.f32 %v6113, %v5985
    %v6146 = vmax.f32 %v6114, %v5986
    %v6147 = vmax.f32 %v6115, %v5987
    %v6148 = vmax.f32 %v6116, %v5988
    %v6149 = vmax.f32 %v6117, %v5989
    %v6150 = vmax.f32 %v6118, %v5990
    %v6151 = vmax.f32 %v6119, %v5991
    %v6152 = vmax.f32 %v6120, %v5992
    %v6153 = vmax.f32 %v6121, %v5993
    %v6154 = vmax.f32 %v6122, %v5994
    %v6155 = vmax.f32 %v6123, %v5995
    %v6156 = vmax.f32 %v6124, %v5996
    %v6157 = vmax.f32 %v6125, %v5997
    %v6158 = vmax.f32 %v6126, %v5998
    %v6159 = vmax.f32 %v6127, %v5999
    %v6160 = vmax.f32 %v6128, %v6000
    %v6161 = vmax.f32 %v6129, %v6001
    %v6162 = vmax.f32 %v6130, %v6002
    %v6163 = vmax.f32 %v6131, %v6003
    %v6164 = vmax.f32 %v6132, %v6004
    %v6165 = vmax.f32 %v6133, %v6005
    %v6166 = vmax.f32 %v6134, %v6006
    %v6167 = vmax.f32 %v6135, %v6007
    %s6168 = sld [smem:[#allocation7 + $0xc]]
    %v6169 = vstv %s6168
    %v6170 = vmul.f32 %v216, %v6169
    %v6171 = vmul.f32 %v217, %v6169
    %v6172 = vmul.f32 %v218, %v6169
    %v6173 = vmul.f32 %v219, %v6169
    %v6174 = vmul.f32 %v220, %v6169
    %v6175 = vmul.f32 %v221, %v6169
    %v6176 = vmul.f32 %v222, %v6169
    %v6177 = vmul.f32 %v223, %v6169
    %v6178 = vmul.f32 %v224, %v6169
    %v6179 = vmul.f32 %v225, %v6169
    %v6180 = vmul.f32 %v226, %v6169
    %v6181 = vmul.f32 %v227, %v6169
    %v6182 = vmul.f32 %v228, %v6169
    %v6183 = vmul.f32 %v229, %v6169
    %v6184 = vmul.f32 %v230, %v6169
    %v6185 = vmul.f32 %v231, %v6169
    %v6186 = vmul.f32 %v232, %v6169
    %v6187 = vmul.f32 %v233, %v6169
    %v6188 = vmul.f32 %v234, %v6169
    %v6189 = vmul.f32 %v235, %v6169
    %v6190 = vmul.f32 %v236, %v6169
    %v6191 = vmul.f32 %v237, %v6169
    %v6192 = vmul.f32 %v238, %v6169
    %v6193 = vmul.f32 %v239, %v6169
    %v6194 = vmul.f32 %v240, %v6169
    %v6195 = vmul.f32 %v241, %v6169
    %v6196 = vmul.f32 %v242, %v6169
    %v6197 = vmul.f32 %v243, %v6169
    %v6198 = vmul.f32 %v244, %v6169
    %v6199 = vmul.f32 %v245, %v6169
    %v6200 = vmul.f32 %v246, %v6169
    %v6201 = vmul.f32 %v247, %v6169
    %v6202 = vmul.f32 %v248, %v6169
    %v6203 = vmul.f32 %v249, %v6169
    %v6204 = vmul.f32 %v250, %v6169
    %v6205 = vmul.f32 %v251, %v6169
    %v6206 = vmul.f32 %v252, %v6169
    %v6207 = vmul.f32 %v253, %v6169
    %v6208 = vmul.f32 %v254, %v6169
    %v6209 = vmul.f32 %v255, %v6169
    %v6210 = vmul.f32 %v256, %v6169
    %v6211 = vmul.f32 %v257, %v6169
    %v6212 = vmul.f32 %v258, %v6169
    %v6213 = vmul.f32 %v259, %v6169
    %v6214 = vmul.f32 %v260, %v6169
    %v6215 = vmul.f32 %v261, %v6169
    %v6216 = vmul.f32 %v262, %v6169
    %v6217 = vmul.f32 %v263, %v6169
    %v6218 = vmul.f32 %v264, %v6169
    %v6219 = vmul.f32 %v265, %v6169
    %v6220 = vmul.f32 %v266, %v6169
    %v6221 = vmul.f32 %v267, %v6169
    %v6222 = vmul.f32 %v268, %v6169
    %v6223 = vmul.f32 %v269, %v6169
    %v6224 = vmul.f32 %v270, %v6169
    %v6225 = vmul.f32 %v271, %v6169
    %v6226 = vmul.f32 %v272, %v6169
    %v6227 = vmul.f32 %v273, %v6169
    %v6228 = vmul.f32 %v274, %v6169
    %v6229 = vmul.f32 %v275, %v6169
    %v6230 = vmul.f32 %v276, %v6169
    %v6231 = vmul.f32 %v277, %v6169
    %v6232 = vmul.f32 %v278, %v6169
    %v6233 = vmul.f32 %v279, %v6169
    %v6234 = vmul.f32 %v280, %v6169
    %v6235 = vmul.f32 %v281, %v6169
    %v6236 = vmul.f32 %v282, %v6169
    %v6237 = vmul.f32 %v283, %v6169
    %v6238 = vmul.f32 %v284, %v6169
    %v6239 = vmul.f32 %v285, %v6169
    %v6240 = vmul.f32 %v286, %v6169
    %v6241 = vmul.f32 %v287, %v6169
    %v6242 = vmul.f32 %v288, %v6169
    %v6243 = vmul.f32 %v289, %v6169
    %v6244 = vmul.f32 %v290, %v6169
    %v6245 = vmul.f32 %v291, %v6169
    %v6246 = vmul.f32 %v292, %v6169
    %v6247 = vmul.f32 %v293, %v6169
    %v6248 = vmul.f32 %v294, %v6169
    %v6249 = vmul.f32 %v295, %v6169
    %v6250 = vmul.f32 %v296, %v6169
    %v6251 = vmul.f32 %v297, %v6169
    %v6252 = vmul.f32 %v298, %v6169
    %v6253 = vmul.f32 %v299, %v6169
    %v6254 = vmul.f32 %v300, %v6169
    %v6255 = vmul.f32 %v301, %v6169
    %v6256 = vmul.f32 %v302, %v6169
    %v6257 = vmul.f32 %v303, %v6169
    %v6258 = vmul.f32 %v304, %v6169
    %v6259 = vmul.f32 %v305, %v6169
    %v6260 = vmul.f32 %v306, %v6169
    %v6261 = vmul.f32 %v307, %v6169
    %v6262 = vmul.f32 %v308, %v6169
    %v6263 = vmul.f32 %v309, %v6169
    %v6264 = vmul.f32 %v310, %v6169
    %v6265 = vmul.f32 %v311, %v6169
    %v6266 = vmul.f32 %v312, %v6169
    %v6267 = vmul.f32 %v313, %v6169
    %v6268 = vmul.f32 %v314, %v6169
    %v6269 = vmul.f32 %v315, %v6169
    %v6270 = vmul.f32 %v316, %v6169
    %v6271 = vmul.f32 %v317, %v6169
    %v6272 = vmul.f32 %v318, %v6169
    %v6273 = vmul.f32 %v319, %v6169
    %v6274 = vmul.f32 %v320, %v6169
    %v6275 = vmul.f32 %v321, %v6169
    %v6276 = vmul.f32 %v322, %v6169
    %v6277 = vmul.f32 %v323, %v6169
    %v6278 = vmul.f32 %v324, %v6169
    %v6279 = vmul.f32 %v325, %v6169
    %v6280 = vmul.f32 %v326, %v6169
    %v6281 = vmul.f32 %v327, %v6169
    %v6282 = vmul.f32 %v328, %v6169
    %v6283 = vmul.f32 %v329, %v6169
    %v6284 = vmul.f32 %v330, %v6169
    %v6285 = vmul.f32 %v331, %v6169
    %v6286 = vmul.f32 %v332, %v6169
    %v6287 = vmul.f32 %v333, %v6169
    %v6288 = vmul.f32 %v334, %v6169
    %v6289 = vmul.f32 %v335, %v6169
    %v6290 = vmul.f32 %v336, %v6169
    %v6291 = vmul.f32 %v337, %v6169
    %v6292 = vmul.f32 %v338, %v6169
    %v6293 = vmul.f32 %v339, %v6169
    %v6294 = vmul.f32 %v340, %v6169
    %v6295 = vmul.f32 %v341, %v6169
    %v6296 = vmul.f32 %v342, %v6169
    %v6297 = vmul.f32 %v343, %v6169
    %v6298 = vmul.f32 %v344, %v6169
    %v6299 = vmul.f32 %v345, %v6169
    %v6300 = vmul.f32 %v346, %v6169
    %v6301 = vmul.f32 %v347, %v6169
    %v6302 = vmul.f32 %v348, %v6169
    %v6303 = vmul.f32 %v349, %v6169
    %v6304 = vmul.f32 %v350, %v6169
    %v6305 = vmul.f32 %v351, %v6169
    %v6306 = vmul.f32 %v352, %v6169
    %v6307 = vmul.f32 %v353, %v6169
    %v6308 = vmul.f32 %v354, %v6169
    %v6309 = vmul.f32 %v355, %v6169
    %v6310 = vmul.f32 %v356, %v6169
    %v6311 = vmul.f32 %v357, %v6169
    %v6312 = vmul.f32 %v358, %v6169
    %v6313 = vmul.f32 %v359, %v6169
    %v6314 = vmul.f32 %v360, %v6169
    %v6315 = vmul.f32 %v361, %v6169
    %v6316 = vmul.f32 %v362, %v6169
    %v6317 = vmul.f32 %v363, %v6169
    %v6318 = vmul.f32 %v364, %v6169
    %v6319 = vmul.f32 %v365, %v6169
    %v6320 = vmul.f32 %v366, %v6169
    %v6321 = vmul.f32 %v367, %v6169
    %v6322 = vmul.f32 %v368, %v6169
    %v6323 = vmul.f32 %v369, %v6169
    %v6324 = vmul.f32 %v370, %v6169
    %v6325 = vmul.f32 %v371, %v6169
    %v6326 = vmul.f32 %v372, %v6169
    %v6327 = vmul.f32 %v373, %v6169
    %v6328 = vmul.f32 %v374, %v6169
    %v6329 = vmul.f32 %v375, %v6169
    %s6330 = sld [smem:[#allocation7 + $0xd]]
    %v6331 = vstv %s6330
    %v6332 = vmul.f32 %v377, %v6331
    %v6333 = vmul.f32 %v379, %v6331
    %v6334 = vmul.f32 %v381, %v6331
    %v6335 = vmul.f32 %v383, %v6331
    %v6336 = vmul.f32 %v385, %v6331
    %v6337 = vmul.f32 %v387, %v6331
    %v6338 = vmul.f32 %v389, %v6331
    %v6339 = vmul.f32 %v391, %v6331
    %v6340 = vmul.f32 %v393, %v6331
    %v6341 = vmul.f32 %v395, %v6331
    %v6342 = vmul.f32 %v397, %v6331
    %v6343 = vmul.f32 %v399, %v6331
    %v6344 = vmul.f32 %v401, %v6331
    %v6345 = vmul.f32 %v403, %v6331
    %v6346 = vmul.f32 %v405, %v6331
    %v6347 = vmul.f32 %v407, %v6331
    %v6348 = vmul.f32 %v409, %v6331
    %v6349 = vmul.f32 %v411, %v6331
    %v6350 = vmul.f32 %v413, %v6331
    %v6351 = vmul.f32 %v415, %v6331
    %v6352 = vmul.f32 %v417, %v6331
    %v6353 = vmul.f32 %v419, %v6331
    %v6354 = vmul.f32 %v421, %v6331
    %v6355 = vmul.f32 %v423, %v6331
    %v6356 = vmul.f32 %v425, %v6331
    %v6357 = vmul.f32 %v427, %v6331
    %v6358 = vmul.f32 %v429, %v6331
    %v6359 = vmul.f32 %v431, %v6331
    %v6360 = vmul.f32 %v433, %v6331
    %v6361 = vmul.f32 %v435, %v6331
    %v6362 = vmul.f32 %v437, %v6331
    %v6363 = vmul.f32 %v439, %v6331
    %v6364 = vmul.f32 %v441, %v6331
    %v6365 = vmul.f32 %v443, %v6331
    %v6366 = vmul.f32 %v445, %v6331
    %v6367 = vmul.f32 %v447, %v6331
    %v6368 = vmul.f32 %v449, %v6331
    %v6369 = vmul.f32 %v451, %v6331
    %v6370 = vmul.f32 %v453, %v6331
    %v6371 = vmul.f32 %v455, %v6331
    %v6372 = vmul.f32 %v457, %v6331
    %v6373 = vmul.f32 %v459, %v6331
    %v6374 = vmul.f32 %v461, %v6331
    %v6375 = vmul.f32 %v463, %v6331
    %v6376 = vmul.f32 %v465, %v6331
    %v6377 = vmul.f32 %v467, %v6331
    %v6378 = vmul.f32 %v469, %v6331
    %v6379 = vmul.f32 %v471, %v6331
    %v6380 = vmul.f32 %v473, %v6331
    %v6381 = vmul.f32 %v475, %v6331
    %v6382 = vmul.f32 %v477, %v6331
    %v6383 = vmul.f32 %v479, %v6331
    %v6384 = vmul.f32 %v481, %v6331
    %v6385 = vmul.f32 %v483, %v6331
    %v6386 = vmul.f32 %v485, %v6331
    %v6387 = vmul.f32 %v487, %v6331
    %v6388 = vmul.f32 %v489, %v6331
    %v6389 = vmul.f32 %v491, %v6331
    %v6390 = vmul.f32 %v493, %v6331
    %v6391 = vmul.f32 %v495, %v6331
    %v6392 = vmul.f32 %v497, %v6331
    %v6393 = vmul.f32 %v499, %v6331
    %v6394 = vmul.f32 %v501, %v6331
    %v6395 = vmul.f32 %v503, %v6331
    %v6396 = vmul.f32 %v505, %v6331
    %v6397 = vmul.f32 %v507, %v6331
    %v6398 = vmul.f32 %v509, %v6331
    %v6399 = vmul.f32 %v511, %v6331
    %v6400 = vmul.f32 %v513, %v6331
    %v6401 = vmul.f32 %v515, %v6331
    %v6402 = vmul.f32 %v517, %v6331
    %v6403 = vmul.f32 %v519, %v6331
    %v6404 = vmul.f32 %v521, %v6331
    %v6405 = vmul.f32 %v523, %v6331
    %v6406 = vmul.f32 %v525, %v6331
    %v6407 = vmul.f32 %v527, %v6331
    %v6408 = vmul.f32 %v529, %v6331
    %v6409 = vmul.f32 %v531, %v6331
    %v6410 = vmul.f32 %v533, %v6331
    %v6411 = vmul.f32 %v535, %v6331
    %v6412 = vmul.f32 %v537, %v6331
    %v6413 = vmul.f32 %v539, %v6331
    %v6414 = vmul.f32 %v541, %v6331
    %v6415 = vmul.f32 %v543, %v6331
    %v6416 = vmul.f32 %v545, %v6331
    %v6417 = vmul.f32 %v547, %v6331
    %v6418 = vmul.f32 %v549, %v6331
    %v6419 = vmul.f32 %v551, %v6331
    %v6420 = vmul.f32 %v553, %v6331
    %v6421 = vmul.f32 %v555, %v6331
    %v6422 = vmul.f32 %v557, %v6331
    %v6423 = vmul.f32 %v559, %v6331
    %v6424 = vmul.f32 %v561, %v6331
    %v6425 = vmul.f32 %v563, %v6331
    %v6426 = vmul.f32 %v565, %v6331
    %v6427 = vmul.f32 %v567, %v6331
    %v6428 = vmul.f32 %v569, %v6331
    %v6429 = vmul.f32 %v571, %v6331
    %v6430 = vmul.f32 %v573, %v6331
    %v6431 = vmul.f32 %v575, %v6331
    %v6432 = vmul.f32 %v577, %v6331
    %v6433 = vmul.f32 %v579, %v6331
    %v6434 = vmul.f32 %v581, %v6331
    %v6435 = vmul.f32 %v583, %v6331
    %v6436 = vmul.f32 %v585, %v6331
    %v6437 = vmul.f32 %v587, %v6331
    %v6438 = vmul.f32 %v589, %v6331
    %v6439 = vmul.f32 %v591, %v6331
    %v6440 = vmul.f32 %v593, %v6331
    %v6441 = vmul.f32 %v595, %v6331
    %v6442 = vmul.f32 %v597, %v6331
    %v6443 = vmul.f32 %v599, %v6331
    %v6444 = vmul.f32 %v601, %v6331
    %v6445 = vmul.f32 %v603, %v6331
    %v6446 = vmul.f32 %v605, %v6331
    %v6447 = vmul.f32 %v607, %v6331
    %v6448 = vmul.f32 %v609, %v6331
    %v6449 = vmul.f32 %v611, %v6331
    %v6450 = vmul.f32 %v613, %v6331
    %v6451 = vmul.f32 %v615, %v6331
    %v6452 = vmul.f32 %v617, %v6331
    %v6453 = vmul.f32 %v619, %v6331
    %v6454 = vmul.f32 %v621, %v6331
    %v6455 = vmul.f32 %v623, %v6331
    %v6456 = vmul.f32 %v625, %v6331
    %v6457 = vmul.f32 %v627, %v6331
    %v6458 = vmul.f32 %v629, %v6331
    %v6459 = vmul.f32 %v631, %v6331
    %v6460 = vmul.f32 %v633, %v6331
    %v6461 = vmul.f32 %v635, %v6331
    %v6462 = vmul.f32 %v637, %v6331
    %v6463 = vmul.f32 %v639, %v6331
    %v6464 = vmul.f32 %v641, %v6331
    %v6465 = vmul.f32 %v643, %v6331
    %v6466 = vmul.f32 %v645, %v6331
    %v6467 = vmul.f32 %v647, %v6331
    %v6468 = vmul.f32 %v649, %v6331
    %v6469 = vmul.f32 %v651, %v6331
    %v6470 = vmul.f32 %v653, %v6331
    %v6471 = vmul.f32 %v655, %v6331
    %v6472 = vmul.f32 %v657, %v6331
    %v6473 = vmul.f32 %v659, %v6331
    %v6474 = vmul.f32 %v661, %v6331
    %v6475 = vmul.f32 %v663, %v6331
    %v6476 = vmul.f32 %v665, %v6331
    %v6477 = vmul.f32 %v667, %v6331
    %v6478 = vmul.f32 %v669, %v6331
    %v6479 = vmul.f32 %v671, %v6331
    %v6480 = vmul.f32 %v673, %v6331
    %v6481 = vmul.f32 %v675, %v6331
    %v6482 = vmul.f32 %v677, %v6331
    %v6483 = vmul.f32 %v679, %v6331
    %v6484 = vmul.f32 %v681, %v6331
    %v6485 = vmul.f32 %v683, %v6331
    %v6486 = vmul.f32 %v685, %v6331
    %v6487 = vmul.f32 %v687, %v6331
    %v6488 = vmul.f32 %v689, %v6331
    %v6489 = vmul.f32 %v691, %v6331
    %v6490 = vmul.f32 %v693, %v6331
    %v6491 = vmul.f32 %v695, %v6331
    %v6492 = vadd.f32 %v6170, %v6332
    %v6493 = vadd.f32 %v6171, %v6333
    %v6494 = vadd.f32 %v6172, %v6334
    %v6495 = vadd.f32 %v6173, %v6335
    %v6496 = vadd.f32 %v6174, %v6336
    %v6497 = vadd.f32 %v6175, %v6337
    %v6498 = vadd.f32 %v6176, %v6338
    %v6499 = vadd.f32 %v6177, %v6339
    %v6500 = vadd.f32 %v6178, %v6340
    %v6501 = vadd.f32 %v6179, %v6341
    %v6502 = vadd.f32 %v6180, %v6342
    %v6503 = vadd.f32 %v6181, %v6343
    %v6504 = vadd.f32 %v6182, %v6344
    %v6505 = vadd.f32 %v6183, %v6345
    %v6506 = vadd.f32 %v6184, %v6346
    %v6507 = vadd.f32 %v6185, %v6347
    %v6508 = vadd.f32 %v6186, %v6348
    %v6509 = vadd.f32 %v6187, %v6349
    %v6510 = vadd.f32 %v6188, %v6350
    %v6511 = vadd.f32 %v6189, %v6351
    %v6512 = vadd.f32 %v6190, %v6352
    %v6513 = vadd.f32 %v6191, %v6353
    %v6514 = vadd.f32 %v6192, %v6354
    %v6515 = vadd.f32 %v6193, %v6355
    %v6516 = vadd.f32 %v6194, %v6356
    %v6517 = vadd.f32 %v6195, %v6357
    %v6518 = vadd.f32 %v6196, %v6358
    %v6519 = vadd.f32 %v6197, %v6359
    %v6520 = vadd.f32 %v6198, %v6360
    %v6521 = vadd.f32 %v6199, %v6361
    %v6522 = vadd.f32 %v6200, %v6362
    %v6523 = vadd.f32 %v6201, %v6363
    %v6524 = vadd.f32 %v6202, %v6364
    %v6525 = vadd.f32 %v6203, %v6365
    %v6526 = vadd.f32 %v6204, %v6366
    %v6527 = vadd.f32 %v6205, %v6367
    %v6528 = vadd.f32 %v6206, %v6368
    %v6529 = vadd.f32 %v6207, %v6369
    %v6530 = vadd.f32 %v6208, %v6370
    %v6531 = vadd.f32 %v6209, %v6371
    %v6532 = vadd.f32 %v6210, %v6372
    %v6533 = vadd.f32 %v6211, %v6373
    %v6534 = vadd.f32 %v6212, %v6374
    %v6535 = vadd.f32 %v6213, %v6375
    %v6536 = vadd.f32 %v6214, %v6376
    %v6537 = vadd.f32 %v6215, %v6377
    %v6538 = vadd.f32 %v6216, %v6378
    %v6539 = vadd.f32 %v6217, %v6379
    %v6540 = vadd.f32 %v6218, %v6380
    %v6541 = vadd.f32 %v6219, %v6381
    %v6542 = vadd.f32 %v6220, %v6382
    %v6543 = vadd.f32 %v6221, %v6383
    %v6544 = vadd.f32 %v6222, %v6384
    %v6545 = vadd.f32 %v6223, %v6385
    %v6546 = vadd.f32 %v6224, %v6386
    %v6547 = vadd.f32 %v6225, %v6387
    %v6548 = vadd.f32 %v6226, %v6388
    %v6549 = vadd.f32 %v6227, %v6389
    %v6550 = vadd.f32 %v6228, %v6390
    %v6551 = vadd.f32 %v6229, %v6391
    %v6552 = vadd.f32 %v6230, %v6392
    %v6553 = vadd.f32 %v6231, %v6393
    %v6554 = vadd.f32 %v6232, %v6394
    %v6555 = vadd.f32 %v6233, %v6395
    %v6556 = vadd.f32 %v6234, %v6396
    %v6557 = vadd.f32 %v6235, %v6397
    %v6558 = vadd.f32 %v6236, %v6398
    %v6559 = vadd.f32 %v6237, %v6399
    %v6560 = vadd.f32 %v6238, %v6400
    %v6561 = vadd.f32 %v6239, %v6401
    %v6562 = vadd.f32 %v6240, %v6402
    %v6563 = vadd.f32 %v6241, %v6403
    %v6564 = vadd.f32 %v6242, %v6404
    %v6565 = vadd.f32 %v6243, %v6405
    %v6566 = vadd.f32 %v6244, %v6406
    %v6567 = vadd.f32 %v6245, %v6407
    %v6568 = vadd.f32 %v6246, %v6408
    %v6569 = vadd.f32 %v6247, %v6409
    %v6570 = vadd.f32 %v6248, %v6410
    %v6571 = vadd.f32 %v6249, %v6411
    %v6572 = vadd.f32 %v6250, %v6412
    %v6573 = vadd.f32 %v6251, %v6413
    %v6574 = vadd.f32 %v6252, %v6414
    %v6575 = vadd.f32 %v6253, %v6415
    %v6576 = vadd.f32 %v6254, %v6416
    %v6577 = vadd.f32 %v6255, %v6417
    %v6578 = vadd.f32 %v6256, %v6418
    %v6579 = vadd.f32 %v6257, %v6419
    %v6580 = vadd.f32 %v6258, %v6420
    %v6581 = vadd.f32 %v6259, %v6421
    %v6582 = vadd.f32 %v6260, %v6422
    %v6583 = vadd.f32 %v6261, %v6423
    %v6584 = vadd.f32 %v6262, %v6424
    %v6585 = vadd.f32 %v6263, %v6425
    %v6586 = vadd.f32 %v6264, %v6426
    %v6587 = vadd.f32 %v6265, %v6427
    %v6588 = vadd.f32 %v6266, %v6428
    %v6589 = vadd.f32 %v6267, %v6429
    %v6590 = vadd.f32 %v6268, %v6430
    %v6591 = vadd.f32 %v6269, %v6431
    %v6592 = vadd.f32 %v6270, %v6432
    %v6593 = vadd.f32 %v6271, %v6433
    %v6594 = vadd.f32 %v6272, %v6434
    %v6595 = vadd.f32 %v6273, %v6435
    %v6596 = vadd.f32 %v6274, %v6436
    %v6597 = vadd.f32 %v6275, %v6437
    %v6598 = vadd.f32 %v6276, %v6438
    %v6599 = vadd.f32 %v6277, %v6439
    %v6600 = vadd.f32 %v6278, %v6440
    %v6601 = vadd.f32 %v6279, %v6441
    %v6602 = vadd.f32 %v6280, %v6442
    %v6603 = vadd.f32 %v6281, %v6443
    %v6604 = vadd.f32 %v6282, %v6444
    %v6605 = vadd.f32 %v6283, %v6445
    %v6606 = vadd.f32 %v6284, %v6446
    %v6607 = vadd.f32 %v6285, %v6447
    %v6608 = vadd.f32 %v6286, %v6448
    %v6609 = vadd.f32 %v6287, %v6449
    %v6610 = vadd.f32 %v6288, %v6450
    %v6611 = vadd.f32 %v6289, %v6451
    %v6612 = vadd.f32 %v6290, %v6452
    %v6613 = vadd.f32 %v6291, %v6453
    %v6614 = vadd.f32 %v6292, %v6454
    %v6615 = vadd.f32 %v6293, %v6455
    %v6616 = vadd.f32 %v6294, %v6456
    %v6617 = vadd.f32 %v6295, %v6457
    %v6618 = vadd.f32 %v6296, %v6458
    %v6619 = vadd.f32 %v6297, %v6459
    %v6620 = vadd.f32 %v6298, %v6460
    %v6621 = vadd.f32 %v6299, %v6461
    %v6622 = vadd.f32 %v6300, %v6462
    %v6623 = vadd.f32 %v6301, %v6463
    %v6624 = vadd.f32 %v6302, %v6464
    %v6625 = vadd.f32 %v6303, %v6465
    %v6626 = vadd.f32 %v6304, %v6466
    %v6627 = vadd.f32 %v6305, %v6467
    %v6628 = vadd.f32 %v6306, %v6468
    %v6629 = vadd.f32 %v6307, %v6469
    %v6630 = vadd.f32 %v6308, %v6470
    %v6631 = vadd.f32 %v6309, %v6471
    %v6632 = vadd.f32 %v6310, %v6472
    %v6633 = vadd.f32 %v6311, %v6473
    %v6634 = vadd.f32 %v6312, %v6474
    %v6635 = vadd.f32 %v6313, %v6475
    %v6636 = vadd.f32 %v6314, %v6476
    %v6637 = vadd.f32 %v6315, %v6477
    %v6638 = vadd.f32 %v6316, %v6478
    %v6639 = vadd.f32 %v6317, %v6479
    %v6640 = vadd.f32 %v6318, %v6480
    %v6641 = vadd.f32 %v6319, %v6481
    %v6642 = vadd.f32 %v6320, %v6482
    %v6643 = vadd.f32 %v6321, %v6483
    %v6644 = vadd.f32 %v6322, %v6484
    %v6645 = vadd.f32 %v6323, %v6485
    %v6646 = vadd.f32 %v6324, %v6486
    %v6647 = vadd.f32 %v6325, %v6487
    %v6648 = vadd.f32 %v6326, %v6488
    %v6649 = vadd.f32 %v6327, %v6489
    %v6650 = vadd.f32 %v6328, %v6490
    %v6651 = vadd.f32 %v6329, %v6491
    %s6652 = sld [smem:[#allocation7 + $0xe]]
    %v6653 = vstv %s6652
    %v6654 = vmul.f32 %v697, %v6653
    %v6655 = vmul.f32 %v699, %v6653
    %v6656 = vmul.f32 %v701, %v6653
    %v6657 = vmul.f32 %v703, %v6653
    %v6658 = vmul.f32 %v705, %v6653
    %v6659 = vmul.f32 %v707, %v6653
    %v6660 = vmul.f32 %v709, %v6653
    %v6661 = vmul.f32 %v711, %v6653
    %v6662 = vmul.f32 %v713, %v6653
    %v6663 = vmul.f32 %v715, %v6653
    %v6664 = vmul.f32 %v717, %v6653
    %v6665 = vmul.f32 %v719, %v6653
    %v6666 = vmul.f32 %v721, %v6653
    %v6667 = vmul.f32 %v723, %v6653
    %v6668 = vmul.f32 %v725, %v6653
    %v6669 = vmul.f32 %v727, %v6653
    %v6670 = vmul.f32 %v729, %v6653
    %v6671 = vmul.f32 %v731, %v6653
    %v6672 = vmul.f32 %v733, %v6653
    %v6673 = vmul.f32 %v735, %v6653
    %v6674 = vmul.f32 %v737, %v6653
    %v6675 = vmul.f32 %v739, %v6653
    %v6676 = vmul.f32 %v741, %v6653
    %v6677 = vmul.f32 %v743, %v6653
    %v6678 = vmul.f32 %v745, %v6653
    %v6679 = vmul.f32 %v747, %v6653
    %v6680 = vmul.f32 %v749, %v6653
    %v6681 = vmul.f32 %v751, %v6653
    %v6682 = vmul.f32 %v753, %v6653
    %v6683 = vmul.f32 %v755, %v6653
    %v6684 = vmul.f32 %v757, %v6653
    %v6685 = vmul.f32 %v759, %v6653
    %v6686 = vmul.f32 %v761, %v6653
    %v6687 = vmul.f32 %v763, %v6653
    %v6688 = vmul.f32 %v765, %v6653
    %v6689 = vmul.f32 %v767, %v6653
    %v6690 = vmul.f32 %v769, %v6653
    %v6691 = vmul.f32 %v771, %v6653
    %v6692 = vmul.f32 %v773, %v6653
    %v6693 = vmul.f32 %v775, %v6653
    %v6694 = vmul.f32 %v777, %v6653
    %v6695 = vmul.f32 %v779, %v6653
    %v6696 = vmul.f32 %v781, %v6653
    %v6697 = vmul.f32 %v783, %v6653
    %v6698 = vmul.f32 %v785, %v6653
    %v6699 = vmul.f32 %v787, %v6653
    %v6700 = vmul.f32 %v789, %v6653
    %v6701 = vmul.f32 %v791, %v6653
    %v6702 = vmul.f32 %v793, %v6653
    %v6703 = vmul.f32 %v795, %v6653
    %v6704 = vmul.f32 %v797, %v6653
    %v6705 = vmul.f32 %v799, %v6653
    %v6706 = vmul.f32 %v801, %v6653
    %v6707 = vmul.f32 %v803, %v6653
    %v6708 = vmul.f32 %v805, %v6653
    %v6709 = vmul.f32 %v807, %v6653
    %v6710 = vmul.f32 %v809, %v6653
    %v6711 = vmul.f32 %v811, %v6653
    %v6712 = vmul.f32 %v813, %v6653
    %v6713 = vmul.f32 %v815, %v6653
    %v6714 = vmul.f32 %v817, %v6653
    %v6715 = vmul.f32 %v819, %v6653
    %v6716 = vmul.f32 %v821, %v6653
    %v6717 = vmul.f32 %v823, %v6653
    %v6718 = vmul.f32 %v825, %v6653
    %v6719 = vmul.f32 %v827, %v6653
    %v6720 = vmul.f32 %v829, %v6653
    %v6721 = vmul.f32 %v831, %v6653
    %v6722 = vmul.f32 %v833, %v6653
    %v6723 = vmul.f32 %v835, %v6653
    %v6724 = vmul.f32 %v837, %v6653
    %v6725 = vmul.f32 %v839, %v6653
    %v6726 = vmul.f32 %v841, %v6653
    %v6727 = vmul.f32 %v843, %v6653
    %v6728 = vmul.f32 %v845, %v6653
    %v6729 = vmul.f32 %v847, %v6653
    %v6730 = vmul.f32 %v849, %v6653
    %v6731 = vmul.f32 %v851, %v6653
    %v6732 = vmul.f32 %v853, %v6653
    %v6733 = vmul.f32 %v855, %v6653
    %v6734 = vmul.f32 %v857, %v6653
    %v6735 = vmul.f32 %v859, %v6653
    %v6736 = vmul.f32 %v861, %v6653
    %v6737 = vmul.f32 %v863, %v6653
    %v6738 = vmul.f32 %v865, %v6653
    %v6739 = vmul.f32 %v867, %v6653
    %v6740 = vmul.f32 %v869, %v6653
    %v6741 = vmul.f32 %v871, %v6653
    %v6742 = vmul.f32 %v873, %v6653
    %v6743 = vmul.f32 %v875, %v6653
    %v6744 = vmul.f32 %v877, %v6653
    %v6745 = vmul.f32 %v879, %v6653
    %v6746 = vmul.f32 %v881, %v6653
    %v6747 = vmul.f32 %v883, %v6653
    %v6748 = vmul.f32 %v885, %v6653
    %v6749 = vmul.f32 %v887, %v6653
    %v6750 = vmul.f32 %v889, %v6653
    %v6751 = vmul.f32 %v891, %v6653
    %v6752 = vmul.f32 %v893, %v6653
    %v6753 = vmul.f32 %v895, %v6653
    %v6754 = vmul.f32 %v897, %v6653
    %v6755 = vmul.f32 %v899, %v6653
    %v6756 = vmul.f32 %v901, %v6653
    %v6757 = vmul.f32 %v903, %v6653
    %v6758 = vmul.f32 %v905, %v6653
    %v6759 = vmul.f32 %v907, %v6653
    %v6760 = vmul.f32 %v909, %v6653
    %v6761 = vmul.f32 %v911, %v6653
    %v6762 = vmul.f32 %v913, %v6653
    %v6763 = vmul.f32 %v915, %v6653
    %v6764 = vmul.f32 %v917, %v6653
    %v6765 = vmul.f32 %v919, %v6653
    %v6766 = vmul.f32 %v921, %v6653
    %v6767 = vmul.f32 %v923, %v6653
    %v6768 = vmul.f32 %v925, %v6653
    %v6769 = vmul.f32 %v927, %v6653
    %v6770 = vmul.f32 %v929, %v6653
    %v6771 = vmul.f32 %v931, %v6653
    %v6772 = vmul.f32 %v933, %v6653
    %v6773 = vmul.f32 %v935, %v6653
    %v6774 = vmul.f32 %v937, %v6653
    %v6775 = vmul.f32 %v939, %v6653
    %v6776 = vmul.f32 %v941, %v6653
    %v6777 = vmul.f32 %v943, %v6653
    %v6778 = vmul.f32 %v945, %v6653
    %v6779 = vmul.f32 %v947, %v6653
    %v6780 = vmul.f32 %v949, %v6653
    %v6781 = vmul.f32 %v951, %v6653
    %v6782 = vmul.f32 %v953, %v6653
    %v6783 = vmul.f32 %v955, %v6653
    %v6784 = vmul.f32 %v957, %v6653
    %v6785 = vmul.f32 %v959, %v6653
    %v6786 = vmul.f32 %v961, %v6653
    %v6787 = vmul.f32 %v963, %v6653
    %v6788 = vmul.f32 %v965, %v6653
    %v6789 = vmul.f32 %v967, %v6653
    %v6790 = vmul.f32 %v969, %v6653
    %v6791 = vmul.f32 %v971, %v6653
    %v6792 = vmul.f32 %v973, %v6653
    %v6793 = vmul.f32 %v975, %v6653
    %v6794 = vmul.f32 %v977, %v6653
    %v6795 = vmul.f32 %v979, %v6653
    %v6796 = vmul.f32 %v981, %v6653
    %v6797 = vmul.f32 %v983, %v6653
    %v6798 = vmul.f32 %v985, %v6653
    %v6799 = vmul.f32 %v987, %v6653
    %v6800 = vmul.f32 %v989, %v6653
    %v6801 = vmul.f32 %v991, %v6653
    %v6802 = vmul.f32 %v993, %v6653
    %v6803 = vmul.f32 %v995, %v6653
    %v6804 = vmul.f32 %v997, %v6653
    %v6805 = vmul.f32 %v999, %v6653
    %v6806 = vmul.f32 %v1001, %v6653
    %v6807 = vmul.f32 %v1003, %v6653
    %v6808 = vmul.f32 %v1005, %v6653
    %v6809 = vmul.f32 %v1007, %v6653
    %v6810 = vmul.f32 %v1009, %v6653
    %v6811 = vmul.f32 %v1011, %v6653
    %v6812 = vmul.f32 %v1013, %v6653
    %v6813 = vmul.f32 %v1015, %v6653
    %v6814 = vadd.f32 %v6492, %v6654
    %v6815 = vadd.f32 %v6493, %v6655
    %v6816 = vadd.f32 %v6494, %v6656
    %v6817 = vadd.f32 %v6495, %v6657
    %v6818 = vadd.f32 %v6496, %v6658
    %v6819 = vadd.f32 %v6497, %v6659
    %v6820 = vadd.f32 %v6498, %v6660
    %v6821 = vadd.f32 %v6499, %v6661
    %v6822 = vadd.f32 %v6500, %v6662
    %v6823 = vadd.f32 %v6501, %v6663
    %v6824 = vadd.f32 %v6502, %v6664
    %v6825 = vadd.f32 %v6503, %v6665
    %v6826 = vadd.f32 %v6504, %v6666
    %v6827 = vadd.f32 %v6505, %v6667
    %v6828 = vadd.f32 %v6506, %v6668
    %v6829 = vadd.f32 %v6507, %v6669
    %v6830 = vadd.f32 %v6508, %v6670
    %v6831 = vadd.f32 %v6509, %v6671
    %v6832 = vadd.f32 %v6510, %v6672
    %v6833 = vadd.f32 %v6511, %v6673
    %v6834 = vadd.f32 %v6512, %v6674
    %v6835 = vadd.f32 %v6513, %v6675
    %v6836 = vadd.f32 %v6514, %v6676
    %v6837 = vadd.f32 %v6515, %v6677
    %v6838 = vadd.f32 %v6516, %v6678
    %v6839 = vadd.f32 %v6517, %v6679
    %v6840 = vadd.f32 %v6518, %v6680
    %v6841 = vadd.f32 %v6519, %v6681
    %v6842 = vadd.f32 %v6520, %v6682
    %v6843 = vadd.f32 %v6521, %v6683
    %v6844 = vadd.f32 %v6522, %v6684
    %v6845 = vadd.f32 %v6523, %v6685
    %v6846 = vadd.f32 %v6524, %v6686
    %v6847 = vadd.f32 %v6525, %v6687
    %v6848 = vadd.f32 %v6526, %v6688
    %v6849 = vadd.f32 %v6527, %v6689
    %v6850 = vadd.f32 %v6528, %v6690
    %v6851 = vadd.f32 %v6529, %v6691
    %v6852 = vadd.f32 %v6530, %v6692
    %v6853 = vadd.f32 %v6531, %v6693
    %v6854 = vadd.f32 %v6532, %v6694
    %v6855 = vadd.f32 %v6533, %v6695
    %v6856 = vadd.f32 %v6534, %v6696
    %v6857 = vadd.f32 %v6535, %v6697
    %v6858 = vadd.f32 %v6536, %v6698
    %v6859 = vadd.f32 %v6537, %v6699
    %v6860 = vadd.f32 %v6538, %v6700
    %v6861 = vadd.f32 %v6539, %v6701
    %v6862 = vadd.f32 %v6540, %v6702
    %v6863 = vadd.f32 %v6541, %v6703
    %v6864 = vadd.f32 %v6542, %v6704
    %v6865 = vadd.f32 %v6543, %v6705
    %v6866 = vadd.f32 %v6544, %v6706
    %v6867 = vadd.f32 %v6545, %v6707
    %v6868 = vadd.f32 %v6546, %v6708
    %v6869 = vadd.f32 %v6547, %v6709
    %v6870 = vadd.f32 %v6548, %v6710
    %v6871 = vadd.f32 %v6549, %v6711
    %v6872 = vadd.f32 %v6550, %v6712
    %v6873 = vadd.f32 %v6551, %v6713
    %v6874 = vadd.f32 %v6552, %v6714
    %v6875 = vadd.f32 %v6553, %v6715
    %v6876 = vadd.f32 %v6554, %v6716
    %v6877 = vadd.f32 %v6555, %v6717
    %v6878 = vadd.f32 %v6556, %v6718
    %v6879 = vadd.f32 %v6557, %v6719
    %v6880 = vadd.f32 %v6558, %v6720
    %v6881 = vadd.f32 %v6559, %v6721
    %v6882 = vadd.f32 %v6560, %v6722
    %v6883 = vadd.f32 %v6561, %v6723
    %v6884 = vadd.f32 %v6562, %v6724
    %v6885 = vadd.f32 %v6563, %v6725
    %v6886 = vadd.f32 %v6564, %v6726
    %v6887 = vadd.f32 %v6565, %v6727
    %v6888 = vadd.f32 %v6566, %v6728
    %v6889 = vadd.f32 %v6567, %v6729
    %v6890 = vadd.f32 %v6568, %v6730
    %v6891 = vadd.f32 %v6569, %v6731
    %v6892 = vadd.f32 %v6570, %v6732
    %v6893 = vadd.f32 %v6571, %v6733
    %v6894 = vadd.f32 %v6572, %v6734
    %v6895 = vadd.f32 %v6573, %v6735
    %v6896 = vadd.f32 %v6574, %v6736
    %v6897 = vadd.f32 %v6575, %v6737
    %v6898 = vadd.f32 %v6576, %v6738
    %v6899 = vadd.f32 %v6577, %v6739
    %v6900 = vadd.f32 %v6578, %v6740
    %v6901 = vadd.f32 %v6579, %v6741
    %v6902 = vadd.f32 %v6580, %v6742
    %v6903 = vadd.f32 %v6581, %v6743
    %v6904 = vadd.f32 %v6582, %v6744
    %v6905 = vadd.f32 %v6583, %v6745
    %v6906 = vadd.f32 %v6584, %v6746
    %v6907 = vadd.f32 %v6585, %v6747
    %v6908 = vadd.f32 %v6586, %v6748
    %v6909 = vadd.f32 %v6587, %v6749
    %v6910 = vadd.f32 %v6588, %v6750
    %v6911 = vadd.f32 %v6589, %v6751
    %v6912 = vadd.f32 %v6590, %v6752
    %v6913 = vadd.f32 %v6591, %v6753
    %v6914 = vadd.f32 %v6592, %v6754
    %v6915 = vadd.f32 %v6593, %v6755
    %v6916 = vadd.f32 %v6594, %v6756
    %v6917 = vadd.f32 %v6595, %v6757
    %v6918 = vadd.f32 %v6596, %v6758
    %v6919 = vadd.f32 %v6597, %v6759
    %v6920 = vadd.f32 %v6598, %v6760
    %v6921 = vadd.f32 %v6599, %v6761
    %v6922 = vadd.f32 %v6600, %v6762
    %v6923 = vadd.f32 %v6601, %v6763
    %v6924 = vadd.f32 %v6602, %v6764
    %v6925 = vadd.f32 %v6603, %v6765
    %v6926 = vadd.f32 %v6604, %v6766
    %v6927 = vadd.f32 %v6605, %v6767
    %v6928 = vadd.f32 %v6606, %v6768
    %v6929 = vadd.f32 %v6607, %v6769
    %v6930 = vadd.f32 %v6608, %v6770
    %v6931 = vadd.f32 %v6609, %v6771
    %v6932 = vadd.f32 %v6610, %v6772
    %v6933 = vadd.f32 %v6611, %v6773
    %v6934 = vadd.f32 %v6612, %v6774
    %v6935 = vadd.f32 %v6613, %v6775
    %v6936 = vadd.f32 %v6614, %v6776
    %v6937 = vadd.f32 %v6615, %v6777
    %v6938 = vadd.f32 %v6616, %v6778
    %v6939 = vadd.f32 %v6617, %v6779
    %v6940 = vadd.f32 %v6618, %v6780
    %v6941 = vadd.f32 %v6619, %v6781
    %v6942 = vadd.f32 %v6620, %v6782
    %v6943 = vadd.f32 %v6621, %v6783
    %v6944 = vadd.f32 %v6622, %v6784
    %v6945 = vadd.f32 %v6623, %v6785
    %v6946 = vadd.f32 %v6624, %v6786
    %v6947 = vadd.f32 %v6625, %v6787
    %v6948 = vadd.f32 %v6626, %v6788
    %v6949 = vadd.f32 %v6627, %v6789
    %v6950 = vadd.f32 %v6628, %v6790
    %v6951 = vadd.f32 %v6629, %v6791
    %v6952 = vadd.f32 %v6630, %v6792
    %v6953 = vadd.f32 %v6631, %v6793
    %v6954 = vadd.f32 %v6632, %v6794
    %v6955 = vadd.f32 %v6633, %v6795
    %v6956 = vadd.f32 %v6634, %v6796
    %v6957 = vadd.f32 %v6635, %v6797
    %v6958 = vadd.f32 %v6636, %v6798
    %v6959 = vadd.f32 %v6637, %v6799
    %v6960 = vadd.f32 %v6638, %v6800
    %v6961 = vadd.f32 %v6639, %v6801
    %v6962 = vadd.f32 %v6640, %v6802
    %v6963 = vadd.f32 %v6641, %v6803
    %v6964 = vadd.f32 %v6642, %v6804
    %v6965 = vadd.f32 %v6643, %v6805
    %v6966 = vadd.f32 %v6644, %v6806
    %v6967 = vadd.f32 %v6645, %v6807
    %v6968 = vadd.f32 %v6646, %v6808
    %v6969 = vadd.f32 %v6647, %v6809
    %v6970 = vadd.f32 %v6648, %v6810
    %v6971 = vadd.f32 %v6649, %v6811
    %v6972 = vadd.f32 %v6650, %v6812
    %v6973 = vadd.f32 %v6651, %v6813
    %s6974 = sld [smem:[#allocation8 + $0x4]]
    %v6975 = vstv %s6974
    %v6976 = vadd.f32 %v6814, %v6975
    %v6977 = vadd.f32 %v6815, %v6975
    %v6978 = vadd.f32 %v6816, %v6975
    %v6979 = vadd.f32 %v6817, %v6975
    %v6980 = vadd.f32 %v6818, %v6975
    %v6981 = vadd.f32 %v6819, %v6975
    %v6982 = vadd.f32 %v6820, %v6975
    %v6983 = vadd.f32 %v6821, %v6975
    %v6984 = vadd.f32 %v6822, %v6975
    %v6985 = vadd.f32 %v6823, %v6975
    %v6986 = vadd.f32 %v6824, %v6975
    %v6987 = vadd.f32 %v6825, %v6975
    %v6988 = vadd.f32 %v6826, %v6975
    %v6989 = vadd.f32 %v6827, %v6975
    %v6990 = vadd.f32 %v6828, %v6975
    %v6991 = vadd.f32 %v6829, %v6975
    %v6992 = vadd.f32 %v6830, %v6975
    %v6993 = vadd.f32 %v6831, %v6975
    %v6994 = vadd.f32 %v6832, %v6975
    %v6995 = vadd.f32 %v6833, %v6975
    %v6996 = vadd.f32 %v6834, %v6975
    %v6997 = vadd.f32 %v6835, %v6975
    %v6998 = vadd.f32 %v6836, %v6975
    %v6999 = vadd.f32 %v6837, %v6975
    %v7000 = vadd.f32 %v6838, %v6975
    %v7001 = vadd.f32 %v6839, %v6975
    %v7002 = vadd.f32 %v6840, %v6975
    %v7003 = vadd.f32 %v6841, %v6975
    %v7004 = vadd.f32 %v6842, %v6975
    %v7005 = vadd.f32 %v6843, %v6975
    %v7006 = vadd.f32 %v6844, %v6975
    %v7007 = vadd.f32 %v6845, %v6975
    %v7008 = vadd.f32 %v6846, %v6975
    %v7009 = vadd.f32 %v6847, %v6975
    %v7010 = vadd.f32 %v6848, %v6975
    %v7011 = vadd.f32 %v6849, %v6975
    %v7012 = vadd.f32 %v6850, %v6975
    %v7013 = vadd.f32 %v6851, %v6975
    %v7014 = vadd.f32 %v6852, %v6975
    %v7015 = vadd.f32 %v6853, %v6975
    %v7016 = vadd.f32 %v6854, %v6975
    %v7017 = vadd.f32 %v6855, %v6975
    %v7018 = vadd.f32 %v6856, %v6975
    %v7019 = vadd.f32 %v6857, %v6975
    %v7020 = vadd.f32 %v6858, %v6975
    %v7021 = vadd.f32 %v6859, %v6975
    %v7022 = vadd.f32 %v6860, %v6975
    %v7023 = vadd.f32 %v6861, %v6975
    %v7024 = vadd.f32 %v6862, %v6975
    %v7025 = vadd.f32 %v6863, %v6975
    %v7026 = vadd.f32 %v6864, %v6975
    %v7027 = vadd.f32 %v6865, %v6975
    %v7028 = vadd.f32 %v6866, %v6975
    %v7029 = vadd.f32 %v6867, %v6975
    %v7030 = vadd.f32 %v6868, %v6975
    %v7031 = vadd.f32 %v6869, %v6975
    %v7032 = vadd.f32 %v6870, %v6975
    %v7033 = vadd.f32 %v6871, %v6975
    %v7034 = vadd.f32 %v6872, %v6975
    %v7035 = vadd.f32 %v6873, %v6975
    %v7036 = vadd.f32 %v6874, %v6975
    %v7037 = vadd.f32 %v6875, %v6975
    %v7038 = vadd.f32 %v6876, %v6975
    %v7039 = vadd.f32 %v6877, %v6975
    %v7040 = vadd.f32 %v6878, %v6975
    %v7041 = vadd.f32 %v6879, %v6975
    %v7042 = vadd.f32 %v6880, %v6975
    %v7043 = vadd.f32 %v6881, %v6975
    %v7044 = vadd.f32 %v6882, %v6975
    %v7045 = vadd.f32 %v6883, %v6975
    %v7046 = vadd.f32 %v6884, %v6975
    %v7047 = vadd.f32 %v6885, %v6975
    %v7048 = vadd.f32 %v6886, %v6975
    %v7049 = vadd.f32 %v6887, %v6975
    %v7050 = vadd.f32 %v6888, %v6975
    %v7051 = vadd.f32 %v6889, %v6975
    %v7052 = vadd.f32 %v6890, %v6975
    %v7053 = vadd.f32 %v6891, %v6975
    %v7054 = vadd.f32 %v6892, %v6975
    %v7055 = vadd.f32 %v6893, %v6975
    %v7056 = vadd.f32 %v6894, %v6975
    %v7057 = vadd.f32 %v6895, %v6975
    %v7058 = vadd.f32 %v6896, %v6975
    %v7059 = vadd.f32 %v6897, %v6975
    %v7060 = vadd.f32 %v6898, %v6975
    %v7061 = vadd.f32 %v6899, %v6975
    %v7062 = vadd.f32 %v6900, %v6975
    %v7063 = vadd.f32 %v6901, %v6975
    %v7064 = vadd.f32 %v6902, %v6975
    %v7065 = vadd.f32 %v6903, %v6975
    %v7066 = vadd.f32 %v6904, %v6975
    %v7067 = vadd.f32 %v6905, %v6975
    %v7068 = vadd.f32 %v6906, %v6975
    %v7069 = vadd.f32 %v6907, %v6975
    %v7070 = vadd.f32 %v6908, %v6975
    %v7071 = vadd.f32 %v6909, %v6975
    %v7072 = vadd.f32 %v6910, %v6975
    %v7073 = vadd.f32 %v6911, %v6975
    %v7074 = vadd.f32 %v6912, %v6975
    %v7075 = vadd.f32 %v6913, %v6975
    %v7076 = vadd.f32 %v6914, %v6975
    %v7077 = vadd.f32 %v6915, %v6975
    %v7078 = vadd.f32 %v6916, %v6975
    %v7079 = vadd.f32 %v6917, %v6975
    %v7080 = vadd.f32 %v6918, %v6975
    %v7081 = vadd.f32 %v6919, %v6975
    %v7082 = vadd.f32 %v6920, %v6975
    %v7083 = vadd.f32 %v6921, %v6975
    %v7084 = vadd.f32 %v6922, %v6975
    %v7085 = vadd.f32 %v6923, %v6975
    %v7086 = vadd.f32 %v6924, %v6975
    %v7087 = vadd.f32 %v6925, %v6975
    %v7088 = vadd.f32 %v6926, %v6975
    %v7089 = vadd.f32 %v6927, %v6975
    %v7090 = vadd.f32 %v6928, %v6975
    %v7091 = vadd.f32 %v6929, %v6975
    %v7092 = vadd.f32 %v6930, %v6975
    %v7093 = vadd.f32 %v6931, %v6975
    %v7094 = vadd.f32 %v6932, %v6975
    %v7095 = vadd.f32 %v6933, %v6975
    %v7096 = vadd.f32 %v6934, %v6975
    %v7097 = vadd.f32 %v6935, %v6975
    %v7098 = vadd.f32 %v6936, %v6975
    %v7099 = vadd.f32 %v6937, %v6975
    %v7100 = vadd.f32 %v6938, %v6975
    %v7101 = vadd.f32 %v6939, %v6975
    %v7102 = vadd.f32 %v6940, %v6975
    %v7103 = vadd.f32 %v6941, %v6975
    %v7104 = vadd.f32 %v6942, %v6975
    %v7105 = vadd.f32 %v6943, %v6975
    %v7106 = vadd.f32 %v6944, %v6975
    %v7107 = vadd.f32 %v6945, %v6975
    %v7108 = vadd.f32 %v6946, %v6975
    %v7109 = vadd.f32 %v6947, %v6975
    %v7110 = vadd.f32 %v6948, %v6975
    %v7111 = vadd.f32 %v6949, %v6975
    %v7112 = vadd.f32 %v6950, %v6975
    %v7113 = vadd.f32 %v6951, %v6975
    %v7114 = vadd.f32 %v6952, %v6975
    %v7115 = vadd.f32 %v6953, %v6975
    %v7116 = vadd.f32 %v6954, %v6975
    %v7117 = vadd.f32 %v6955, %v6975
    %v7118 = vadd.f32 %v6956, %v6975
    %v7119 = vadd.f32 %v6957, %v6975
    %v7120 = vadd.f32 %v6958, %v6975
    %v7121 = vadd.f32 %v6959, %v6975
    %v7122 = vadd.f32 %v6960, %v6975
    %v7123 = vadd.f32 %v6961, %v6975
    %v7124 = vadd.f32 %v6962, %v6975
    %v7125 = vadd.f32 %v6963, %v6975
    %v7126 = vadd.f32 %v6964, %v6975
    %v7127 = vadd.f32 %v6965, %v6975
    %v7128 = vadd.f32 %v6966, %v6975
    %v7129 = vadd.f32 %v6967, %v6975
    %v7130 = vadd.f32 %v6968, %v6975
    %v7131 = vadd.f32 %v6969, %v6975
    %v7132 = vadd.f32 %v6970, %v6975
    %v7133 = vadd.f32 %v6971, %v6975
    %v7134 = vadd.f32 %v6972, %v6975
    %v7135 = vadd.f32 %v6973, %v6975
    %v7136 = vmax.f32 %v6976, 0.0
    %v7137 = vmax.f32 %v6977, 0.0
    %v7138 = vmax.f32 %v6978, 0.0
    %v7139 = vmax.f32 %v6979, 0.0
    %v7140 = vmax.f32 %v6980, 0.0
    %v7141 = vmax.f32 %v6981, 0.0
    %v7142 = vmax.f32 %v6982, 0.0
    %v7143 = vmax.f32 %v6983, 0.0
    %v7144 = vmax.f32 %v6984, 0.0
    %v7145 = vmax.f32 %v6985, 0.0
    %v7146 = vmax.f32 %v6986, 0.0
    %v7147 = vmax.f32 %v6987, 0.0
    %v7148 = vmax.f32 %v6988, 0.0
    %v7149 = vmax.f32 %v6989, 0.0
    %v7150 = vmax.f32 %v6990, 0.0
    %v7151 = vmax.f32 %v6991, 0.0
    %v7152 = vmax.f32 %v6992, 0.0
    %v7153 = vmax.f32 %v6993, 0.0
    %v7154 = vmax.f32 %v6994, 0.0
    %v7155 = vmax.f32 %v6995, 0.0
    %v7156 = vmax.f32 %v6996, 0.0
    %v7157 = vmax.f32 %v6997, 0.0
    %v7158 = vmax.f32 %v6998, 0.0
    %v7159 = vmax.f32 %v6999, 0.0
    %v7160 = vmax.f32 %v7000, 0.0
    %v7161 = vmax.f32 %v7001, 0.0
    %v7162 = vmax.f32 %v7002, 0.0
    %v7163 = vmax.f32 %v7003, 0.0
    %v7164 = vmax.f32 %v7004, 0.0
    %v7165 = vmax.f32 %v7005, 0.0
    %v7166 = vmax.f32 %v7006, 0.0
    %v7167 = vmax.f32 %v7007, 0.0
    %v7168 = vmax.f32 %v7008, 0.0
    %v7169 = vmax.f32 %v7009, 0.0
    %v7170 = vmax.f32 %v7010, 0.0
    %v7171 = vmax.f32 %v7011, 0.0
    %v7172 = vmax.f32 %v7012, 0.0
    %v7173 = vmax.f32 %v7013, 0.0
    %v7174 = vmax.f32 %v7014, 0.0
    %v7175 = vmax.f32 %v7015, 0.0
    %v7176 = vmax.f32 %v7016, 0.0
    %v7177 = vmax.f32 %v7017, 0.0
    %v7178 = vmax.f32 %v7018, 0.0
    %v7179 = vmax.f32 %v7019, 0.0
    %v7180 = vmax.f32 %v7020, 0.0
    %v7181 = vmax.f32 %v7021, 0.0
    %v7182 = vmax.f32 %v7022, 0.0
    %v7183 = vmax.f32 %v7023, 0.0
    %v7184 = vmax.f32 %v7024, 0.0
    %v7185 = vmax.f32 %v7025, 0.0
    %v7186 = vmax.f32 %v7026, 0.0
    %v7187 = vmax.f32 %v7027, 0.0
    %v7188 = vmax.f32 %v7028, 0.0
    %v7189 = vmax.f32 %v7029, 0.0
    %v7190 = vmax.f32 %v7030, 0.0
    %v7191 = vmax.f32 %v7031, 0.0
    %v7192 = vmax.f32 %v7032, 0.0
    %v7193 = vmax.f32 %v7033, 0.0
    %v7194 = vmax.f32 %v7034, 0.0
    %v7195 = vmax.f32 %v7035, 0.0
    %v7196 = vmax.f32 %v7036, 0.0
    %v7197 = vmax.f32 %v7037, 0.0
    %v7198 = vmax.f32 %v7038, 0.0
    %v7199 = vmax.f32 %v7039, 0.0
    %v7200 = vmax.f32 %v7040, 0.0
    %v7201 = vmax.f32 %v7041, 0.0
    %v7202 = vmax.f32 %v7042, 0.0
    %v7203 = vmax.f32 %v7043, 0.0
    %v7204 = vmax.f32 %v7044, 0.0
    %v7205 = vmax.f32 %v7045, 0.0
    %v7206 = vmax.f32 %v7046, 0.0
    %v7207 = vmax.f32 %v7047, 0.0
    %v7208 = vmax.f32 %v7048, 0.0
    %v7209 = vmax.f32 %v7049, 0.0
    %v7210 = vmax.f32 %v7050, 0.0
    %v7211 = vmax.f32 %v7051, 0.0
    %v7212 = vmax.f32 %v7052, 0.0
    %v7213 = vmax.f32 %v7053, 0.0
    %v7214 = vmax.f32 %v7054, 0.0
    %v7215 = vmax.f32 %v7055, 0.0
    %v7216 = vmax.f32 %v7056, 0.0
    %v7217 = vmax.f32 %v7057, 0.0
    %v7218 = vmax.f32 %v7058, 0.0
    %v7219 = vmax.f32 %v7059, 0.0
    %v7220 = vmax.f32 %v7060, 0.0
    %v7221 = vmax.f32 %v7061, 0.0
    %v7222 = vmax.f32 %v7062, 0.0
    %v7223 = vmax.f32 %v7063, 0.0
    %v7224 = vmax.f32 %v7064, 0.0
    %v7225 = vmax.f32 %v7065, 0.0
    %v7226 = vmax.f32 %v7066, 0.0
    %v7227 = vmax.f32 %v7067, 0.0
    %v7228 = vmax.f32 %v7068, 0.0
    %v7229 = vmax.f32 %v7069, 0.0
    %v7230 = vmax.f32 %v7070, 0.0
    %v7231 = vmax.f32 %v7071, 0.0
    %v7232 = vmax.f32 %v7072, 0.0
    %v7233 = vmax.f32 %v7073, 0.0
    %v7234 = vmax.f32 %v7074, 0.0
    %v7235 = vmax.f32 %v7075, 0.0
    %v7236 = vmax.f32 %v7076, 0.0
    %v7237 = vmax.f32 %v7077, 0.0
    %v7238 = vmax.f32 %v7078, 0.0
    %v7239 = vmax.f32 %v7079, 0.0
    %v7240 = vmax.f32 %v7080, 0.0
    %v7241 = vmax.f32 %v7081, 0.0
    %v7242 = vmax.f32 %v7082, 0.0
    %v7243 = vmax.f32 %v7083, 0.0
    %v7244 = vmax.f32 %v7084, 0.0
    %v7245 = vmax.f32 %v7085, 0.0
    %v7246 = vmax.f32 %v7086, 0.0
    %v7247 = vmax.f32 %v7087, 0.0
    %v7248 = vmax.f32 %v7088, 0.0
    %v7249 = vmax.f32 %v7089, 0.0
    %v7250 = vmax.f32 %v7090, 0.0
    %v7251 = vmax.f32 %v7091, 0.0
    %v7252 = vmax.f32 %v7092, 0.0
    %v7253 = vmax.f32 %v7093, 0.0
    %v7254 = vmax.f32 %v7094, 0.0
    %v7255 = vmax.f32 %v7095, 0.0
    %v7256 = vmax.f32 %v7096, 0.0
    %v7257 = vmax.f32 %v7097, 0.0
    %v7258 = vmax.f32 %v7098, 0.0
    %v7259 = vmax.f32 %v7099, 0.0
    %v7260 = vmax.f32 %v7100, 0.0
    %v7261 = vmax.f32 %v7101, 0.0
    %v7262 = vmax.f32 %v7102, 0.0
    %v7263 = vmax.f32 %v7103, 0.0
    %v7264 = vmax.f32 %v7104, 0.0
    %v7265 = vmax.f32 %v7105, 0.0
    %v7266 = vmax.f32 %v7106, 0.0
    %v7267 = vmax.f32 %v7107, 0.0
    %v7268 = vmax.f32 %v7108, 0.0
    %v7269 = vmax.f32 %v7109, 0.0
    %v7270 = vmax.f32 %v7110, 0.0
    %v7271 = vmax.f32 %v7111, 0.0
    %v7272 = vmax.f32 %v7112, 0.0
    %v7273 = vmax.f32 %v7113, 0.0
    %v7274 = vmax.f32 %v7114, 0.0
    %v7275 = vmax.f32 %v7115, 0.0
    %v7276 = vmax.f32 %v7116, 0.0
    %v7277 = vmax.f32 %v7117, 0.0
    %v7278 = vmax.f32 %v7118, 0.0
    %v7279 = vmax.f32 %v7119, 0.0
    %v7280 = vmax.f32 %v7120, 0.0
    %v7281 = vmax.f32 %v7121, 0.0
    %v7282 = vmax.f32 %v7122, 0.0
    %v7283 = vmax.f32 %v7123, 0.0
    %v7284 = vmax.f32 %v7124, 0.0
    %v7285 = vmax.f32 %v7125, 0.0
    %v7286 = vmax.f32 %v7126, 0.0
    %v7287 = vmax.f32 %v7127, 0.0
    %v7288 = vmax.f32 %v7128, 0.0
    %v7289 = vmax.f32 %v7129, 0.0
    %v7290 = vmax.f32 %v7130, 0.0
    %v7291 = vmax.f32 %v7131, 0.0
    %v7292 = vmax.f32 %v7132, 0.0
    %v7293 = vmax.f32 %v7133, 0.0
    %v7294 = vmax.f32 %v7134, 0.0
    %v7295 = vmax.f32 %v7135, 0.0
    %v7296 = vmax.f32 %v6040, %v7136
    %v7297 = vmax.f32 %v6041, %v7137
    %v7298 = vmax.f32 %v6042, %v7138
    %v7299 = vmax.f32 %v6043, %v7139
    %v7300 = vmax.f32 %v6044, %v7140
    %v7301 = vmax.f32 %v6045, %v7141
    %v7302 = vmax.f32 %v6046, %v7142
    %v7303 = vmax.f32 %v6047, %v7143
    %v7304 = vmax.f32 %v6048, %v7144
    %v7305 = vmax.f32 %v6049, %v7145
    %v7306 = vmax.f32 %v6050, %v7146
    %v7307 = vmax.f32 %v6051, %v7147
    %v7308 = vmax.f32 %v6052, %v7148
    %v7309 = vmax.f32 %v6053, %v7149
    %v7310 = vmax.f32 %v6054, %v7150
    %v7311 = vmax.f32 %v6055, %v7151
    %v7312 = vmax.f32 %v6056, %v7152
    %v7313 = vmax.f32 %v6057, %v7153
    %v7314 = vmax.f32 %v6058, %v7154
    %v7315 = vmax.f32 %v6059, %v7155
    %v7316 = vmax.f32 %v6060, %v7156
    %v7317 = vmax.f32 %v6061, %v7157
    %v7318 = vmax.f32 %v6062, %v7158
    %v7319 = vmax.f32 %v6063, %v7159
    %v7320 = vmax.f32 %v6064, %v7160
    %v7321 = vmax.f32 %v6065, %v7161
    %v7322 = vmax.f32 %v6066, %v7162
    %v7323 = vmax.f32 %v6067, %v7163
    %v7324 = vmax.f32 %v6068, %v7164
    %v7325 = vmax.f32 %v6069, %v7165
    %v7326 = vmax.f32 %v6070, %v7166
    %v7327 = vmax.f32 %v6071, %v7167
    %v7328 = vmax.f32 %v7296, %v7168
    %v7329 = vmax.f32 %v7297, %v7169
    %v7330 = vmax.f32 %v7298, %v7170
    %v7331 = vmax.f32 %v7299, %v7171
    %v7332 = vmax.f32 %v7300, %v7172
    %v7333 = vmax.f32 %v7301, %v7173
    %v7334 = vmax.f32 %v7302, %v7174
    %v7335 = vmax.f32 %v7303, %v7175
    %v7336 = vmax.f32 %v7304, %v7176
    %v7337 = vmax.f32 %v7305, %v7177
    %v7338 = vmax.f32 %v7306, %v7178
    %v7339 = vmax.f32 %v7307, %v7179
    %v7340 = vmax.f32 %v7308, %v7180
    %v7341 = vmax.f32 %v7309, %v7181
    %v7342 = vmax.f32 %v7310, %v7182
    %v7343 = vmax.f32 %v7311, %v7183
    %v7344 = vmax.f32 %v7312, %v7184
    %v7345 = vmax.f32 %v7313, %v7185
    %v7346 = vmax.f32 %v7314, %v7186
    %v7347 = vmax.f32 %v7315, %v7187
    %v7348 = vmax.f32 %v7316, %v7188
    %v7349 = vmax.f32 %v7317, %v7189
    %v7350 = vmax.f32 %v7318, %v7190
    %v7351 = vmax.f32 %v7319, %v7191
    %v7352 = vmax.f32 %v7320, %v7192
    %v7353 = vmax.f32 %v7321, %v7193
    %v7354 = vmax.f32 %v7322, %v7194
    %v7355 = vmax.f32 %v7323, %v7195
    %v7356 = vmax.f32 %v7324, %v7196
    %v7357 = vmax.f32 %v7325, %v7197
    %v7358 = vmax.f32 %v7326, %v7198
    %v7359 = vmax.f32 %v7327, %v7199
    %v7360 = vmax.f32 %v6136, %v7200
    %v7361 = vmax.f32 %v6137, %v7201
    %v7362 = vmax.f32 %v6138, %v7202
    %v7363 = vmax.f32 %v6139, %v7203
    %v7364 = vmax.f32 %v6140, %v7204
    %v7365 = vmax.f32 %v6141, %v7205
    %v7366 = vmax.f32 %v6142, %v7206
    %v7367 = vmax.f32 %v6143, %v7207
    %v7368 = vmax.f32 %v6144, %v7208
    %v7369 = vmax.f32 %v6145, %v7209
    %v7370 = vmax.f32 %v6146, %v7210
    %v7371 = vmax.f32 %v6147, %v7211
    %v7372 = vmax.f32 %v6148, %v7212
    %v7373 = vmax.f32 %v6149, %v7213
    %v7374 = vmax.f32 %v6150, %v7214
    %v7375 = vmax.f32 %v6151, %v7215
    %v7376 = vmax.f32 %v6152, %v7216
    %v7377 = vmax.f32 %v6153, %v7217
    %v7378 = vmax.f32 %v6154, %v7218
    %v7379 = vmax.f32 %v6155, %v7219
    %v7380 = vmax.f32 %v6156, %v7220
    %v7381 = vmax.f32 %v6157, %v7221
    %v7382 = vmax.f32 %v6158, %v7222
    %v7383 = vmax.f32 %v6159, %v7223
    %v7384 = vmax.f32 %v6160, %v7224
    %v7385 = vmax.f32 %v6161, %v7225
    %v7386 = vmax.f32 %v6162, %v7226
    %v7387 = vmax.f32 %v6163, %v7227
    %v7388 = vmax.f32 %v6164, %v7228
    %v7389 = vmax.f32 %v6165, %v7229
    %v7390 = vmax.f32 %v6166, %v7230
    %v7391 = vmax.f32 %v6167, %v7231
    %v7392 = vmax.f32 %v7360, %v7232
    %v7393 = vmax.f32 %v7361, %v7233
    %v7394 = vmax.f32 %v7362, %v7234
    %v7395 = vmax.f32 %v7363, %v7235
    %v7396 = vmax.f32 %v7364, %v7236
    %v7397 = vmax.f32 %v7365, %v7237
    %v7398 = vmax.f32 %v7366, %v7238
    %v7399 = vmax.f32 %v7367, %v7239
    %v7400 = vmax.f32 %v7368, %v7240
    %v7401 = vmax.f32 %v7369, %v7241
    %v7402 = vmax.f32 %v7370, %v7242
    %v7403 = vmax.f32 %v7371, %v7243
    %v7404 = vmax.f32 %v7372, %v7244
    %v7405 = vmax.f32 %v7373, %v7245
    %v7406 = vmax.f32 %v7374, %v7246
    %v7407 = vmax.f32 %v7375, %v7247
    %v7408 = vmax.f32 %v7376, %v7248
    %v7409 = vmax.f32 %v7377, %v7249
    %v7410 = vmax.f32 %v7378, %v7250
    %v7411 = vmax.f32 %v7379, %v7251
    %v7412 = vmax.f32 %v7380, %v7252
    %v7413 = vmax.f32 %v7381, %v7253
    %v7414 = vmax.f32 %v7382, %v7254
    %v7415 = vmax.f32 %v7383, %v7255
    %v7416 = vmax.f32 %v7384, %v7256
    %v7417 = vmax.f32 %v7385, %v7257
    %v7418 = vmax.f32 %v7386, %v7258
    %v7419 = vmax.f32 %v7387, %v7259
    %v7420 = vmax.f32 %v7388, %v7260
    %v7421 = vmax.f32 %v7389, %v7261
    %v7422 = vmax.f32 %v7390, %v7262
    %v7423 = vmax.f32 %v7391, %v7263
    %v7424 = vmax.f32 %v7392, %v7264
    %v7425 = vmax.f32 %v7393, %v7265
    %v7426 = vmax.f32 %v7394, %v7266
    %v7427 = vmax.f32 %v7395, %v7267
    %v7428 = vmax.f32 %v7396, %v7268
    %v7429 = vmax.f32 %v7397, %v7269
    %v7430 = vmax.f32 %v7398, %v7270
    %v7431 = vmax.f32 %v7399, %v7271
    %v7432 = vmax.f32 %v7400, %v7272
    %v7433 = vmax.f32 %v7401, %v7273
    %v7434 = vmax.f32 %v7402, %v7274
    %v7435 = vmax.f32 %v7403, %v7275
    %v7436 = vmax.f32 %v7404, %v7276
    %v7437 = vmax.f32 %v7405, %v7277
    %v7438 = vmax.f32 %v7406, %v7278
    %v7439 = vmax.f32 %v7407, %v7279
    %v7440 = vmax.f32 %v7408, %v7280
    %v7441 = vmax.f32 %v7409, %v7281
    %v7442 = vmax.f32 %v7410, %v7282
    %v7443 = vmax.f32 %v7411, %v7283
    %v7444 = vmax.f32 %v7412, %v7284
    %v7445 = vmax.f32 %v7413, %v7285
    %v7446 = vmax.f32 %v7414, %v7286
    %v7447 = vmax.f32 %v7415, %v7287
    %v7448 = vmax.f32 %v7416, %v7288
    %v7449 = vmax.f32 %v7417, %v7289
    %v7450 = vmax.f32 %v7418, %v7290
    %v7451 = vmax.f32 %v7419, %v7291
    %v7452 = vmax.f32 %v7420, %v7292
    %v7453 = vmax.f32 %v7421, %v7293
    %v7454 = vmax.f32 %v7422, %v7294
    %v7455 = vmax.f32 %v7423, %v7295
    %s7456 = sld [smem:[#allocation7 + $0xf]]
    %v7457 = vstv %s7456
    %v7458 = vmul.f32 %v216, %v7457
    %v7459 = vmul.f32 %v217, %v7457
    %v7460 = vmul.f32 %v218, %v7457
    %v7461 = vmul.f32 %v219, %v7457
    %v7462 = vmul.f32 %v220, %v7457
    %v7463 = vmul.f32 %v221, %v7457
    %v7464 = vmul.f32 %v222, %v7457
    %v7465 = vmul.f32 %v223, %v7457
    %v7466 = vmul.f32 %v224, %v7457
    %v7467 = vmul.f32 %v225, %v7457
    %v7468 = vmul.f32 %v226, %v7457
    %v7469 = vmul.f32 %v227, %v7457
    %v7470 = vmul.f32 %v228, %v7457
    %v7471 = vmul.f32 %v229, %v7457
    %v7472 = vmul.f32 %v230, %v7457
    %v7473 = vmul.f32 %v231, %v7457
    %v7474 = vmul.f32 %v232, %v7457
    %v7475 = vmul.f32 %v233, %v7457
    %v7476 = vmul.f32 %v234, %v7457
    %v7477 = vmul.f32 %v235, %v7457
    %v7478 = vmul.f32 %v236, %v7457
    %v7479 = vmul.f32 %v237, %v7457
    %v7480 = vmul.f32 %v238, %v7457
    %v7481 = vmul.f32 %v239, %v7457
    %v7482 = vmul.f32 %v240, %v7457
    %v7483 = vmul.f32 %v241, %v7457
    %v7484 = vmul.f32 %v242, %v7457
    %v7485 = vmul.f32 %v243, %v7457
    %v7486 = vmul.f32 %v244, %v7457
    %v7487 = vmul.f32 %v245, %v7457
    %v7488 = vmul.f32 %v246, %v7457
    %v7489 = vmul.f32 %v247, %v7457
    %v7490 = vmul.f32 %v248, %v7457
    %v7491 = vmul.f32 %v249, %v7457
    %v7492 = vmul.f32 %v250, %v7457
    %v7493 = vmul.f32 %v251, %v7457
    %v7494 = vmul.f32 %v252, %v7457
    %v7495 = vmul.f32 %v253, %v7457
    %v7496 = vmul.f32 %v254, %v7457
    %v7497 = vmul.f32 %v255, %v7457
    %v7498 = vmul.f32 %v256, %v7457
    %v7499 = vmul.f32 %v257, %v7457
    %v7500 = vmul.f32 %v258, %v7457
    %v7501 = vmul.f32 %v259, %v7457
    %v7502 = vmul.f32 %v260, %v7457
    %v7503 = vmul.f32 %v261, %v7457
    %v7504 = vmul.f32 %v262, %v7457
    %v7505 = vmul.f32 %v263, %v7457
    %v7506 = vmul.f32 %v264, %v7457
    %v7507 = vmul.f32 %v265, %v7457
    %v7508 = vmul.f32 %v266, %v7457
    %v7509 = vmul.f32 %v267, %v7457
    %v7510 = vmul.f32 %v268, %v7457
    %v7511 = vmul.f32 %v269, %v7457
    %v7512 = vmul.f32 %v270, %v7457
    %v7513 = vmul.f32 %v271, %v7457
    %v7514 = vmul.f32 %v272, %v7457
    %v7515 = vmul.f32 %v273, %v7457
    %v7516 = vmul.f32 %v274, %v7457
    %v7517 = vmul.f32 %v275, %v7457
    %v7518 = vmul.f32 %v276, %v7457
    %v7519 = vmul.f32 %v277, %v7457
    %v7520 = vmul.f32 %v278, %v7457
    %v7521 = vmul.f32 %v279, %v7457
    %v7522 = vmul.f32 %v280, %v7457
    %v7523 = vmul.f32 %v281, %v7457
    %v7524 = vmul.f32 %v282, %v7457
    %v7525 = vmul.f32 %v283, %v7457
    %v7526 = vmul.f32 %v284, %v7457
    %v7527 = vmul.f32 %v285, %v7457
    %v7528 = vmul.f32 %v286, %v7457
    %v7529 = vmul.f32 %v287, %v7457
    %v7530 = vmul.f32 %v288, %v7457
    %v7531 = vmul.f32 %v289, %v7457
    %v7532 = vmul.f32 %v290, %v7457
    %v7533 = vmul.f32 %v291, %v7457
    %v7534 = vmul.f32 %v292, %v7457
    %v7535 = vmul.f32 %v293, %v7457
    %v7536 = vmul.f32 %v294, %v7457
    %v7537 = vmul.f32 %v295, %v7457
    %v7538 = vmul.f32 %v296, %v7457
    %v7539 = vmul.f32 %v297, %v7457
    %v7540 = vmul.f32 %v298, %v7457
    %v7541 = vmul.f32 %v299, %v7457
    %v7542 = vmul.f32 %v300, %v7457
    %v7543 = vmul.f32 %v301, %v7457
    %v7544 = vmul.f32 %v302, %v7457
    %v7545 = vmul.f32 %v303, %v7457
    %v7546 = vmul.f32 %v304, %v7457
    %v7547 = vmul.f32 %v305, %v7457
    %v7548 = vmul.f32 %v306, %v7457
    %v7549 = vmul.f32 %v307, %v7457
    %v7550 = vmul.f32 %v308, %v7457
    %v7551 = vmul.f32 %v309, %v7457
    %v7552 = vmul.f32 %v310, %v7457
    %v7553 = vmul.f32 %v311, %v7457
    %v7554 = vmul.f32 %v312, %v7457
    %v7555 = vmul.f32 %v313, %v7457
    %v7556 = vmul.f32 %v314, %v7457
    %v7557 = vmul.f32 %v315, %v7457
    %v7558 = vmul.f32 %v316, %v7457
    %v7559 = vmul.f32 %v317, %v7457
    %v7560 = vmul.f32 %v318, %v7457
    %v7561 = vmul.f32 %v319, %v7457
    %v7562 = vmul.f32 %v320, %v7457
    %v7563 = vmul.f32 %v321, %v7457
    %v7564 = vmul.f32 %v322, %v7457
    %v7565 = vmul.f32 %v323, %v7457
    %v7566 = vmul.f32 %v324, %v7457
    %v7567 = vmul.f32 %v325, %v7457
    %v7568 = vmul.f32 %v326, %v7457
    %v7569 = vmul.f32 %v327, %v7457
    %v7570 = vmul.f32 %v328, %v7457
    %v7571 = vmul.f32 %v329, %v7457
    %v7572 = vmul.f32 %v330, %v7457
    %v7573 = vmul.f32 %v331, %v7457
    %v7574 = vmul.f32 %v332, %v7457
    %v7575 = vmul.f32 %v333, %v7457
    %v7576 = vmul.f32 %v334, %v7457
    %v7577 = vmul.f32 %v335, %v7457
    %v7578 = vmul.f32 %v336, %v7457
    %v7579 = vmul.f32 %v337, %v7457
    %v7580 = vmul.f32 %v338, %v7457
    %v7581 = vmul.f32 %v339, %v7457
    %v7582 = vmul.f32 %v340, %v7457
    %v7583 = vmul.f32 %v341, %v7457
    %v7584 = vmul.f32 %v342, %v7457
    %v7585 = vmul.f32 %v343, %v7457
    %v7586 = vmul.f32 %v344, %v7457
    %v7587 = vmul.f32 %v345, %v7457
    %v7588 = vmul.f32 %v346, %v7457
    %v7589 = vmul.f32 %v347, %v7457
    %v7590 = vmul.f32 %v348, %v7457
    %v7591 = vmul.f32 %v349, %v7457
    %v7592 = vmul.f32 %v350, %v7457
    %v7593 = vmul.f32 %v351, %v7457
    %v7594 = vmul.f32 %v352, %v7457
    %v7595 = vmul.f32 %v353, %v7457
    %v7596 = vmul.f32 %v354, %v7457
    %v7597 = vmul.f32 %v355, %v7457
    %v7598 = vmul.f32 %v356, %v7457
    %v7599 = vmul.f32 %v357, %v7457
    %v7600 = vmul.f32 %v358, %v7457
    %v7601 = vmul.f32 %v359, %v7457
    %v7602 = vmul.f32 %v360, %v7457
    %v7603 = vmul.f32 %v361, %v7457
    %v7604 = vmul.f32 %v362, %v7457
    %v7605 = vmul.f32 %v363, %v7457
    %v7606 = vmul.f32 %v364, %v7457
    %v7607 = vmul.f32 %v365, %v7457
    %v7608 = vmul.f32 %v366, %v7457
    %v7609 = vmul.f32 %v367, %v7457
    %v7610 = vmul.f32 %v368, %v7457
    %v7611 = vmul.f32 %v369, %v7457
    %v7612 = vmul.f32 %v370, %v7457
    %v7613 = vmul.f32 %v371, %v7457
    %v7614 = vmul.f32 %v372, %v7457
    %v7615 = vmul.f32 %v373, %v7457
    %v7616 = vmul.f32 %v374, %v7457
    %v7617 = vmul.f32 %v375, %v7457
    %s7618 = sld [smem:[#allocation7 + $0x10]]
    %v7619 = vstv %s7618
    %v7620 = vmul.f32 %v377, %v7619
    %v7621 = vmul.f32 %v379, %v7619
    %v7622 = vmul.f32 %v381, %v7619
    %v7623 = vmul.f32 %v383, %v7619
    %v7624 = vmul.f32 %v385, %v7619
    %v7625 = vmul.f32 %v387, %v7619
    %v7626 = vmul.f32 %v389, %v7619
    %v7627 = vmul.f32 %v391, %v7619
    %v7628 = vmul.f32 %v393, %v7619
    %v7629 = vmul.f32 %v395, %v7619
    %v7630 = vmul.f32 %v397, %v7619
    %v7631 = vmul.f32 %v399, %v7619
    %v7632 = vmul.f32 %v401, %v7619
    %v7633 = vmul.f32 %v403, %v7619
    %v7634 = vmul.f32 %v405, %v7619
    %v7635 = vmul.f32 %v407, %v7619
    %v7636 = vmul.f32 %v409, %v7619
    %v7637 = vmul.f32 %v411, %v7619
    %v7638 = vmul.f32 %v413, %v7619
    %v7639 = vmul.f32 %v415, %v7619
    %v7640 = vmul.f32 %v417, %v7619
    %v7641 = vmul.f32 %v419, %v7619
    %v7642 = vmul.f32 %v421, %v7619
    %v7643 = vmul.f32 %v423, %v7619
    %v7644 = vmul.f32 %v425, %v7619
    %v7645 = vmul.f32 %v427, %v7619
    %v7646 = vmul.f32 %v429, %v7619
    %v7647 = vmul.f32 %v431, %v7619
    %v7648 = vmul.f32 %v433, %v7619
    %v7649 = vmul.f32 %v435, %v7619
    %v7650 = vmul.f32 %v437, %v7619
    %v7651 = vmul.f32 %v439, %v7619
    %v7652 = vmul.f32 %v441, %v7619
    %v7653 = vmul.f32 %v443, %v7619
    %v7654 = vmul.f32 %v445, %v7619
    %v7655 = vmul.f32 %v447, %v7619
    %v7656 = vmul.f32 %v449, %v7619
    %v7657 = vmul.f32 %v451, %v7619
    %v7658 = vmul.f32 %v453, %v7619
    %v7659 = vmul.f32 %v455, %v7619
    %v7660 = vmul.f32 %v457, %v7619
    %v7661 = vmul.f32 %v459, %v7619
    %v7662 = vmul.f32 %v461, %v7619
    %v7663 = vmul.f32 %v463, %v7619
    %v7664 = vmul.f32 %v465, %v7619
    %v7665 = vmul.f32 %v467, %v7619
    %v7666 = vmul.f32 %v469, %v7619
    %v7667 = vmul.f32 %v471, %v7619
    %v7668 = vmul.f32 %v473, %v7619
    %v7669 = vmul.f32 %v475, %v7619
    %v7670 = vmul.f32 %v477, %v7619
    %v7671 = vmul.f32 %v479, %v7619
    %v7672 = vmul.f32 %v481, %v7619
    %v7673 = vmul.f32 %v483, %v7619
    %v7674 = vmul.f32 %v485, %v7619
    %v7675 = vmul.f32 %v487, %v7619
    %v7676 = vmul.f32 %v489, %v7619
    %v7677 = vmul.f32 %v491, %v7619
    %v7678 = vmul.f32 %v493, %v7619
    %v7679 = vmul.f32 %v495, %v7619
    %v7680 = vmul.f32 %v497, %v7619
    %v7681 = vmul.f32 %v499, %v7619
    %v7682 = vmul.f32 %v501, %v7619
    %v7683 = vmul.f32 %v503, %v7619
    %v7684 = vmul.f32 %v505, %v7619
    %v7685 = vmul.f32 %v507, %v7619
    %v7686 = vmul.f32 %v509, %v7619
    %v7687 = vmul.f32 %v511, %v7619
    %v7688 = vmul.f32 %v513, %v7619
    %v7689 = vmul.f32 %v515, %v7619
    %v7690 = vmul.f32 %v517, %v7619
    %v7691 = vmul.f32 %v519, %v7619
    %v7692 = vmul.f32 %v521, %v7619
    %v7693 = vmul.f32 %v523, %v7619
    %v7694 = vmul.f32 %v525, %v7619
    %v7695 = vmul.f32 %v527, %v7619
    %v7696 = vmul.f32 %v529, %v7619
    %v7697 = vmul.f32 %v531, %v7619
    %v7698 = vmul.f32 %v533, %v7619
    %v7699 = vmul.f32 %v535, %v7619
    %v7700 = vmul.f32 %v537, %v7619
    %v7701 = vmul.f32 %v539, %v7619
    %v7702 = vmul.f32 %v541, %v7619
    %v7703 = vmul.f32 %v543, %v7619
    %v7704 = vmul.f32 %v545, %v7619
    %v7705 = vmul.f32 %v547, %v7619
    %v7706 = vmul.f32 %v549, %v7619
    %v7707 = vmul.f32 %v551, %v7619
    %v7708 = vmul.f32 %v553, %v7619
    %v7709 = vmul.f32 %v555, %v7619
    %v7710 = vmul.f32 %v557, %v7619
    %v7711 = vmul.f32 %v559, %v7619
    %v7712 = vmul.f32 %v561, %v7619
    %v7713 = vmul.f32 %v563, %v7619
    %v7714 = vmul.f32 %v565, %v7619
    %v7715 = vmul.f32 %v567, %v7619
    %v7716 = vmul.f32 %v569, %v7619
    %v7717 = vmul.f32 %v571, %v7619
    %v7718 = vmul.f32 %v573, %v7619
    %v7719 = vmul.f32 %v575, %v7619
    %v7720 = vmul.f32 %v577, %v7619
    %v7721 = vmul.f32 %v579, %v7619
    %v7722 = vmul.f32 %v581, %v7619
    %v7723 = vmul.f32 %v583, %v7619
    %v7724 = vmul.f32 %v585, %v7619
    %v7725 = vmul.f32 %v587, %v7619
    %v7726 = vmul.f32 %v589, %v7619
    %v7727 = vmul.f32 %v591, %v7619
    %v7728 = vmul.f32 %v593, %v7619
    %v7729 = vmul.f32 %v595, %v7619
    %v7730 = vmul.f32 %v597, %v7619
    %v7731 = vmul.f32 %v599, %v7619
    %v7732 = vmul.f32 %v601, %v7619
    %v7733 = vmul.f32 %v603, %v7619
    %v7734 = vmul.f32 %v605, %v7619
    %v7735 = vmul.f32 %v607, %v7619
    %v7736 = vmul.f32 %v609, %v7619
    %v7737 = vmul.f32 %v611, %v7619
    %v7738 = vmul.f32 %v613, %v7619
    %v7739 = vmul.f32 %v615, %v7619
    %v7740 = vmul.f32 %v617, %v7619
    %v7741 = vmul.f32 %v619, %v7619
    %v7742 = vmul.f32 %v621, %v7619
    %v7743 = vmul.f32 %v623, %v7619
    %v7744 = vmul.f32 %v625, %v7619
    %v7745 = vmul.f32 %v627, %v7619
    %v7746 = vmul.f32 %v629, %v7619
    %v7747 = vmul.f32 %v631, %v7619
    %v7748 = vmul.f32 %v633, %v7619
    %v7749 = vmul.f32 %v635, %v7619
    %v7750 = vmul.f32 %v637, %v7619
    %v7751 = vmul.f32 %v639, %v7619
    %v7752 = vmul.f32 %v641, %v7619
    %v7753 = vmul.f32 %v643, %v7619
    %v7754 = vmul.f32 %v645, %v7619
    %v7755 = vmul.f32 %v647, %v7619
    %v7756 = vmul.f32 %v649, %v7619
    %v7757 = vmul.f32 %v651, %v7619
    %v7758 = vmul.f32 %v653, %v7619
    %v7759 = vmul.f32 %v655, %v7619
    %v7760 = vmul.f32 %v657, %v7619
    %v7761 = vmul.f32 %v659, %v7619
    %v7762 = vmul.f32 %v661, %v7619
    %v7763 = vmul.f32 %v663, %v7619
    %v7764 = vmul.f32 %v665, %v7619
    %v7765 = vmul.f32 %v667, %v7619
    %v7766 = vmul.f32 %v669, %v7619
    %v7767 = vmul.f32 %v671, %v7619
    %v7768 = vmul.f32 %v673, %v7619
    %v7769 = vmul.f32 %v675, %v7619
    %v7770 = vmul.f32 %v677, %v7619
    %v7771 = vmul.f32 %v679, %v7619
    %v7772 = vmul.f32 %v681, %v7619
    %v7773 = vmul.f32 %v683, %v7619
    %v7774 = vmul.f32 %v685, %v7619
    %v7775 = vmul.f32 %v687, %v7619
    %v7776 = vmul.f32 %v689, %v7619
    %v7777 = vmul.f32 %v691, %v7619
    %v7778 = vmul.f32 %v693, %v7619
    %v7779 = vmul.f32 %v695, %v7619
    %v7780 = vadd.f32 %v7458, %v7620
    %v7781 = vadd.f32 %v7459, %v7621
    %v7782 = vadd.f32 %v7460, %v7622
    %v7783 = vadd.f32 %v7461, %v7623
    %v7784 = vadd.f32 %v7462, %v7624
    %v7785 = vadd.f32 %v7463, %v7625
    %v7786 = vadd.f32 %v7464, %v7626
    %v7787 = vadd.f32 %v7465, %v7627
    %v7788 = vadd.f32 %v7466, %v7628
    %v7789 = vadd.f32 %v7467, %v7629
    %v7790 = vadd.f32 %v7468, %v7630
    %v7791 = vadd.f32 %v7469, %v7631
    %v7792 = vadd.f32 %v7470, %v7632
    %v7793 = vadd.f32 %v7471, %v7633
    %v7794 = vadd.f32 %v7472, %v7634
    %v7795 = vadd.f32 %v7473, %v7635
    %v7796 = vadd.f32 %v7474, %v7636
    %v7797 = vadd.f32 %v7475, %v7637
    %v7798 = vadd.f32 %v7476, %v7638
    %v7799 = vadd.f32 %v7477, %v7639
    %v7800 = vadd.f32 %v7478, %v7640
    %v7801 = vadd.f32 %v7479, %v7641
    %v7802 = vadd.f32 %v7480, %v7642
    %v7803 = vadd.f32 %v7481, %v7643
    %v7804 = vadd.f32 %v7482, %v7644
    %v7805 = vadd.f32 %v7483, %v7645
    %v7806 = vadd.f32 %v7484, %v7646
    %v7807 = vadd.f32 %v7485, %v7647
    %v7808 = vadd.f32 %v7486, %v7648
    %v7809 = vadd.f32 %v7487, %v7649
    %v7810 = vadd.f32 %v7488, %v7650
    %v7811 = vadd.f32 %v7489, %v7651
    %v7812 = vadd.f32 %v7490, %v7652
    %v7813 = vadd.f32 %v7491, %v7653
    %v7814 = vadd.f32 %v7492, %v7654
    %v7815 = vadd.f32 %v7493, %v7655
    %v7816 = vadd.f32 %v7494, %v7656
    %v7817 = vadd.f32 %v7495, %v7657
    %v7818 = vadd.f32 %v7496, %v7658
    %v7819 = vadd.f32 %v7497, %v7659
    %v7820 = vadd.f32 %v7498, %v7660
    %v7821 = vadd.f32 %v7499, %v7661
    %v7822 = vadd.f32 %v7500, %v7662
    %v7823 = vadd.f32 %v7501, %v7663
    %v7824 = vadd.f32 %v7502, %v7664
    %v7825 = vadd.f32 %v7503, %v7665
    %v7826 = vadd.f32 %v7504, %v7666
    %v7827 = vadd.f32 %v7505, %v7667
    %v7828 = vadd.f32 %v7506, %v7668
    %v7829 = vadd.f32 %v7507, %v7669
    %v7830 = vadd.f32 %v7508, %v7670
    %v7831 = vadd.f32 %v7509, %v7671
    %v7832 = vadd.f32 %v7510, %v7672
    %v7833 = vadd.f32 %v7511, %v7673
    %v7834 = vadd.f32 %v7512, %v7674
    %v7835 = vadd.f32 %v7513, %v7675
    %v7836 = vadd.f32 %v7514, %v7676
    %v7837 = vadd.f32 %v7515, %v7677
    %v7838 = vadd.f32 %v7516, %v7678
    %v7839 = vadd.f32 %v7517, %v7679
    %v7840 = vadd.f32 %v7518, %v7680
    %v7841 = vadd.f32 %v7519, %v7681
    %v7842 = vadd.f32 %v7520, %v7682
    %v7843 = vadd.f32 %v7521, %v7683
    %v7844 = vadd.f32 %v7522, %v7684
    %v7845 = vadd.f32 %v7523, %v7685
    %v7846 = vadd.f32 %v7524, %v7686
    %v7847 = vadd.f32 %v7525, %v7687
    %v7848 = vadd.f32 %v7526, %v7688
    %v7849 = vadd.f32 %v7527, %v7689
    %v7850 = vadd.f32 %v7528, %v7690
    %v7851 = vadd.f32 %v7529, %v7691
    %v7852 = vadd.f32 %v7530, %v7692
    %v7853 = vadd.f32 %v7531, %v7693
    %v7854 = vadd.f32 %v7532, %v7694
    %v7855 = vadd.f32 %v7533, %v7695
    %v7856 = vadd.f32 %v7534, %v7696
    %v7857 = vadd.f32 %v7535, %v7697
    %v7858 = vadd.f32 %v7536, %v7698
    %v7859 = vadd.f32 %v7537, %v7699
    %v7860 = vadd.f32 %v7538, %v7700
    %v7861 = vadd.f32 %v7539, %v7701
    %v7862 = vadd.f32 %v7540, %v7702
    %v7863 = vadd.f32 %v7541, %v7703
    %v7864 = vadd.f32 %v7542, %v7704
    %v7865 = vadd.f32 %v7543, %v7705
    %v7866 = vadd.f32 %v7544, %v7706
    %v7867 = vadd.f32 %v7545, %v7707
    %v7868 = vadd.f32 %v7546, %v7708
    %v7869 = vadd.f32 %v7547, %v7709
    %v7870 = vadd.f32 %v7548, %v7710
    %v7871 = vadd.f32 %v7549, %v7711
    %v7872 = vadd.f32 %v7550, %v7712
    %v7873 = vadd.f32 %v7551, %v7713
    %v7874 = vadd.f32 %v7552, %v7714
    %v7875 = vadd.f32 %v7553, %v7715
    %v7876 = vadd.f32 %v7554, %v7716
    %v7877 = vadd.f32 %v7555, %v7717
    %v7878 = vadd.f32 %v7556, %v7718
    %v7879 = vadd.f32 %v7557, %v7719
    %v7880 = vadd.f32 %v7558, %v7720
    %v7881 = vadd.f32 %v7559, %v7721
    %v7882 = vadd.f32 %v7560, %v7722
    %v7883 = vadd.f32 %v7561, %v7723
    %v7884 = vadd.f32 %v7562, %v7724
    %v7885 = vadd.f32 %v7563, %v7725
    %v7886 = vadd.f32 %v7564, %v7726
    %v7887 = vadd.f32 %v7565, %v7727
    %v7888 = vadd.f32 %v7566, %v7728
    %v7889 = vadd.f32 %v7567, %v7729
    %v7890 = vadd.f32 %v7568, %v7730
    %v7891 = vadd.f32 %v7569, %v7731
    %v7892 = vadd.f32 %v7570, %v7732
    %v7893 = vadd.f32 %v7571, %v7733
    %v7894 = vadd.f32 %v7572, %v7734
    %v7895 = vadd.f32 %v7573, %v7735
    %v7896 = vadd.f32 %v7574, %v7736
    %v7897 = vadd.f32 %v7575, %v7737
    %v7898 = vadd.f32 %v7576, %v7738
    %v7899 = vadd.f32 %v7577, %v7739
    %v7900 = vadd.f32 %v7578, %v7740
    %v7901 = vadd.f32 %v7579, %v7741
    %v7902 = vadd.f32 %v7580, %v7742
    %v7903 = vadd.f32 %v7581, %v7743
    %v7904 = vadd.f32 %v7582, %v7744
    %v7905 = vadd.f32 %v7583, %v7745
    %v7906 = vadd.f32 %v7584, %v7746
    %v7907 = vadd.f32 %v7585, %v7747
    %v7908 = vadd.f32 %v7586, %v7748
    %v7909 = vadd.f32 %v7587, %v7749
    %v7910 = vadd.f32 %v7588, %v7750
    %v7911 = vadd.f32 %v7589, %v7751
    %v7912 = vadd.f32 %v7590, %v7752
    %v7913 = vadd.f32 %v7591, %v7753
    %v7914 = vadd.f32 %v7592, %v7754
    %v7915 = vadd.f32 %v7593, %v7755
    %v7916 = vadd.f32 %v7594, %v7756
    %v7917 = vadd.f32 %v7595, %v7757
    %v7918 = vadd.f32 %v7596, %v7758
    %v7919 = vadd.f32 %v7597, %v7759
    %v7920 = vadd.f32 %v7598, %v7760
    %v7921 = vadd.f32 %v7599, %v7761
    %v7922 = vadd.f32 %v7600, %v7762
    %v7923 = vadd.f32 %v7601, %v7763
    %v7924 = vadd.f32 %v7602, %v7764
    %v7925 = vadd.f32 %v7603, %v7765
    %v7926 = vadd.f32 %v7604, %v7766
    %v7927 = vadd.f32 %v7605, %v7767
    %v7928 = vadd.f32 %v7606, %v7768
    %v7929 = vadd.f32 %v7607, %v7769
    %v7930 = vadd.f32 %v7608, %v7770
    %v7931 = vadd.f32 %v7609, %v7771
    %v7932 = vadd.f32 %v7610, %v7772
    %v7933 = vadd.f32 %v7611, %v7773
    %v7934 = vadd.f32 %v7612, %v7774
    %v7935 = vadd.f32 %v7613, %v7775
    %v7936 = vadd.f32 %v7614, %v7776
    %v7937 = vadd.f32 %v7615, %v7777
    %v7938 = vadd.f32 %v7616, %v7778
    %v7939 = vadd.f32 %v7617, %v7779
    %s7940 = sld [smem:[#allocation7 + $0x11]]
    %v7941 = vstv %s7940
    %v7942 = vmul.f32 %v697, %v7941
    %v7943 = vmul.f32 %v699, %v7941
    %v7944 = vmul.f32 %v701, %v7941
    %v7945 = vmul.f32 %v703, %v7941
    %v7946 = vmul.f32 %v705, %v7941
    %v7947 = vmul.f32 %v707, %v7941
    %v7948 = vmul.f32 %v709, %v7941
    %v7949 = vmul.f32 %v711, %v7941
    %v7950 = vmul.f32 %v713, %v7941
    %v7951 = vmul.f32 %v715, %v7941
    %v7952 = vmul.f32 %v717, %v7941
    %v7953 = vmul.f32 %v719, %v7941
    %v7954 = vmul.f32 %v721, %v7941
    %v7955 = vmul.f32 %v723, %v7941
    %v7956 = vmul.f32 %v725, %v7941
    %v7957 = vmul.f32 %v727, %v7941
    %v7958 = vmul.f32 %v729, %v7941
    %v7959 = vmul.f32 %v731, %v7941
    %v7960 = vmul.f32 %v733, %v7941
    %v7961 = vmul.f32 %v735, %v7941
    %v7962 = vmul.f32 %v737, %v7941
    %v7963 = vmul.f32 %v739, %v7941
    %v7964 = vmul.f32 %v741, %v7941
    %v7965 = vmul.f32 %v743, %v7941
    %v7966 = vmul.f32 %v745, %v7941
    %v7967 = vmul.f32 %v747, %v7941
    %v7968 = vmul.f32 %v749, %v7941
    %v7969 = vmul.f32 %v751, %v7941
    %v7970 = vmul.f32 %v753, %v7941
    %v7971 = vmul.f32 %v755, %v7941
    %v7972 = vmul.f32 %v757, %v7941
    %v7973 = vmul.f32 %v759, %v7941
    %v7974 = vmul.f32 %v761, %v7941
    %v7975 = vmul.f32 %v763, %v7941
    %v7976 = vmul.f32 %v765, %v7941
    %v7977 = vmul.f32 %v767, %v7941
    %v7978 = vmul.f32 %v769, %v7941
    %v7979 = vmul.f32 %v771, %v7941
    %v7980 = vmul.f32 %v773, %v7941
    %v7981 = vmul.f32 %v775, %v7941
    %v7982 = vmul.f32 %v777, %v7941
    %v7983 = vmul.f32 %v779, %v7941
    %v7984 = vmul.f32 %v781, %v7941
    %v7985 = vmul.f32 %v783, %v7941
    %v7986 = vmul.f32 %v785, %v7941
    %v7987 = vmul.f32 %v787, %v7941
    %v7988 = vmul.f32 %v789, %v7941
    %v7989 = vmul.f32 %v791, %v7941
    %v7990 = vmul.f32 %v793, %v7941
    %v7991 = vmul.f32 %v795, %v7941
    %v7992 = vmul.f32 %v797, %v7941
    %v7993 = vmul.f32 %v799, %v7941
    %v7994 = vmul.f32 %v801, %v7941
    %v7995 = vmul.f32 %v803, %v7941
    %v7996 = vmul.f32 %v805, %v7941
    %v7997 = vmul.f32 %v807, %v7941
    %v7998 = vmul.f32 %v809, %v7941
    %v7999 = vmul.f32 %v811, %v7941
    %v8000 = vmul.f32 %v813, %v7941
    %v8001 = vmul.f32 %v815, %v7941
    %v8002 = vmul.f32 %v817, %v7941
    %v8003 = vmul.f32 %v819, %v7941
    %v8004 = vmul.f32 %v821, %v7941
    %v8005 = vmul.f32 %v823, %v7941
    %v8006 = vmul.f32 %v825, %v7941
    %v8007 = vmul.f32 %v827, %v7941
    %v8008 = vmul.f32 %v829, %v7941
    %v8009 = vmul.f32 %v831, %v7941
    %v8010 = vmul.f32 %v833, %v7941
    %v8011 = vmul.f32 %v835, %v7941
    %v8012 = vmul.f32 %v837, %v7941
    %v8013 = vmul.f32 %v839, %v7941
    %v8014 = vmul.f32 %v841, %v7941
    %v8015 = vmul.f32 %v843, %v7941
    %v8016 = vmul.f32 %v845, %v7941
    %v8017 = vmul.f32 %v847, %v7941
    %v8018 = vmul.f32 %v849, %v7941
    %v8019 = vmul.f32 %v851, %v7941
    %v8020 = vmul.f32 %v853, %v7941
    %v8021 = vmul.f32 %v855, %v7941
    %v8022 = vmul.f32 %v857, %v7941
    %v8023 = vmul.f32 %v859, %v7941
    %v8024 = vmul.f32 %v861, %v7941
    %v8025 = vmul.f32 %v863, %v7941
    %v8026 = vmul.f32 %v865, %v7941
    %v8027 = vmul.f32 %v867, %v7941
    %v8028 = vmul.f32 %v869, %v7941
    %v8029 = vmul.f32 %v871, %v7941
    %v8030 = vmul.f32 %v873, %v7941
    %v8031 = vmul.f32 %v875, %v7941
    %v8032 = vmul.f32 %v877, %v7941
    %v8033 = vmul.f32 %v879, %v7941
    %v8034 = vmul.f32 %v881, %v7941
    %v8035 = vmul.f32 %v883, %v7941
    %v8036 = vmul.f32 %v885, %v7941
    %v8037 = vmul.f32 %v887, %v7941
    %v8038 = vmul.f32 %v889, %v7941
    %v8039 = vmul.f32 %v891, %v7941
    %v8040 = vmul.f32 %v893, %v7941
    %v8041 = vmul.f32 %v895, %v7941
    %v8042 = vmul.f32 %v897, %v7941
    %v8043 = vmul.f32 %v899, %v7941
    %v8044 = vmul.f32 %v901, %v7941
    %v8045 = vmul.f32 %v903, %v7941
    %v8046 = vmul.f32 %v905, %v7941
    %v8047 = vmul.f32 %v907, %v7941
    %v8048 = vmul.f32 %v909, %v7941
    %v8049 = vmul.f32 %v911, %v7941
    %v8050 = vmul.f32 %v913, %v7941
    %v8051 = vmul.f32 %v915, %v7941
    %v8052 = vmul.f32 %v917, %v7941
    %v8053 = vmul.f32 %v919, %v7941
    %v8054 = vmul.f32 %v921, %v7941
    %v8055 = vmul.f32 %v923, %v7941
    %v8056 = vmul.f32 %v925, %v7941
    %v8057 = vmul.f32 %v927, %v7941
    %v8058 = vmul.f32 %v929, %v7941
    %v8059 = vmul.f32 %v931, %v7941
    %v8060 = vmul.f32 %v933, %v7941
    %v8061 = vmul.f32 %v935, %v7941
    %v8062 = vmul.f32 %v937, %v7941
    %v8063 = vmul.f32 %v939, %v7941
    %v8064 = vmul.f32 %v941, %v7941
    %v8065 = vmul.f32 %v943, %v7941
    %v8066 = vmul.f32 %v945, %v7941
    %v8067 = vmul.f32 %v947, %v7941
    %v8068 = vmul.f32 %v949, %v7941
    %v8069 = vmul.f32 %v951, %v7941
    %v8070 = vmul.f32 %v953, %v7941
    %v8071 = vmul.f32 %v955, %v7941
    %v8072 = vmul.f32 %v957, %v7941
    %v8073 = vmul.f32 %v959, %v7941
    %v8074 = vmul.f32 %v961, %v7941
    %v8075 = vmul.f32 %v963, %v7941
    %v8076 = vmul.f32 %v965, %v7941
    %v8077 = vmul.f32 %v967, %v7941
    %v8078 = vmul.f32 %v969, %v7941
    %v8079 = vmul.f32 %v971, %v7941
    %v8080 = vmul.f32 %v973, %v7941
    %v8081 = vmul.f32 %v975, %v7941
    %v8082 = vmul.f32 %v977, %v7941
    %v8083 = vmul.f32 %v979, %v7941
    %v8084 = vmul.f32 %v981, %v7941
    %v8085 = vmul.f32 %v983, %v7941
    %v8086 = vmul.f32 %v985, %v7941
    %v8087 = vmul.f32 %v987, %v7941
    %v8088 = vmul.f32 %v989, %v7941
    %v8089 = vmul.f32 %v991, %v7941
    %v8090 = vmul.f32 %v993, %v7941
    %v8091 = vmul.f32 %v995, %v7941
    %v8092 = vmul.f32 %v997, %v7941
    %v8093 = vmul.f32 %v999, %v7941
    %v8094 = vmul.f32 %v1001, %v7941
    %v8095 = vmul.f32 %v1003, %v7941
    %v8096 = vmul.f32 %v1005, %v7941
    %v8097 = vmul.f32 %v1007, %v7941
    %v8098 = vmul.f32 %v1009, %v7941
    %v8099 = vmul.f32 %v1011, %v7941
    %v8100 = vmul.f32 %v1013, %v7941
    %v8101 = vmul.f32 %v1015, %v7941
    %v8102 = vadd.f32 %v7780, %v7942
    %v8103 = vadd.f32 %v7781, %v7943
    %v8104 = vadd.f32 %v7782, %v7944
    %v8105 = vadd.f32 %v7783, %v7945
    %v8106 = vadd.f32 %v7784, %v7946
    %v8107 = vadd.f32 %v7785, %v7947
    %v8108 = vadd.f32 %v7786, %v7948
    %v8109 = vadd.f32 %v7787, %v7949
    %v8110 = vadd.f32 %v7788, %v7950
    %v8111 = vadd.f32 %v7789, %v7951
    %v8112 = vadd.f32 %v7790, %v7952
    %v8113 = vadd.f32 %v7791, %v7953
    %v8114 = vadd.f32 %v7792, %v7954
    %v8115 = vadd.f32 %v7793, %v7955
    %v8116 = vadd.f32 %v7794, %v7956
    %v8117 = vadd.f32 %v7795, %v7957
    %v8118 = vadd.f32 %v7796, %v7958
    %v8119 = vadd.f32 %v7797, %v7959
    %v8120 = vadd.f32 %v7798, %v7960
    %v8121 = vadd.f32 %v7799, %v7961
    %v8122 = vadd.f32 %v7800, %v7962
    %v8123 = vadd.f32 %v7801, %v7963
    %v8124 = vadd.f32 %v7802, %v7964
    %v8125 = vadd.f32 %v7803, %v7965
    %v8126 = vadd.f32 %v7804, %v7966
    %v8127 = vadd.f32 %v7805, %v7967
    %v8128 = vadd.f32 %v7806, %v7968
    %v8129 = vadd.f32 %v7807, %v7969
    %v8130 = vadd.f32 %v7808, %v7970
    %v8131 = vadd.f32 %v7809, %v7971
    %v8132 = vadd.f32 %v7810, %v7972
    %v8133 = vadd.f32 %v7811, %v7973
    %v8134 = vadd.f32 %v7812, %v7974
    %v8135 = vadd.f32 %v7813, %v7975
    %v8136 = vadd.f32 %v7814, %v7976
    %v8137 = vadd.f32 %v7815, %v7977
    %v8138 = vadd.f32 %v7816, %v7978
    %v8139 = vadd.f32 %v7817, %v7979
    %v8140 = vadd.f32 %v7818, %v7980
    %v8141 = vadd.f32 %v7819, %v7981
    %v8142 = vadd.f32 %v7820, %v7982
    %v8143 = vadd.f32 %v7821, %v7983
    %v8144 = vadd.f32 %v7822, %v7984
    %v8145 = vadd.f32 %v7823, %v7985
    %v8146 = vadd.f32 %v7824, %v7986
    %v8147 = vadd.f32 %v7825, %v7987
    %v8148 = vadd.f32 %v7826, %v7988
    %v8149 = vadd.f32 %v7827, %v7989
    %v8150 = vadd.f32 %v7828, %v7990
    %v8151 = vadd.f32 %v7829, %v7991
    %v8152 = vadd.f32 %v7830, %v7992
    %v8153 = vadd.f32 %v7831, %v7993
    %v8154 = vadd.f32 %v7832, %v7994
    %v8155 = vadd.f32 %v7833, %v7995
    %v8156 = vadd.f32 %v7834, %v7996
    %v8157 = vadd.f32 %v7835, %v7997
    %v8158 = vadd.f32 %v7836, %v7998
    %v8159 = vadd.f32 %v7837, %v7999
    %v8160 = vadd.f32 %v7838, %v8000
    %v8161 = vadd.f32 %v7839, %v8001
    %v8162 = vadd.f32 %v7840, %v8002
    %v8163 = vadd.f32 %v7841, %v8003
    %v8164 = vadd.f32 %v7842, %v8004
    %v8165 = vadd.f32 %v7843, %v8005
    %v8166 = vadd.f32 %v7844, %v8006
    %v8167 = vadd.f32 %v7845, %v8007
    %v8168 = vadd.f32 %v7846, %v8008
    %v8169 = vadd.f32 %v7847, %v8009
    %v8170 = vadd.f32 %v7848, %v8010
    %v8171 = vadd.f32 %v7849, %v8011
    %v8172 = vadd.f32 %v7850, %v8012
    %v8173 = vadd.f32 %v7851, %v8013
    %v8174 = vadd.f32 %v7852, %v8014
    %v8175 = vadd.f32 %v7853, %v8015
    %v8176 = vadd.f32 %v7854, %v8016
    %v8177 = vadd.f32 %v7855, %v8017
    %v8178 = vadd.f32 %v7856, %v8018
    %v8179 = vadd.f32 %v7857, %v8019
    %v8180 = vadd.f32 %v7858, %v8020
    %v8181 = vadd.f32 %v7859, %v8021
    %v8182 = vadd.f32 %v7860, %v8022
    %v8183 = vadd.f32 %v7861, %v8023
    %v8184 = vadd.f32 %v7862, %v8024
    %v8185 = vadd.f32 %v7863, %v8025
    %v8186 = vadd.f32 %v7864, %v8026
    %v8187 = vadd.f32 %v7865, %v8027
    %v8188 = vadd.f32 %v7866, %v8028
    %v8189 = vadd.f32 %v7867, %v8029
    %v8190 = vadd.f32 %v7868, %v8030
    %v8191 = vadd.f32 %v7869, %v8031
    %v8192 = vadd.f32 %v7870, %v8032
    %v8193 = vadd.f32 %v7871, %v8033
    %v8194 = vadd.f32 %v7872, %v8034
    %v8195 = vadd.f32 %v7873, %v8035
    %v8196 = vadd.f32 %v7874, %v8036
    %v8197 = vadd.f32 %v7875, %v8037
    %v8198 = vadd.f32 %v7876, %v8038
    %v8199 = vadd.f32 %v7877, %v8039
    %v8200 = vadd.f32 %v7878, %v8040
    %v8201 = vadd.f32 %v7879, %v8041
    %v8202 = vadd.f32 %v7880, %v8042
    %v8203 = vadd.f32 %v7881, %v8043
    %v8204 = vadd.f32 %v7882, %v8044
    %v8205 = vadd.f32 %v7883, %v8045
    %v8206 = vadd.f32 %v7884, %v8046
    %v8207 = vadd.f32 %v7885, %v8047
    %v8208 = vadd.f32 %v7886, %v8048
    %v8209 = vadd.f32 %v7887, %v8049
    %v8210 = vadd.f32 %v7888, %v8050
    %v8211 = vadd.f32 %v7889, %v8051
    %v8212 = vadd.f32 %v7890, %v8052
    %v8213 = vadd.f32 %v7891, %v8053
    %v8214 = vadd.f32 %v7892, %v8054
    %v8215 = vadd.f32 %v7893, %v8055
    %v8216 = vadd.f32 %v7894, %v8056
    %v8217 = vadd.f32 %v7895, %v8057
    %v8218 = vadd.f32 %v7896, %v8058
    %v8219 = vadd.f32 %v7897, %v8059
    %v8220 = vadd.f32 %v7898, %v8060
    %v8221 = vadd.f32 %v7899, %v8061
    %v8222 = vadd.f32 %v7900, %v8062
    %v8223 = vadd.f32 %v7901, %v8063
    %v8224 = vadd.f32 %v7902, %v8064
    %v8225 = vadd.f32 %v7903, %v8065
    %v8226 = vadd.f32 %v7904, %v8066
    %v8227 = vadd.f32 %v7905, %v8067
    %v8228 = vadd.f32 %v7906, %v8068
    %v8229 = vadd.f32 %v7907, %v8069
    %v8230 = vadd.f32 %v7908, %v8070
    %v8231 = vadd.f32 %v7909, %v8071
    %v8232 = vadd.f32 %v7910, %v8072
    %v8233 = vadd.f32 %v7911, %v8073
    %v8234 = vadd.f32 %v7912, %v8074
    %v8235 = vadd.f32 %v7913, %v8075
    %v8236 = vadd.f32 %v7914, %v8076
    %v8237 = vadd.f32 %v7915, %v8077
    %v8238 = vadd.f32 %v7916, %v8078
    %v8239 = vadd.f32 %v7917, %v8079
    %v8240 = vadd.f32 %v7918, %v8080
    %v8241 = vadd.f32 %v7919, %v8081
    %v8242 = vadd.f32 %v7920, %v8082
    %v8243 = vadd.f32 %v7921, %v8083
    %v8244 = vadd.f32 %v7922, %v8084
    %v8245 = vadd.f32 %v7923, %v8085
    %v8246 = vadd.f32 %v7924, %v8086
    %v8247 = vadd.f32 %v7925, %v8087
    %v8248 = vadd.f32 %v7926, %v8088
    %v8249 = vadd.f32 %v7927, %v8089
    %v8250 = vadd.f32 %v7928, %v8090
    %v8251 = vadd.f32 %v7929, %v8091
    %v8252 = vadd.f32 %v7930, %v8092
    %v8253 = vadd.f32 %v7931, %v8093
    %v8254 = vadd.f32 %v7932, %v8094
    %v8255 = vadd.f32 %v7933, %v8095
    %v8256 = vadd.f32 %v7934, %v8096
    %v8257 = vadd.f32 %v7935, %v8097
    %v8258 = vadd.f32 %v7936, %v8098
    %v8259 = vadd.f32 %v7937, %v8099
    %v8260 = vadd.f32 %v7938, %v8100
    %v8261 = vadd.f32 %v7939, %v8101
    %s8262 = sld [smem:[#allocation8 + $0x5]]
    %v8263 = vstv %s8262
    %v8264 = vadd.f32 %v8102, %v8263
    %v8265 = vadd.f32 %v8103, %v8263
    %v8266 = vadd.f32 %v8104, %v8263
    %v8267 = vadd.f32 %v8105, %v8263
    %v8268 = vadd.f32 %v8106, %v8263
    %v8269 = vadd.f32 %v8107, %v8263
    %v8270 = vadd.f32 %v8108, %v8263
    %v8271 = vadd.f32 %v8109, %v8263
    %v8272 = vadd.f32 %v8110, %v8263
    %v8273 = vadd.f32 %v8111, %v8263
    %v8274 = vadd.f32 %v8112, %v8263
    %v8275 = vadd.f32 %v8113, %v8263
    %v8276 = vadd.f32 %v8114, %v8263
    %v8277 = vadd.f32 %v8115, %v8263
    %v8278 = vadd.f32 %v8116, %v8263
    %v8279 = vadd.f32 %v8117, %v8263
    %v8280 = vadd.f32 %v8118, %v8263
    %v8281 = vadd.f32 %v8119, %v8263
    %v8282 = vadd.f32 %v8120, %v8263
    %v8283 = vadd.f32 %v8121, %v8263
    %v8284 = vadd.f32 %v8122, %v8263
    %v8285 = vadd.f32 %v8123, %v8263
    %v8286 = vadd.f32 %v8124, %v8263
    %v8287 = vadd.f32 %v8125, %v8263
    %v8288 = vadd.f32 %v8126, %v8263
    %v8289 = vadd.f32 %v8127, %v8263
    %v8290 = vadd.f32 %v8128, %v8263
    %v8291 = vadd.f32 %v8129, %v8263
    %v8292 = vadd.f32 %v8130, %v8263
    %v8293 = vadd.f32 %v8131, %v8263
    %v8294 = vadd.f32 %v8132, %v8263
    %v8295 = vadd.f32 %v8133, %v8263
    %v8296 = vadd.f32 %v8134, %v8263
    %v8297 = vadd.f32 %v8135, %v8263
    %v8298 = vadd.f32 %v8136, %v8263
    %v8299 = vadd.f32 %v8137, %v8263
    %v8300 = vadd.f32 %v8138, %v8263
    %v8301 = vadd.f32 %v8139, %v8263
    %v8302 = vadd.f32 %v8140, %v8263
    %v8303 = vadd.f32 %v8141, %v8263
    %v8304 = vadd.f32 %v8142, %v8263
    %v8305 = vadd.f32 %v8143, %v8263
    %v8306 = vadd.f32 %v8144, %v8263
    %v8307 = vadd.f32 %v8145, %v8263
    %v8308 = vadd.f32 %v8146, %v8263
    %v8309 = vadd.f32 %v8147, %v8263
    %v8310 = vadd.f32 %v8148, %v8263
    %v8311 = vadd.f32 %v8149, %v8263
    %v8312 = vadd.f32 %v8150, %v8263
    %v8313 = vadd.f32 %v8151, %v8263
    %v8314 = vadd.f32 %v8152, %v8263
    %v8315 = vadd.f32 %v8153, %v8263
    %v8316 = vadd.f32 %v8154, %v8263
    %v8317 = vadd.f32 %v8155, %v8263
    %v8318 = vadd.f32 %v8156, %v8263
    %v8319 = vadd.f32 %v8157, %v8263
    %v8320 = vadd.f32 %v8158, %v8263
    %v8321 = vadd.f32 %v8159, %v8263
    %v8322 = vadd.f32 %v8160, %v8263
    %v8323 = vadd.f32 %v8161, %v8263
    %v8324 = vadd.f32 %v8162, %v8263
    %v8325 = vadd.f32 %v8163, %v8263
    %v8326 = vadd.f32 %v8164, %v8263
    %v8327 = vadd.f32 %v8165, %v8263
    %v8328 = vadd.f32 %v8166, %v8263
    %v8329 = vadd.f32 %v8167, %v8263
    %v8330 = vadd.f32 %v8168, %v8263
    %v8331 = vadd.f32 %v8169, %v8263
    %v8332 = vadd.f32 %v8170, %v8263
    %v8333 = vadd.f32 %v8171, %v8263
    %v8334 = vadd.f32 %v8172, %v8263
    %v8335 = vadd.f32 %v8173, %v8263
    %v8336 = vadd.f32 %v8174, %v8263
    %v8337 = vadd.f32 %v8175, %v8263
    %v8338 = vadd.f32 %v8176, %v8263
    %v8339 = vadd.f32 %v8177, %v8263
    %v8340 = vadd.f32 %v8178, %v8263
    %v8341 = vadd.f32 %v8179, %v8263
    %v8342 = vadd.f32 %v8180, %v8263
    %v8343 = vadd.f32 %v8181, %v8263
    %v8344 = vadd.f32 %v8182, %v8263
    %v8345 = vadd.f32 %v8183, %v8263
    %v8346 = vadd.f32 %v8184, %v8263
    %v8347 = vadd.f32 %v8185, %v8263
    %v8348 = vadd.f32 %v8186, %v8263
    %v8349 = vadd.f32 %v8187, %v8263
    %v8350 = vadd.f32 %v8188, %v8263
    %v8351 = vadd.f32 %v8189, %v8263
    %v8352 = vadd.f32 %v8190, %v8263
    %v8353 = vadd.f32 %v8191, %v8263
    %v8354 = vadd.f32 %v8192, %v8263
    %v8355 = vadd.f32 %v8193, %v8263
    %v8356 = vadd.f32 %v8194, %v8263
    %v8357 = vadd.f32 %v8195, %v8263
    %v8358 = vadd.f32 %v8196, %v8263
    %v8359 = vadd.f32 %v8197, %v8263
    %v8360 = vadd.f32 %v8198, %v8263
    %v8361 = vadd.f32 %v8199, %v8263
    %v8362 = vadd.f32 %v8200, %v8263
    %v8363 = vadd.f32 %v8201, %v8263
    %v8364 = vadd.f32 %v8202, %v8263
    %v8365 = vadd.f32 %v8203, %v8263
    %v8366 = vadd.f32 %v8204, %v8263
    %v8367 = vadd.f32 %v8205, %v8263
    %v8368 = vadd.f32 %v8206, %v8263
    %v8369 = vadd.f32 %v8207, %v8263
    %v8370 = vadd.f32 %v8208, %v8263
    %v8371 = vadd.f32 %v8209, %v8263
    %v8372 = vadd.f32 %v8210, %v8263
    %v8373 = vadd.f32 %v8211, %v8263
    %v8374 = vadd.f32 %v8212, %v8263
    %v8375 = vadd.f32 %v8213, %v8263
    %v8376 = vadd.f32 %v8214, %v8263
    %v8377 = vadd.f32 %v8215, %v8263
    %v8378 = vadd.f32 %v8216, %v8263
    %v8379 = vadd.f32 %v8217, %v8263
    %v8380 = vadd.f32 %v8218, %v8263
    %v8381 = vadd.f32 %v8219, %v8263
    %v8382 = vadd.f32 %v8220, %v8263
    %v8383 = vadd.f32 %v8221, %v8263
    %v8384 = vadd.f32 %v8222, %v8263
    %v8385 = vadd.f32 %v8223, %v8263
    %v8386 = vadd.f32 %v8224, %v8263
    %v8387 = vadd.f32 %v8225, %v8263
    %v8388 = vadd.f32 %v8226, %v8263
    %v8389 = vadd.f32 %v8227, %v8263
    %v8390 = vadd.f32 %v8228, %v8263
    %v8391 = vadd.f32 %v8229, %v8263
    %v8392 = vadd.f32 %v8230, %v8263
    %v8393 = vadd.f32 %v8231, %v8263
    %v8394 = vadd.f32 %v8232, %v8263
    %v8395 = vadd.f32 %v8233, %v8263
    %v8396 = vadd.f32 %v8234, %v8263
    %v8397 = vadd.f32 %v8235, %v8263
    %v8398 = vadd.f32 %v8236, %v8263
    %v8399 = vadd.f32 %v8237, %v8263
    %v8400 = vadd.f32 %v8238, %v8263
    %v8401 = vadd.f32 %v8239, %v8263
    %v8402 = vadd.f32 %v8240, %v8263
    %v8403 = vadd.f32 %v8241, %v8263
    %v8404 = vadd.f32 %v8242, %v8263
    %v8405 = vadd.f32 %v8243, %v8263
    %v8406 = vadd.f32 %v8244, %v8263
    %v8407 = vadd.f32 %v8245, %v8263
    %v8408 = vadd.f32 %v8246, %v8263
    %v8409 = vadd.f32 %v8247, %v8263
    %v8410 = vadd.f32 %v8248, %v8263
    %v8411 = vadd.f32 %v8249, %v8263
    %v8412 = vadd.f32 %v8250, %v8263
    %v8413 = vadd.f32 %v8251, %v8263
    %v8414 = vadd.f32 %v8252, %v8263
    %v8415 = vadd.f32 %v8253, %v8263
    %v8416 = vadd.f32 %v8254, %v8263
    %v8417 = vadd.f32 %v8255, %v8263
    %v8418 = vadd.f32 %v8256, %v8263
    %v8419 = vadd.f32 %v8257, %v8263
    %v8420 = vadd.f32 %v8258, %v8263
    %v8421 = vadd.f32 %v8259, %v8263
    %v8422 = vadd.f32 %v8260, %v8263
    %v8423 = vadd.f32 %v8261, %v8263
    %v8424 = vmax.f32 %v8264, 0.0
    %v8425 = vmax.f32 %v8265, 0.0
    %v8426 = vmax.f32 %v8266, 0.0
    %v8427 = vmax.f32 %v8267, 0.0
    %v8428 = vmax.f32 %v8268, 0.0
    %v8429 = vmax.f32 %v8269, 0.0
    %v8430 = vmax.f32 %v8270, 0.0
    %v8431 = vmax.f32 %v8271, 0.0
    %v8432 = vmax.f32 %v8272, 0.0
    %v8433 = vmax.f32 %v8273, 0.0
    %v8434 = vmax.f32 %v8274, 0.0
    %v8435 = vmax.f32 %v8275, 0.0
    %v8436 = vmax.f32 %v8276, 0.0
    %v8437 = vmax.f32 %v8277, 0.0
    %v8438 = vmax.f32 %v8278, 0.0
    %v8439 = vmax.f32 %v8279, 0.0
    %v8440 = vmax.f32 %v8280, 0.0
    %v8441 = vmax.f32 %v8281, 0.0
    %v8442 = vmax.f32 %v8282, 0.0
    %v8443 = vmax.f32 %v8283, 0.0
    %v8444 = vmax.f32 %v8284, 0.0
    %v8445 = vmax.f32 %v8285, 0.0
    %v8446 = vmax.f32 %v8286, 0.0
    %v8447 = vmax.f32 %v8287, 0.0
    %v8448 = vmax.f32 %v8288, 0.0
    %v8449 = vmax.f32 %v8289, 0.0
    %v8450 = vmax.f32 %v8290, 0.0
    %v8451 = vmax.f32 %v8291, 0.0
    %v8452 = vmax.f32 %v8292, 0.0
    %v8453 = vmax.f32 %v8293, 0.0
    %v8454 = vmax.f32 %v8294, 0.0
    %v8455 = vmax.f32 %v8295, 0.0
    %v8456 = vmax.f32 %v8296, 0.0
    %v8457 = vmax.f32 %v8297, 0.0
    %v8458 = vmax.f32 %v8298, 0.0
    %v8459 = vmax.f32 %v8299, 0.0
    %v8460 = vmax.f32 %v8300, 0.0
    %v8461 = vmax.f32 %v8301, 0.0
    %v8462 = vmax.f32 %v8302, 0.0
    %v8463 = vmax.f32 %v8303, 0.0
    %v8464 = vmax.f32 %v8304, 0.0
    %v8465 = vmax.f32 %v8305, 0.0
    %v8466 = vmax.f32 %v8306, 0.0
    %v8467 = vmax.f32 %v8307, 0.0
    %v8468 = vmax.f32 %v8308, 0.0
    %v8469 = vmax.f32 %v8309, 0.0
    %v8470 = vmax.f32 %v8310, 0.0
    %v8471 = vmax.f32 %v8311, 0.0
    %v8472 = vmax.f32 %v8312, 0.0
    %v8473 = vmax.f32 %v8313, 0.0
    %v8474 = vmax.f32 %v8314, 0.0
    %v8475 = vmax.f32 %v8315, 0.0
    %v8476 = vmax.f32 %v8316, 0.0
    %v8477 = vmax.f32 %v8317, 0.0
    %v8478 = vmax.f32 %v8318, 0.0
    %v8479 = vmax.f32 %v8319, 0.0
    %v8480 = vmax.f32 %v8320, 0.0
    %v8481 = vmax.f32 %v8321, 0.0
    %v8482 = vmax.f32 %v8322, 0.0
    %v8483 = vmax.f32 %v8323, 0.0
    %v8484 = vmax.f32 %v8324, 0.0
    %v8485 = vmax.f32 %v8325, 0.0
    %v8486 = vmax.f32 %v8326, 0.0
    %v8487 = vmax.f32 %v8327, 0.0
    %v8488 = vmax.f32 %v8328, 0.0
    %v8489 = vmax.f32 %v8329, 0.0
    %v8490 = vmax.f32 %v8330, 0.0
    %v8491 = vmax.f32 %v8331, 0.0
    %v8492 = vmax.f32 %v8332, 0.0
    %v8493 = vmax.f32 %v8333, 0.0
    %v8494 = vmax.f32 %v8334, 0.0
    %v8495 = vmax.f32 %v8335, 0.0
    %v8496 = vmax.f32 %v8336, 0.0
    %v8497 = vmax.f32 %v8337, 0.0
    %v8498 = vmax.f32 %v8338, 0.0
    %v8499 = vmax.f32 %v8339, 0.0
    %v8500 = vmax.f32 %v8340, 0.0
    %v8501 = vmax.f32 %v8341, 0.0
    %v8502 = vmax.f32 %v8342, 0.0
    %v8503 = vmax.f32 %v8343, 0.0
    %v8504 = vmax.f32 %v8344, 0.0
    %v8505 = vmax.f32 %v8345, 0.0
    %v8506 = vmax.f32 %v8346, 0.0
    %v8507 = vmax.f32 %v8347, 0.0
    %v8508 = vmax.f32 %v8348, 0.0
    %v8509 = vmax.f32 %v8349, 0.0
    %v8510 = vmax.f32 %v8350, 0.0
    %v8511 = vmax.f32 %v8351, 0.0
    %v8512 = vmax.f32 %v8352, 0.0
    %v8513 = vmax.f32 %v8353, 0.0
    %v8514 = vmax.f32 %v8354, 0.0
    %v8515 = vmax.f32 %v8355, 0.0
    %v8516 = vmax.f32 %v8356, 0.0
    %v8517 = vmax.f32 %v8357, 0.0
    %v8518 = vmax.f32 %v8358, 0.0
    %v8519 = vmax.f32 %v8359, 0.0
    %v8520 = vmax.f32 %v8360, 0.0
    %v8521 = vmax.f32 %v8361, 0.0
    %v8522 = vmax.f32 %v8362, 0.0
    %v8523 = vmax.f32 %v8363, 0.0
    %v8524 = vmax.f32 %v8364, 0.0
    %v8525 = vmax.f32 %v8365, 0.0
    %v8526 = vmax.f32 %v8366, 0.0
    %v8527 = vmax.f32 %v8367, 0.0
    %v8528 = vmax.f32 %v8368, 0.0
    %v8529 = vmax.f32 %v8369, 0.0
    %v8530 = vmax.f32 %v8370, 0.0
    %v8531 = vmax.f32 %v8371, 0.0
    %v8532 = vmax.f32 %v8372, 0.0
    %v8533 = vmax.f32 %v8373, 0.0
    %v8534 = vmax.f32 %v8374, 0.0
    %v8535 = vmax.f32 %v8375, 0.0
    %v8536 = vmax.f32 %v8376, 0.0
    %v8537 = vmax.f32 %v8377, 0.0
    %v8538 = vmax.f32 %v8378, 0.0
    %v8539 = vmax.f32 %v8379, 0.0
    %v8540 = vmax.f32 %v8380, 0.0
    %v8541 = vmax.f32 %v8381, 0.0
    %v8542 = vmax.f32 %v8382, 0.0
    %v8543 = vmax.f32 %v8383, 0.0
    %v8544 = vmax.f32 %v8384, 0.0
    %v8545 = vmax.f32 %v8385, 0.0
    %v8546 = vmax.f32 %v8386, 0.0
    %v8547 = vmax.f32 %v8387, 0.0
    %v8548 = vmax.f32 %v8388, 0.0
    %v8549 = vmax.f32 %v8389, 0.0
    %v8550 = vmax.f32 %v8390, 0.0
    %v8551 = vmax.f32 %v8391, 0.0
    %v8552 = vmax.f32 %v8392, 0.0
    %v8553 = vmax.f32 %v8393, 0.0
    %v8554 = vmax.f32 %v8394, 0.0
    %v8555 = vmax.f32 %v8395, 0.0
    %v8556 = vmax.f32 %v8396, 0.0
    %v8557 = vmax.f32 %v8397, 0.0
    %v8558 = vmax.f32 %v8398, 0.0
    %v8559 = vmax.f32 %v8399, 0.0
    %v8560 = vmax.f32 %v8400, 0.0
    %v8561 = vmax.f32 %v8401, 0.0
    %v8562 = vmax.f32 %v8402, 0.0
    %v8563 = vmax.f32 %v8403, 0.0
    %v8564 = vmax.f32 %v8404, 0.0
    %v8565 = vmax.f32 %v8405, 0.0
    %v8566 = vmax.f32 %v8406, 0.0
    %v8567 = vmax.f32 %v8407, 0.0
    %v8568 = vmax.f32 %v8408, 0.0
    %v8569 = vmax.f32 %v8409, 0.0
    %v8570 = vmax.f32 %v8410, 0.0
    %v8571 = vmax.f32 %v8411, 0.0
    %v8572 = vmax.f32 %v8412, 0.0
    %v8573 = vmax.f32 %v8413, 0.0
    %v8574 = vmax.f32 %v8414, 0.0
    %v8575 = vmax.f32 %v8415, 0.0
    %v8576 = vmax.f32 %v8416, 0.0
    %v8577 = vmax.f32 %v8417, 0.0
    %v8578 = vmax.f32 %v8418, 0.0
    %v8579 = vmax.f32 %v8419, 0.0
    %v8580 = vmax.f32 %v8420, 0.0
    %v8581 = vmax.f32 %v8421, 0.0
    %v8582 = vmax.f32 %v8422, 0.0
    %v8583 = vmax.f32 %v8423, 0.0
    %v8584 = vmax.f32 %v7328, %v8424
    %v8585 = vmax.f32 %v7329, %v8425
    %v8586 = vmax.f32 %v7330, %v8426
    %v8587 = vmax.f32 %v7331, %v8427
    %v8588 = vmax.f32 %v7332, %v8428
    %v8589 = vmax.f32 %v7333, %v8429
    %v8590 = vmax.f32 %v7334, %v8430
    %v8591 = vmax.f32 %v7335, %v8431
    %v8592 = vmax.f32 %v7336, %v8432
    %v8593 = vmax.f32 %v7337, %v8433
    %v8594 = vmax.f32 %v7338, %v8434
    %v8595 = vmax.f32 %v7339, %v8435
    %v8596 = vmax.f32 %v7340, %v8436
    %v8597 = vmax.f32 %v7341, %v8437
    %v8598 = vmax.f32 %v7342, %v8438
    %v8599 = vmax.f32 %v7343, %v8439
    %v8600 = vmax.f32 %v7344, %v8440
    %v8601 = vmax.f32 %v7345, %v8441
    %v8602 = vmax.f32 %v7346, %v8442
    %v8603 = vmax.f32 %v7347, %v8443
    %v8604 = vmax.f32 %v7348, %v8444
    %v8605 = vmax.f32 %v7349, %v8445
    %v8606 = vmax.f32 %v7350, %v8446
    %v8607 = vmax.f32 %v7351, %v8447
    %v8608 = vmax.f32 %v7352, %v8448
    %v8609 = vmax.f32 %v7353, %v8449
    %v8610 = vmax.f32 %v7354, %v8450
    %v8611 = vmax.f32 %v7355, %v8451
    %v8612 = vmax.f32 %v7356, %v8452
    %v8613 = vmax.f32 %v7357, %v8453
    %v8614 = vmax.f32 %v7358, %v8454
    %v8615 = vmax.f32 %v7359, %v8455
    %v8616 = vmax.f32 %v8584, %v8456
    %v8617 = vmax.f32 %v8585, %v8457
    %v8618 = vmax.f32 %v8586, %v8458
    %v8619 = vmax.f32 %v8587, %v8459
    %v8620 = vmax.f32 %v8588, %v8460
    %v8621 = vmax.f32 %v8589, %v8461
    %v8622 = vmax.f32 %v8590, %v8462
    %v8623 = vmax.f32 %v8591, %v8463
    %v8624 = vmax.f32 %v8592, %v8464
    %v8625 = vmax.f32 %v8593, %v8465
    %v8626 = vmax.f32 %v8594, %v8466
    %v8627 = vmax.f32 %v8595, %v8467
    %v8628 = vmax.f32 %v8596, %v8468
    %v8629 = vmax.f32 %v8597, %v8469
    %v8630 = vmax.f32 %v8598, %v8470
    %v8631 = vmax.f32 %v8599, %v8471
    %v8632 = vmax.f32 %v8600, %v8472
    %v8633 = vmax.f32 %v8601, %v8473
    %v8634 = vmax.f32 %v8602, %v8474
    %v8635 = vmax.f32 %v8603, %v8475
    %v8636 = vmax.f32 %v8604, %v8476
    %v8637 = vmax.f32 %v8605, %v8477
    %v8638 = vmax.f32 %v8606, %v8478
    %v8639 = vmax.f32 %v8607, %v8479
    %v8640 = vmax.f32 %v8608, %v8480
    %v8641 = vmax.f32 %v8609, %v8481
    %v8642 = vmax.f32 %v8610, %v8482
    %v8643 = vmax.f32 %v8611, %v8483
    %v8644 = vmax.f32 %v8612, %v8484
    %v8645 = vmax.f32 %v8613, %v8485
    %v8646 = vmax.f32 %v8614, %v8486
    %v8647 = vmax.f32 %v8615, %v8487
    %v8648 = vmax.f32 %v7424, %v8488
    %v8649 = vmax.f32 %v7425, %v8489
    %v8650 = vmax.f32 %v7426, %v8490
    %v8651 = vmax.f32 %v7427, %v8491
    %v8652 = vmax.f32 %v7428, %v8492
    %v8653 = vmax.f32 %v7429, %v8493
    %v8654 = vmax.f32 %v7430, %v8494
    %v8655 = vmax.f32 %v7431, %v8495
    %v8656 = vmax.f32 %v7432, %v8496
    %v8657 = vmax.f32 %v7433, %v8497
    %v8658 = vmax.f32 %v7434, %v8498
    %v8659 = vmax.f32 %v7435, %v8499
    %v8660 = vmax.f32 %v7436, %v8500
    %v8661 = vmax.f32 %v7437, %v8501
    %v8662 = vmax.f32 %v7438, %v8502
    %v8663 = vmax.f32 %v7439, %v8503
    %v8664 = vmax.f32 %v7440, %v8504
    %v8665 = vmax.f32 %v7441, %v8505
    %v8666 = vmax.f32 %v7442, %v8506
    %v8667 = vmax.f32 %v7443, %v8507
    %v8668 = vmax.f32 %v7444, %v8508
    %v8669 = vmax.f32 %v7445, %v8509
    %v8670 = vmax.f32 %v7446, %v8510
    %v8671 = vmax.f32 %v7447, %v8511
    %v8672 = vmax.f32 %v7448, %v8512
    %v8673 = vmax.f32 %v7449, %v8513
    %v8674 = vmax.f32 %v7450, %v8514
    %v8675 = vmax.f32 %v7451, %v8515
    %v8676 = vmax.f32 %v7452, %v8516
    %v8677 = vmax.f32 %v7453, %v8517
    %v8678 = vmax.f32 %v7454, %v8518
    %v8679 = vmax.f32 %v7455, %v8519
    %v8680 = vmax.f32 %v8648, %v8520
    %v8681 = vmax.f32 %v8649, %v8521
    %v8682 = vmax.f32 %v8650, %v8522
    %v8683 = vmax.f32 %v8651, %v8523
    %v8684 = vmax.f32 %v8652, %v8524
    %v8685 = vmax.f32 %v8653, %v8525
    %v8686 = vmax.f32 %v8654, %v8526
    %v8687 = vmax.f32 %v8655, %v8527
    %v8688 = vmax.f32 %v8656, %v8528
    %v8689 = vmax.f32 %v8657, %v8529
    %v8690 = vmax.f32 %v8658, %v8530
    %v8691 = vmax.f32 %v8659, %v8531
    %v8692 = vmax.f32 %v8660, %v8532
    %v8693 = vmax.f32 %v8661, %v8533
    %v8694 = vmax.f32 %v8662, %v8534
    %v8695 = vmax.f32 %v8663, %v8535
    %v8696 = vmax.f32 %v8664, %v8536
    %v8697 = vmax.f32 %v8665, %v8537
    %v8698 = vmax.f32 %v8666, %v8538
    %v8699 = vmax.f32 %v8667, %v8539
    %v8700 = vmax.f32 %v8668, %v8540
    %v8701 = vmax.f32 %v8669, %v8541
    %v8702 = vmax.f32 %v8670, %v8542
    %v8703 = vmax.f32 %v8671, %v8543
    %v8704 = vmax.f32 %v8672, %v8544
    %v8705 = vmax.f32 %v8673, %v8545
    %v8706 = vmax.f32 %v8674, %v8546
    %v8707 = vmax.f32 %v8675, %v8547
    %v8708 = vmax.f32 %v8676, %v8548
    %v8709 = vmax.f32 %v8677, %v8549
    %v8710 = vmax.f32 %v8678, %v8550
    %v8711 = vmax.f32 %v8679, %v8551
    %v8712 = vmax.f32 %v8680, %v8552
    %v8713 = vmax.f32 %v8681, %v8553
    %v8714 = vmax.f32 %v8682, %v8554
    %v8715 = vmax.f32 %v8683, %v8555
    %v8716 = vmax.f32 %v8684, %v8556
    %v8717 = vmax.f32 %v8685, %v8557
    %v8718 = vmax.f32 %v8686, %v8558
    %v8719 = vmax.f32 %v8687, %v8559
    %v8720 = vmax.f32 %v8688, %v8560
    %v8721 = vmax.f32 %v8689, %v8561
    %v8722 = vmax.f32 %v8690, %v8562
    %v8723 = vmax.f32 %v8691, %v8563
    %v8724 = vmax.f32 %v8692, %v8564
    %v8725 = vmax.f32 %v8693, %v8565
    %v8726 = vmax.f32 %v8694, %v8566
    %v8727 = vmax.f32 %v8695, %v8567
    %v8728 = vmax.f32 %v8696, %v8568
    %v8729 = vmax.f32 %v8697, %v8569
    %v8730 = vmax.f32 %v8698, %v8570
    %v8731 = vmax.f32 %v8699, %v8571
    %v8732 = vmax.f32 %v8700, %v8572
    %v8733 = vmax.f32 %v8701, %v8573
    %v8734 = vmax.f32 %v8702, %v8574
    %v8735 = vmax.f32 %v8703, %v8575
    %v8736 = vmax.f32 %v8704, %v8576
    %v8737 = vmax.f32 %v8705, %v8577
    %v8738 = vmax.f32 %v8706, %v8578
    %v8739 = vmax.f32 %v8707, %v8579
    %v8740 = vmax.f32 %v8708, %v8580
    %v8741 = vmax.f32 %v8709, %v8581
    %v8742 = vmax.f32 %v8710, %v8582
    %v8743 = vmax.f32 %v8711, %v8583
    %s8744 = sld [smem:[#allocation7 + $0x12]]
    %v8745 = vstv %s8744
    %v8746 = vmul.f32 %v216, %v8745
    %v8747 = vmul.f32 %v217, %v8745
    %v8748 = vmul.f32 %v218, %v8745
    %v8749 = vmul.f32 %v219, %v8745
    %v8750 = vmul.f32 %v220, %v8745
    %v8751 = vmul.f32 %v221, %v8745
    %v8752 = vmul.f32 %v222, %v8745
    %v8753 = vmul.f32 %v223, %v8745
    %v8754 = vmul.f32 %v224, %v8745
    %v8755 = vmul.f32 %v225, %v8745
    %v8756 = vmul.f32 %v226, %v8745
    %v8757 = vmul.f32 %v227, %v8745
    %v8758 = vmul.f32 %v228, %v8745
    %v8759 = vmul.f32 %v229, %v8745
    %v8760 = vmul.f32 %v230, %v8745
    %v8761 = vmul.f32 %v231, %v8745
    %v8762 = vmul.f32 %v232, %v8745
    %v8763 = vmul.f32 %v233, %v8745
    %v8764 = vmul.f32 %v234, %v8745
    %v8765 = vmul.f32 %v235, %v8745
    %v8766 = vmul.f32 %v236, %v8745
    %v8767 = vmul.f32 %v237, %v8745
    %v8768 = vmul.f32 %v238, %v8745
    %v8769 = vmul.f32 %v239, %v8745
    %v8770 = vmul.f32 %v240, %v8745
    %v8771 = vmul.f32 %v241, %v8745
    %v8772 = vmul.f32 %v242, %v8745
    %v8773 = vmul.f32 %v243, %v8745
    %v8774 = vmul.f32 %v244, %v8745
    %v8775 = vmul.f32 %v245, %v8745
    %v8776 = vmul.f32 %v246, %v8745
    %v8777 = vmul.f32 %v247, %v8745
    %v8778 = vmul.f32 %v248, %v8745
    %v8779 = vmul.f32 %v249, %v8745
    %v8780 = vmul.f32 %v250, %v8745
    %v8781 = vmul.f32 %v251, %v8745
    %v8782 = vmul.f32 %v252, %v8745
    %v8783 = vmul.f32 %v253, %v8745
    %v8784 = vmul.f32 %v254, %v8745
    %v8785 = vmul.f32 %v255, %v8745
    %v8786 = vmul.f32 %v256, %v8745
    %v8787 = vmul.f32 %v257, %v8745
    %v8788 = vmul.f32 %v258, %v8745
    %v8789 = vmul.f32 %v259, %v8745
    %v8790 = vmul.f32 %v260, %v8745
    %v8791 = vmul.f32 %v261, %v8745
    %v8792 = vmul.f32 %v262, %v8745
    %v8793 = vmul.f32 %v263, %v8745
    %v8794 = vmul.f32 %v264, %v8745
    %v8795 = vmul.f32 %v265, %v8745
    %v8796 = vmul.f32 %v266, %v8745
    %v8797 = vmul.f32 %v267, %v8745
    %v8798 = vmul.f32 %v268, %v8745
    %v8799 = vmul.f32 %v269, %v8745
    %v8800 = vmul.f32 %v270, %v8745
    %v8801 = vmul.f32 %v271, %v8745
    %v8802 = vmul.f32 %v272, %v8745
    %v8803 = vmul.f32 %v273, %v8745
    %v8804 = vmul.f32 %v274, %v8745
    %v8805 = vmul.f32 %v275, %v8745
    %v8806 = vmul.f32 %v276, %v8745
    %v8807 = vmul.f32 %v277, %v8745
    %v8808 = vmul.f32 %v278, %v8745
    %v8809 = vmul.f32 %v279, %v8745
    %v8810 = vmul.f32 %v280, %v8745
    %v8811 = vmul.f32 %v281, %v8745
    %v8812 = vmul.f32 %v282, %v8745
    %v8813 = vmul.f32 %v283, %v8745
    %v8814 = vmul.f32 %v284, %v8745
    %v8815 = vmul.f32 %v285, %v8745
    %v8816 = vmul.f32 %v286, %v8745
    %v8817 = vmul.f32 %v287, %v8745
    %v8818 = vmul.f32 %v288, %v8745
    %v8819 = vmul.f32 %v289, %v8745
    %v8820 = vmul.f32 %v290, %v8745
    %v8821 = vmul.f32 %v291, %v8745
    %v8822 = vmul.f32 %v292, %v8745
    %v8823 = vmul.f32 %v293, %v8745
    %v8824 = vmul.f32 %v294, %v8745
    %v8825 = vmul.f32 %v295, %v8745
    %v8826 = vmul.f32 %v296, %v8745
    %v8827 = vmul.f32 %v297, %v8745
    %v8828 = vmul.f32 %v298, %v8745
    %v8829 = vmul.f32 %v299, %v8745
    %v8830 = vmul.f32 %v300, %v8745
    %v8831 = vmul.f32 %v301, %v8745
    %v8832 = vmul.f32 %v302, %v8745
    %v8833 = vmul.f32 %v303, %v8745
    %v8834 = vmul.f32 %v304, %v8745
    %v8835 = vmul.f32 %v305, %v8745
    %v8836 = vmul.f32 %v306, %v8745
    %v8837 = vmul.f32 %v307, %v8745
    %v8838 = vmul.f32 %v308, %v8745
    %v8839 = vmul.f32 %v309, %v8745
    %v8840 = vmul.f32 %v310, %v8745
    %v8841 = vmul.f32 %v311, %v8745
    %v8842 = vmul.f32 %v312, %v8745
    %v8843 = vmul.f32 %v313, %v8745
    %v8844 = vmul.f32 %v314, %v8745
    %v8845 = vmul.f32 %v315, %v8745
    %v8846 = vmul.f32 %v316, %v8745
    %v8847 = vmul.f32 %v317, %v8745
    %v8848 = vmul.f32 %v318, %v8745
    %v8849 = vmul.f32 %v319, %v8745
    %v8850 = vmul.f32 %v320, %v8745
    %v8851 = vmul.f32 %v321, %v8745
    %v8852 = vmul.f32 %v322, %v8745
    %v8853 = vmul.f32 %v323, %v8745
    %v8854 = vmul.f32 %v324, %v8745
    %v8855 = vmul.f32 %v325, %v8745
    %v8856 = vmul.f32 %v326, %v8745
    %v8857 = vmul.f32 %v327, %v8745
    %v8858 = vmul.f32 %v328, %v8745
    %v8859 = vmul.f32 %v329, %v8745
    %v8860 = vmul.f32 %v330, %v8745
    %v8861 = vmul.f32 %v331, %v8745
    %v8862 = vmul.f32 %v332, %v8745
    %v8863 = vmul.f32 %v333, %v8745
    %v8864 = vmul.f32 %v334, %v8745
    %v8865 = vmul.f32 %v335, %v8745
    %v8866 = vmul.f32 %v336, %v8745
    %v8867 = vmul.f32 %v337, %v8745
    %v8868 = vmul.f32 %v338, %v8745
    %v8869 = vmul.f32 %v339, %v8745
    %v8870 = vmul.f32 %v340, %v8745
    %v8871 = vmul.f32 %v341, %v8745
    %v8872 = vmul.f32 %v342, %v8745
    %v8873 = vmul.f32 %v343, %v8745
    %v8874 = vmul.f32 %v344, %v8745
    %v8875 = vmul.f32 %v345, %v8745
    %v8876 = vmul.f32 %v346, %v8745
    %v8877 = vmul.f32 %v347, %v8745
    %v8878 = vmul.f32 %v348, %v8745
    %v8879 = vmul.f32 %v349, %v8745
    %v8880 = vmul.f32 %v350, %v8745
    %v8881 = vmul.f32 %v351, %v8745
    %v8882 = vmul.f32 %v352, %v8745
    %v8883 = vmul.f32 %v353, %v8745
    %v8884 = vmul.f32 %v354, %v8745
    %v8885 = vmul.f32 %v355, %v8745
    %v8886 = vmul.f32 %v356, %v8745
    %v8887 = vmul.f32 %v357, %v8745
    %v8888 = vmul.f32 %v358, %v8745
    %v8889 = vmul.f32 %v359, %v8745
    %v8890 = vmul.f32 %v360, %v8745
    %v8891 = vmul.f32 %v361, %v8745
    %v8892 = vmul.f32 %v362, %v8745
    %v8893 = vmul.f32 %v363, %v8745
    %v8894 = vmul.f32 %v364, %v8745
    %v8895 = vmul.f32 %v365, %v8745
    %v8896 = vmul.f32 %v366, %v8745
    %v8897 = vmul.f32 %v367, %v8745
    %v8898 = vmul.f32 %v368, %v8745
    %v8899 = vmul.f32 %v369, %v8745
    %v8900 = vmul.f32 %v370, %v8745
    %v8901 = vmul.f32 %v371, %v8745
    %v8902 = vmul.f32 %v372, %v8745
    %v8903 = vmul.f32 %v373, %v8745
    %v8904 = vmul.f32 %v374, %v8745
    %v8905 = vmul.f32 %v375, %v8745
    %s8906 = sld [smem:[#allocation7 + $0x13]]
    %v8907 = vstv %s8906
    %v8908 = vmul.f32 %v377, %v8907
    %v8909 = vmul.f32 %v379, %v8907
    %v8910 = vmul.f32 %v381, %v8907
    %v8911 = vmul.f32 %v383, %v8907
    %v8912 = vmul.f32 %v385, %v8907
    %v8913 = vmul.f32 %v387, %v8907
    %v8914 = vmul.f32 %v389, %v8907
    %v8915 = vmul.f32 %v391, %v8907
    %v8916 = vmul.f32 %v393, %v8907
    %v8917 = vmul.f32 %v395, %v8907
    %v8918 = vmul.f32 %v397, %v8907
    %v8919 = vmul.f32 %v399, %v8907
    %v8920 = vmul.f32 %v401, %v8907
    %v8921 = vmul.f32 %v403, %v8907
    %v8922 = vmul.f32 %v405, %v8907
    %v8923 = vmul.f32 %v407, %v8907
    %v8924 = vmul.f32 %v409, %v8907
    %v8925 = vmul.f32 %v411, %v8907
    %v8926 = vmul.f32 %v413, %v8907
    %v8927 = vmul.f32 %v415, %v8907
    %v8928 = vmul.f32 %v417, %v8907
    %v8929 = vmul.f32 %v419, %v8907
    %v8930 = vmul.f32 %v421, %v8907
    %v8931 = vmul.f32 %v423, %v8907
    %v8932 = vmul.f32 %v425, %v8907
    %v8933 = vmul.f32 %v427, %v8907
    %v8934 = vmul.f32 %v429, %v8907
    %v8935 = vmul.f32 %v431, %v8907
    %v8936 = vmul.f32 %v433, %v8907
    %v8937 = vmul.f32 %v435, %v8907
    %v8938 = vmul.f32 %v437, %v8907
    %v8939 = vmul.f32 %v439, %v8907
    %v8940 = vmul.f32 %v441, %v8907
    %v8941 = vmul.f32 %v443, %v8907
    %v8942 = vmul.f32 %v445, %v8907
    %v8943 = vmul.f32 %v447, %v8907
    %v8944 = vmul.f32 %v449, %v8907
    %v8945 = vmul.f32 %v451, %v8907
    %v8946 = vmul.f32 %v453, %v8907
    %v8947 = vmul.f32 %v455, %v8907
    %v8948 = vmul.f32 %v457, %v8907
    %v8949 = vmul.f32 %v459, %v8907
    %v8950 = vmul.f32 %v461, %v8907
    %v8951 = vmul.f32 %v463, %v8907
    %v8952 = vmul.f32 %v465, %v8907
    %v8953 = vmul.f32 %v467, %v8907
    %v8954 = vmul.f32 %v469, %v8907
    %v8955 = vmul.f32 %v471, %v8907
    %v8956 = vmul.f32 %v473, %v8907
    %v8957 = vmul.f32 %v475, %v8907
    %v8958 = vmul.f32 %v477, %v8907
    %v8959 = vmul.f32 %v479, %v8907
    %v8960 = vmul.f32 %v481, %v8907
    %v8961 = vmul.f32 %v483, %v8907
    %v8962 = vmul.f32 %v485, %v8907
    %v8963 = vmul.f32 %v487, %v8907
    %v8964 = vmul.f32 %v489, %v8907
    %v8965 = vmul.f32 %v491, %v8907
    %v8966 = vmul.f32 %v493, %v8907
    %v8967 = vmul.f32 %v495, %v8907
    %v8968 = vmul.f32 %v497, %v8907
    %v8969 = vmul.f32 %v499, %v8907
    %v8970 = vmul.f32 %v501, %v8907
    %v8971 = vmul.f32 %v503, %v8907
    %v8972 = vmul.f32 %v505, %v8907
    %v8973 = vmul.f32 %v507, %v8907
    %v8974 = vmul.f32 %v509, %v8907
    %v8975 = vmul.f32 %v511, %v8907
    %v8976 = vmul.f32 %v513, %v8907
    %v8977 = vmul.f32 %v515, %v8907
    %v8978 = vmul.f32 %v517, %v8907
    %v8979 = vmul.f32 %v519, %v8907
    %v8980 = vmul.f32 %v521, %v8907
    %v8981 = vmul.f32 %v523, %v8907
    %v8982 = vmul.f32 %v525, %v8907
    %v8983 = vmul.f32 %v527, %v8907
    %v8984 = vmul.f32 %v529, %v8907
    %v8985 = vmul.f32 %v531, %v8907
    %v8986 = vmul.f32 %v533, %v8907
    %v8987 = vmul.f32 %v535, %v8907
    %v8988 = vmul.f32 %v537, %v8907
    %v8989 = vmul.f32 %v539, %v8907
    %v8990 = vmul.f32 %v541, %v8907
    %v8991 = vmul.f32 %v543, %v8907
    %v8992 = vmul.f32 %v545, %v8907
    %v8993 = vmul.f32 %v547, %v8907
    %v8994 = vmul.f32 %v549, %v8907
    %v8995 = vmul.f32 %v551, %v8907
    %v8996 = vmul.f32 %v553, %v8907
    %v8997 = vmul.f32 %v555, %v8907
    %v8998 = vmul.f32 %v557, %v8907
    %v8999 = vmul.f32 %v559, %v8907
    %v9000 = vmul.f32 %v561, %v8907
    %v9001 = vmul.f32 %v563, %v8907
    %v9002 = vmul.f32 %v565, %v8907
    %v9003 = vmul.f32 %v567, %v8907
    %v9004 = vmul.f32 %v569, %v8907
    %v9005 = vmul.f32 %v571, %v8907
    %v9006 = vmul.f32 %v573, %v8907
    %v9007 = vmul.f32 %v575, %v8907
    %v9008 = vmul.f32 %v577, %v8907
    %v9009 = vmul.f32 %v579, %v8907
    %v9010 = vmul.f32 %v581, %v8907
    %v9011 = vmul.f32 %v583, %v8907
    %v9012 = vmul.f32 %v585, %v8907
    %v9013 = vmul.f32 %v587, %v8907
    %v9014 = vmul.f32 %v589, %v8907
    %v9015 = vmul.f32 %v591, %v8907
    %v9016 = vmul.f32 %v593, %v8907
    %v9017 = vmul.f32 %v595, %v8907
    %v9018 = vmul.f32 %v597, %v8907
    %v9019 = vmul.f32 %v599, %v8907
    %v9020 = vmul.f32 %v601, %v8907
    %v9021 = vmul.f32 %v603, %v8907
    %v9022 = vmul.f32 %v605, %v8907
    %v9023 = vmul.f32 %v607, %v8907
    %v9024 = vmul.f32 %v609, %v8907
    %v9025 = vmul.f32 %v611, %v8907
    %v9026 = vmul.f32 %v613, %v8907
    %v9027 = vmul.f32 %v615, %v8907
    %v9028 = vmul.f32 %v617, %v8907
    %v9029 = vmul.f32 %v619, %v8907
    %v9030 = vmul.f32 %v621, %v8907
    %v9031 = vmul.f32 %v623, %v8907
    %v9032 = vmul.f32 %v625, %v8907
    %v9033 = vmul.f32 %v627, %v8907
    %v9034 = vmul.f32 %v629, %v8907
    %v9035 = vmul.f32 %v631, %v8907
    %v9036 = vmul.f32 %v633, %v8907
    %v9037 = vmul.f32 %v635, %v8907
    %v9038 = vmul.f32 %v637, %v8907
    %v9039 = vmul.f32 %v639, %v8907
    %v9040 = vmul.f32 %v641, %v8907
    %v9041 = vmul.f32 %v643, %v8907
    %v9042 = vmul.f32 %v645, %v8907
    %v9043 = vmul.f32 %v647, %v8907
    %v9044 = vmul.f32 %v649, %v8907
    %v9045 = vmul.f32 %v651, %v8907
    %v9046 = vmul.f32 %v653, %v8907
    %v9047 = vmul.f32 %v655, %v8907
    %v9048 = vmul.f32 %v657, %v8907
    %v9049 = vmul.f32 %v659, %v8907
    %v9050 = vmul.f32 %v661, %v8907
    %v9051 = vmul.f32 %v663, %v8907
    %v9052 = vmul.f32 %v665, %v8907
    %v9053 = vmul.f32 %v667, %v8907
    %v9054 = vmul.f32 %v669, %v8907
    %v9055 = vmul.f32 %v671, %v8907
    %v9056 = vmul.f32 %v673, %v8907
    %v9057 = vmul.f32 %v675, %v8907
    %v9058 = vmul.f32 %v677, %v8907
    %v9059 = vmul.f32 %v679, %v8907
    %v9060 = vmul.f32 %v681, %v8907
    %v9061 = vmul.f32 %v683, %v8907
    %v9062 = vmul.f32 %v685, %v8907
    %v9063 = vmul.f32 %v687, %v8907
    %v9064 = vmul.f32 %v689, %v8907
    %v9065 = vmul.f32 %v691, %v8907
    %v9066 = vmul.f32 %v693, %v8907
    %v9067 = vmul.f32 %v695, %v8907
    %v9068 = vadd.f32 %v8746, %v8908
    %v9069 = vadd.f32 %v8747, %v8909
    %v9070 = vadd.f32 %v8748, %v8910
    %v9071 = vadd.f32 %v8749, %v8911
    %v9072 = vadd.f32 %v8750, %v8912
    %v9073 = vadd.f32 %v8751, %v8913
    %v9074 = vadd.f32 %v8752, %v8914
    %v9075 = vadd.f32 %v8753, %v8915
    %v9076 = vadd.f32 %v8754, %v8916
    %v9077 = vadd.f32 %v8755, %v8917
    %v9078 = vadd.f32 %v8756, %v8918
    %v9079 = vadd.f32 %v8757, %v8919
    %v9080 = vadd.f32 %v8758, %v8920
    %v9081 = vadd.f32 %v8759, %v8921
    %v9082 = vadd.f32 %v8760, %v8922
    %v9083 = vadd.f32 %v8761, %v8923
    %v9084 = vadd.f32 %v8762, %v8924
    %v9085 = vadd.f32 %v8763, %v8925
    %v9086 = vadd.f32 %v8764, %v8926
    %v9087 = vadd.f32 %v8765, %v8927
    %v9088 = vadd.f32 %v8766, %v8928
    %v9089 = vadd.f32 %v8767, %v8929
    %v9090 = vadd.f32 %v8768, %v8930
    %v9091 = vadd.f32 %v8769, %v8931
    %v9092 = vadd.f32 %v8770, %v8932
    %v9093 = vadd.f32 %v8771, %v8933
    %v9094 = vadd.f32 %v8772, %v8934
    %v9095 = vadd.f32 %v8773, %v8935
    %v9096 = vadd.f32 %v8774, %v8936
    %v9097 = vadd.f32 %v8775, %v8937
    %v9098 = vadd.f32 %v8776, %v8938
    %v9099 = vadd.f32 %v8777, %v8939
    %v9100 = vadd.f32 %v8778, %v8940
    %v9101 = vadd.f32 %v8779, %v8941
    %v9102 = vadd.f32 %v8780, %v8942
    %v9103 = vadd.f32 %v8781, %v8943
    %v9104 = vadd.f32 %v8782, %v8944
    %v9105 = vadd.f32 %v8783, %v8945
    %v9106 = vadd.f32 %v8784, %v8946
    %v9107 = vadd.f32 %v8785, %v8947
    %v9108 = vadd.f32 %v8786, %v8948
    %v9109 = vadd.f32 %v8787, %v8949
    %v9110 = vadd.f32 %v8788, %v8950
    %v9111 = vadd.f32 %v8789, %v8951
    %v9112 = vadd.f32 %v8790, %v8952
    %v9113 = vadd.f32 %v8791, %v8953
    %v9114 = vadd.f32 %v8792, %v8954
    %v9115 = vadd.f32 %v8793, %v8955
    %v9116 = vadd.f32 %v8794, %v8956
    %v9117 = vadd.f32 %v8795, %v8957
    %v9118 = vadd.f32 %v8796, %v8958
    %v9119 = vadd.f32 %v8797, %v8959
    %v9120 = vadd.f32 %v8798, %v8960
    %v9121 = vadd.f32 %v8799, %v8961
    %v9122 = vadd.f32 %v8800, %v8962
    %v9123 = vadd.f32 %v8801, %v8963
    %v9124 = vadd.f32 %v8802, %v8964
    %v9125 = vadd.f32 %v8803, %v8965
    %v9126 = vadd.f32 %v8804, %v8966
    %v9127 = vadd.f32 %v8805, %v8967
    %v9128 = vadd.f32 %v8806, %v8968
    %v9129 = vadd.f32 %v8807, %v8969
    %v9130 = vadd.f32 %v8808, %v8970
    %v9131 = vadd.f32 %v8809, %v8971
    %v9132 = vadd.f32 %v8810, %v8972
    %v9133 = vadd.f32 %v8811, %v8973
    %v9134 = vadd.f32 %v8812, %v8974
    %v9135 = vadd.f32 %v8813, %v8975
    %v9136 = vadd.f32 %v8814, %v8976
    %v9137 = vadd.f32 %v8815, %v8977
    %v9138 = vadd.f32 %v8816, %v8978
    %v9139 = vadd.f32 %v8817, %v8979
    %v9140 = vadd.f32 %v8818, %v8980
    %v9141 = vadd.f32 %v8819, %v8981
    %v9142 = vadd.f32 %v8820, %v8982
    %v9143 = vadd.f32 %v8821, %v8983
    %v9144 = vadd.f32 %v8822, %v8984
    %v9145 = vadd.f32 %v8823, %v8985
    %v9146 = vadd.f32 %v8824, %v8986
    %v9147 = vadd.f32 %v8825, %v8987
    %v9148 = vadd.f32 %v8826, %v8988
    %v9149 = vadd.f32 %v8827, %v8989
    %v9150 = vadd.f32 %v8828, %v8990
    %v9151 = vadd.f32 %v8829, %v8991
    %v9152 = vadd.f32 %v8830, %v8992
    %v9153 = vadd.f32 %v8831, %v8993
    %v9154 = vadd.f32 %v8832, %v8994
    %v9155 = vadd.f32 %v8833, %v8995
    %v9156 = vadd.f32 %v8834, %v8996
    %v9157 = vadd.f32 %v8835, %v8997
    %v9158 = vadd.f32 %v8836, %v8998
    %v9159 = vadd.f32 %v8837, %v8999
    %v9160 = vadd.f32 %v8838, %v9000
    %v9161 = vadd.f32 %v8839, %v9001
    %v9162 = vadd.f32 %v8840, %v9002
    %v9163 = vadd.f32 %v8841, %v9003
    %v9164 = vadd.f32 %v8842, %v9004
    %v9165 = vadd.f32 %v8843, %v9005
    %v9166 = vadd.f32 %v8844, %v9006
    %v9167 = vadd.f32 %v8845, %v9007
    %v9168 = vadd.f32 %v8846, %v9008
    %v9169 = vadd.f32 %v8847, %v9009
    %v9170 = vadd.f32 %v8848, %v9010
    %v9171 = vadd.f32 %v8849, %v9011
    %v9172 = vadd.f32 %v8850, %v9012
    %v9173 = vadd.f32 %v8851, %v9013
    %v9174 = vadd.f32 %v8852, %v9014
    %v9175 = vadd.f32 %v8853, %v9015
    %v9176 = vadd.f32 %v8854, %v9016
    %v9177 = vadd.f32 %v8855, %v9017
    %v9178 = vadd.f32 %v8856, %v9018
    %v9179 = vadd.f32 %v8857, %v9019
    %v9180 = vadd.f32 %v8858, %v9020
    %v9181 = vadd.f32 %v8859, %v9021
    %v9182 = vadd.f32 %v8860, %v9022
    %v9183 = vadd.f32 %v8861, %v9023
    %v9184 = vadd.f32 %v8862, %v9024
    %v9185 = vadd.f32 %v8863, %v9025
    %v9186 = vadd.f32 %v8864, %v9026
    %v9187 = vadd.f32 %v8865, %v9027
    %v9188 = vadd.f32 %v8866, %v9028
    %v9189 = vadd.f32 %v8867, %v9029
    %v9190 = vadd.f32 %v8868, %v9030
    %v9191 = vadd.f32 %v8869, %v9031
    %v9192 = vadd.f32 %v8870, %v9032
    %v9193 = vadd.f32 %v8871, %v9033
    %v9194 = vadd.f32 %v8872, %v9034
    %v9195 = vadd.f32 %v8873, %v9035
    %v9196 = vadd.f32 %v8874, %v9036
    %v9197 = vadd.f32 %v8875, %v9037
    %v9198 = vadd.f32 %v8876, %v9038
    %v9199 = vadd.f32 %v8877, %v9039
    %v9200 = vadd.f32 %v8878, %v9040
    %v9201 = vadd.f32 %v8879, %v9041
    %v9202 = vadd.f32 %v8880, %v9042
    %v9203 = vadd.f32 %v8881, %v9043
    %v9204 = vadd.f32 %v8882, %v9044
    %v9205 = vadd.f32 %v8883, %v9045
    %v9206 = vadd.f32 %v8884, %v9046
    %v9207 = vadd.f32 %v8885, %v9047
    %v9208 = vadd.f32 %v8886, %v9048
    %v9209 = vadd.f32 %v8887, %v9049
    %v9210 = vadd.f32 %v8888, %v9050
    %v9211 = vadd.f32 %v8889, %v9051
    %v9212 = vadd.f32 %v8890, %v9052
    %v9213 = vadd.f32 %v8891, %v9053
    %v9214 = vadd.f32 %v8892, %v9054
    %v9215 = vadd.f32 %v8893, %v9055
    %v9216 = vadd.f32 %v8894, %v9056
    %v9217 = vadd.f32 %v8895, %v9057
    %v9218 = vadd.f32 %v8896, %v9058
    %v9219 = vadd.f32 %v8897, %v9059
    %v9220 = vadd.f32 %v8898, %v9060
    %v9221 = vadd.f32 %v8899, %v9061
    %v9222 = vadd.f32 %v8900, %v9062
    %v9223 = vadd.f32 %v8901, %v9063
    %v9224 = vadd.f32 %v8902, %v9064
    %v9225 = vadd.f32 %v8903, %v9065
    %v9226 = vadd.f32 %v8904, %v9066
    %v9227 = vadd.f32 %v8905, %v9067
    %s9228 = sld [smem:[#allocation7 + $0x14]]
    %v9229 = vstv %s9228
    %v9230 = vmul.f32 %v697, %v9229
    %v9231 = vmul.f32 %v699, %v9229
    %v9232 = vmul.f32 %v701, %v9229
    %v9233 = vmul.f32 %v703, %v9229
    %v9234 = vmul.f32 %v705, %v9229
    %v9235 = vmul.f32 %v707, %v9229
    %v9236 = vmul.f32 %v709, %v9229
    %v9237 = vmul.f32 %v711, %v9229
    %v9238 = vmul.f32 %v713, %v9229
    %v9239 = vmul.f32 %v715, %v9229
    %v9240 = vmul.f32 %v717, %v9229
    %v9241 = vmul.f32 %v719, %v9229
    %v9242 = vmul.f32 %v721, %v9229
    %v9243 = vmul.f32 %v723, %v9229
    %v9244 = vmul.f32 %v725, %v9229
    %v9245 = vmul.f32 %v727, %v9229
    %v9246 = vmul.f32 %v729, %v9229
    %v9247 = vmul.f32 %v731, %v9229
    %v9248 = vmul.f32 %v733, %v9229
    %v9249 = vmul.f32 %v735, %v9229
    %v9250 = vmul.f32 %v737, %v9229
    %v9251 = vmul.f32 %v739, %v9229
    %v9252 = vmul.f32 %v741, %v9229
    %v9253 = vmul.f32 %v743, %v9229
    %v9254 = vmul.f32 %v745, %v9229
    %v9255 = vmul.f32 %v747, %v9229
    %v9256 = vmul.f32 %v749, %v9229
    %v9257 = vmul.f32 %v751, %v9229
    %v9258 = vmul.f32 %v753, %v9229
    %v9259 = vmul.f32 %v755, %v9229
    %v9260 = vmul.f32 %v757, %v9229
    %v9261 = vmul.f32 %v759, %v9229
    %v9262 = vmul.f32 %v761, %v9229
    %v9263 = vmul.f32 %v763, %v9229
    %v9264 = vmul.f32 %v765, %v9229
    %v9265 = vmul.f32 %v767, %v9229
    %v9266 = vmul.f32 %v769, %v9229
    %v9267 = vmul.f32 %v771, %v9229
    %v9268 = vmul.f32 %v773, %v9229
    %v9269 = vmul.f32 %v775, %v9229
    %v9270 = vmul.f32 %v777, %v9229
    %v9271 = vmul.f32 %v779, %v9229
    %v9272 = vmul.f32 %v781, %v9229
    %v9273 = vmul.f32 %v783, %v9229
    %v9274 = vmul.f32 %v785, %v9229
    %v9275 = vmul.f32 %v787, %v9229
    %v9276 = vmul.f32 %v789, %v9229
    %v9277 = vmul.f32 %v791, %v9229
    %v9278 = vmul.f32 %v793, %v9229
    %v9279 = vmul.f32 %v795, %v9229
    %v9280 = vmul.f32 %v797, %v9229
    %v9281 = vmul.f32 %v799, %v9229
    %v9282 = vmul.f32 %v801, %v9229
    %v9283 = vmul.f32 %v803, %v9229
    %v9284 = vmul.f32 %v805, %v9229
    %v9285 = vmul.f32 %v807, %v9229
    %v9286 = vmul.f32 %v809, %v9229
    %v9287 = vmul.f32 %v811, %v9229
    %v9288 = vmul.f32 %v813, %v9229
    %v9289 = vmul.f32 %v815, %v9229
    %v9290 = vmul.f32 %v817, %v9229
    %v9291 = vmul.f32 %v819, %v9229
    %v9292 = vmul.f32 %v821, %v9229
    %v9293 = vmul.f32 %v823, %v9229
    %v9294 = vmul.f32 %v825, %v9229
    %v9295 = vmul.f32 %v827, %v9229
    %v9296 = vmul.f32 %v829, %v9229
    %v9297 = vmul.f32 %v831, %v9229
    %v9298 = vmul.f32 %v833, %v9229
    %v9299 = vmul.f32 %v835, %v9229
    %v9300 = vmul.f32 %v837, %v9229
    %v9301 = vmul.f32 %v839, %v9229
    %v9302 = vmul.f32 %v841, %v9229
    %v9303 = vmul.f32 %v843, %v9229
    %v9304 = vmul.f32 %v845, %v9229
    %v9305 = vmul.f32 %v847, %v9229
    %v9306 = vmul.f32 %v849, %v9229
    %v9307 = vmul.f32 %v851, %v9229
    %v9308 = vmul.f32 %v853, %v9229
    %v9309 = vmul.f32 %v855, %v9229
    %v9310 = vmul.f32 %v857, %v9229
    %v9311 = vmul.f32 %v859, %v9229
    %v9312 = vmul.f32 %v861, %v9229
    %v9313 = vmul.f32 %v863, %v9229
    %v9314 = vmul.f32 %v865, %v9229
    %v9315 = vmul.f32 %v867, %v9229
    %v9316 = vmul.f32 %v869, %v9229
    %v9317 = vmul.f32 %v871, %v9229
    %v9318 = vmul.f32 %v873, %v9229
    %v9319 = vmul.f32 %v875, %v9229
    %v9320 = vmul.f32 %v877, %v9229
    %v9321 = vmul.f32 %v879, %v9229
    %v9322 = vmul.f32 %v881, %v9229
    %v9323 = vmul.f32 %v883, %v9229
    %v9324 = vmul.f32 %v885, %v9229
    %v9325 = vmul.f32 %v887, %v9229
    %v9326 = vmul.f32 %v889, %v9229
    %v9327 = vmul.f32 %v891, %v9229
    %v9328 = vmul.f32 %v893, %v9229
    %v9329 = vmul.f32 %v895, %v9229
    %v9330 = vmul.f32 %v897, %v9229
    %v9331 = vmul.f32 %v899, %v9229
    %v9332 = vmul.f32 %v901, %v9229
    %v9333 = vmul.f32 %v903, %v9229
    %v9334 = vmul.f32 %v905, %v9229
    %v9335 = vmul.f32 %v907, %v9229
    %v9336 = vmul.f32 %v909, %v9229
    %v9337 = vmul.f32 %v911, %v9229
    %v9338 = vmul.f32 %v913, %v9229
    %v9339 = vmul.f32 %v915, %v9229
    %v9340 = vmul.f32 %v917, %v9229
    %v9341 = vmul.f32 %v919, %v9229
    %v9342 = vmul.f32 %v921, %v9229
    %v9343 = vmul.f32 %v923, %v9229
    %v9344 = vmul.f32 %v925, %v9229
    %v9345 = vmul.f32 %v927, %v9229
    %v9346 = vmul.f32 %v929, %v9229
    %v9347 = vmul.f32 %v931, %v9229
    %v9348 = vmul.f32 %v933, %v9229
    %v9349 = vmul.f32 %v935, %v9229
    %v9350 = vmul.f32 %v937, %v9229
    %v9351 = vmul.f32 %v939, %v9229
    %v9352 = vmul.f32 %v941, %v9229
    %v9353 = vmul.f32 %v943, %v9229
    %v9354 = vmul.f32 %v945, %v9229
    %v9355 = vmul.f32 %v947, %v9229
    %v9356 = vmul.f32 %v949, %v9229
    %v9357 = vmul.f32 %v951, %v9229
    %v9358 = vmul.f32 %v953, %v9229
    %v9359 = vmul.f32 %v955, %v9229
    %v9360 = vmul.f32 %v957, %v9229
    %v9361 = vmul.f32 %v959, %v9229
    %v9362 = vmul.f32 %v961, %v9229
    %v9363 = vmul.f32 %v963, %v9229
    %v9364 = vmul.f32 %v965, %v9229
    %v9365 = vmul.f32 %v967, %v9229
    %v9366 = vmul.f32 %v969, %v9229
    %v9367 = vmul.f32 %v971, %v9229
    %v9368 = vmul.f32 %v973, %v9229
    %v9369 = vmul.f32 %v975, %v9229
    %v9370 = vmul.f32 %v977, %v9229
    %v9371 = vmul.f32 %v979, %v9229
    %v9372 = vmul.f32 %v981, %v9229
    %v9373 = vmul.f32 %v983, %v9229
    %v9374 = vmul.f32 %v985, %v9229
    %v9375 = vmul.f32 %v987, %v9229
    %v9376 = vmul.f32 %v989, %v9229
    %v9377 = vmul.f32 %v991, %v9229
    %v9378 = vmul.f32 %v993, %v9229
    %v9379 = vmul.f32 %v995, %v9229
    %v9380 = vmul.f32 %v997, %v9229
    %v9381 = vmul.f32 %v999, %v9229
    %v9382 = vmul.f32 %v1001, %v9229
    %v9383 = vmul.f32 %v1003, %v9229
    %v9384 = vmul.f32 %v1005, %v9229
    %v9385 = vmul.f32 %v1007, %v9229
    %v9386 = vmul.f32 %v1009, %v9229
    %v9387 = vmul.f32 %v1011, %v9229
    %v9388 = vmul.f32 %v1013, %v9229
    %v9389 = vmul.f32 %v1015, %v9229
    %v9390 = vadd.f32 %v9068, %v9230
    %v9391 = vadd.f32 %v9069, %v9231
    %v9392 = vadd.f32 %v9070, %v9232
    %v9393 = vadd.f32 %v9071, %v9233
    %v9394 = vadd.f32 %v9072, %v9234
    %v9395 = vadd.f32 %v9073, %v9235
    %v9396 = vadd.f32 %v9074, %v9236
    %v9397 = vadd.f32 %v9075, %v9237
    %v9398 = vadd.f32 %v9076, %v9238
    %v9399 = vadd.f32 %v9077, %v9239
    %v9400 = vadd.f32 %v9078, %v9240
    %v9401 = vadd.f32 %v9079, %v9241
    %v9402 = vadd.f32 %v9080, %v9242
    %v9403 = vadd.f32 %v9081, %v9243
    %v9404 = vadd.f32 %v9082, %v9244
    %v9405 = vadd.f32 %v9083, %v9245
    %v9406 = vadd.f32 %v9084, %v9246
    %v9407 = vadd.f32 %v9085, %v9247
    %v9408 = vadd.f32 %v9086, %v9248
    %v9409 = vadd.f32 %v9087, %v9249
    %v9410 = vadd.f32 %v9088, %v9250
    %v9411 = vadd.f32 %v9089, %v9251
    %v9412 = vadd.f32 %v9090, %v9252
    %v9413 = vadd.f32 %v9091, %v9253
    %v9414 = vadd.f32 %v9092, %v9254
    %v9415 = vadd.f32 %v9093, %v9255
    %v9416 = vadd.f32 %v9094, %v9256
    %v9417 = vadd.f32 %v9095, %v9257
    %v9418 = vadd.f32 %v9096, %v9258
    %v9419 = vadd.f32 %v9097, %v9259
    %v9420 = vadd.f32 %v9098, %v9260
    %v9421 = vadd.f32 %v9099, %v9261
    %v9422 = vadd.f32 %v9100, %v9262
    %v9423 = vadd.f32 %v9101, %v9263
    %v9424 = vadd.f32 %v9102, %v9264
    %v9425 = vadd.f32 %v9103, %v9265
    %v9426 = vadd.f32 %v9104, %v9266
    %v9427 = vadd.f32 %v9105, %v9267
    %v9428 = vadd.f32 %v9106, %v9268
    %v9429 = vadd.f32 %v9107, %v9269
    %v9430 = vadd.f32 %v9108, %v9270
    %v9431 = vadd.f32 %v9109, %v9271
    %v9432 = vadd.f32 %v9110, %v9272
    %v9433 = vadd.f32 %v9111, %v9273
    %v9434 = vadd.f32 %v9112, %v9274
    %v9435 = vadd.f32 %v9113, %v9275
    %v9436 = vadd.f32 %v9114, %v9276
    %v9437 = vadd.f32 %v9115, %v9277
    %v9438 = vadd.f32 %v9116, %v9278
    %v9439 = vadd.f32 %v9117, %v9279
    %v9440 = vadd.f32 %v9118, %v9280
    %v9441 = vadd.f32 %v9119, %v9281
    %v9442 = vadd.f32 %v9120, %v9282
    %v9443 = vadd.f32 %v9121, %v9283
    %v9444 = vadd.f32 %v9122, %v9284
    %v9445 = vadd.f32 %v9123, %v9285
    %v9446 = vadd.f32 %v9124, %v9286
    %v9447 = vadd.f32 %v9125, %v9287
    %v9448 = vadd.f32 %v9126, %v9288
    %v9449 = vadd.f32 %v9127, %v9289
    %v9450 = vadd.f32 %v9128, %v9290
    %v9451 = vadd.f32 %v9129, %v9291
    %v9452 = vadd.f32 %v9130, %v9292
    %v9453 = vadd.f32 %v9131, %v9293
    %v9454 = vadd.f32 %v9132, %v9294
    %v9455 = vadd.f32 %v9133, %v9295
    %v9456 = vadd.f32 %v9134, %v9296
    %v9457 = vadd.f32 %v9135, %v9297
    %v9458 = vadd.f32 %v9136, %v9298
    %v9459 = vadd.f32 %v9137, %v9299
    %v9460 = vadd.f32 %v9138, %v9300
    %v9461 = vadd.f32 %v9139, %v9301
    %v9462 = vadd.f32 %v9140, %v9302
    %v9463 = vadd.f32 %v9141, %v9303
    %v9464 = vadd.f32 %v9142, %v9304
    %v9465 = vadd.f32 %v9143, %v9305
    %v9466 = vadd.f32 %v9144, %v9306
    %v9467 = vadd.f32 %v9145, %v9307
    %v9468 = vadd.f32 %v9146, %v9308
    %v9469 = vadd.f32 %v9147, %v9309
    %v9470 = vadd.f32 %v9148, %v9310
    %v9471 = vadd.f32 %v9149, %v9311
    %v9472 = vadd.f32 %v9150, %v9312
    %v9473 = vadd.f32 %v9151, %v9313
    %v9474 = vadd.f32 %v9152, %v9314
    %v9475 = vadd.f32 %v9153, %v9315
    %v9476 = vadd.f32 %v9154, %v9316
    %v9477 = vadd.f32 %v9155, %v9317
    %v9478 = vadd.f32 %v9156, %v9318
    %v9479 = vadd.f32 %v9157, %v9319
    %v9480 = vadd.f32 %v9158, %v9320
    %v9481 = vadd.f32 %v9159, %v9321
    %v9482 = vadd.f32 %v9160, %v9322
    %v9483 = vadd.f32 %v9161, %v9323
    %v9484 = vadd.f32 %v9162, %v9324
    %v9485 = vadd.f32 %v9163, %v9325
    %v9486 = vadd.f32 %v9164, %v9326
    %v9487 = vadd.f32 %v9165, %v9327
    %v9488 = vadd.f32 %v9166, %v9328
    %v9489 = vadd.f32 %v9167, %v9329
    %v9490 = vadd.f32 %v9168, %v9330
    %v9491 = vadd.f32 %v9169, %v9331
    %v9492 = vadd.f32 %v9170, %v9332
    %v9493 = vadd.f32 %v9171, %v9333
    %v9494 = vadd.f32 %v9172, %v9334
    %v9495 = vadd.f32 %v9173, %v9335
    %v9496 = vadd.f32 %v9174, %v9336
    %v9497 = vadd.f32 %v9175, %v9337
    %v9498 = vadd.f32 %v9176, %v9338
    %v9499 = vadd.f32 %v9177, %v9339
    %v9500 = vadd.f32 %v9178, %v9340
    %v9501 = vadd.f32 %v9179, %v9341
    %v9502 = vadd.f32 %v9180, %v9342
    %v9503 = vadd.f32 %v9181, %v9343
    %v9504 = vadd.f32 %v9182, %v9344
    %v9505 = vadd.f32 %v9183, %v9345
    %v9506 = vadd.f32 %v9184, %v9346
    %v9507 = vadd.f32 %v9185, %v9347
    %v9508 = vadd.f32 %v9186, %v9348
    %v9509 = vadd.f32 %v9187, %v9349
    %v9510 = vadd.f32 %v9188, %v9350
    %v9511 = vadd.f32 %v9189, %v9351
    %v9512 = vadd.f32 %v9190, %v9352
    %v9513 = vadd.f32 %v9191, %v9353
    %v9514 = vadd.f32 %v9192, %v9354
    %v9515 = vadd.f32 %v9193, %v9355
    %v9516 = vadd.f32 %v9194, %v9356
    %v9517 = vadd.f32 %v9195, %v9357
    %v9518 = vadd.f32 %v9196, %v9358
    %v9519 = vadd.f32 %v9197, %v9359
    %v9520 = vadd.f32 %v9198, %v9360
    %v9521 = vadd.f32 %v9199, %v9361
    %v9522 = vadd.f32 %v9200, %v9362
    %v9523 = vadd.f32 %v9201, %v9363
    %v9524 = vadd.f32 %v9202, %v9364
    %v9525 = vadd.f32 %v9203, %v9365
    %v9526 = vadd.f32 %v9204, %v9366
    %v9527 = vadd.f32 %v9205, %v9367
    %v9528 = vadd.f32 %v9206, %v9368
    %v9529 = vadd.f32 %v9207, %v9369
    %v9530 = vadd.f32 %v9208, %v9370
    %v9531 = vadd.f32 %v9209, %v9371
    %v9532 = vadd.f32 %v9210, %v9372
    %v9533 = vadd.f32 %v9211, %v9373
    %v9534 = vadd.f32 %v9212, %v9374
    %v9535 = vadd.f32 %v9213, %v9375
    %v9536 = vadd.f32 %v9214, %v9376
    %v9537 = vadd.f32 %v9215, %v9377
    %v9538 = vadd.f32 %v9216, %v9378
    %v9539 = vadd.f32 %v9217, %v9379
    %v9540 = vadd.f32 %v9218, %v9380
    %v9541 = vadd.f32 %v9219, %v9381
    %v9542 = vadd.f32 %v9220, %v9382
    %v9543 = vadd.f32 %v9221, %v9383
    %v9544 = vadd.f32 %v9222, %v9384
    %v9545 = vadd.f32 %v9223, %v9385
    %v9546 = vadd.f32 %v9224, %v9386
    %v9547 = vadd.f32 %v9225, %v9387
    %v9548 = vadd.f32 %v9226, %v9388
    %v9549 = vadd.f32 %v9227, %v9389
    %s9550 = sld [smem:[#allocation8 + $0x6]]
    %v9551 = vstv %s9550
    %v9552 = vadd.f32 %v9390, %v9551
    %v9553 = vadd.f32 %v9391, %v9551
    %v9554 = vadd.f32 %v9392, %v9551
    %v9555 = vadd.f32 %v9393, %v9551
    %v9556 = vadd.f32 %v9394, %v9551
    %v9557 = vadd.f32 %v9395, %v9551
    %v9558 = vadd.f32 %v9396, %v9551
    %v9559 = vadd.f32 %v9397, %v9551
    %v9560 = vadd.f32 %v9398, %v9551
    %v9561 = vadd.f32 %v9399, %v9551
    %v9562 = vadd.f32 %v9400, %v9551
    %v9563 = vadd.f32 %v9401, %v9551
    %v9564 = vadd.f32 %v9402, %v9551
    %v9565 = vadd.f32 %v9403, %v9551
    %v9566 = vadd.f32 %v9404, %v9551
    %v9567 = vadd.f32 %v9405, %v9551
    %v9568 = vadd.f32 %v9406, %v9551
    %v9569 = vadd.f32 %v9407, %v9551
    %v9570 = vadd.f32 %v9408, %v9551
    %v9571 = vadd.f32 %v9409, %v9551
    %v9572 = vadd.f32 %v9410, %v9551
    %v9573 = vadd.f32 %v9411, %v9551
    %v9574 = vadd.f32 %v9412, %v9551
    %v9575 = vadd.f32 %v9413, %v9551
    %v9576 = vadd.f32 %v9414, %v9551
    %v9577 = vadd.f32 %v9415, %v9551
    %v9578 = vadd.f32 %v9416, %v9551
    %v9579 = vadd.f32 %v9417, %v9551
    %v9580 = vadd.f32 %v9418, %v9551
    %v9581 = vadd.f32 %v9419, %v9551
    %v9582 = vadd.f32 %v9420, %v9551
    %v9583 = vadd.f32 %v9421, %v9551
    %v9584 = vadd.f32 %v9422, %v9551
    %v9585 = vadd.f32 %v9423, %v9551
    %v9586 = vadd.f32 %v9424, %v9551
    %v9587 = vadd.f32 %v9425, %v9551
    %v9588 = vadd.f32 %v9426, %v9551
    %v9589 = vadd.f32 %v9427, %v9551
    %v9590 = vadd.f32 %v9428, %v9551
    %v9591 = vadd.f32 %v9429, %v9551
    %v9592 = vadd.f32 %v9430, %v9551
    %v9593 = vadd.f32 %v9431, %v9551
    %v9594 = vadd.f32 %v9432, %v9551
    %v9595 = vadd.f32 %v9433, %v9551
    %v9596 = vadd.f32 %v9434, %v9551
    %v9597 = vadd.f32 %v9435, %v9551
    %v9598 = vadd.f32 %v9436, %v9551
    %v9599 = vadd.f32 %v9437, %v9551
    %v9600 = vadd.f32 %v9438, %v9551
    %v9601 = vadd.f32 %v9439, %v9551
    %v9602 = vadd.f32 %v9440, %v9551
    %v9603 = vadd.f32 %v9441, %v9551
    %v9604 = vadd.f32 %v9442, %v9551
    %v9605 = vadd.f32 %v9443, %v9551
    %v9606 = vadd.f32 %v9444, %v9551
    %v9607 = vadd.f32 %v9445, %v9551
    %v9608 = vadd.f32 %v9446, %v9551
    %v9609 = vadd.f32 %v9447, %v9551
    %v9610 = vadd.f32 %v9448, %v9551
    %v9611 = vadd.f32 %v9449, %v9551
    %v9612 = vadd.f32 %v9450, %v9551
    %v9613 = vadd.f32 %v9451, %v9551
    %v9614 = vadd.f32 %v9452, %v9551
    %v9615 = vadd.f32 %v9453, %v9551
    %v9616 = vadd.f32 %v9454, %v9551
    %v9617 = vadd.f32 %v9455, %v9551
    %v9618 = vadd.f32 %v9456, %v9551
    %v9619 = vadd.f32 %v9457, %v9551
    %v9620 = vadd.f32 %v9458, %v9551
    %v9621 = vadd.f32 %v9459, %v9551
    %v9622 = vadd.f32 %v9460, %v9551
    %v9623 = vadd.f32 %v9461, %v9551
    %v9624 = vadd.f32 %v9462, %v9551
    %v9625 = vadd.f32 %v9463, %v9551
    %v9626 = vadd.f32 %v9464, %v9551
    %v9627 = vadd.f32 %v9465, %v9551
    %v9628 = vadd.f32 %v9466, %v9551
    %v9629 = vadd.f32 %v9467, %v9551
    %v9630 = vadd.f32 %v9468, %v9551
    %v9631 = vadd.f32 %v9469, %v9551
    %v9632 = vadd.f32 %v9470, %v9551
    %v9633 = vadd.f32 %v9471, %v9551
    %v9634 = vadd.f32 %v9472, %v9551
    %v9635 = vadd.f32 %v9473, %v9551
    %v9636 = vadd.f32 %v9474, %v9551
    %v9637 = vadd.f32 %v9475, %v9551
    %v9638 = vadd.f32 %v9476, %v9551
    %v9639 = vadd.f32 %v9477, %v9551
    %v9640 = vadd.f32 %v9478, %v9551
    %v9641 = vadd.f32 %v9479, %v9551
    %v9642 = vadd.f32 %v9480, %v9551
    %v9643 = vadd.f32 %v9481, %v9551
    %v9644 = vadd.f32 %v9482, %v9551
    %v9645 = vadd.f32 %v9483, %v9551
    %v9646 = vadd.f32 %v9484, %v9551
    %v9647 = vadd.f32 %v9485, %v9551
    %v9648 = vadd.f32 %v9486, %v9551
    %v9649 = vadd.f32 %v9487, %v9551
    %v9650 = vadd.f32 %v9488, %v9551
    %v9651 = vadd.f32 %v9489, %v9551
    %v9652 = vadd.f32 %v9490, %v9551
    %v9653 = vadd.f32 %v9491, %v9551
    %v9654 = vadd.f32 %v9492, %v9551
    %v9655 = vadd.f32 %v9493, %v9551
    %v9656 = vadd.f32 %v9494, %v9551
    %v9657 = vadd.f32 %v9495, %v9551
    %v9658 = vadd.f32 %v9496, %v9551
    %v9659 = vadd.f32 %v9497, %v9551
    %v9660 = vadd.f32 %v9498, %v9551
    %v9661 = vadd.f32 %v9499, %v9551
    %v9662 = vadd.f32 %v9500, %v9551
    %v9663 = vadd.f32 %v9501, %v9551
    %v9664 = vadd.f32 %v9502, %v9551
    %v9665 = vadd.f32 %v9503, %v9551
    %v9666 = vadd.f32 %v9504, %v9551
    %v9667 = vadd.f32 %v9505, %v9551
    %v9668 = vadd.f32 %v9506, %v9551
    %v9669 = vadd.f32 %v9507, %v9551
    %v9670 = vadd.f32 %v9508, %v9551
    %v9671 = vadd.f32 %v9509, %v9551
    %v9672 = vadd.f32 %v9510, %v9551
    %v9673 = vadd.f32 %v9511, %v9551
    %v9674 = vadd.f32 %v9512, %v9551
    %v9675 = vadd.f32 %v9513, %v9551
    %v9676 = vadd.f32 %v9514, %v9551
    %v9677 = vadd.f32 %v9515, %v9551
    %v9678 = vadd.f32 %v9516, %v9551
    %v9679 = vadd.f32 %v9517, %v9551
    %v9680 = vadd.f32 %v9518, %v9551
    %v9681 = vadd.f32 %v9519, %v9551
    %v9682 = vadd.f32 %v9520, %v9551
    %v9683 = vadd.f32 %v9521, %v9551
    %v9684 = vadd.f32 %v9522, %v9551
    %v9685 = vadd.f32 %v9523, %v9551
    %v9686 = vadd.f32 %v9524, %v9551
    %v9687 = vadd.f32 %v9525, %v9551
    %v9688 = vadd.f32 %v9526, %v9551
    %v9689 = vadd.f32 %v9527, %v9551
    %v9690 = vadd.f32 %v9528, %v9551
    %v9691 = vadd.f32 %v9529, %v9551
    %v9692 = vadd.f32 %v9530, %v9551
    %v9693 = vadd.f32 %v9531, %v9551
    %v9694 = vadd.f32 %v9532, %v9551
    %v9695 = vadd.f32 %v9533, %v9551
    %v9696 = vadd.f32 %v9534, %v9551
    %v9697 = vadd.f32 %v9535, %v9551
    %v9698 = vadd.f32 %v9536, %v9551
    %v9699 = vadd.f32 %v9537, %v9551
    %v9700 = vadd.f32 %v9538, %v9551
    %v9701 = vadd.f32 %v9539, %v9551
    %v9702 = vadd.f32 %v9540, %v9551
    %v9703 = vadd.f32 %v9541, %v9551
    %v9704 = vadd.f32 %v9542, %v9551
    %v9705 = vadd.f32 %v9543, %v9551
    %v9706 = vadd.f32 %v9544, %v9551
    %v9707 = vadd.f32 %v9545, %v9551
    %v9708 = vadd.f32 %v9546, %v9551
    %v9709 = vadd.f32 %v9547, %v9551
    %v9710 = vadd.f32 %v9548, %v9551
    %v9711 = vadd.f32 %v9549, %v9551
    %v9712 = vmax.f32 %v9552, 0.0
    %v9713 = vmax.f32 %v9553, 0.0
    %v9714 = vmax.f32 %v9554, 0.0
    %v9715 = vmax.f32 %v9555, 0.0
    %v9716 = vmax.f32 %v9556, 0.0
    %v9717 = vmax.f32 %v9557, 0.0
    %v9718 = vmax.f32 %v9558, 0.0
    %v9719 = vmax.f32 %v9559, 0.0
    %v9720 = vmax.f32 %v9560, 0.0
    %v9721 = vmax.f32 %v9561, 0.0
    %v9722 = vmax.f32 %v9562, 0.0
    %v9723 = vmax.f32 %v9563, 0.0
    %v9724 = vmax.f32 %v9564, 0.0
    %v9725 = vmax.f32 %v9565, 0.0
    %v9726 = vmax.f32 %v9566, 0.0
    %v9727 = vmax.f32 %v9567, 0.0
    %v9728 = vmax.f32 %v9568, 0.0
    %v9729 = vmax.f32 %v9569, 0.0
    %v9730 = vmax.f32 %v9570, 0.0
    %v9731 = vmax.f32 %v9571, 0.0
    %v9732 = vmax.f32 %v9572, 0.0
    %v9733 = vmax.f32 %v9573, 0.0
    %v9734 = vmax.f32 %v9574, 0.0
    %v9735 = vmax.f32 %v9575, 0.0
    %v9736 = vmax.f32 %v9576, 0.0
    %v9737 = vmax.f32 %v9577, 0.0
    %v9738 = vmax.f32 %v9578, 0.0
    %v9739 = vmax.f32 %v9579, 0.0
    %v9740 = vmax.f32 %v9580, 0.0
    %v9741 = vmax.f32 %v9581, 0.0
    %v9742 = vmax.f32 %v9582, 0.0
    %v9743 = vmax.f32 %v9583, 0.0
    %v9744 = vmax.f32 %v9584, 0.0
    %v9745 = vmax.f32 %v9585, 0.0
    %v9746 = vmax.f32 %v9586, 0.0
    %v9747 = vmax.f32 %v9587, 0.0
    %v9748 = vmax.f32 %v9588, 0.0
    %v9749 = vmax.f32 %v9589, 0.0
    %v9750 = vmax.f32 %v9590, 0.0
    %v9751 = vmax.f32 %v9591, 0.0
    %v9752 = vmax.f32 %v9592, 0.0
    %v9753 = vmax.f32 %v9593, 0.0
    %v9754 = vmax.f32 %v9594, 0.0
    %v9755 = vmax.f32 %v9595, 0.0
    %v9756 = vmax.f32 %v9596, 0.0
    %v9757 = vmax.f32 %v9597, 0.0
    %v9758 = vmax.f32 %v9598, 0.0
    %v9759 = vmax.f32 %v9599, 0.0
    %v9760 = vmax.f32 %v9600, 0.0
    %v9761 = vmax.f32 %v9601, 0.0
    %v9762 = vmax.f32 %v9602, 0.0
    %v9763 = vmax.f32 %v9603, 0.0
    %v9764 = vmax.f32 %v9604, 0.0
    %v9765 = vmax.f32 %v9605, 0.0
    %v9766 = vmax.f32 %v9606, 0.0
    %v9767 = vmax.f32 %v9607, 0.0
    %v9768 = vmax.f32 %v9608, 0.0
    %v9769 = vmax.f32 %v9609, 0.0
    %v9770 = vmax.f32 %v9610, 0.0
    %v9771 = vmax.f32 %v9611, 0.0
    %v9772 = vmax.f32 %v9612, 0.0
    %v9773 = vmax.f32 %v9613, 0.0
    %v9774 = vmax.f32 %v9614, 0.0
    %v9775 = vmax.f32 %v9615, 0.0
    %v9776 = vmax.f32 %v9616, 0.0
    %v9777 = vmax.f32 %v9617, 0.0
    %v9778 = vmax.f32 %v9618, 0.0
    %v9779 = vmax.f32 %v9619, 0.0
    %v9780 = vmax.f32 %v9620, 0.0
    %v9781 = vmax.f32 %v9621, 0.0
    %v9782 = vmax.f32 %v9622, 0.0
    %v9783 = vmax.f32 %v9623, 0.0
    %v9784 = vmax.f32 %v9624, 0.0
    %v9785 = vmax.f32 %v9625, 0.0
    %v9786 = vmax.f32 %v9626, 0.0
    %v9787 = vmax.f32 %v9627, 0.0
    %v9788 = vmax.f32 %v9628, 0.0
    %v9789 = vmax.f32 %v9629, 0.0
    %v9790 = vmax.f32 %v9630, 0.0
    %v9791 = vmax.f32 %v9631, 0.0
    %v9792 = vmax.f32 %v9632, 0.0
    %v9793 = vmax.f32 %v9633, 0.0
    %v9794 = vmax.f32 %v9634, 0.0
    %v9795 = vmax.f32 %v9635, 0.0
    %v9796 = vmax.f32 %v9636, 0.0
    %v9797 = vmax.f32 %v9637, 0.0
    %v9798 = vmax.f32 %v9638, 0.0
    %v9799 = vmax.f32 %v9639, 0.0
    %v9800 = vmax.f32 %v9640, 0.0
    %v9801 = vmax.f32 %v9641, 0.0
    %v9802 = vmax.f32 %v9642, 0.0
    %v9803 = vmax.f32 %v9643, 0.0
    %v9804 = vmax.f32 %v9644, 0.0
    %v9805 = vmax.f32 %v9645, 0.0
    %v9806 = vmax.f32 %v9646, 0.0
    %v9807 = vmax.f32 %v9647, 0.0
    %v9808 = vmax.f32 %v9648, 0.0
    %v9809 = vmax.f32 %v9649, 0.0
    %v9810 = vmax.f32 %v9650, 0.0
    %v9811 = vmax.f32 %v9651, 0.0
    %v9812 = vmax.f32 %v9652, 0.0
    %v9813 = vmax.f32 %v9653, 0.0
    %v9814 = vmax.f32 %v9654, 0.0
    %v9815 = vmax.f32 %v9655, 0.0
    %v9816 = vmax.f32 %v9656, 0.0
    %v9817 = vmax.f32 %v9657, 0.0
    %v9818 = vmax.f32 %v9658, 0.0
    %v9819 = vmax.f32 %v9659, 0.0
    %v9820 = vmax.f32 %v9660, 0.0
    %v9821 = vmax.f32 %v9661, 0.0
    %v9822 = vmax.f32 %v9662, 0.0
    %v9823 = vmax.f32 %v9663, 0.0
    %v9824 = vmax.f32 %v9664, 0.0
    %v9825 = vmax.f32 %v9665, 0.0
    %v9826 = vmax.f32 %v9666, 0.0
    %v9827 = vmax.f32 %v9667, 0.0
    %v9828 = vmax.f32 %v9668, 0.0
    %v9829 = vmax.f32 %v9669, 0.0
    %v9830 = vmax.f32 %v9670, 0.0
    %v9831 = vmax.f32 %v9671, 0.0
    %v9832 = vmax.f32 %v9672, 0.0
    %v9833 = vmax.f32 %v9673, 0.0
    %v9834 = vmax.f32 %v9674, 0.0
    %v9835 = vmax.f32 %v9675, 0.0
    %v9836 = vmax.f32 %v9676, 0.0
    %v9837 = vmax.f32 %v9677, 0.0
    %v9838 = vmax.f32 %v9678, 0.0
    %v9839 = vmax.f32 %v9679, 0.0
    %v9840 = vmax.f32 %v9680, 0.0
    %v9841 = vmax.f32 %v9681, 0.0
    %v9842 = vmax.f32 %v9682, 0.0
    %v9843 = vmax.f32 %v9683, 0.0
    %v9844 = vmax.f32 %v9684, 0.0
    %v9845 = vmax.f32 %v9685, 0.0
    %v9846 = vmax.f32 %v9686, 0.0
    %v9847 = vmax.f32 %v9687, 0.0
    %v9848 = vmax.f32 %v9688, 0.0
    %v9849 = vmax.f32 %v9689, 0.0
    %v9850 = vmax.f32 %v9690, 0.0
    %v9851 = vmax.f32 %v9691, 0.0
    %v9852 = vmax.f32 %v9692, 0.0
    %v9853 = vmax.f32 %v9693, 0.0
    %v9854 = vmax.f32 %v9694, 0.0
    %v9855 = vmax.f32 %v9695, 0.0
    %v9856 = vmax.f32 %v9696, 0.0
    %v9857 = vmax.f32 %v9697, 0.0
    %v9858 = vmax.f32 %v9698, 0.0
    %v9859 = vmax.f32 %v9699, 0.0
    %v9860 = vmax.f32 %v9700, 0.0
    %v9861 = vmax.f32 %v9701, 0.0
    %v9862 = vmax.f32 %v9702, 0.0
    %v9863 = vmax.f32 %v9703, 0.0
    %v9864 = vmax.f32 %v9704, 0.0
    %v9865 = vmax.f32 %v9705, 0.0
    %v9866 = vmax.f32 %v9706, 0.0
    %v9867 = vmax.f32 %v9707, 0.0
    %v9868 = vmax.f32 %v9708, 0.0
    %v9869 = vmax.f32 %v9709, 0.0
    %v9870 = vmax.f32 %v9710, 0.0
    %v9871 = vmax.f32 %v9711, 0.0
    %v9872 = vmax.f32 %v8616, %v9712
    %v9873 = vmax.f32 %v8617, %v9713
    %v9874 = vmax.f32 %v8618, %v9714
    %v9875 = vmax.f32 %v8619, %v9715
    %v9876 = vmax.f32 %v8620, %v9716
    %v9877 = vmax.f32 %v8621, %v9717
    %v9878 = vmax.f32 %v8622, %v9718
    %v9879 = vmax.f32 %v8623, %v9719
    %v9880 = vmax.f32 %v8624, %v9720
    %v9881 = vmax.f32 %v8625, %v9721
    %v9882 = vmax.f32 %v8626, %v9722
    %v9883 = vmax.f32 %v8627, %v9723
    %v9884 = vmax.f32 %v8628, %v9724
    %v9885 = vmax.f32 %v8629, %v9725
    %v9886 = vmax.f32 %v8630, %v9726
    %v9887 = vmax.f32 %v8631, %v9727
    %v9888 = vmax.f32 %v8632, %v9728
    %v9889 = vmax.f32 %v8633, %v9729
    %v9890 = vmax.f32 %v8634, %v9730
    %v9891 = vmax.f32 %v8635, %v9731
    %v9892 = vmax.f32 %v8636, %v9732
    %v9893 = vmax.f32 %v8637, %v9733
    %v9894 = vmax.f32 %v8638, %v9734
    %v9895 = vmax.f32 %v8639, %v9735
    %v9896 = vmax.f32 %v8640, %v9736
    %v9897 = vmax.f32 %v8641, %v9737
    %v9898 = vmax.f32 %v8642, %v9738
    %v9899 = vmax.f32 %v8643, %v9739
    %v9900 = vmax.f32 %v8644, %v9740
    %v9901 = vmax.f32 %v8645, %v9741
    %v9902 = vmax.f32 %v8646, %v9742
    %v9903 = vmax.f32 %v8647, %v9743
    %v9904 = vmax.f32 %v9872, %v9744
    %v9905 = vmax.f32 %v9873, %v9745
    %v9906 = vmax.f32 %v9874, %v9746
    %v9907 = vmax.f32 %v9875, %v9747
    %v9908 = vmax.f32 %v9876, %v9748
    %v9909 = vmax.f32 %v9877, %v9749
    %v9910 = vmax.f32 %v9878, %v9750
    %v9911 = vmax.f32 %v9879, %v9751
    %v9912 = vmax.f32 %v9880, %v9752
    %v9913 = vmax.f32 %v9881, %v9753
    %v9914 = vmax.f32 %v9882, %v9754
    %v9915 = vmax.f32 %v9883, %v9755
    %v9916 = vmax.f32 %v9884, %v9756
    %v9917 = vmax.f32 %v9885, %v9757
    %v9918 = vmax.f32 %v9886, %v9758
    %v9919 = vmax.f32 %v9887, %v9759
    %v9920 = vmax.f32 %v9888, %v9760
    %v9921 = vmax.f32 %v9889, %v9761
    %v9922 = vmax.f32 %v9890, %v9762
    %v9923 = vmax.f32 %v9891, %v9763
    %v9924 = vmax.f32 %v9892, %v9764
    %v9925 = vmax.f32 %v9893, %v9765
    %v9926 = vmax.f32 %v9894, %v9766
    %v9927 = vmax.f32 %v9895, %v9767
    %v9928 = vmax.f32 %v9896, %v9768
    %v9929 = vmax.f32 %v9897, %v9769
    %v9930 = vmax.f32 %v9898, %v9770
    %v9931 = vmax.f32 %v9899, %v9771
    %v9932 = vmax.f32 %v9900, %v9772
    %v9933 = vmax.f32 %v9901, %v9773
    %v9934 = vmax.f32 %v9902, %v9774
    %v9935 = vmax.f32 %v9903, %v9775
    %v9936 = vmax.f32 %v8712, %v9776
    %v9937 = vmax.f32 %v8713, %v9777
    %v9938 = vmax.f32 %v8714, %v9778
    %v9939 = vmax.f32 %v8715, %v9779
    %v9940 = vmax.f32 %v8716, %v9780
    %v9941 = vmax.f32 %v8717, %v9781
    %v9942 = vmax.f32 %v8718, %v9782
    %v9943 = vmax.f32 %v8719, %v9783
    %v9944 = vmax.f32 %v8720, %v9784
    %v9945 = vmax.f32 %v8721, %v9785
    %v9946 = vmax.f32 %v8722, %v9786
    %v9947 = vmax.f32 %v8723, %v9787
    %v9948 = vmax.f32 %v8724, %v9788
    %v9949 = vmax.f32 %v8725, %v9789
    %v9950 = vmax.f32 %v8726, %v9790
    %v9951 = vmax.f32 %v8727, %v9791
    %v9952 = vmax.f32 %v8728, %v9792
    %v9953 = vmax.f32 %v8729, %v9793
    %v9954 = vmax.f32 %v8730, %v9794
    %v9955 = vmax.f32 %v8731, %v9795
    %v9956 = vmax.f32 %v8732, %v9796
    %v9957 = vmax.f32 %v8733, %v9797
    %v9958 = vmax.f32 %v8734, %v9798
    %v9959 = vmax.f32 %v8735, %v9799
    %v9960 = vmax.f32 %v8736, %v9800
    %v9961 = vmax.f32 %v8737, %v9801
    %v9962 = vmax.f32 %v8738, %v9802
    %v9963 = vmax.f32 %v8739, %v9803
    %v9964 = vmax.f32 %v8740, %v9804
    %v9965 = vmax.f32 %v8741, %v9805
    %v9966 = vmax.f32 %v8742, %v9806
    %v9967 = vmax.f32 %v8743, %v9807
    %v9968 = vmax.f32 %v9936, %v9808
    %v9969 = vmax.f32 %v9937, %v9809
    %v9970 = vmax.f32 %v9938, %v9810
    %v9971 = vmax.f32 %v9939, %v9811
    %v9972 = vmax.f32 %v9940, %v9812
    %v9973 = vmax.f32 %v9941, %v9813
    %v9974 = vmax.f32 %v9942, %v9814
    %v9975 = vmax.f32 %v9943, %v9815
    %v9976 = vmax.f32 %v9944, %v9816
    %v9977 = vmax.f32 %v9945, %v9817
    %v9978 = vmax.f32 %v9946, %v9818
    %v9979 = vmax.f32 %v9947, %v9819
    %v9980 = vmax.f32 %v9948, %v9820
    %v9981 = vmax.f32 %v9949, %v9821
    %v9982 = vmax.f32 %v9950, %v9822
    %v9983 = vmax.f32 %v9951, %v9823
    %v9984 = vmax.f32 %v9952, %v9824
    %v9985 = vmax.f32 %v9953, %v9825
    %v9986 = vmax.f32 %v9954, %v9826
    %v9987 = vmax.f32 %v9955, %v9827
    %v9988 = vmax.f32 %v9956, %v9828
    %v9989 = vmax.f32 %v9957, %v9829
    %v9990 = vmax.f32 %v9958, %v9830
    %v9991 = vmax.f32 %v9959, %v9831
    %v9992 = vmax.f32 %v9960, %v9832
    %v9993 = vmax.f32 %v9961, %v9833
    %v9994 = vmax.f32 %v9962, %v9834
    %v9995 = vmax.f32 %v9963, %v9835
    %v9996 = vmax.f32 %v9964, %v9836
    %v9997 = vmax.f32 %v9965, %v9837
    %v9998 = vmax.f32 %v9966, %v9838
    %v9999 = vmax.f32 %v9967, %v9839
    %v10000 = vmax.f32 %v9968, %v9840
    %v10001 = vmax.f32 %v9969, %v9841
    %v10002 = vmax.f32 %v9970, %v9842
    %v10003 = vmax.f32 %v9971, %v9843
    %v10004 = vmax.f32 %v9972, %v9844
    %v10005 = vmax.f32 %v9973, %v9845
    %v10006 = vmax.f32 %v9974, %v9846
    %v10007 = vmax.f32 %v9975, %v9847
    %v10008 = vmax.f32 %v9976, %v9848
    %v10009 = vmax.f32 %v9977, %v9849
    %v10010 = vmax.f32 %v9978, %v9850
    %v10011 = vmax.f32 %v9979, %v9851
    %v10012 = vmax.f32 %v9980, %v9852
    %v10013 = vmax.f32 %v9981, %v9853
    %v10014 = vmax.f32 %v9982, %v9854
    %v10015 = vmax.f32 %v9983, %v9855
    %v10016 = vmax.f32 %v9984, %v9856
    %v10017 = vmax.f32 %v9985, %v9857
    %v10018 = vmax.f32 %v9986, %v9858
    %v10019 = vmax.f32 %v9987, %v9859
    %v10020 = vmax.f32 %v9988, %v9860
    %v10021 = vmax.f32 %v9989, %v9861
    %v10022 = vmax.f32 %v9990, %v9862
    %v10023 = vmax.f32 %v9991, %v9863
    %v10024 = vmax.f32 %v9992, %v9864
    %v10025 = vmax.f32 %v9993, %v9865
    %v10026 = vmax.f32 %v9994, %v9866
    %v10027 = vmax.f32 %v9995, %v9867
    %v10028 = vmax.f32 %v9996, %v9868
    %v10029 = vmax.f32 %v9997, %v9869
    %v10030 = vmax.f32 %v9998, %v9870
    %v10031 = vmax.f32 %v9999, %v9871
    %s10032 = sld [smem:[#allocation7 + $0x15]]
    %v10033 = vstv %s10032
    %v10034 = vmul.f32 %v216, %v10033
    %v10035 = vmul.f32 %v217, %v10033
    %v10036 = vmul.f32 %v218, %v10033
    %v10037 = vmul.f32 %v219, %v10033
    %v10038 = vmul.f32 %v220, %v10033
    %v10039 = vmul.f32 %v221, %v10033
    %v10040 = vmul.f32 %v222, %v10033
    %v10041 = vmul.f32 %v223, %v10033
    %v10042 = vmul.f32 %v224, %v10033
    %v10043 = vmul.f32 %v225, %v10033
    %v10044 = vmul.f32 %v226, %v10033
    %v10045 = vmul.f32 %v227, %v10033
    %v10046 = vmul.f32 %v228, %v10033
    %v10047 = vmul.f32 %v229, %v10033
    %v10048 = vmul.f32 %v230, %v10033
    %v10049 = vmul.f32 %v231, %v10033
    %v10050 = vmul.f32 %v232, %v10033
    %v10051 = vmul.f32 %v233, %v10033
    %v10052 = vmul.f32 %v234, %v10033
    %v10053 = vmul.f32 %v235, %v10033
    %v10054 = vmul.f32 %v236, %v10033
    %v10055 = vmul.f32 %v237, %v10033
    %v10056 = vmul.f32 %v238, %v10033
    %v10057 = vmul.f32 %v239, %v10033
    %v10058 = vmul.f32 %v240, %v10033
    %v10059 = vmul.f32 %v241, %v10033
    %v10060 = vmul.f32 %v242, %v10033
    %v10061 = vmul.f32 %v243, %v10033
    %v10062 = vmul.f32 %v244, %v10033
    %v10063 = vmul.f32 %v245, %v10033
    %v10064 = vmul.f32 %v246, %v10033
    %v10065 = vmul.f32 %v247, %v10033
    %v10066 = vmul.f32 %v248, %v10033
    %v10067 = vmul.f32 %v249, %v10033
    %v10068 = vmul.f32 %v250, %v10033
    %v10069 = vmul.f32 %v251, %v10033
    %v10070 = vmul.f32 %v252, %v10033
    %v10071 = vmul.f32 %v253, %v10033
    %v10072 = vmul.f32 %v254, %v10033
    %v10073 = vmul.f32 %v255, %v10033
    %v10074 = vmul.f32 %v256, %v10033
    %v10075 = vmul.f32 %v257, %v10033
    %v10076 = vmul.f32 %v258, %v10033
    %v10077 = vmul.f32 %v259, %v10033
    %v10078 = vmul.f32 %v260, %v10033
    %v10079 = vmul.f32 %v261, %v10033
    %v10080 = vmul.f32 %v262, %v10033
    %v10081 = vmul.f32 %v263, %v10033
    %v10082 = vmul.f32 %v264, %v10033
    %v10083 = vmul.f32 %v265, %v10033
    %v10084 = vmul.f32 %v266, %v10033
    %v10085 = vmul.f32 %v267, %v10033
    %v10086 = vmul.f32 %v268, %v10033
    %v10087 = vmul.f32 %v269, %v10033
    %v10088 = vmul.f32 %v270, %v10033
    %v10089 = vmul.f32 %v271, %v10033
    %v10090 = vmul.f32 %v272, %v10033
    %v10091 = vmul.f32 %v273, %v10033
    %v10092 = vmul.f32 %v274, %v10033
    %v10093 = vmul.f32 %v275, %v10033
    %v10094 = vmul.f32 %v276, %v10033
    %v10095 = vmul.f32 %v277, %v10033
    %v10096 = vmul.f32 %v278, %v10033
    %v10097 = vmul.f32 %v279, %v10033
    %v10098 = vmul.f32 %v280, %v10033
    %v10099 = vmul.f32 %v281, %v10033
    %v10100 = vmul.f32 %v282, %v10033
    %v10101 = vmul.f32 %v283, %v10033
    %v10102 = vmul.f32 %v284, %v10033
    %v10103 = vmul.f32 %v285, %v10033
    %v10104 = vmul.f32 %v286, %v10033
    %v10105 = vmul.f32 %v287, %v10033
    %v10106 = vmul.f32 %v288, %v10033
    %v10107 = vmul.f32 %v289, %v10033
    %v10108 = vmul.f32 %v290, %v10033
    %v10109 = vmul.f32 %v291, %v10033
    %v10110 = vmul.f32 %v292, %v10033
    %v10111 = vmul.f32 %v293, %v10033
    %v10112 = vmul.f32 %v294, %v10033
    %v10113 = vmul.f32 %v295, %v10033
    %v10114 = vmul.f32 %v296, %v10033
    %v10115 = vmul.f32 %v297, %v10033
    %v10116 = vmul.f32 %v298, %v10033
    %v10117 = vmul.f32 %v299, %v10033
    %v10118 = vmul.f32 %v300, %v10033
    %v10119 = vmul.f32 %v301, %v10033
    %v10120 = vmul.f32 %v302, %v10033
    %v10121 = vmul.f32 %v303, %v10033
    %v10122 = vmul.f32 %v304, %v10033
    %v10123 = vmul.f32 %v305, %v10033
    %v10124 = vmul.f32 %v306, %v10033
    %v10125 = vmul.f32 %v307, %v10033
    %v10126 = vmul.f32 %v308, %v10033
    %v10127 = vmul.f32 %v309, %v10033
    %v10128 = vmul.f32 %v310, %v10033
    %v10129 = vmul.f32 %v311, %v10033
    %v10130 = vmul.f32 %v312, %v10033
    %v10131 = vmul.f32 %v313, %v10033
    %v10132 = vmul.f32 %v314, %v10033
    %v10133 = vmul.f32 %v315, %v10033
    %v10134 = vmul.f32 %v316, %v10033
    %v10135 = vmul.f32 %v317, %v10033
    %v10136 = vmul.f32 %v318, %v10033
    %v10137 = vmul.f32 %v319, %v10033
    %v10138 = vmul.f32 %v320, %v10033
    %v10139 = vmul.f32 %v321, %v10033
    %v10140 = vmul.f32 %v322, %v10033
    %v10141 = vmul.f32 %v323, %v10033
    %v10142 = vmul.f32 %v324, %v10033
    %v10143 = vmul.f32 %v325, %v10033
    %v10144 = vmul.f32 %v326, %v10033
    %v10145 = vmul.f32 %v327, %v10033
    %v10146 = vmul.f32 %v328, %v10033
    %v10147 = vmul.f32 %v329, %v10033
    %v10148 = vmul.f32 %v330, %v10033
    %v10149 = vmul.f32 %v331, %v10033
    %v10150 = vmul.f32 %v332, %v10033
    %v10151 = vmul.f32 %v333, %v10033
    %v10152 = vmul.f32 %v334, %v10033
    %v10153 = vmul.f32 %v335, %v10033
    %v10154 = vmul.f32 %v336, %v10033
    %v10155 = vmul.f32 %v337, %v10033
    %v10156 = vmul.f32 %v338, %v10033
    %v10157 = vmul.f32 %v339, %v10033
    %v10158 = vmul.f32 %v340, %v10033
    %v10159 = vmul.f32 %v341, %v10033
    %v10160 = vmul.f32 %v342, %v10033
    %v10161 = vmul.f32 %v343, %v10033
    %v10162 = vmul.f32 %v344, %v10033
    %v10163 = vmul.f32 %v345, %v10033
    %v10164 = vmul.f32 %v346, %v10033
    %v10165 = vmul.f32 %v347, %v10033
    %v10166 = vmul.f32 %v348, %v10033
    %v10167 = vmul.f32 %v349, %v10033
    %v10168 = vmul.f32 %v350, %v10033
    %v10169 = vmul.f32 %v351, %v10033
    %v10170 = vmul.f32 %v352, %v10033
    %v10171 = vmul.f32 %v353, %v10033
    %v10172 = vmul.f32 %v354, %v10033
    %v10173 = vmul.f32 %v355, %v10033
    %v10174 = vmul.f32 %v356, %v10033
    %v10175 = vmul.f32 %v357, %v10033
    %v10176 = vmul.f32 %v358, %v10033
    %v10177 = vmul.f32 %v359, %v10033
    %v10178 = vmul.f32 %v360, %v10033
    %v10179 = vmul.f32 %v361, %v10033
    %v10180 = vmul.f32 %v362, %v10033
    %v10181 = vmul.f32 %v363, %v10033
    %v10182 = vmul.f32 %v364, %v10033
    %v10183 = vmul.f32 %v365, %v10033
    %v10184 = vmul.f32 %v366, %v10033
    %v10185 = vmul.f32 %v367, %v10033
    %v10186 = vmul.f32 %v368, %v10033
    %v10187 = vmul.f32 %v369, %v10033
    %v10188 = vmul.f32 %v370, %v10033
    %v10189 = vmul.f32 %v371, %v10033
    %v10190 = vmul.f32 %v372, %v10033
    %v10191 = vmul.f32 %v373, %v10033
    %v10192 = vmul.f32 %v374, %v10033
    %v10193 = vmul.f32 %v375, %v10033
    %s10194 = sld [smem:[#allocation7 + $0x16]]
    %v10195 = vstv %s10194
    %v10196 = vmul.f32 %v377, %v10195
    %v10197 = vmul.f32 %v379, %v10195
    %v10198 = vmul.f32 %v381, %v10195
    %v10199 = vmul.f32 %v383, %v10195
    %v10200 = vmul.f32 %v385, %v10195
    %v10201 = vmul.f32 %v387, %v10195
    %v10202 = vmul.f32 %v389, %v10195
    %v10203 = vmul.f32 %v391, %v10195
    %v10204 = vmul.f32 %v393, %v10195
    %v10205 = vmul.f32 %v395, %v10195
    %v10206 = vmul.f32 %v397, %v10195
    %v10207 = vmul.f32 %v399, %v10195
    %v10208 = vmul.f32 %v401, %v10195
    %v10209 = vmul.f32 %v403, %v10195
    %v10210 = vmul.f32 %v405, %v10195
    %v10211 = vmul.f32 %v407, %v10195
    %v10212 = vmul.f32 %v409, %v10195
    %v10213 = vmul.f32 %v411, %v10195
    %v10214 = vmul.f32 %v413, %v10195
    %v10215 = vmul.f32 %v415, %v10195
    %v10216 = vmul.f32 %v417, %v10195
    %v10217 = vmul.f32 %v419, %v10195
    %v10218 = vmul.f32 %v421, %v10195
    %v10219 = vmul.f32 %v423, %v10195
    %v10220 = vmul.f32 %v425, %v10195
    %v10221 = vmul.f32 %v427, %v10195
    %v10222 = vmul.f32 %v429, %v10195
    %v10223 = vmul.f32 %v431, %v10195
    %v10224 = vmul.f32 %v433, %v10195
    %v10225 = vmul.f32 %v435, %v10195
    %v10226 = vmul.f32 %v437, %v10195
    %v10227 = vmul.f32 %v439, %v10195
    %v10228 = vmul.f32 %v441, %v10195
    %v10229 = vmul.f32 %v443, %v10195
    %v10230 = vmul.f32 %v445, %v10195
    %v10231 = vmul.f32 %v447, %v10195
    %v10232 = vmul.f32 %v449, %v10195
    %v10233 = vmul.f32 %v451, %v10195
    %v10234 = vmul.f32 %v453, %v10195
    %v10235 = vmul.f32 %v455, %v10195
    %v10236 = vmul.f32 %v457, %v10195
    %v10237 = vmul.f32 %v459, %v10195
    %v10238 = vmul.f32 %v461, %v10195
    %v10239 = vmul.f32 %v463, %v10195
    %v10240 = vmul.f32 %v465, %v10195
    %v10241 = vmul.f32 %v467, %v10195
    %v10242 = vmul.f32 %v469, %v10195
    %v10243 = vmul.f32 %v471, %v10195
    %v10244 = vmul.f32 %v473, %v10195
    %v10245 = vmul.f32 %v475, %v10195
    %v10246 = vmul.f32 %v477, %v10195
    %v10247 = vmul.f32 %v479, %v10195
    %v10248 = vmul.f32 %v481, %v10195
    %v10249 = vmul.f32 %v483, %v10195
    %v10250 = vmul.f32 %v485, %v10195
    %v10251 = vmul.f32 %v487, %v10195
    %v10252 = vmul.f32 %v489, %v10195
    %v10253 = vmul.f32 %v491, %v10195
    %v10254 = vmul.f32 %v493, %v10195
    %v10255 = vmul.f32 %v495, %v10195
    %v10256 = vmul.f32 %v497, %v10195
    %v10257 = vmul.f32 %v499, %v10195
    %v10258 = vmul.f32 %v501, %v10195
    %v10259 = vmul.f32 %v503, %v10195
    %v10260 = vmul.f32 %v505, %v10195
    %v10261 = vmul.f32 %v507, %v10195
    %v10262 = vmul.f32 %v509, %v10195
    %v10263 = vmul.f32 %v511, %v10195
    %v10264 = vmul.f32 %v513, %v10195
    %v10265 = vmul.f32 %v515, %v10195
    %v10266 = vmul.f32 %v517, %v10195
    %v10267 = vmul.f32 %v519, %v10195
    %v10268 = vmul.f32 %v521, %v10195
    %v10269 = vmul.f32 %v523, %v10195
    %v10270 = vmul.f32 %v525, %v10195
    %v10271 = vmul.f32 %v527, %v10195
    %v10272 = vmul.f32 %v529, %v10195
    %v10273 = vmul.f32 %v531, %v10195
    %v10274 = vmul.f32 %v533, %v10195
    %v10275 = vmul.f32 %v535, %v10195
    %v10276 = vmul.f32 %v537, %v10195
    %v10277 = vmul.f32 %v539, %v10195
    %v10278 = vmul.f32 %v541, %v10195
    %v10279 = vmul.f32 %v543, %v10195
    %v10280 = vmul.f32 %v545, %v10195
    %v10281 = vmul.f32 %v547, %v10195
    %v10282 = vmul.f32 %v549, %v10195
    %v10283 = vmul.f32 %v551, %v10195
    %v10284 = vmul.f32 %v553, %v10195
    %v10285 = vmul.f32 %v555, %v10195
    %v10286 = vmul.f32 %v557, %v10195
    %v10287 = vmul.f32 %v559, %v10195
    %v10288 = vmul.f32 %v561, %v10195
    %v10289 = vmul.f32 %v563, %v10195
    %v10290 = vmul.f32 %v565, %v10195
    %v10291 = vmul.f32 %v567, %v10195
    %v10292 = vmul.f32 %v569, %v10195
    %v10293 = vmul.f32 %v571, %v10195
    %v10294 = vmul.f32 %v573, %v10195
    %v10295 = vmul.f32 %v575, %v10195
    %v10296 = vmul.f32 %v577, %v10195
    %v10297 = vmul.f32 %v579, %v10195
    %v10298 = vmul.f32 %v581, %v10195
    %v10299 = vmul.f32 %v583, %v10195
    %v10300 = vmul.f32 %v585, %v10195
    %v10301 = vmul.f32 %v587, %v10195
    %v10302 = vmul.f32 %v589, %v10195
    %v10303 = vmul.f32 %v591, %v10195
    %v10304 = vmul.f32 %v593, %v10195
    %v10305 = vmul.f32 %v595, %v10195
    %v10306 = vmul.f32 %v597, %v10195
    %v10307 = vmul.f32 %v599, %v10195
    %v10308 = vmul.f32 %v601, %v10195
    %v10309 = vmul.f32 %v603, %v10195
    %v10310 = vmul.f32 %v605, %v10195
    %v10311 = vmul.f32 %v607, %v10195
    %v10312 = vmul.f32 %v609, %v10195
    %v10313 = vmul.f32 %v611, %v10195
    %v10314 = vmul.f32 %v613, %v10195
    %v10315 = vmul.f32 %v615, %v10195
    %v10316 = vmul.f32 %v617, %v10195
    %v10317 = vmul.f32 %v619, %v10195
    %v10318 = vmul.f32 %v621, %v10195
    %v10319 = vmul.f32 %v623, %v10195
    %v10320 = vmul.f32 %v625, %v10195
    %v10321 = vmul.f32 %v627, %v10195
    %v10322 = vmul.f32 %v629, %v10195
    %v10323 = vmul.f32 %v631, %v10195
    %v10324 = vmul.f32 %v633, %v10195
    %v10325 = vmul.f32 %v635, %v10195
    %v10326 = vmul.f32 %v637, %v10195
    %v10327 = vmul.f32 %v639, %v10195
    %v10328 = vmul.f32 %v641, %v10195
    %v10329 = vmul.f32 %v643, %v10195
    %v10330 = vmul.f32 %v645, %v10195
    %v10331 = vmul.f32 %v647, %v10195
    %v10332 = vmul.f32 %v649, %v10195
    %v10333 = vmul.f32 %v651, %v10195
    %v10334 = vmul.f32 %v653, %v10195
    %v10335 = vmul.f32 %v655, %v10195
    %v10336 = vmul.f32 %v657, %v10195
    %v10337 = vmul.f32 %v659, %v10195
    %v10338 = vmul.f32 %v661, %v10195
    %v10339 = vmul.f32 %v663, %v10195
    %v10340 = vmul.f32 %v665, %v10195
    %v10341 = vmul.f32 %v667, %v10195
    %v10342 = vmul.f32 %v669, %v10195
    %v10343 = vmul.f32 %v671, %v10195
    %v10344 = vmul.f32 %v673, %v10195
    %v10345 = vmul.f32 %v675, %v10195
    %v10346 = vmul.f32 %v677, %v10195
    %v10347 = vmul.f32 %v679, %v10195
    %v10348 = vmul.f32 %v681, %v10195
    %v10349 = vmul.f32 %v683, %v10195
    %v10350 = vmul.f32 %v685, %v10195
    %v10351 = vmul.f32 %v687, %v10195
    %v10352 = vmul.f32 %v689, %v10195
    %v10353 = vmul.f32 %v691, %v10195
    %v10354 = vmul.f32 %v693, %v10195
    %v10355 = vmul.f32 %v695, %v10195
    %v10356 = vadd.f32 %v10034, %v10196
    %v10357 = vadd.f32 %v10035, %v10197
    %v10358 = vadd.f32 %v10036, %v10198
    %v10359 = vadd.f32 %v10037, %v10199
    %v10360 = vadd.f32 %v10038, %v10200
    %v10361 = vadd.f32 %v10039, %v10201
    %v10362 = vadd.f32 %v10040, %v10202
    %v10363 = vadd.f32 %v10041, %v10203
    %v10364 = vadd.f32 %v10042, %v10204
    %v10365 = vadd.f32 %v10043, %v10205
    %v10366 = vadd.f32 %v10044, %v10206
    %v10367 = vadd.f32 %v10045, %v10207
    %v10368 = vadd.f32 %v10046, %v10208
    %v10369 = vadd.f32 %v10047, %v10209
    %v10370 = vadd.f32 %v10048, %v10210
    %v10371 = vadd.f32 %v10049, %v10211
    %v10372 = vadd.f32 %v10050, %v10212
    %v10373 = vadd.f32 %v10051, %v10213
    %v10374 = vadd.f32 %v10052, %v10214
    %v10375 = vadd.f32 %v10053, %v10215
    %v10376 = vadd.f32 %v10054, %v10216
    %v10377 = vadd.f32 %v10055, %v10217
    %v10378 = vadd.f32 %v10056, %v10218
    %v10379 = vadd.f32 %v10057, %v10219
    %v10380 = vadd.f32 %v10058, %v10220
    %v10381 = vadd.f32 %v10059, %v10221
    %v10382 = vadd.f32 %v10060, %v10222
    %v10383 = vadd.f32 %v10061, %v10223
    %v10384 = vadd.f32 %v10062, %v10224
    %v10385 = vadd.f32 %v10063, %v10225
    %v10386 = vadd.f32 %v10064, %v10226
    %v10387 = vadd.f32 %v10065, %v10227
    %v10388 = vadd.f32 %v10066, %v10228
    %v10389 = vadd.f32 %v10067, %v10229
    %v10390 = vadd.f32 %v10068, %v10230
    %v10391 = vadd.f32 %v10069, %v10231
    %v10392 = vadd.f32 %v10070, %v10232
    %v10393 = vadd.f32 %v10071, %v10233
    %v10394 = vadd.f32 %v10072, %v10234
    %v10395 = vadd.f32 %v10073, %v10235
    %v10396 = vadd.f32 %v10074, %v10236
    %v10397 = vadd.f32 %v10075, %v10237
    %v10398 = vadd.f32 %v10076, %v10238
    %v10399 = vadd.f32 %v10077, %v10239
    %v10400 = vadd.f32 %v10078, %v10240
    %v10401 = vadd.f32 %v10079, %v10241
    %v10402 = vadd.f32 %v10080, %v10242
    %v10403 = vadd.f32 %v10081, %v10243
    %v10404 = vadd.f32 %v10082, %v10244
    %v10405 = vadd.f32 %v10083, %v10245
    %v10406 = vadd.f32 %v10084, %v10246
    %v10407 = vadd.f32 %v10085, %v10247
    %v10408 = vadd.f32 %v10086, %v10248
    %v10409 = vadd.f32 %v10087, %v10249
    %v10410 = vadd.f32 %v10088, %v10250
    %v10411 = vadd.f32 %v10089, %v10251
    %v10412 = vadd.f32 %v10090, %v10252
    %v10413 = vadd.f32 %v10091, %v10253
    %v10414 = vadd.f32 %v10092, %v10254
    %v10415 = vadd.f32 %v10093, %v10255
    %v10416 = vadd.f32 %v10094, %v10256
    %v10417 = vadd.f32 %v10095, %v10257
    %v10418 = vadd.f32 %v10096, %v10258
    %v10419 = vadd.f32 %v10097, %v10259
    %v10420 = vadd.f32 %v10098, %v10260
    %v10421 = vadd.f32 %v10099, %v10261
    %v10422 = vadd.f32 %v10100, %v10262
    %v10423 = vadd.f32 %v10101, %v10263
    %v10424 = vadd.f32 %v10102, %v10264
    %v10425 = vadd.f32 %v10103, %v10265
    %v10426 = vadd.f32 %v10104, %v10266
    %v10427 = vadd.f32 %v10105, %v10267
    %v10428 = vadd.f32 %v10106, %v10268
    %v10429 = vadd.f32 %v10107, %v10269
    %v10430 = vadd.f32 %v10108, %v10270
    %v10431 = vadd.f32 %v10109, %v10271
    %v10432 = vadd.f32 %v10110, %v10272
    %v10433 = vadd.f32 %v10111, %v10273
    %v10434 = vadd.f32 %v10112, %v10274
    %v10435 = vadd.f32 %v10113, %v10275
    %v10436 = vadd.f32 %v10114, %v10276
    %v10437 = vadd.f32 %v10115, %v10277
    %v10438 = vadd.f32 %v10116, %v10278
    %v10439 = vadd.f32 %v10117, %v10279
    %v10440 = vadd.f32 %v10118, %v10280
    %v10441 = vadd.f32 %v10119, %v10281
    %v10442 = vadd.f32 %v10120, %v10282
    %v10443 = vadd.f32 %v10121, %v10283
    %v10444 = vadd.f32 %v10122, %v10284
    %v10445 = vadd.f32 %v10123, %v10285
    %v10446 = vadd.f32 %v10124, %v10286
    %v10447 = vadd.f32 %v10125, %v10287
    %v10448 = vadd.f32 %v10126, %v10288
    %v10449 = vadd.f32 %v10127, %v10289
    %v10450 = vadd.f32 %v10128, %v10290
    %v10451 = vadd.f32 %v10129, %v10291
    %v10452 = vadd.f32 %v10130, %v10292
    %v10453 = vadd.f32 %v10131, %v10293
    %v10454 = vadd.f32 %v10132, %v10294
    %v10455 = vadd.f32 %v10133, %v10295
    %v10456 = vadd.f32 %v10134, %v10296
    %v10457 = vadd.f32 %v10135, %v10297
    %v10458 = vadd.f32 %v10136, %v10298
    %v10459 = vadd.f32 %v10137, %v10299
    %v10460 = vadd.f32 %v10138, %v10300
    %v10461 = vadd.f32 %v10139, %v10301
    %v10462 = vadd.f32 %v10140, %v10302
    %v10463 = vadd.f32 %v10141, %v10303
    %v10464 = vadd.f32 %v10142, %v10304
    %v10465 = vadd.f32 %v10143, %v10305
    %v10466 = vadd.f32 %v10144, %v10306
    %v10467 = vadd.f32 %v10145, %v10307
    %v10468 = vadd.f32 %v10146, %v10308
    %v10469 = vadd.f32 %v10147, %v10309
    %v10470 = vadd.f32 %v10148, %v10310
    %v10471 = vadd.f32 %v10149, %v10311
    %v10472 = vadd.f32 %v10150, %v10312
    %v10473 = vadd.f32 %v10151, %v10313
    %v10474 = vadd.f32 %v10152, %v10314
    %v10475 = vadd.f32 %v10153, %v10315
    %v10476 = vadd.f32 %v10154, %v10316
    %v10477 = vadd.f32 %v10155, %v10317
    %v10478 = vadd.f32 %v10156, %v10318
    %v10479 = vadd.f32 %v10157, %v10319
    %v10480 = vadd.f32 %v10158, %v10320
    %v10481 = vadd.f32 %v10159, %v10321
    %v10482 = vadd.f32 %v10160, %v10322
    %v10483 = vadd.f32 %v10161, %v10323
    %v10484 = vadd.f32 %v10162, %v10324
    %v10485 = vadd.f32 %v10163, %v10325
    %v10486 = vadd.f32 %v10164, %v10326
    %v10487 = vadd.f32 %v10165, %v10327
    %v10488 = vadd.f32 %v10166, %v10328
    %v10489 = vadd.f32 %v10167, %v10329
    %v10490 = vadd.f32 %v10168, %v10330
    %v10491 = vadd.f32 %v10169, %v10331
    %v10492 = vadd.f32 %v10170, %v10332
    %v10493 = vadd.f32 %v10171, %v10333
    %v10494 = vadd.f32 %v10172, %v10334
    %v10495 = vadd.f32 %v10173, %v10335
    %v10496 = vadd.f32 %v10174, %v10336
    %v10497 = vadd.f32 %v10175, %v10337
    %v10498 = vadd.f32 %v10176, %v10338
    %v10499 = vadd.f32 %v10177, %v10339
    %v10500 = vadd.f32 %v10178, %v10340
    %v10501 = vadd.f32 %v10179, %v10341
    %v10502 = vadd.f32 %v10180, %v10342
    %v10503 = vadd.f32 %v10181, %v10343
    %v10504 = vadd.f32 %v10182, %v10344
    %v10505 = vadd.f32 %v10183, %v10345
    %v10506 = vadd.f32 %v10184, %v10346
    %v10507 = vadd.f32 %v10185, %v10347
    %v10508 = vadd.f32 %v10186, %v10348
    %v10509 = vadd.f32 %v10187, %v10349
    %v10510 = vadd.f32 %v10188, %v10350
    %v10511 = vadd.f32 %v10189, %v10351
    %v10512 = vadd.f32 %v10190, %v10352
    %v10513 = vadd.f32 %v10191, %v10353
    %v10514 = vadd.f32 %v10192, %v10354
    %v10515 = vadd.f32 %v10193, %v10355
    %s10516 = sld [smem:[#allocation7 + $0x17]]
    %v10517 = vstv %s10516
    %v10518 = vmul.f32 %v697, %v10517
    %v10519 = vmul.f32 %v699, %v10517
    %v10520 = vmul.f32 %v701, %v10517
    %v10521 = vmul.f32 %v703, %v10517
    %v10522 = vmul.f32 %v705, %v10517
    %v10523 = vmul.f32 %v707, %v10517
    %v10524 = vmul.f32 %v709, %v10517
    %v10525 = vmul.f32 %v711, %v10517
    %v10526 = vmul.f32 %v713, %v10517
    %v10527 = vmul.f32 %v715, %v10517
    %v10528 = vmul.f32 %v717, %v10517
    %v10529 = vmul.f32 %v719, %v10517
    %v10530 = vmul.f32 %v721, %v10517
    %v10531 = vmul.f32 %v723, %v10517
    %v10532 = vmul.f32 %v725, %v10517
    %v10533 = vmul.f32 %v727, %v10517
    %v10534 = vmul.f32 %v729, %v10517
    %v10535 = vmul.f32 %v731, %v10517
    %v10536 = vmul.f32 %v733, %v10517
    %v10537 = vmul.f32 %v735, %v10517
    %v10538 = vmul.f32 %v737, %v10517
    %v10539 = vmul.f32 %v739, %v10517
    %v10540 = vmul.f32 %v741, %v10517
    %v10541 = vmul.f32 %v743, %v10517
    %v10542 = vmul.f32 %v745, %v10517
    %v10543 = vmul.f32 %v747, %v10517
    %v10544 = vmul.f32 %v749, %v10517
    %v10545 = vmul.f32 %v751, %v10517
    %v10546 = vmul.f32 %v753, %v10517
    %v10547 = vmul.f32 %v755, %v10517
    %v10548 = vmul.f32 %v757, %v10517
    %v10549 = vmul.f32 %v759, %v10517
    %v10550 = vmul.f32 %v761, %v10517
    %v10551 = vmul.f32 %v763, %v10517
    %v10552 = vmul.f32 %v765, %v10517
    %v10553 = vmul.f32 %v767, %v10517
    %v10554 = vmul.f32 %v769, %v10517
    %v10555 = vmul.f32 %v771, %v10517
    %v10556 = vmul.f32 %v773, %v10517
    %v10557 = vmul.f32 %v775, %v10517
    %v10558 = vmul.f32 %v777, %v10517
    %v10559 = vmul.f32 %v779, %v10517
    %v10560 = vmul.f32 %v781, %v10517
    %v10561 = vmul.f32 %v783, %v10517
    %v10562 = vmul.f32 %v785, %v10517
    %v10563 = vmul.f32 %v787, %v10517
    %v10564 = vmul.f32 %v789, %v10517
    %v10565 = vmul.f32 %v791, %v10517
    %v10566 = vmul.f32 %v793, %v10517
    %v10567 = vmul.f32 %v795, %v10517
    %v10568 = vmul.f32 %v797, %v10517
    %v10569 = vmul.f32 %v799, %v10517
    %v10570 = vmul.f32 %v801, %v10517
    %v10571 = vmul.f32 %v803, %v10517
    %v10572 = vmul.f32 %v805, %v10517
    %v10573 = vmul.f32 %v807, %v10517
    %v10574 = vmul.f32 %v809, %v10517
    %v10575 = vmul.f32 %v811, %v10517
    %v10576 = vmul.f32 %v813, %v10517
    %v10577 = vmul.f32 %v815, %v10517
    %v10578 = vmul.f32 %v817, %v10517
    %v10579 = vmul.f32 %v819, %v10517
    %v10580 = vmul.f32 %v821, %v10517
    %v10581 = vmul.f32 %v823, %v10517
    %v10582 = vmul.f32 %v825, %v10517
    %v10583 = vmul.f32 %v827, %v10517
    %v10584 = vmul.f32 %v829, %v10517
    %v10585 = vmul.f32 %v831, %v10517
    %v10586 = vmul.f32 %v833, %v10517
    %v10587 = vmul.f32 %v835, %v10517
    %v10588 = vmul.f32 %v837, %v10517
    %v10589 = vmul.f32 %v839, %v10517
    %v10590 = vmul.f32 %v841, %v10517
    %v10591 = vmul.f32 %v843, %v10517
    %v10592 = vmul.f32 %v845, %v10517
    %v10593 = vmul.f32 %v847, %v10517
    %v10594 = vmul.f32 %v849, %v10517
    %v10595 = vmul.f32 %v851, %v10517
    %v10596 = vmul.f32 %v853, %v10517
    %v10597 = vmul.f32 %v855, %v10517
    %v10598 = vmul.f32 %v857, %v10517
    %v10599 = vmul.f32 %v859, %v10517
    %v10600 = vmul.f32 %v861, %v10517
    %v10601 = vmul.f32 %v863, %v10517
    %v10602 = vmul.f32 %v865, %v10517
    %v10603 = vmul.f32 %v867, %v10517
    %v10604 = vmul.f32 %v869, %v10517
    %v10605 = vmul.f32 %v871, %v10517
    %v10606 = vmul.f32 %v873, %v10517
    %v10607 = vmul.f32 %v875, %v10517
    %v10608 = vmul.f32 %v877, %v10517
    %v10609 = vmul.f32 %v879, %v10517
    %v10610 = vmul.f32 %v881, %v10517
    %v10611 = vmul.f32 %v883, %v10517
    %v10612 = vmul.f32 %v885, %v10517
    %v10613 = vmul.f32 %v887, %v10517
    %v10614 = vmul.f32 %v889, %v10517
    %v10615 = vmul.f32 %v891, %v10517
    %v10616 = vmul.f32 %v893, %v10517
    %v10617 = vmul.f32 %v895, %v10517
    %v10618 = vmul.f32 %v897, %v10517
    %v10619 = vmul.f32 %v899, %v10517
    %v10620 = vmul.f32 %v901, %v10517
    %v10621 = vmul.f32 %v903, %v10517
    %v10622 = vmul.f32 %v905, %v10517
    %v10623 = vmul.f32 %v907, %v10517
    %v10624 = vmul.f32 %v909, %v10517
    %v10625 = vmul.f32 %v911, %v10517
    %v10626 = vmul.f32 %v913, %v10517
    %v10627 = vmul.f32 %v915, %v10517
    %v10628 = vmul.f32 %v917, %v10517
    %v10629 = vmul.f32 %v919, %v10517
    %v10630 = vmul.f32 %v921, %v10517
    %v10631 = vmul.f32 %v923, %v10517
    %v10632 = vmul.f32 %v925, %v10517
    %v10633 = vmul.f32 %v927, %v10517
    %v10634 = vmul.f32 %v929, %v10517
    %v10635 = vmul.f32 %v931, %v10517
    %v10636 = vmul.f32 %v933, %v10517
    %v10637 = vmul.f32 %v935, %v10517
    %v10638 = vmul.f32 %v937, %v10517
    %v10639 = vmul.f32 %v939, %v10517
    %v10640 = vmul.f32 %v941, %v10517
    %v10641 = vmul.f32 %v943, %v10517
    %v10642 = vmul.f32 %v945, %v10517
    %v10643 = vmul.f32 %v947, %v10517
    %v10644 = vmul.f32 %v949, %v10517
    %v10645 = vmul.f32 %v951, %v10517
    %v10646 = vmul.f32 %v953, %v10517
    %v10647 = vmul.f32 %v955, %v10517
    %v10648 = vmul.f32 %v957, %v10517
    %v10649 = vmul.f32 %v959, %v10517
    %v10650 = vmul.f32 %v961, %v10517
    %v10651 = vmul.f32 %v963, %v10517
    %v10652 = vmul.f32 %v965, %v10517
    %v10653 = vmul.f32 %v967, %v10517
    %v10654 = vmul.f32 %v969, %v10517
    %v10655 = vmul.f32 %v971, %v10517
    %v10656 = vmul.f32 %v973, %v10517
    %v10657 = vmul.f32 %v975, %v10517
    %v10658 = vmul.f32 %v977, %v10517
    %v10659 = vmul.f32 %v979, %v10517
    %v10660 = vmul.f32 %v981, %v10517
    %v10661 = vmul.f32 %v983, %v10517
    %v10662 = vmul.f32 %v985, %v10517
    %v10663 = vmul.f32 %v987, %v10517
    %v10664 = vmul.f32 %v989, %v10517
    %v10665 = vmul.f32 %v991, %v10517
    %v10666 = vmul.f32 %v993, %v10517
    %v10667 = vmul.f32 %v995, %v10517
    %v10668 = vmul.f32 %v997, %v10517
    %v10669 = vmul.f32 %v999, %v10517
    %v10670 = vmul.f32 %v1001, %v10517
    %v10671 = vmul.f32 %v1003, %v10517
    %v10672 = vmul.f32 %v1005, %v10517
    %v10673 = vmul.f32 %v1007, %v10517
    %v10674 = vmul.f32 %v1009, %v10517
    %v10675 = vmul.f32 %v1011, %v10517
    %v10676 = vmul.f32 %v1013, %v10517
    %v10677 = vmul.f32 %v1015, %v10517
    %v10678 = vadd.f32 %v10356, %v10518
    %v10679 = vadd.f32 %v10357, %v10519
    %v10680 = vadd.f32 %v10358, %v10520
    %v10681 = vadd.f32 %v10359, %v10521
    %v10682 = vadd.f32 %v10360, %v10522
    %v10683 = vadd.f32 %v10361, %v10523
    %v10684 = vadd.f32 %v10362, %v10524
    %v10685 = vadd.f32 %v10363, %v10525
    %v10686 = vadd.f32 %v10364, %v10526
    %v10687 = vadd.f32 %v10365, %v10527
    %v10688 = vadd.f32 %v10366, %v10528
    %v10689 = vadd.f32 %v10367, %v10529
    %v10690 = vadd.f32 %v10368, %v10530
    %v10691 = vadd.f32 %v10369, %v10531
    %v10692 = vadd.f32 %v10370, %v10532
    %v10693 = vadd.f32 %v10371, %v10533
    %v10694 = vadd.f32 %v10372, %v10534
    %v10695 = vadd.f32 %v10373, %v10535
    %v10696 = vadd.f32 %v10374, %v10536
    %v10697 = vadd.f32 %v10375, %v10537
    %v10698 = vadd.f32 %v10376, %v10538
    %v10699 = vadd.f32 %v10377, %v10539
    %v10700 = vadd.f32 %v10378, %v10540
    %v10701 = vadd.f32 %v10379, %v10541
    %v10702 = vadd.f32 %v10380, %v10542
    %v10703 = vadd.f32 %v10381, %v10543
    %v10704 = vadd.f32 %v10382, %v10544
    %v10705 = vadd.f32 %v10383, %v10545
    %v10706 = vadd.f32 %v10384, %v10546
    %v10707 = vadd.f32 %v10385, %v10547
    %v10708 = vadd.f32 %v10386, %v10548
    %v10709 = vadd.f32 %v10387, %v10549
    %v10710 = vadd.f32 %v10388, %v10550
    %v10711 = vadd.f32 %v10389, %v10551
    %v10712 = vadd.f32 %v10390, %v10552
    %v10713 = vadd.f32 %v10391, %v10553
    %v10714 = vadd.f32 %v10392, %v10554
    %v10715 = vadd.f32 %v10393, %v10555
    %v10716 = vadd.f32 %v10394, %v10556
    %v10717 = vadd.f32 %v10395, %v10557
    %v10718 = vadd.f32 %v10396, %v10558
    %v10719 = vadd.f32 %v10397, %v10559
    %v10720 = vadd.f32 %v10398, %v10560
    %v10721 = vadd.f32 %v10399, %v10561
    %v10722 = vadd.f32 %v10400, %v10562
    %v10723 = vadd.f32 %v10401, %v10563
    %v10724 = vadd.f32 %v10402, %v10564
    %v10725 = vadd.f32 %v10403, %v10565
    %v10726 = vadd.f32 %v10404, %v10566
    %v10727 = vadd.f32 %v10405, %v10567
    %v10728 = vadd.f32 %v10406, %v10568
    %v10729 = vadd.f32 %v10407, %v10569
    %v10730 = vadd.f32 %v10408, %v10570
    %v10731 = vadd.f32 %v10409, %v10571
    %v10732 = vadd.f32 %v10410, %v10572
    %v10733 = vadd.f32 %v10411, %v10573
    %v10734 = vadd.f32 %v10412, %v10574
    %v10735 = vadd.f32 %v10413, %v10575
    %v10736 = vadd.f32 %v10414, %v10576
    %v10737 = vadd.f32 %v10415, %v10577
    %v10738 = vadd.f32 %v10416, %v10578
    %v10739 = vadd.f32 %v10417, %v10579
    %v10740 = vadd.f32 %v10418, %v10580
    %v10741 = vadd.f32 %v10419, %v10581
    %v10742 = vadd.f32 %v10420, %v10582
    %v10743 = vadd.f32 %v10421, %v10583
    %v10744 = vadd.f32 %v10422, %v10584
    %v10745 = vadd.f32 %v10423, %v10585
    %v10746 = vadd.f32 %v10424, %v10586
    %v10747 = vadd.f32 %v10425, %v10587
    %v10748 = vadd.f32 %v10426, %v10588
    %v10749 = vadd.f32 %v10427, %v10589
    %v10750 = vadd.f32 %v10428, %v10590
    %v10751 = vadd.f32 %v10429, %v10591
    %v10752 = vadd.f32 %v10430, %v10592
    %v10753 = vadd.f32 %v10431, %v10593
    %v10754 = vadd.f32 %v10432, %v10594
    %v10755 = vadd.f32 %v10433, %v10595
    %v10756 = vadd.f32 %v10434, %v10596
    %v10757 = vadd.f32 %v10435, %v10597
    %v10758 = vadd.f32 %v10436, %v10598
    %v10759 = vadd.f32 %v10437, %v10599
    %v10760 = vadd.f32 %v10438, %v10600
    %v10761 = vadd.f32 %v10439, %v10601
    %v10762 = vadd.f32 %v10440, %v10602
    %v10763 = vadd.f32 %v10441, %v10603
    %v10764 = vadd.f32 %v10442, %v10604
    %v10765 = vadd.f32 %v10443, %v10605
    %v10766 = vadd.f32 %v10444, %v10606
    %v10767 = vadd.f32 %v10445, %v10607
    %v10768 = vadd.f32 %v10446, %v10608
    %v10769 = vadd.f32 %v10447, %v10609
    %v10770 = vadd.f32 %v10448, %v10610
    %v10771 = vadd.f32 %v10449, %v10611
    %v10772 = vadd.f32 %v10450, %v10612
    %v10773 = vadd.f32 %v10451, %v10613
    %v10774 = vadd.f32 %v10452, %v10614
    %v10775 = vadd.f32 %v10453, %v10615
    %v10776 = vadd.f32 %v10454, %v10616
    %v10777 = vadd.f32 %v10455, %v10617
    %v10778 = vadd.f32 %v10456, %v10618
    %v10779 = vadd.f32 %v10457, %v10619
    %v10780 = vadd.f32 %v10458, %v10620
    %v10781 = vadd.f32 %v10459, %v10621
    %v10782 = vadd.f32 %v10460, %v10622
    %v10783 = vadd.f32 %v10461, %v10623
    %v10784 = vadd.f32 %v10462, %v10624
    %v10785 = vadd.f32 %v10463, %v10625
    %v10786 = vadd.f32 %v10464, %v10626
    %v10787 = vadd.f32 %v10465, %v10627
    %v10788 = vadd.f32 %v10466, %v10628
    %v10789 = vadd.f32 %v10467, %v10629
    %v10790 = vadd.f32 %v10468, %v10630
    %v10791 = vadd.f32 %v10469, %v10631
    %v10792 = vadd.f32 %v10470, %v10632
    %v10793 = vadd.f32 %v10471, %v10633
    %v10794 = vadd.f32 %v10472, %v10634
    %v10795 = vadd.f32 %v10473, %v10635
    %v10796 = vadd.f32 %v10474, %v10636
    %v10797 = vadd.f32 %v10475, %v10637
    %v10798 = vadd.f32 %v10476, %v10638
    %v10799 = vadd.f32 %v10477, %v10639
    %v10800 = vadd.f32 %v10478, %v10640
    %v10801 = vadd.f32 %v10479, %v10641
    %v10802 = vadd.f32 %v10480, %v10642
    %v10803 = vadd.f32 %v10481, %v10643
    %v10804 = vadd.f32 %v10482, %v10644
    %v10805 = vadd.f32 %v10483, %v10645
    %v10806 = vadd.f32 %v10484, %v10646
    %v10807 = vadd.f32 %v10485, %v10647
    %v10808 = vadd.f32 %v10486, %v10648
    %v10809 = vadd.f32 %v10487, %v10649
    %v10810 = vadd.f32 %v10488, %v10650
    %v10811 = vadd.f32 %v10489, %v10651
    %v10812 = vadd.f32 %v10490, %v10652
    %v10813 = vadd.f32 %v10491, %v10653
    %v10814 = vadd.f32 %v10492, %v10654
    %v10815 = vadd.f32 %v10493, %v10655
    %v10816 = vadd.f32 %v10494, %v10656
    %v10817 = vadd.f32 %v10495, %v10657
    %v10818 = vadd.f32 %v10496, %v10658
    %v10819 = vadd.f32 %v10497, %v10659
    %v10820 = vadd.f32 %v10498, %v10660
    %v10821 = vadd.f32 %v10499, %v10661
    %v10822 = vadd.f32 %v10500, %v10662
    %v10823 = vadd.f32 %v10501, %v10663
    %v10824 = vadd.f32 %v10502, %v10664
    %v10825 = vadd.f32 %v10503, %v10665
    %v10826 = vadd.f32 %v10504, %v10666
    %v10827 = vadd.f32 %v10505, %v10667
    %v10828 = vadd.f32 %v10506, %v10668
    %v10829 = vadd.f32 %v10507, %v10669
    %v10830 = vadd.f32 %v10508, %v10670
    %v10831 = vadd.f32 %v10509, %v10671
    %v10832 = vadd.f32 %v10510, %v10672
    %v10833 = vadd.f32 %v10511, %v10673
    %v10834 = vadd.f32 %v10512, %v10674
    %v10835 = vadd.f32 %v10513, %v10675
    %v10836 = vadd.f32 %v10514, %v10676
    %v10837 = vadd.f32 %v10515, %v10677
    %s10838 = sld [smem:[#allocation8 + $0x7]]
    %v10839 = vstv %s10838
    %v10840 = vadd.f32 %v10678, %v10839
    %v10841 = vadd.f32 %v10679, %v10839
    %v10842 = vadd.f32 %v10680, %v10839
    %v10843 = vadd.f32 %v10681, %v10839
    %v10844 = vadd.f32 %v10682, %v10839
    %v10845 = vadd.f32 %v10683, %v10839
    %v10846 = vadd.f32 %v10684, %v10839
    %v10847 = vadd.f32 %v10685, %v10839
    %v10848 = vadd.f32 %v10686, %v10839
    %v10849 = vadd.f32 %v10687, %v10839
    %v10850 = vadd.f32 %v10688, %v10839
    %v10851 = vadd.f32 %v10689, %v10839
    %v10852 = vadd.f32 %v10690, %v10839
    %v10853 = vadd.f32 %v10691, %v10839
    %v10854 = vadd.f32 %v10692, %v10839
    %v10855 = vadd.f32 %v10693, %v10839
    %v10856 = vadd.f32 %v10694, %v10839
    %v10857 = vadd.f32 %v10695, %v10839
    %v10858 = vadd.f32 %v10696, %v10839
    %v10859 = vadd.f32 %v10697, %v10839
    %v10860 = vadd.f32 %v10698, %v10839
    %v10861 = vadd.f32 %v10699, %v10839
    %v10862 = vadd.f32 %v10700, %v10839
    %v10863 = vadd.f32 %v10701, %v10839
    %v10864 = vadd.f32 %v10702, %v10839
    %v10865 = vadd.f32 %v10703, %v10839
    %v10866 = vadd.f32 %v10704, %v10839
    %v10867 = vadd.f32 %v10705, %v10839
    %v10868 = vadd.f32 %v10706, %v10839
    %v10869 = vadd.f32 %v10707, %v10839
    %v10870 = vadd.f32 %v10708, %v10839
    %v10871 = vadd.f32 %v10709, %v10839
    %v10872 = vadd.f32 %v10710, %v10839
    %v10873 = vadd.f32 %v10711, %v10839
    %v10874 = vadd.f32 %v10712, %v10839
    %v10875 = vadd.f32 %v10713, %v10839
    %v10876 = vadd.f32 %v10714, %v10839
    %v10877 = vadd.f32 %v10715, %v10839
    %v10878 = vadd.f32 %v10716, %v10839
    %v10879 = vadd.f32 %v10717, %v10839
    %v10880 = vadd.f32 %v10718, %v10839
    %v10881 = vadd.f32 %v10719, %v10839
    %v10882 = vadd.f32 %v10720, %v10839
    %v10883 = vadd.f32 %v10721, %v10839
    %v10884 = vadd.f32 %v10722, %v10839
    %v10885 = vadd.f32 %v10723, %v10839
    %v10886 = vadd.f32 %v10724, %v10839
    %v10887 = vadd.f32 %v10725, %v10839
    %v10888 = vadd.f32 %v10726, %v10839
    %v10889 = vadd.f32 %v10727, %v10839
    %v10890 = vadd.f32 %v10728, %v10839
    %v10891 = vadd.f32 %v10729, %v10839
    %v10892 = vadd.f32 %v10730, %v10839
    %v10893 = vadd.f32 %v10731, %v10839
    %v10894 = vadd.f32 %v10732, %v10839
    %v10895 = vadd.f32 %v10733, %v10839
    %v10896 = vadd.f32 %v10734, %v10839
    %v10897 = vadd.f32 %v10735, %v10839
    %v10898 = vadd.f32 %v10736, %v10839
    %v10899 = vadd.f32 %v10737, %v10839
    %v10900 = vadd.f32 %v10738, %v10839
    %v10901 = vadd.f32 %v10739, %v10839
    %v10902 = vadd.f32 %v10740, %v10839
    %v10903 = vadd.f32 %v10741, %v10839
    %v10904 = vadd.f32 %v10742, %v10839
    %v10905 = vadd.f32 %v10743, %v10839
    %v10906 = vadd.f32 %v10744, %v10839
    %v10907 = vadd.f32 %v10745, %v10839
    %v10908 = vadd.f32 %v10746, %v10839
    %v10909 = vadd.f32 %v10747, %v10839
    %v10910 = vadd.f32 %v10748, %v10839
    %v10911 = vadd.f32 %v10749, %v10839
    %v10912 = vadd.f32 %v10750, %v10839
    %v10913 = vadd.f32 %v10751, %v10839
    %v10914 = vadd.f32 %v10752, %v10839
    %v10915 = vadd.f32 %v10753, %v10839
    %v10916 = vadd.f32 %v10754, %v10839
    %v10917 = vadd.f32 %v10755, %v10839
    %v10918 = vadd.f32 %v10756, %v10839
    %v10919 = vadd.f32 %v10757, %v10839
    %v10920 = vadd.f32 %v10758, %v10839
    %v10921 = vadd.f32 %v10759, %v10839
    %v10922 = vadd.f32 %v10760, %v10839
    %v10923 = vadd.f32 %v10761, %v10839
    %v10924 = vadd.f32 %v10762, %v10839
    %v10925 = vadd.f32 %v10763, %v10839
    %v10926 = vadd.f32 %v10764, %v10839
    %v10927 = vadd.f32 %v10765, %v10839
    %v10928 = vadd.f32 %v10766, %v10839
    %v10929 = vadd.f32 %v10767, %v10839
    %v10930 = vadd.f32 %v10768, %v10839
    %v10931 = vadd.f32 %v10769, %v10839
    %v10932 = vadd.f32 %v10770, %v10839
    %v10933 = vadd.f32 %v10771, %v10839
    %v10934 = vadd.f32 %v10772, %v10839
    %v10935 = vadd.f32 %v10773, %v10839
    %v10936 = vadd.f32 %v10774, %v10839
    %v10937 = vadd.f32 %v10775, %v10839
    %v10938 = vadd.f32 %v10776, %v10839
    %v10939 = vadd.f32 %v10777, %v10839
    %v10940 = vadd.f32 %v10778, %v10839
    %v10941 = vadd.f32 %v10779, %v10839
    %v10942 = vadd.f32 %v10780, %v10839
    %v10943 = vadd.f32 %v10781, %v10839
    %v10944 = vadd.f32 %v10782, %v10839
    %v10945 = vadd.f32 %v10783, %v10839
    %v10946 = vadd.f32 %v10784, %v10839
    %v10947 = vadd.f32 %v10785, %v10839
    %v10948 = vadd.f32 %v10786, %v10839
    %v10949 = vadd.f32 %v10787, %v10839
    %v10950 = vadd.f32 %v10788, %v10839
    %v10951 = vadd.f32 %v10789, %v10839
    %v10952 = vadd.f32 %v10790, %v10839
    %v10953 = vadd.f32 %v10791, %v10839
    %v10954 = vadd.f32 %v10792, %v10839
    %v10955 = vadd.f32 %v10793, %v10839
    %v10956 = vadd.f32 %v10794, %v10839
    %v10957 = vadd.f32 %v10795, %v10839
    %v10958 = vadd.f32 %v10796, %v10839
    %v10959 = vadd.f32 %v10797, %v10839
    %v10960 = vadd.f32 %v10798, %v10839
    %v10961 = vadd.f32 %v10799, %v10839
    %v10962 = vadd.f32 %v10800, %v10839
    %v10963 = vadd.f32 %v10801, %v10839
    %v10964 = vadd.f32 %v10802, %v10839
    %v10965 = vadd.f32 %v10803, %v10839
    %v10966 = vadd.f32 %v10804, %v10839
    %v10967 = vadd.f32 %v10805, %v10839
    %v10968 = vadd.f32 %v10806, %v10839
    %v10969 = vadd.f32 %v10807, %v10839
    %v10970 = vadd.f32 %v10808, %v10839
    %v10971 = vadd.f32 %v10809, %v10839
    %v10972 = vadd.f32 %v10810, %v10839
    %v10973 = vadd.f32 %v10811, %v10839
    %v10974 = vadd.f32 %v10812, %v10839
    %v10975 = vadd.f32 %v10813, %v10839
    %v10976 = vadd.f32 %v10814, %v10839
    %v10977 = vadd.f32 %v10815, %v10839
    %v10978 = vadd.f32 %v10816, %v10839
    %v10979 = vadd.f32 %v10817, %v10839
    %v10980 = vadd.f32 %v10818, %v10839
    %v10981 = vadd.f32 %v10819, %v10839
    %v10982 = vadd.f32 %v10820, %v10839
    %v10983 = vadd.f32 %v10821, %v10839
    %v10984 = vadd.f32 %v10822, %v10839
    %v10985 = vadd.f32 %v10823, %v10839
    %v10986 = vadd.f32 %v10824, %v10839
    %v10987 = vadd.f32 %v10825, %v10839
    %v10988 = vadd.f32 %v10826, %v10839
    %v10989 = vadd.f32 %v10827, %v10839
    %v10990 = vadd.f32 %v10828, %v10839
    %v10991 = vadd.f32 %v10829, %v10839
    %v10992 = vadd.f32 %v10830, %v10839
    %v10993 = vadd.f32 %v10831, %v10839
    %v10994 = vadd.f32 %v10832, %v10839
    %v10995 = vadd.f32 %v10833, %v10839
    %v10996 = vadd.f32 %v10834, %v10839
    %v10997 = vadd.f32 %v10835, %v10839
    %v10998 = vadd.f32 %v10836, %v10839
    %v10999 = vadd.f32 %v10837, %v10839
    %v11000 = vmax.f32 %v10840, 0.0
    %v11001 = vmax.f32 %v10841, 0.0
    %v11002 = vmax.f32 %v10842, 0.0
    %v11003 = vmax.f32 %v10843, 0.0
    %v11004 = vmax.f32 %v10844, 0.0
    %v11005 = vmax.f32 %v10845, 0.0
    %v11006 = vmax.f32 %v10846, 0.0
    %v11007 = vmax.f32 %v10847, 0.0
    %v11008 = vmax.f32 %v10848, 0.0
    %v11009 = vmax.f32 %v10849, 0.0
    %v11010 = vmax.f32 %v10850, 0.0
    %v11011 = vmax.f32 %v10851, 0.0
    %v11012 = vmax.f32 %v10852, 0.0
    %v11013 = vmax.f32 %v10853, 0.0
    %v11014 = vmax.f32 %v10854, 0.0
    %v11015 = vmax.f32 %v10855, 0.0
    %v11016 = vmax.f32 %v10856, 0.0
    %v11017 = vmax.f32 %v10857, 0.0
    %v11018 = vmax.f32 %v10858, 0.0
    %v11019 = vmax.f32 %v10859, 0.0
    %v11020 = vmax.f32 %v10860, 0.0
    %v11021 = vmax.f32 %v10861, 0.0
    %v11022 = vmax.f32 %v10862, 0.0
    %v11023 = vmax.f32 %v10863, 0.0
    %v11024 = vmax.f32 %v10864, 0.0
    %v11025 = vmax.f32 %v10865, 0.0
    %v11026 = vmax.f32 %v10866, 0.0
    %v11027 = vmax.f32 %v10867, 0.0
    %v11028 = vmax.f32 %v10868, 0.0
    %v11029 = vmax.f32 %v10869, 0.0
    %v11030 = vmax.f32 %v10870, 0.0
    %v11031 = vmax.f32 %v10871, 0.0
    %v11032 = vmax.f32 %v10872, 0.0
    %v11033 = vmax.f32 %v10873, 0.0
    %v11034 = vmax.f32 %v10874, 0.0
    %v11035 = vmax.f32 %v10875, 0.0
    %v11036 = vmax.f32 %v10876, 0.0
    %v11037 = vmax.f32 %v10877, 0.0
    %v11038 = vmax.f32 %v10878, 0.0
    %v11039 = vmax.f32 %v10879, 0.0
    %v11040 = vmax.f32 %v10880, 0.0
    %v11041 = vmax.f32 %v10881, 0.0
    %v11042 = vmax.f32 %v10882, 0.0
    %v11043 = vmax.f32 %v10883, 0.0
    %v11044 = vmax.f32 %v10884, 0.0
    %v11045 = vmax.f32 %v10885, 0.0
    %v11046 = vmax.f32 %v10886, 0.0
    %v11047 = vmax.f32 %v10887, 0.0
    %v11048 = vmax.f32 %v10888, 0.0
    %v11049 = vmax.f32 %v10889, 0.0
    %v11050 = vmax.f32 %v10890, 0.0
    %v11051 = vmax.f32 %v10891, 0.0
    %v11052 = vmax.f32 %v10892, 0.0
    %v11053 = vmax.f32 %v10893, 0.0
    %v11054 = vmax.f32 %v10894, 0.0
    %v11055 = vmax.f32 %v10895, 0.0
    %v11056 = vmax.f32 %v10896, 0.0
    %v11057 = vmax.f32 %v10897, 0.0
    %v11058 = vmax.f32 %v10898, 0.0
    %v11059 = vmax.f32 %v10899, 0.0
    %v11060 = vmax.f32 %v10900, 0.0
    %v11061 = vmax.f32 %v10901, 0.0
    %v11062 = vmax.f32 %v10902, 0.0
    %v11063 = vmax.f32 %v10903, 0.0
    %v11064 = vmax.f32 %v10904, 0.0
    %v11065 = vmax.f32 %v10905, 0.0
    %v11066 = vmax.f32 %v10906, 0.0
    %v11067 = vmax.f32 %v10907, 0.0
    %v11068 = vmax.f32 %v10908, 0.0
    %v11069 = vmax.f32 %v10909, 0.0
    %v11070 = vmax.f32 %v10910, 0.0
    %v11071 = vmax.f32 %v10911, 0.0
    %v11072 = vmax.f32 %v10912, 0.0
    %v11073 = vmax.f32 %v10913, 0.0
    %v11074 = vmax.f32 %v10914, 0.0
    %v11075 = vmax.f32 %v10915, 0.0
    %v11076 = vmax.f32 %v10916, 0.0
    %v11077 = vmax.f32 %v10917, 0.0
    %v11078 = vmax.f32 %v10918, 0.0
    %v11079 = vmax.f32 %v10919, 0.0
    %v11080 = vmax.f32 %v10920, 0.0
    %v11081 = vmax.f32 %v10921, 0.0
    %v11082 = vmax.f32 %v10922, 0.0
    %v11083 = vmax.f32 %v10923, 0.0
    %v11084 = vmax.f32 %v10924, 0.0
    %v11085 = vmax.f32 %v10925, 0.0
    %v11086 = vmax.f32 %v10926, 0.0
    %v11087 = vmax.f32 %v10927, 0.0
    %v11088 = vmax.f32 %v10928, 0.0
    %v11089 = vmax.f32 %v10929, 0.0
    %v11090 = vmax.f32 %v10930, 0.0
    %v11091 = vmax.f32 %v10931, 0.0
    %v11092 = vmax.f32 %v10932, 0.0
    %v11093 = vmax.f32 %v10933, 0.0
    %v11094 = vmax.f32 %v10934, 0.0
    %v11095 = vmax.f32 %v10935, 0.0
    %v11096 = vmax.f32 %v10936, 0.0
    %v11097 = vmax.f32 %v10937, 0.0
    %v11098 = vmax.f32 %v10938, 0.0
    %v11099 = vmax.f32 %v10939, 0.0
    %v11100 = vmax.f32 %v10940, 0.0
    %v11101 = vmax.f32 %v10941, 0.0
    %v11102 = vmax.f32 %v10942, 0.0
    %v11103 = vmax.f32 %v10943, 0.0
    %v11104 = vmax.f32 %v10944, 0.0
    %v11105 = vmax.f32 %v10945, 0.0
    %v11106 = vmax.f32 %v10946, 0.0
    %v11107 = vmax.f32 %v10947, 0.0
    %v11108 = vmax.f32 %v10948, 0.0
    %v11109 = vmax.f32 %v10949, 0.0
    %v11110 = vmax.f32 %v10950, 0.0
    %v11111 = vmax.f32 %v10951, 0.0
    %v11112 = vmax.f32 %v10952, 0.0
    %v11113 = vmax.f32 %v10953, 0.0
    %v11114 = vmax.f32 %v10954, 0.0
    %v11115 = vmax.f32 %v10955, 0.0
    %v11116 = vmax.f32 %v10956, 0.0
    %v11117 = vmax.f32 %v10957, 0.0
    %v11118 = vmax.f32 %v10958, 0.0
    %v11119 = vmax.f32 %v10959, 0.0
    %v11120 = vmax.f32 %v10960, 0.0
    %v11121 = vmax.f32 %v10961, 0.0
    %v11122 = vmax.f32 %v10962, 0.0
    %v11123 = vmax.f32 %v10963, 0.0
    %v11124 = vmax.f32 %v10964, 0.0
    %v11125 = vmax.f32 %v10965, 0.0
    %v11126 = vmax.f32 %v10966, 0.0
    %v11127 = vmax.f32 %v10967, 0.0
    %v11128 = vmax.f32 %v10968, 0.0
    %v11129 = vmax.f32 %v10969, 0.0
    %v11130 = vmax.f32 %v10970, 0.0
    %v11131 = vmax.f32 %v10971, 0.0
    %v11132 = vmax.f32 %v10972, 0.0
    %v11133 = vmax.f32 %v10973, 0.0
    %v11134 = vmax.f32 %v10974, 0.0
    %v11135 = vmax.f32 %v10975, 0.0
    %v11136 = vmax.f32 %v10976, 0.0
    %v11137 = vmax.f32 %v10977, 0.0
    %v11138 = vmax.f32 %v10978, 0.0
    %v11139 = vmax.f32 %v10979, 0.0
    %v11140 = vmax.f32 %v10980, 0.0
    %v11141 = vmax.f32 %v10981, 0.0
    %v11142 = vmax.f32 %v10982, 0.0
    %v11143 = vmax.f32 %v10983, 0.0
    %v11144 = vmax.f32 %v10984, 0.0
    %v11145 = vmax.f32 %v10985, 0.0
    %v11146 = vmax.f32 %v10986, 0.0
    %v11147 = vmax.f32 %v10987, 0.0
    %v11148 = vmax.f32 %v10988, 0.0
    %v11149 = vmax.f32 %v10989, 0.0
    %v11150 = vmax.f32 %v10990, 0.0
    %v11151 = vmax.f32 %v10991, 0.0
    %v11152 = vmax.f32 %v10992, 0.0
    %v11153 = vmax.f32 %v10993, 0.0
    %v11154 = vmax.f32 %v10994, 0.0
    %v11155 = vmax.f32 %v10995, 0.0
    %v11156 = vmax.f32 %v10996, 0.0
    %v11157 = vmax.f32 %v10997, 0.0
    %v11158 = vmax.f32 %v10998, 0.0
    %v11159 = vmax.f32 %v10999, 0.0
    %v11160 = vmax.f32 %v9904, %v11000
    %v11161 = vmax.f32 %v9905, %v11001
    %v11162 = vmax.f32 %v9906, %v11002
    %v11163 = vmax.f32 %v9907, %v11003
    %v11164 = vmax.f32 %v9908, %v11004
    %v11165 = vmax.f32 %v9909, %v11005
    %v11166 = vmax.f32 %v9910, %v11006
    %v11167 = vmax.f32 %v9911, %v11007
    %v11168 = vmax.f32 %v9912, %v11008
    %v11169 = vmax.f32 %v9913, %v11009
    %v11170 = vmax.f32 %v9914, %v11010
    %v11171 = vmax.f32 %v9915, %v11011
    %v11172 = vmax.f32 %v9916, %v11012
    %v11173 = vmax.f32 %v9917, %v11013
    %v11174 = vmax.f32 %v9918, %v11014
    %v11175 = vmax.f32 %v9919, %v11015
    %v11176 = vmax.f32 %v9920, %v11016
    %v11177 = vmax.f32 %v9921, %v11017
    %v11178 = vmax.f32 %v9922, %v11018
    %v11179 = vmax.f32 %v9923, %v11019
    %v11180 = vmax.f32 %v9924, %v11020
    %v11181 = vmax.f32 %v9925, %v11021
    %v11182 = vmax.f32 %v9926, %v11022
    %v11183 = vmax.f32 %v9927, %v11023
    %v11184 = vmax.f32 %v9928, %v11024
    %v11185 = vmax.f32 %v9929, %v11025
    %v11186 = vmax.f32 %v9930, %v11026
    %v11187 = vmax.f32 %v9931, %v11027
    %v11188 = vmax.f32 %v9932, %v11028
    %v11189 = vmax.f32 %v9933, %v11029
    %v11190 = vmax.f32 %v9934, %v11030
    %v11191 = vmax.f32 %v9935, %v11031
    %v11192 = vmax.f32 %v11160, %v11032
    %v11193 = vmax.f32 %v11161, %v11033
    %v11194 = vmax.f32 %v11162, %v11034
    %v11195 = vmax.f32 %v11163, %v11035
    %v11196 = vmax.f32 %v11164, %v11036
    %v11197 = vmax.f32 %v11165, %v11037
    %v11198 = vmax.f32 %v11166, %v11038
    %v11199 = vmax.f32 %v11167, %v11039
    %v11200 = vmax.f32 %v11168, %v11040
    %v11201 = vmax.f32 %v11169, %v11041
    %v11202 = vmax.f32 %v11170, %v11042
    %v11203 = vmax.f32 %v11171, %v11043
    %v11204 = vmax.f32 %v11172, %v11044
    %v11205 = vmax.f32 %v11173, %v11045
    %v11206 = vmax.f32 %v11174, %v11046
    %v11207 = vmax.f32 %v11175, %v11047
    %v11208 = vmax.f32 %v11176, %v11048
    %v11209 = vmax.f32 %v11177, %v11049
    %v11210 = vmax.f32 %v11178, %v11050
    %v11211 = vmax.f32 %v11179, %v11051
    %v11212 = vmax.f32 %v11180, %v11052
    %v11213 = vmax.f32 %v11181, %v11053
    %v11214 = vmax.f32 %v11182, %v11054
    %v11215 = vmax.f32 %v11183, %v11055
    %v11216 = vmax.f32 %v11184, %v11056
    %v11217 = vmax.f32 %v11185, %v11057
    %v11218 = vmax.f32 %v11186, %v11058
    %v11219 = vmax.f32 %v11187, %v11059
    %v11220 = vmax.f32 %v11188, %v11060
    %v11221 = vmax.f32 %v11189, %v11061
    %v11222 = vmax.f32 %v11190, %v11062
    %v11223 = vmax.f32 %v11191, %v11063
    %v11224 = vmax.f32 %v10000, %v11064
    %v11225 = vmax.f32 %v10001, %v11065
    %v11226 = vmax.f32 %v10002, %v11066
    %v11227 = vmax.f32 %v10003, %v11067
    %v11228 = vmax.f32 %v10004, %v11068
    %v11229 = vmax.f32 %v10005, %v11069
    %v11230 = vmax.f32 %v10006, %v11070
    %v11231 = vmax.f32 %v10007, %v11071
    %v11232 = vmax.f32 %v10008, %v11072
    %v11233 = vmax.f32 %v10009, %v11073
    %v11234 = vmax.f32 %v10010, %v11074
    %v11235 = vmax.f32 %v10011, %v11075
    %v11236 = vmax.f32 %v10012, %v11076
    %v11237 = vmax.f32 %v10013, %v11077
    %v11238 = vmax.f32 %v10014, %v11078
    %v11239 = vmax.f32 %v10015, %v11079
    %v11240 = vmax.f32 %v10016, %v11080
    %v11241 = vmax.f32 %v10017, %v11081
    %v11242 = vmax.f32 %v10018, %v11082
    %v11243 = vmax.f32 %v10019, %v11083
    %v11244 = vmax.f32 %v10020, %v11084
    %v11245 = vmax.f32 %v10021, %v11085
    %v11246 = vmax.f32 %v10022, %v11086
    %v11247 = vmax.f32 %v10023, %v11087
    %v11248 = vmax.f32 %v10024, %v11088
    %v11249 = vmax.f32 %v10025, %v11089
    %v11250 = vmax.f32 %v10026, %v11090
    %v11251 = vmax.f32 %v10027, %v11091
    %v11252 = vmax.f32 %v10028, %v11092
    %v11253 = vmax.f32 %v10029, %v11093
    %v11254 = vmax.f32 %v10030, %v11094
    %v11255 = vmax.f32 %v10031, %v11095
    %v11256 = vmax.f32 %v11224, %v11096
    %v11257 = vmax.f32 %v11225, %v11097
    %v11258 = vmax.f32 %v11226, %v11098
    %v11259 = vmax.f32 %v11227, %v11099
    %v11260 = vmax.f32 %v11228, %v11100
    %v11261 = vmax.f32 %v11229, %v11101
    %v11262 = vmax.f32 %v11230, %v11102
    %v11263 = vmax.f32 %v11231, %v11103
    %v11264 = vmax.f32 %v11232, %v11104
    %v11265 = vmax.f32 %v11233, %v11105
    %v11266 = vmax.f32 %v11234, %v11106
    %v11267 = vmax.f32 %v11235, %v11107
    %v11268 = vmax.f32 %v11236, %v11108
    %v11269 = vmax.f32 %v11237, %v11109
    %v11270 = vmax.f32 %v11238, %v11110
    %v11271 = vmax.f32 %v11239, %v11111
    %v11272 = vmax.f32 %v11240, %v11112
    %v11273 = vmax.f32 %v11241, %v11113
    %v11274 = vmax.f32 %v11242, %v11114
    %v11275 = vmax.f32 %v11243, %v11115
    %v11276 = vmax.f32 %v11244, %v11116
    %v11277 = vmax.f32 %v11245, %v11117
    %v11278 = vmax.f32 %v11246, %v11118
    %v11279 = vmax.f32 %v11247, %v11119
    %v11280 = vmax.f32 %v11248, %v11120
    %v11281 = vmax.f32 %v11249, %v11121
    %v11282 = vmax.f32 %v11250, %v11122
    %v11283 = vmax.f32 %v11251, %v11123
    %v11284 = vmax.f32 %v11252, %v11124
    %v11285 = vmax.f32 %v11253, %v11125
    %v11286 = vmax.f32 %v11254, %v11126
    %v11287 = vmax.f32 %v11255, %v11127
    %v11288 = vmax.f32 %v11256, %v11128
    %v11289 = vmax.f32 %v11257, %v11129
    %v11290 = vmax.f32 %v11258, %v11130
    %v11291 = vmax.f32 %v11259, %v11131
    %v11292 = vmax.f32 %v11260, %v11132
    %v11293 = vmax.f32 %v11261, %v11133
    %v11294 = vmax.f32 %v11262, %v11134
    %v11295 = vmax.f32 %v11263, %v11135
    %v11296 = vmax.f32 %v11264, %v11136
    %v11297 = vmax.f32 %v11265, %v11137
    %v11298 = vmax.f32 %v11266, %v11138
    %v11299 = vmax.f32 %v11267, %v11139
    %v11300 = vmax.f32 %v11268, %v11140
    %v11301 = vmax.f32 %v11269, %v11141
    %v11302 = vmax.f32 %v11270, %v11142
    %v11303 = vmax.f32 %v11271, %v11143
    %v11304 = vmax.f32 %v11272, %v11144
    %v11305 = vmax.f32 %v11273, %v11145
    %v11306 = vmax.f32 %v11274, %v11146
    %v11307 = vmax.f32 %v11275, %v11147
    %v11308 = vmax.f32 %v11276, %v11148
    %v11309 = vmax.f32 %v11277, %v11149
    %v11310 = vmax.f32 %v11278, %v11150
    %v11311 = vmax.f32 %v11279, %v11151
    %v11312 = vmax.f32 %v11280, %v11152
    %v11313 = vmax.f32 %v11281, %v11153
    %v11314 = vmax.f32 %v11282, %v11154
    %v11315 = vmax.f32 %v11283, %v11155
    %v11316 = vmax.f32 %v11284, %v11156
    %v11317 = vmax.f32 %v11285, %v11157
    %v11318 = vmax.f32 %v11286, %v11158
    %v11319 = vmax.f32 %v11287, %v11159
    %v11320 = vlaneseq
    %v11321 = vand.u32 %v11320, 127
    %vm11322 = vcmp.lt.s32.totalorder %v11321, 126
    %v11323 = vsel %vm11322, %v11192, 0.0
    %v11324 = vsel %vm11322, %v11193, 0.0
    %v11325 = vsel %vm11322, %v11194, 0.0
    %v11326 = vsel %vm11322, %v11195, 0.0
    %v11327 = vsel %vm11322, %v11196, 0.0
    %v11328 = vsel %vm11322, %v11197, 0.0
    %v11329 = vsel %vm11322, %v11198, 0.0
    %v11330 = vsel %vm11322, %v11199, 0.0
    %v11331 = vsel %vm11322, %v11200, 0.0
    %v11332 = vsel %vm11322, %v11201, 0.0
    %v11333 = vsel %vm11322, %v11202, 0.0
    %v11334 = vsel %vm11322, %v11203, 0.0
    %v11335 = vsel %vm11322, %v11204, 0.0
    %v11336 = vsel %vm11322, %v11205, 0.0
    %v11337 = vsel %vm11322, %v11206, 0.0
    %v11338 = vsel %vm11322, %v11207, 0.0
    %v11339 = vsel %vm11322, %v11208, 0.0
    %v11340 = vsel %vm11322, %v11209, 0.0
    %v11341 = vsel %vm11322, %v11210, 0.0
    %v11342 = vsel %vm11322, %v11211, 0.0
    %v11343 = vsel %vm11322, %v11212, 0.0
    %v11344 = vsel %vm11322, %v11213, 0.0
    %v11345 = vsel %vm11322, %v11214, 0.0
    %v11346 = vsel %vm11322, %v11215, 0.0
    %v11347 = vsel %vm11322, %v11216, 0.0
    %v11348 = vsel %vm11322, %v11217, 0.0
    %v11349 = vsel %vm11322, %v11218, 0.0
    %v11350 = vsel %vm11322, %v11219, 0.0
    %v11351 = vsel %vm11322, %v11220, 0.0
    %v11352 = vsel %vm11322, %v11221, 0.0
    %v11353 = vsel %vm11322, %v11222, 0.0
    %v11354 = vsel %vm11322, %v11223, 0.0
    %v11355 = vsel %vm11322, %v11288, 0.0
    %v11356 = vsel %vm11322, %v11289, 0.0
    %v11357 = vsel %vm11322, %v11290, 0.0
    %v11358 = vsel %vm11322, %v11291, 0.0
    %v11359 = vsel %vm11322, %v11292, 0.0
    %v11360 = vsel %vm11322, %v11293, 0.0
    %v11361 = vsel %vm11322, %v11294, 0.0
    %v11362 = vsel %vm11322, %v11295, 0.0
    %v11363 = vsel %vm11322, %v11296, 0.0
    %v11364 = vsel %vm11322, %v11297, 0.0
    %v11365 = vsel %vm11322, %v11298, 0.0
    %v11366 = vsel %vm11322, %v11299, 0.0
    %v11367 = vsel %vm11322, %v11300, 0.0
    %v11368 = vsel %vm11322, %v11301, 0.0
    %v11369 = vsel %vm11322, %v11302, 0.0
    %v11370 = vsel %vm11322, %v11303, 0.0
    %v11371 = vsel %vm11322, %v11304, 0.0
    %v11372 = vsel %vm11322, %v11305, 0.0
    %v11373 = vsel %vm11322, %v11306, 0.0
    %v11374 = vsel %vm11322, %v11307, 0.0
    %v11375 = vsel %vm11322, %v11308, 0.0
    %v11376 = vsel %vm11322, %v11309, 0.0
    %v11377 = vsel %vm11322, %v11310, 0.0
    %v11378 = vsel %vm11322, %v11311, 0.0
    %v11379 = vsel %vm11322, %v11312, 0.0
    %v11380 = vsel %vm11322, %v11313, 0.0
    %v11381 = vsel %vm11322, %v11314, 0.0
    %v11382 = vsel %vm11322, %v11315, 0.0
    %v11383 = vsel %vm11322, %v11316, 0.0
    %v11384 = vsel %vm11322, %v11317, 0.0
    %v11385 = vsel %vm11322, %v11318, 0.0
    %v11386 = vsel %vm11322, %v11319, 0.0
    %v11387 = vmul.f32 %v11323, %v11323
    %v11388 = vmul.f32 %v11324, %v11324
    %v11389 = vmul.f32 %v11325, %v11325
    %v11390 = vmul.f32 %v11326, %v11326
    %v11391 = vmul.f32 %v11327, %v11327
    %v11392 = vmul.f32 %v11328, %v11328
    %v11393 = vmul.f32 %v11329, %v11329
    %v11394 = vmul.f32 %v11330, %v11330
    %v11395 = vmul.f32 %v11331, %v11331
    %v11396 = vmul.f32 %v11332, %v11332
    %v11397 = vmul.f32 %v11333, %v11333
    %v11398 = vmul.f32 %v11334, %v11334
    %v11399 = vmul.f32 %v11335, %v11335
    %v11400 = vmul.f32 %v11336, %v11336
    %v11401 = vmul.f32 %v11337, %v11337
    %v11402 = vmul.f32 %v11338, %v11338
    %v11403 = vmul.f32 %v11339, %v11339
    %v11404 = vmul.f32 %v11340, %v11340
    %v11405 = vmul.f32 %v11341, %v11341
    %v11406 = vmul.f32 %v11342, %v11342
    %v11407 = vmul.f32 %v11343, %v11343
    %v11408 = vmul.f32 %v11344, %v11344
    %v11409 = vmul.f32 %v11345, %v11345
    %v11410 = vmul.f32 %v11346, %v11346
    %v11411 = vmul.f32 %v11347, %v11347
    %v11412 = vmul.f32 %v11348, %v11348
    %v11413 = vmul.f32 %v11349, %v11349
    %v11414 = vmul.f32 %v11350, %v11350
    %v11415 = vmul.f32 %v11351, %v11351
    %v11416 = vmul.f32 %v11352, %v11352
    %v11417 = vmul.f32 %v11353, %v11353
    %v11418 = vmul.f32 %v11354, %v11354
    %11419 = vmatpush.xpose.msra.mxu0 %v11402
    %11420 = vmatpush.xpose.msra.mxu0 %v11401
    %11421 = vmatpush.xpose.msra.mxu0 %v11400
    %11422 = vmatpush.xpose.msra.mxu0 %v11399
    %11423 = vmatpush.xpose.msra.mxu0 %v11398
    %11424 = vmatpush.xpose.msra.mxu0 %v11397
    %11425 = vmatpush.xpose.msra.mxu0 %v11396
    %11426 = vmatpush.xpose.msra.mxu0 %v11395
    %11427 = vmatpush.xpose.msra.mxu0 %v11394
    %11428 = vmatpush.xpose.msra.mxu0 %v11393
    %11429 = vmatpush.xpose.msra.mxu0 %v11392
    %11430 = vmatpush.xpose.msra.mxu0 %v11391
    %11431 = vmatpush.xpose.msra.mxu0 %v11390
    %11432 = vmatpush.xpose.msra.mxu0 %v11389
    %11433 = vmatpush.xpose.msra.mxu0 %v11388
    %11434 = vmatpush.xpose.msra.mxu0 %v11387
    %11435 = vmatmul.f32.gmra.mxu0 1.0
    %v11436 = vpop.f32.mrf.mxu0
    %v11437 = vadd.f32 0.0, %v11436
    %11438 = vdwg.mxu0
    %11439 = vmatpush.xpose.msra.mxu0 %v11418
    %11440 = vmatpush.xpose.msra.mxu0 %v11417
    %11441 = vmatpush.xpose.msra.mxu0 %v11416
    %11442 = vmatpush.xpose.msra.mxu0 %v11415
    %11443 = vmatpush.xpose.msra.mxu0 %v11414
    %11444 = vmatpush.xpose.msra.mxu0 %v11413
    %11445 = vmatpush.xpose.msra.mxu0 %v11412
    %11446 = vmatpush.xpose.msra.mxu0 %v11411
    %11447 = vmatpush.xpose.msra.mxu0 %v11410
    %11448 = vmatpush.xpose.msra.mxu0 %v11409
    %11449 = vmatpush.xpose.msra.mxu0 %v11408
    %11450 = vmatpush.xpose.msra.mxu0 %v11407
    %11451 = vmatpush.xpose.msra.mxu0 %v11406
    %11452 = vmatpush.xpose.msra.mxu0 %v11405
    %11453 = vmatpush.xpose.msra.mxu0 %v11404
    %11454 = vmatpush.xpose.msra.mxu0 %v11403
    %11455 = vmatmul.f32.gmra.mxu0 1.0
    %v11456 = vpop.f32.mrf.mxu0
    %v11457 = vadd.f32 0.0, %v11456
    %11458 = vdwg.mxu0
    %v11459 = vmul.f32 %v11355, %v11355
    %v11460 = vmul.f32 %v11356, %v11356
    %v11461 = vmul.f32 %v11357, %v11357
    %v11462 = vmul.f32 %v11358, %v11358
    %v11463 = vmul.f32 %v11359, %v11359
    %v11464 = vmul.f32 %v11360, %v11360
    %v11465 = vmul.f32 %v11361, %v11361
    %v11466 = vmul.f32 %v11362, %v11362
    %v11467 = vmul.f32 %v11363, %v11363
    %v11468 = vmul.f32 %v11364, %v11364
    %v11469 = vmul.f32 %v11365, %v11365
    %v11470 = vmul.f32 %v11366, %v11366
    %v11471 = vmul.f32 %v11367, %v11367
    %v11472 = vmul.f32 %v11368, %v11368
    %v11473 = vmul.f32 %v11369, %v11369
    %v11474 = vmul.f32 %v11370, %v11370
    %v11475 = vmul.f32 %v11371, %v11371
    %v11476 = vmul.f32 %v11372, %v11372
    %v11477 = vmul.f32 %v11373, %v11373
    %v11478 = vmul.f32 %v11374, %v11374
    %v11479 = vmul.f32 %v11375, %v11375
    %v11480 = vmul.f32 %v11376, %v11376
    %v11481 = vmul.f32 %v11377, %v11377
    %v11482 = vmul.f32 %v11378, %v11378
    %v11483 = vmul.f32 %v11379, %v11379
    %v11484 = vmul.f32 %v11380, %v11380
    %v11485 = vmul.f32 %v11381, %v11381
    %v11486 = vmul.f32 %v11382, %v11382
    %v11487 = vmul.f32 %v11383, %v11383
    %v11488 = vmul.f32 %v11384, %v11384
    %v11489 = vmul.f32 %v11385, %v11385
    %v11490 = vmul.f32 %v11386, %v11386
    %11491 = vmatpush.xpose.msra.mxu0 %v11474
    %11492 = vmatpush.xpose.msra.mxu0 %v11473
    %11493 = vmatpush.xpose.msra.mxu0 %v11472
    %11494 = vmatpush.xpose.msra.mxu0 %v11471
    %11495 = vmatpush.xpose.msra.mxu0 %v11470
    %11496 = vmatpush.xpose.msra.mxu0 %v11469
    %11497 = vmatpush.xpose.msra.mxu0 %v11468
    %11498 = vmatpush.xpose.msra.mxu0 %v11467
    %11499 = vmatpush.xpose.msra.mxu0 %v11466
    %11500 = vmatpush.xpose.msra.mxu0 %v11465
    %11501 = vmatpush.xpose.msra.mxu0 %v11464
    %11502 = vmatpush.xpose.msra.mxu0 %v11463
    %11503 = vmatpush.xpose.msra.mxu0 %v11462
    %11504 = vmatpush.xpose.msra.mxu0 %v11461
    %11505 = vmatpush.xpose.msra.mxu0 %v11460
    %11506 = vmatpush.xpose.msra.mxu0 %v11459
    %11507 = vmatmul.f32.gmra.mxu0 1.0
    %v11508 = vpop.f32.mrf.mxu0
    %v11509 = vadd.f32 0.0, %v11508
    %11510 = vdwg.mxu0
    %11511 = vmatpush.xpose.msra.mxu0 %v11490
    %11512 = vmatpush.xpose.msra.mxu0 %v11489
    %11513 = vmatpush.xpose.msra.mxu0 %v11488
    %11514 = vmatpush.xpose.msra.mxu0 %v11487
    %11515 = vmatpush.xpose.msra.mxu0 %v11486
    %11516 = vmatpush.xpose.msra.mxu0 %v11485
    %11517 = vmatpush.xpose.msra.mxu0 %v11484
    %11518 = vmatpush.xpose.msra.mxu0 %v11483
    %11519 = vmatpush.xpose.msra.mxu0 %v11482
    %11520 = vmatpush.xpose.msra.mxu0 %v11481
    %11521 = vmatpush.xpose.msra.mxu0 %v11480
    %11522 = vmatpush.xpose.msra.mxu0 %v11479
    %11523 = vmatpush.xpose.msra.mxu0 %v11478
    %11524 = vmatpush.xpose.msra.mxu0 %v11477
    %11525 = vmatpush.xpose.msra.mxu0 %v11476
    %11526 = vmatpush.xpose.msra.mxu0 %v11475
    %11527 = vmatmul.f32.gmra.mxu0 1.0
    %v11528 = vpop.f32.mrf.mxu0
    %v11529 = vadd.f32 0.0, %v11528
    %11530 = vdwg.mxu0
    %v11531 = vmul.f32 %v11323, %v11355
    %v11532 = vmul.f32 %v11324, %v11356
    %v11533 = vmul.f32 %v11325, %v11357
    %v11534 = vmul.f32 %v11326, %v11358
    %v11535 = vmul.f32 %v11327, %v11359
    %v11536 = vmul.f32 %v11328, %v11360
    %v11537 = vmul.f32 %v11329, %v11361
    %v11538 = vmul.f32 %v11330, %v11362
    %v11539 = vmul.f32 %v11331, %v11363
    %v11540 = vmul.f32 %v11332, %v11364
    %v11541 = vmul.f32 %v11333, %v11365
    %v11542 = vmul.f32 %v11334, %v11366
    %v11543 = vmul.f32 %v11335, %v11367
    %v11544 = vmul.f32 %v11336, %v11368
    %v11545 = vmul.f32 %v11337, %v11369
    %v11546 = vmul.f32 %v11338, %v11370
    %v11547 = vmul.f32 %v11339, %v11371
    %v11548 = vmul.f32 %v11340, %v11372
    %v11549 = vmul.f32 %v11341, %v11373
    %v11550 = vmul.f32 %v11342, %v11374
    %v11551 = vmul.f32 %v11343, %v11375
    %v11552 = vmul.f32 %v11344, %v11376
    %v11553 = vmul.f32 %v11345, %v11377
    %v11554 = vmul.f32 %v11346, %v11378
    %v11555 = vmul.f32 %v11347, %v11379
    %v11556 = vmul.f32 %v11348, %v11380
    %v11557 = vmul.f32 %v11349, %v11381
    %v11558 = vmul.f32 %v11350, %v11382
    %v11559 = vmul.f32 %v11351, %v11383
    %v11560 = vmul.f32 %v11352, %v11384
    %v11561 = vmul.f32 %v11353, %v11385
    %v11562 = vmul.f32 %v11354, %v11386
    %11563 = vmatpush.xpose.msra.mxu0 %v11546
    %11564 = vmatpush.xpose.msra.mxu0 %v11545
    %11565 = vmatpush.xpose.msra.mxu0 %v11544
    %11566 = vmatpush.xpose.msra.mxu0 %v11543
    %11567 = vmatpush.xpose.msra.mxu0 %v11542
    %11568 = vmatpush.xpose.msra.mxu0 %v11541
    %11569 = vmatpush.xpose.msra.mxu0 %v11540
    %11570 = vmatpush.xpose.msra.mxu0 %v11539
    %11571 = vmatpush.xpose.msra.mxu0 %v11538
    %11572 = vmatpush.xpose.msra.mxu0 %v11537
    %11573 = vmatpush.xpose.msra.mxu0 %v11536
    %11574 = vmatpush.xpose.msra.mxu0 %v11535
    %11575 = vmatpush.xpose.msra.mxu0 %v11534
    %11576 = vmatpush.xpose.msra.mxu0 %v11533
    %11577 = vmatpush.xpose.msra.mxu0 %v11532
    %11578 = vmatpush.xpose.msra.mxu0 %v11531
    %11579 = vmatmul.f32.gmra.mxu0 1.0
    %v11580 = vpop.f32.mrf.mxu0
    %v11581 = vadd.f32 0.0, %v11580
    %11582 = vdwg.mxu0
    %11583 = vmatpush.xpose.msra.mxu0 %v11562
    %11584 = vmatpush.xpose.msra.mxu0 %v11561
    %11585 = vmatpush.xpose.msra.mxu0 %v11560
    %11586 = vmatpush.xpose.msra.mxu0 %v11559
    %11587 = vmatpush.xpose.msra.mxu0 %v11558
    %11588 = vmatpush.xpose.msra.mxu0 %v11557
    %11589 = vmatpush.xpose.msra.mxu0 %v11556
    %11590 = vmatpush.xpose.msra.mxu0 %v11555
    %11591 = vmatpush.xpose.msra.mxu0 %v11554
    %11592 = vmatpush.xpose.msra.mxu0 %v11553
    %11593 = vmatpush.xpose.msra.mxu0 %v11552
    %11594 = vmatpush.xpose.msra.mxu0 %v11551
    %11595 = vmatpush.xpose.msra.mxu0 %v11550
    %11596 = vmatpush.xpose.msra.mxu0 %v11549
    %11597 = vmatpush.xpose.msra.mxu0 %v11548
    %11598 = vmatpush.xpose.msra.mxu0 %v11547
    %11599 = vmatmul.f32.gmra.mxu0 1.0
    %v11600 = vpop.f32.mrf.mxu0
    %v11601 = vadd.f32 0.0, %v11600
    %11602 = vdwg.mxu0
    %v11603 = vrsqrt.pop %v11437
    %v11604 = vmul.f32 %v11603, %v11437
    %v11605 = vmul.f32 %v11604, %v11603
    %v11606 = vmul.f32 0.5, %v11605
    %v11607 = vsub.f32 1.5, %v11606
    %v11608 = vmul.f32 %v11603, %v11607
    %v11609 = vmul.f32 %v11437, %v11608
    %vm11610 = vcmp.eq.f32.partialorder %v11437, inf
    %v11611 = vsel %vm11610, %v11437, %v11609
    %vm11612 = vcmp.eq.f32.partialorder %v11437, 0.0
    %v11613 = vand.u32 %v11437, 2147483648
    %v11614 = vsel %vm11612, %v11613, %v11611
    %v11615 = vrsqrt.pop %v11457
    %v11616 = vmul.f32 %v11615, %v11457
    %v11617 = vmul.f32 %v11616, %v11615
    %v11618 = vmul.f32 0.5, %v11617
    %v11619 = vsub.f32 1.5, %v11618
    %v11620 = vmul.f32 %v11615, %v11619
    %v11621 = vmul.f32 %v11457, %v11620
    %vm11622 = vcmp.eq.f32.partialorder %v11457, inf
    %v11623 = vsel %vm11622, %v11457, %v11621
    %vm11624 = vcmp.eq.f32.partialorder %v11457, 0.0
    %v11625 = vand.u32 %v11457, 2147483648
    %v11626 = vsel %vm11624, %v11625, %v11623
    %v11627 = vadd.f32 %v11614, 1e-07
    %v11628 = vadd.f32 %v11626, 1e-07
    %v11629 = vrsqrt.pop %v11509
    %v11630 = vmul.f32 %v11629, %v11509
    %v11631 = vmul.f32 %v11630, %v11629
    %v11632 = vmul.f32 0.5, %v11631
    %v11633 = vsub.f32 1.5, %v11632
    %v11634 = vmul.f32 %v11629, %v11633
    %v11635 = vmul.f32 %v11509, %v11634
    %vm11636 = vcmp.eq.f32.partialorder %v11509, inf
    %v11637 = vsel %vm11636, %v11509, %v11635
    %vm11638 = vcmp.eq.f32.partialorder %v11509, 0.0
    %v11639 = vand.u32 %v11509, 2147483648
    %v11640 = vsel %vm11638, %v11639, %v11637
    %v11641 = vrsqrt.pop %v11529
    %v11642 = vmul.f32 %v11641, %v11529
    %v11643 = vmul.f32 %v11642, %v11641
    %v11644 = vmul.f32 0.5, %v11643
    %v11645 = vsub.f32 1.5, %v11644
    %v11646 = vmul.f32 %v11641, %v11645
    %v11647 = vmul.f32 %v11529, %v11646
    %vm11648 = vcmp.eq.f32.partialorder %v11529, inf
    %v11649 = vsel %vm11648, %v11529, %v11647
    %vm11650 = vcmp.eq.f32.partialorder %v11529, 0.0
    %v11651 = vand.u32 %v11529, 2147483648
    %v11652 = vsel %vm11650, %v11651, %v11649
    %v11653 = vadd.f32 %v11640, 1e-07
    %v11654 = vadd.f32 %v11652, 1e-07
    %v11655 = vmul.f32 %v11627, %v11653
    %v11656 = vmul.f32 %v11628, %v11654
    %v11657 = vrcp.pop %v11655
    %v11658 = vrcp.pop %v11656
    %v11659 = vmul.f32 %v11581, %v11657
    %v11660 = vmul.f32 %v11601, %v11658
    %v11661 = vsub.f32 0.0, %v11659
    %v11662 = vsub.f32 0.0, %v11660
    %v11663 = vmul.f32 %v11661, 1.442695
    %v11664 = vpow.pop %v11663
    %v11665 = vmul.f32 %v11662, 1.442695
    %v11666 = vpow.pop %v11665
    %v11667 = vadd.f32 %v11664, 1.0
    %v11668 = vadd.f32 %v11666, 1.0
    %v11669 = vrcp.pop %v11667
    %v11670 = vmul.f32 %v11667, %v11669
    %v11671 = vsub.f32 1.0, %v11670
    %v11672 = vmul.f32 %v11669, %v11671
    %v11673 = vadd.f32 %v11669, %v11672
    %vm11674 = vweird.f32 %v11667
    %vm11675 = vweird.f32 %v11669
    %vm11676 = vmor %vm11674, %vm11675
    %v11677 = vsel %vm11676, %v11669, %v11673
    %v11678 = vand.u32 2147483647, %v11667
    %vm11679 = vcmp.eq.f32.partialorder %v11678, 8.507059e+37
    %v11680 = vand.u32 %v11667, 2147483648
    %v11681 = vor.u32 1.1754944e-38, %v11680
    %v11682 = vsel %vm11679, %v11681, %v11677
    %v11683 = vmul.f32 1.0, %v11682
    %v11684 = vrcp.pop %v11668
    %v11685 = vmul.f32 %v11668, %v11684
    %v11686 = vsub.f32 1.0, %v11685
    %v11687 = vmul.f32 %v11684, %v11686
    %v11688 = vadd.f32 %v11684, %v11687
    %vm11689 = vweird.f32 %v11668
    %vm11690 = vweird.f32 %v11684
    %vm11691 = vmor %vm11689, %vm11690
    %v11692 = vsel %vm11691, %v11684, %v11688
    %v11693 = vand.u32 2147483647, %v11668
    %vm11694 = vcmp.eq.f32.partialorder %v11693, 8.507059e+37
    %v11695 = vand.u32 %v11668, 2147483648
    %v11696 = vor.u32 1.1754944e-38, %v11695
    %v11697 = vsel %vm11694, %v11696, %v11692
    %v11698 = vmul.f32 1.0, %v11697
    %v11701 = vrot.slane %v11698, 7
    %vm11702 = vcmask 1040384
    %v11703 = vsel %vm11702, %v11683, %v11701
    %v11705 = vlaneseq
    %vm11706 = vcmp.ge.s32.totalorder %v11705, 0
    %vm11707 = vcmp.lt.s32.totalorder %v11705, 256
    %vm11708 = vmand %vm11706, %vm11707
    %11709 = vst.msk [vmem:[#allocation9] sm:$0x3] %vm11708, %v11703
    // Predicated region
    $region26: #{tpu_custom_call.1} parent=1 // pred_check
      _
    $region27: #{tpu_custom_call.1} parent=1 // pred_check_branch
      %11711 = sbr.rel (0) target = $region29
    $region28: #{tpu_custom_call.1} parent=1 // pred_region
      %11713 = vsyncadd [#allocation4], 0
      %s11715 = sshll.u32 [#allocation9], 4
      %s11716 = int_to_ptr.vmem [resolvable:$true] %s11715
      %s11717 = sshll.u32 %s3, 4
      %s11718 = int_to_ptr.hbm [resolvable:$true] %s11717
      %11720 = dma.vmem_to_hbm [thread:$0]  %s11716, 32, %s11718, [#allocation4]
    $region29: #{tpu_custom_call.1} parent=1 // pred_fallthru
      _
    // Predicated region
    $region30: #{tpu_custom_call.1} parent=1 // pred_check
      _
    $region31: #{tpu_custom_call.1} parent=1 // pred_check_branch
      %11722 = sbr.rel (0) target = $region33
    $region32: #{tpu_custom_call.1} parent=1 // pred_region
      %11724 = dma.done [#allocation4], 32
    $region33: #{tpu_custom_call.1} parent=1 // pred_fallthru
      _
    %11725 = vsyncpa [#allocation3], 1
    %11726 = vsyncpa [#allocation4], 1
    %11727 = vsyncpa [#allocation5], 1
    %11728 = vsyncpa [#allocation6], 1

</llo_original>
